<compile_context>
chip_gen: v7x
topology: tpu7x:2x2x1
jax: 0.10.0
libtpu: 0.0.40
codegen_flags: <defaults>
</compile_context>

<pallas_src>
import jax
import jax.numpy as jnp
import numpy as np
from jax.experimental import pallas as pl
from jax.experimental.pallas import tpu as pltpu

K = 5                # conv kernel size (5, 5)
CH = 15              # base_channels
CHP = 16             # channels padded to a clean sublane / bf16-packing boundary
TAPS = K * K         # 25
DEPTH = TAPS * CHP   # 400 : transposed-im2col contraction depth (all four convs)
NEG_SLOPE = 0.3      # LeakyReLU negative slope
BN_EPS = 1e-5
N_CONVS = 4
PATCH_DTYPE = jnp.bfloat16   # bf16 MXU operands, f32 accumulation / epilogue

CW_COLS = 512        # conv-weight slab width (>= DEPTH, 128-aligned)
# -------- misc (f32) parameter slab row layout, width 128 --------
ROW_CB = 0                      # rows 0..15 : conv biases (column l = conv l+1 bias)
ROW_L1 = ROW_CB + CHP           # rows 16..65: W1 (50 x CHP) | b1 at column CHP
ROW_L2 = ROW_L1 + 50            # rows 66..75: W2 (10 x 50)  | b2 at column 50
ROW_L3 = ROW_L2 + 10            # row  76    : W3 (1 x 10)   | b3 at column 10
MISC_ROWS = 80
MISC_COLS = 128


def _leaky(x):
    return jnp.where(x > 0, x, NEG_SLOPE * x)


def _round_up(x, m):
    return ((x + m - 1) // m) * m


# ------------------------------------ wrapper ------------------------------------
def metric_discriminator(x_nchw, packed):
    """Forward pass. x_nchw: (N, 2, H, W) f32. packed: dict from pack_params()."""
    x = x_nchw.astype(jnp.float32)
    N, C, H, W = x.shape
    assert C == 2, "MetricDiscriminator expects 2 input channels (BatchNorm2d(2))"
    assert H >= 4 * (K - 1) + 1 and W >= 4 * (K - 1) + 1
    HW = H * W
    M = N * HW                                # full im2col output width (lane axis)
    MAX_SHIFT = (K - 1) * W + (K - 1)         # largest tap shift
    ACT_COLS = _round_up(M + MAX_SHIFT, 128)  # activation slab width (zero padded)
    HOUT = H - N_CONVS * (K - 1)              # valid spatial extent after 4 convs
    WOUT = W - N_CONVS * (K - 1)

    # channel-major lane-dense input slab: rows >= C and cols >= M are zero
    x_cm = jnp.transpose(x, (1, 0, 2, 3)).reshape(C, M)
    x_act = jnp.zeros((CHP, ACT_COLS), jnp.float32).at[:C, :M].set(x_cm)

    conv_w, misc = packed["conv_w"], packed["misc"]

    def kernel(x_ref, cw_ref, misc_ref, out_ref, act_ref, patch_ref):
        # ---- BatchNorm2d (training-mode batch stats, identity affine) ----
        xv = x_ref[...]                                        # (CHP, ACT_COLS) f32
        v = xv[:, 0:M]
        inv_cnt = 1.0 / float(M)
        mean = jnp.sum(v, axis=1, keepdims=True) * inv_cnt     # (CHP, 1)
        var = jnp.sum(v * v, axis=1, keepdims=True) * inv_cnt - mean * mean
        inv = jax.lax.rsqrt(var + BN_EPS)
        # pad channels are all-zero -> mean 0 -> stay exactly 0; pad columns only feed
        # garbage output columns (see index argument below), so normalising the whole
        # slab is safe and needs no masking.
        act_ref[...] = (xv - mean) * inv

        # ---- four 5x5 valid convs: transposed im2col + one MXU matmul each ----
        # Output pixel (n, oh, ow) lives at column m = n*HW + oh*W + ow; tap (kh, kw)
        # reads input column m + kh*W + kw.  For valid outputs (oh < H-4l, ow < W-4l)
        # that read stays inside the previous layer's valid region, so the garbage
        # columns computed alongside are never read by a valid output.
        for l in range(N_CONVS):
            for kh in range(K):
                for kw in range(K):
                    t = kh * K + kw
                    s = kh * W + kw
                    patch_ref[t * CHP:(t + 1) * CHP, :] = (
                        act_ref[:, s:s + M].astype(PATCH_DTYPE))
            wmat = cw_ref[l * CHP:(l + 1) * CHP, 0:DEPTH]      # (CHP, DEPTH) bf16
            bias = misc_ref[ROW_CB:ROW_CB + CHP, l:l + 1]      # (CHP, 1) f32
            y = jnp.dot(wmat, patch_ref[...],
                        preferred_element_type=jnp.float32)    # (CHP, M) f32
            act_ref[:, 0:M] = _leaky(y + bias)

        # ---- global spatial mean over the valid HOUT x WOUT window, per batch ----
        inv_pix = 1.0 / float(HOUT * WOUT)
        cols = []
        for n_i in range(N):
            acc = jnp.zeros((CHP, WOUT), jnp.float32)
            for oh in range(HOUT):
                base = n_i * HW + oh * W
                acc = acc + act_ref[:, base:base + WOUT]
            cols.append(jnp.sum(acc, axis=1, keepdims=True) * inv_pix)
        feat = jnp.concatenate(cols, axis=1)                   # (CHP, N) channel-major

        # ---- linear stack, channel-major: h = W @ h_prev + b (no transposes) ----
        w1 = misc_ref[ROW_L1:ROW_L1 + 50, 0:CHP]
        b1 = misc_ref[ROW_L1:ROW_L1 + 50, CHP:CHP + 1]
        w2 = misc_ref[ROW_L2:ROW_L2 + 10, 0:50]
        b2 = misc_ref[ROW_L2:ROW_L2 + 10, 50:51]
        w3 = misc_ref[ROW_L3:ROW_L3 + 1, 0:10]
        b3 = misc_ref[ROW_L3:ROW_L3 + 1, 10:11]
        hid = _leaky(jnp.dot(w1, feat, preferred_element_type=jnp.float32) + b1)
        hid = _leaky(jnp.dot(w2, hid, preferred_element_type=jnp.float32) + b2)
        out = jnp.dot(w3, hid, preferred_element_type=jnp.float32) + b3   # (1, N)
        out_ref[...] = out

    flops = N_CONVS * 2 * CHP * DEPTH * M + 2 * N * (CHP * 50 + 50 * 10 + 10)
    bytes_accessed = 4 * x_act.size + 2 * conv_w.size + 4 * misc.size + 4 * N

    grid_spec = pltpu.PrefetchScalarGridSpec(
        num_scalar_prefetch=0,
        grid=(1,),
        in_specs=[pl.BlockSpec(x_act.shape, lambda i: (0, 0)),
                  pl.BlockSpec(conv_w.shape, lambda i: (0, 0)),
                  pl.BlockSpec(misc.shape, lambda i: (0, 0))],
        out_specs=pl.BlockSpec((1, N), lambda i: (0, 0)),
        scratch_shapes=[pltpu.VMEM((CHP, ACT_COLS), jnp.float32),   # activation slab
                        pltpu.VMEM((DEPTH, M), PATCH_DTYPE)],       # im2col patch
    )
    out = pl.pallas_call(
        kernel,
        out_shape=jax.ShapeDtypeStruct((1, N), jnp.float32),
        grid_spec=grid_spec,
        compiler_params=pltpu.CompilerParams(dimension_semantics=("arbitrary",)),
        cost_estimate=pl.CostEstimate(flops=int(flops), transcendentals=2 * CHP,
                                      bytes_accessed=int(bytes_accessed)),
    )(x_act, conv_w, misc)
    return jnp.transpose(out)                                   # (N, 1)


# ------------------------------- parameter packing --------------------------------
def _pack_conv(w_oihw):
    """torch OIHW conv weight -> (CHP, DEPTH) block: [o, (kh*K+kw)*CHP + c]."""
    cout, cin = int(w_oihw.shape[0]), int(w_oihw.shape[1])
    w = jnp.transpose(w_oihw, (2, 3, 1, 0))                     # (kh, kw, cin, cout)
    blk = jnp.zeros((K, K, CHP, CHP), jnp.float32).at[:, :, :cin, :cout].set(w)
    return jnp.transpose(blk.reshape(DEPTH, CHP))               # (CHP, DEPTH)


def pack_params(params):
    """Pack torch-layout params into two compact lane-dense slabs (bf16 + f32)."""
    cw = jnp.zeros((N_CONVS * CHP, CW_COLS), jnp.float32)
    for l in range(N_CONVS):
        cw = cw.at[l * CHP:(l + 1) * CHP, 0:DEPTH].set(_pack_conv(params[f"w{l + 1}"]))
    cw = cw.astype(PATCH_DTYPE)

    misc = jnp.zeros((MISC_ROWS, MISC_COLS), jnp.float32)
    for l in range(N_CONVS):
        misc = misc.at[ROW_CB:ROW_CB + CH, l].set(params[f"b{l + 1}"])
    misc = misc.at[ROW_L1:ROW_L1 + 50, 0:CH].set(params["lw1"])
    misc = misc.at[ROW_L1:ROW_L1 + 50, CHP].set(params["lb1"])
    misc = misc.at[ROW_L2:ROW_L2 + 10, 0:50].set(params["lw2"])
    misc = misc.at[ROW_L2:ROW_L2 + 10, 50].set(params["lb2"])
    misc = misc.at[ROW_L3, 0:10].set(params["lw3"][0])
    misc = misc.at[ROW_L3, 10].set(params["lb3"][0])
    return {"conv_w": cw, "misc": misc}


# ------------------------- deterministic parameter setup --------------------------
def _xavier_uniform(key, shape, fan_in, fan_out):
    bound = float(np.sqrt(6.0 / (fan_in + fan_out)))
    return jax.random.uniform(key, shape, jnp.float32, -bound, bound)


def _spectral_normalize(w_mat, key, n_iters=30):
    """Divide by the largest singular value (power iteration), as spectral_norm."""
    out_dim = w_mat.shape[0]
    u = jax.random.normal(key, (out_dim,), jnp.float32)
    u = u / (jnp.linalg.norm(u) + 1e-12)
    v = None
    for _ in range(n_iters):
        v = w_mat.T @ u
        v = v / (jnp.linalg.norm(v) + 1e-12)
        u = w_mat @ v
        u = u / (jnp.linalg.norm(u) + 1e-12)
    sigma = u @ (w_mat @ v)
    return w_mat / sigma


def init_params(key):
    ks = jax.random.split(key, 14)

    def conv_w(k_w, k_u, cin, cout):
        fan_in, fan_out = cin * K * K, cout * K * K
        w = _xavier_uniform(k_w, (cout, cin, K, K), fan_in, fan_out)        # OIHW
        return _spectral_normalize(w.reshape(cout, -1), k_u).reshape(cout, cin, K, K)

    def lin_w(k_w, k_u, fin, fout):
        w = _xavier_uniform(k_w, (fout, fin), fin, fout)                    # (out, in)
        return _spectral_normalize(w, k_u)

    p = {}
    p["w1"] = conv_w(ks[0], ks[1], 2, CH)
    p["w2"] = conv_w(ks[2], ks[3], CH, CH)
    p["w3"] = conv_w(ks[4], ks[5], CH, CH)
    p["w4"] = conv_w(ks[6], ks[7], CH, CH)
    for i in range(1, 5):
        p[f"b{i}"] = jnp.zeros((CH,), jnp.float32)       # nn.init.zeros_(bias)
    p["lw1"] = lin_w(ks[8], ks[9], CH, 50)
    p["lb1"] = jnp.zeros((50,), jnp.float32)
    p["lw2"] = lin_w(ks[10], ks[11], 50, 10)
    p["lb2"] = jnp.zeros((10,), jnp.float32)
    p["lw3"] = lin_w(ks[12], ks[13], 10, 1)
    p["lb3"] = jnp.zeros((1,), jnp.float32)
    return p


# ------------------------------- pure-JAX reference --------------------------------
def reference_forward(x_nchw, params):
    x = x_nchw.astype(jnp.float32)
    mean = x.mean(axis=(0, 2, 3), keepdims=True)
    var = ((x - mean) ** 2).mean(axis=(0, 2, 3), keepdims=True)
    out = (x - mean) / jnp.sqrt(var + BN_EPS)
    for i in range(1, 5):
        w = params[f"w{i}"]                                    # OIHW
        b = params[f"b{i}"]
        out = jax.lax.conv_general_dilated(
            out, w, (1, 1), "VALID",
            dimension_numbers=("NCHW", "OIHW", "NCHW"),
            precision=jax.lax.Precision.HIGHEST) + b.reshape(1, -1, 1, 1)
        out = _leaky(out)
    feat = out.mean(axis=(2, 3))                               # (N, CH)
    hp = jax.lax.Precision.HIGHEST
    h = _leaky(jnp.dot(feat, params["lw1"].T, precision=hp) + params["lb1"])
    h = _leaky(jnp.dot(h, params["lw2"].T, precision=hp) + params["lb2"])
    return jnp.dot(h, params["lw3"].T, precision=hp) + params["lb3"]        # (N, 1)


# ------------------------------------- main ----------------------------------------
if __name__ == "__main__":
    key = jax.random.PRNGKey(0)
    k_x, k_p = jax.random.split(key)

    # PyTorch-style NCHW input: 2 channels required by BatchNorm2d(2) / conv1.
    # H = W = 20 so four valid 5x5 convs leave a 4x4 spatial map.
    N, C, H, W = 2, 2, 20, 20
    x = jax.random.normal(k_x, (N, C, H, W), jnp.float32)
    params = init_params(k_p)
    packed = pack_params(params)

    y = metric_discriminator(x, packed)
    y = jax.block_until_ready(y)

    y_ref = reference_forward(x, params)
    assert y.shape == (N, 1), y.shape
    # Tolerance documented: kernel uses bf16 conv operands with f32 accumulation,
    # reference uses f32 HIGHEST precision.
    np.testing.assert_allclose(np.asarray(y), np.asarray(y_ref), rtol=5e-2, atol=5e-2)
    print("KERNEL_OK")
</pallas_src>

<mosaic_0001>
module attributes {stable_mosaic.version = 11 : i64} {
  func.func @kernel(%arg0: i32, %arg1: memref<16x896xf32, #tpu.memory_space<vmem>>, %arg2: memref<64x512xbf16, #tpu.memory_space<vmem>>, %arg3: memref<80x128xf32, #tpu.memory_space<vmem>>, %arg4: memref<1x2xf32, #tpu.memory_space<vmem>>, %arg5: memref<16x896xf32, #tpu.memory_space<vmem>>, %arg6: memref<400x800xbf16, #tpu.memory_space<vmem>>) attributes {dimension_semantics = [#tpu.dimension_semantics<arbitrary>], iteration_bounds = array<i64: 1>, scalar_prefetch = 0 : i64, scratch_operands = 2 : i64, tpu.core_type = #tpu.core_type<tc>, window_params = [{pipeline_mode = #tpu.pipeline_mode<synchronous>, transform_indices = @transform_0, window_bounds = array<i64: 16, 896>}, {pipeline_mode = #tpu.pipeline_mode<synchronous>, transform_indices = @transform_1, window_bounds = array<i64: 64, 512>}, {pipeline_mode = #tpu.pipeline_mode<synchronous>, transform_indices = @transform_2, window_bounds = array<i64: 80, 128>}, {pipeline_mode = #tpu.pipeline_mode<synchronous>, transform_indices = @transform_3, window_bounds = array<i64: 1, 2>}]} {
    %c0 = arith.constant 0 : index
    %c0_0 = arith.constant 0 : index
    %0 = vector.load %arg1[%c0, %c0_0] : memref<16x896xf32, #tpu.memory_space<vmem>>, vector<16x896xf32>
    %1 = vector.extract_strided_slice %0 {offsets = [0, 0], sizes = [16, 800], strides = [1, 1]} : vector<16x896xf32> to vector<16x800xf32>
    %cst = arith.constant dense<0.000000e+00> : vector<16xf32>
    %2 = vector.multi_reduction <add>, %1, %cst [1] : vector<16x800xf32> to vector<16xf32>
    %3 = vector.shape_cast %2 : vector<16xf32> to vector<16x1xf32>
    %cst_1 = arith.constant 1.250000e-03 : f32
    %4 = vector.broadcast %cst_1 : f32 to vector<16x1xf32>
    %5 = arith.mulf %3, %4 : vector<16x1xf32>
    %6 = arith.mulf %1, %1 : vector<16x800xf32>
    %cst_2 = arith.constant dense<0.000000e+00> : vector<16xf32>
    %7 = vector.multi_reduction <add>, %6, %cst_2 [1] : vector<16x800xf32> to vector<16xf32>
    %8 = vector.shape_cast %7 : vector<16xf32> to vector<16x1xf32>
    %cst_3 = arith.constant 1.250000e-03 : f32
    %9 = vector.broadcast %cst_3 : f32 to vector<16x1xf32>
    %10 = arith.mulf %8, %9 : vector<16x1xf32>
    %11 = arith.mulf %5, %5 : vector<16x1xf32>
    %12 = arith.subf %10, %11 : vector<16x1xf32>
    %cst_4 = arith.constant 9.99999974E-6 : f32
    %13 = vector.broadcast %cst_4 : f32 to vector<16x1xf32>
    %14 = arith.addf %12, %13 : vector<16x1xf32>
    %15 = math.rsqrt %14 : vector<16x1xf32>
    %16 = vector.broadcast %5 : vector<16x1xf32> to vector<16x896xf32>
    %17 = arith.subf %0, %16 : vector<16x896xf32>
    %18 = vector.broadcast %15 : vector<16x1xf32> to vector<16x896xf32>
    %19 = arith.mulf %17, %18 : vector<16x896xf32>
    %c0_5 = arith.constant 0 : index
    %c0_6 = arith.constant 0 : index
    %20 = vector.load %arg5[%c0_5, %c0_6] : memref<16x896xf32, #tpu.memory_space<vmem>>, vector<16x896xf32>
    tpu.vector_store %arg5[%c0_5, %c0_6], %19 {strides = array<i32>} : memref<16x896xf32, #tpu.memory_space<vmem>>, vector<16x896xf32>,
    %c0_7 = arith.constant 0 : index
    %c0_8 = arith.constant 0 : index
    %21 = vector.load %arg5[%c0_7, %c0_8] : memref<16x896xf32, #tpu.memory_space<vmem>>, vector<16x800xf32>
    %22 = arith.truncf %21 : vector<16x800xf32> to vector<16x800xbf16>
    %c0_9 = arith.constant 0 : index
    %c0_10 = arith.constant 0 : index
    %23 = vector.load %arg6[%c0_9, %c0_10] : memref<400x800xbf16, #tpu.memory_space<vmem>>, vector<16x800xbf16>
    tpu.vector_store %arg6[%c0_9, %c0_10], %22 {strides = array<i32>} : memref<400x800xbf16, #tpu.memory_space<vmem>>, vector<16x800xbf16>,
    %c0_11 = arith.constant 0 : index
    %c1 = arith.constant 1 : index
    %24 = vector.load %arg5[%c0_11, %c1] : memref<16x896xf32, #tpu.memory_space<vmem>>, vector<16x800xf32>
    %25 = arith.truncf %24 : vector<16x800xf32> to vector<16x800xbf16>
    %c16 = arith.constant 16 : index
    %c0_12 = arith.constant 0 : index
    %26 = vector.load %arg6[%c16, %c0_12] : memref<400x800xbf16, #tpu.memory_space<vmem>>, vector<16x800xbf16>
    tpu.vector_store %arg6[%c16, %c0_12], %25 {strides = array<i32>} : memref<400x800xbf16, #tpu.memory_space<vmem>>, vector<16x800xbf16>,
    %c0_13 = arith.constant 0 : index
    %c2 = arith.constant 2 : index
    %27 = vector.load %arg5[%c0_13, %c2] : memref<16x896xf32, #tpu.memory_space<vmem>>, vector<16x800xf32>
    %28 = arith.truncf %27 : vector<16x800xf32> to vector<16x800xbf16>
    %c32 = arith.constant 32 : index
    %c0_14 = arith.constant 0 : index
    %29 = vector.load %arg6[%c32, %c0_14] : memref<400x800xbf16, #tpu.memory_space<vmem>>, vector<16x800xbf16>
    tpu.vector_store %arg6[%c32, %c0_14], %28 {strides = array<i32>} : memref<400x800xbf16, #tpu.memory_space<vmem>>, vector<16x800xbf16>,
    %c0_15 = arith.constant 0 : index
    %c3 = arith.constant 3 : index
    %30 = vector.load %arg5[%c0_15, %c3] : memref<16x896xf32, #tpu.memory_space<vmem>>, vector<16x800xf32>
    %31 = arith.truncf %30 : vector<16x800xf32> to vector<16x800xbf16>
    %c48 = arith.constant 48 : index
    %c0_16 = arith.constant 0 : index
    %32 = vector.load %arg6[%c48, %c0_16] : memref<400x800xbf16, #tpu.memory_space<vmem>>, vector<16x800xbf16>
    tpu.vector_store %arg6[%c48, %c0_16], %31 {strides = array<i32>} : memref<400x800xbf16, #tpu.memory_space<vmem>>, vector<16x800xbf16>,
    %c0_17 = arith.constant 0 : index
    %c4 = arith.constant 4 : index
    %33 = vector.load %arg5[%c0_17, %c4] : memref<16x896xf32, #tpu.memory_space<vmem>>, vector<16x800xf32>
    %34 = arith.truncf %33 : vector<16x800xf32> to vector<16x800xbf16>
    %c64 = arith.constant 64 : index
    %c0_18 = arith.constant 0 : index
    %35 = vector.load %arg6[%c64, %c0_18] : memref<400x800xbf16, #tpu.memory_space<vmem>>, vector<16x800xbf16>
    tpu.vector_store %arg6[%c64, %c0_18], %34 {strides = array<i32>} : memref<400x800xbf16, #tpu.memory_space<vmem>>, vector<16x800xbf16>,
    %c0_19 = arith.constant 0 : index
    %c20 = arith.constant 20 : index
    %36 = vector.load %arg5[%c0_19, %c20] : memref<16x896xf32, #tpu.memory_space<vmem>>, vector<16x800xf32>
    %37 = arith.truncf %36 : vector<16x800xf32> to vector<16x800xbf16>
    %c80 = arith.constant 80 : index
    %c0_20 = arith.constant 0 : index
    %38 = vector.load %arg6[%c80, %c0_20] : memref<400x800xbf16, #tpu.memory_space<vmem>>, vector<16x800xbf16>
    tpu.vector_store %arg6[%c80, %c0_20], %37 {strides = array<i32>} : memref<400x800xbf16, #tpu.memory_space<vmem>>, vector<16x800xbf16>,
    %c0_21 = arith.constant 0 : index
    %c21 = arith.constant 21 : index
    %39 = vector.load %arg5[%c0_21, %c21] : memref<16x896xf32, #tpu.memory_space<vmem>>, vector<16x800xf32>
    %40 = arith.truncf %39 : vector<16x800xf32> to vector<16x800xbf16>
    %c96 = arith.constant 96 : index
    %c0_22 = arith.constant 0 : index
    %41 = vector.load %arg6[%c96, %c0_22] : memref<400x800xbf16, #tpu.memory_space<vmem>>, vector<16x800xbf16>
    tpu.vector_store %arg6[%c96, %c0_22], %40 {strides = array<i32>} : memref<400x800xbf16, #tpu.memory_space<vmem>>, vector<16x800xbf16>,
    %c0_23 = arith.constant 0 : index
    %c22 = arith.constant 22 : index
    %42 = vector.load %arg5[%c0_23, %c22] : memref<16x896xf32, #tpu.memory_space<vmem>>, vector<16x800xf32>
    %43 = arith.truncf %42 : vector<16x800xf32> to vector<16x800xbf16>
    %c112 = arith.constant 112 : index
    %c0_24 = arith.constant 0 : index
    %44 = vector.load %arg6[%c112, %c0_24] : memref<400x800xbf16, #tpu.memory_space<vmem>>, vector<16x800xbf16>
    tpu.vector_store %arg6[%c112, %c0_24], %43 {strides = array<i32>} : memref<400x800xbf16, #tpu.memory_space<vmem>>, vector<16x800xbf16>,
    %c0_25 = arith.constant 0 : index
    %c23 = arith.constant 23 : index
    %45 = vector.load %arg5[%c0_25, %c23] : memref<16x896xf32, #tpu.memory_space<vmem>>, vector<16x800xf32>
    %46 = arith.truncf %45 : vector<16x800xf32> to vector<16x800xbf16>
    %c128 = arith.constant 128 : index
    %c0_26 = arith.constant 0 : index
    %47 = vector.load %arg6[%c128, %c0_26] : memref<400x800xbf16, #tpu.memory_space<vmem>>, vector<16x800xbf16>
    tpu.vector_store %arg6[%c128, %c0_26], %46 {strides = array<i32>} : memref<400x800xbf16, #tpu.memory_space<vmem>>, vector<16x800xbf16>,
    %c0_27 = arith.constant 0 : index
    %c24 = arith.constant 24 : index
    %48 = vector.load %arg5[%c0_27, %c24] : memref<16x896xf32, #tpu.memory_space<vmem>>, vector<16x800xf32>
    %49 = arith.truncf %48 : vector<16x800xf32> to vector<16x800xbf16>
    %c144 = arith.constant 144 : index
    %c0_28 = arith.constant 0 : index
    %50 = vector.load %arg6[%c144, %c0_28] : memref<400x800xbf16, #tpu.memory_space<vmem>>, vector<16x800xbf16>
    tpu.vector_store %arg6[%c144, %c0_28], %49 {strides = array<i32>} : memref<400x800xbf16, #tpu.memory_space<vmem>>, vector<16x800xbf16>,
    %c0_29 = arith.constant 0 : index
    %c40 = arith.constant 40 : index
    %51 = vector.load %arg5[%c0_29, %c40] : memref<16x896xf32, #tpu.memory_space<vmem>>, vector<16x800xf32>
    %52 = arith.truncf %51 : vector<16x800xf32> to vector<16x800xbf16>
    %c160 = arith.constant 160 : index
    %c0_30 = arith.constant 0 : index
    %53 = vector.load %arg6[%c160, %c0_30] : memref<400x800xbf16, #tpu.memory_space<vmem>>, vector<16x800xbf16>
    tpu.vector_store %arg6[%c160, %c0_30], %52 {strides = array<i32>} : memref<400x800xbf16, #tpu.memory_space<vmem>>, vector<16x800xbf16>,
    %c0_31 = arith.constant 0 : index
    %c41 = arith.constant 41 : index
    %54 = vector.load %arg5[%c0_31, %c41] : memref<16x896xf32, #tpu.memory_space<vmem>>, vector<16x800xf32>
    %55 = arith.truncf %54 : vector<16x800xf32> to vector<16x800xbf16>
    %c176 = arith.constant 176 : index
    %c0_32 = arith.constant 0 : index
    %56 = vector.load %arg6[%c176, %c0_32] : memref<400x800xbf16, #tpu.memory_space<vmem>>, vector<16x800xbf16>
    tpu.vector_store %arg6[%c176, %c0_32], %55 {strides = array<i32>} : memref<400x800xbf16, #tpu.memory_space<vmem>>, vector<16x800xbf16>,
    %c0_33 = arith.constant 0 : index
    %c42 = arith.constant 42 : index
    %57 = vector.load %arg5[%c0_33, %c42] : memref<16x896xf32, #tpu.memory_space<vmem>>, vector<16x800xf32>
    %58 = arith.truncf %57 : vector<16x800xf32> to vector<16x800xbf16>
    %c192 = arith.constant 192 : index
    %c0_34 = arith.constant 0 : index
    %59 = vector.load %arg6[%c192, %c0_34] : memref<400x800xbf16, #tpu.memory_space<vmem>>, vector<16x800xbf16>
    tpu.vector_store %arg6[%c192, %c0_34], %58 {strides = array<i32>} : memref<400x800xbf16, #tpu.memory_space<vmem>>, vector<16x800xbf16>,
    %c0_35 = arith.constant 0 : index
    %c43 = arith.constant 43 : index
    %60 = vector.load %arg5[%c0_35, %c43] : memref<16x896xf32, #tpu.memory_space<vmem>>, vector<16x800xf32>
    %61 = arith.truncf %60 : vector<16x800xf32> to vector<16x800xbf16>
    %c208 = arith.constant 208 : index
    %c0_36 = arith.constant 0 : index
    %62 = vector.load %arg6[%c208, %c0_36] : memref<400x800xbf16, #tpu.memory_space<vmem>>, vector<16x800xbf16>
    tpu.vector_store %arg6[%c208, %c0_36], %61 {strides = array<i32>} : memref<400x800xbf16, #tpu.memory_space<vmem>>, vector<16x800xbf16>,
    %c0_37 = arith.constant 0 : index
    %c44 = arith.constant 44 : index
    %63 = vector.load %arg5[%c0_37, %c44] : memref<16x896xf32, #tpu.memory_space<vmem>>, vector<16x800xf32>
    %64 = arith.truncf %63 : vector<16x800xf32> to vector<16x800xbf16>
    %c224 = arith.constant 224 : index
    %c0_38 = arith.constant 0 : index
    %65 = vector.load %arg6[%c224, %c0_38] : memref<400x800xbf16, #tpu.memory_space<vmem>>, vector<16x800xbf16>
    tpu.vector_store %arg6[%c224, %c0_38], %64 {strides = array<i32>} : memref<400x800xbf16, #tpu.memory_space<vmem>>, vector<16x800xbf16>,
    %c0_39 = arith.constant 0 : index
    %c60 = arith.constant 60 : index
    %66 = vector.load %arg5[%c0_39, %c60] : memref<16x896xf32, #tpu.memory_space<vmem>>, vector<16x800xf32>
    %67 = arith.truncf %66 : vector<16x800xf32> to vector<16x800xbf16>
    %c240 = arith.constant 240 : index
    %c0_40 = arith.constant 0 : index
    %68 = vector.load %arg6[%c240, %c0_40] : memref<400x800xbf16, #tpu.memory_space<vmem>>, vector<16x800xbf16>
    tpu.vector_store %arg6[%c240, %c0_40], %67 {strides = array<i32>} : memref<400x800xbf16, #tpu.memory_space<vmem>>, vector<16x800xbf16>,
    %c0_41 = arith.constant 0 : index
    %c61 = arith.constant 61 : index
    %69 = vector.load %arg5[%c0_41, %c61] : memref<16x896xf32, #tpu.memory_space<vmem>>, vector<16x800xf32>
    %70 = arith.truncf %69 : vector<16x800xf32> to vector<16x800xbf16>
    %c256 = arith.constant 256 : index
    %c0_42 = arith.constant 0 : index
    %71 = vector.load %arg6[%c256, %c0_42] : memref<400x800xbf16, #tpu.memory_space<vmem>>, vector<16x800xbf16>
    tpu.vector_store %arg6[%c256, %c0_42], %70 {strides = array<i32>} : memref<400x800xbf16, #tpu.memory_space<vmem>>, vector<16x800xbf16>,
    %c0_43 = arith.constant 0 : index
    %c62 = arith.constant 62 : index
    %72 = vector.load %arg5[%c0_43, %c62] : memref<16x896xf32, #tpu.memory_space<vmem>>, vector<16x800xf32>
    %73 = arith.truncf %72 : vector<16x800xf32> to vector<16x800xbf16>
    %c272 = arith.constant 272 : index
    %c0_44 = arith.constant 0 : index
    %74 = vector.load %arg6[%c272, %c0_44] : memref<400x800xbf16, #tpu.memory_space<vmem>>, vector<16x800xbf16>
    tpu.vector_store %arg6[%c272, %c0_44], %73 {strides = array<i32>} : memref<400x800xbf16, #tpu.memory_space<vmem>>, vector<16x800xbf16>,
    %c0_45 = arith.constant 0 : index
    %c63 = arith.constant 63 : index
    %75 = vector.load %arg5[%c0_45, %c63] : memref<16x896xf32, #tpu.memory_space<vmem>>, vector<16x800xf32>
    %76 = arith.truncf %75 : vector<16x800xf32> to vector<16x800xbf16>
    %c288 = arith.constant 288 : index
    %c0_46 = arith.constant 0 : index
    %77 = vector.load %arg6[%c288, %c0_46] : memref<400x800xbf16, #tpu.memory_space<vmem>>, vector<16x800xbf16>
    tpu.vector_store %arg6[%c288, %c0_46], %76 {strides = array<i32>} : memref<400x800xbf16, #tpu.memory_space<vmem>>, vector<16x800xbf16>,
    %c0_47 = arith.constant 0 : index
    %c64_48 = arith.constant 64 : index
    %78 = vector.load %arg5[%c0_47, %c64_48] : memref<16x896xf32, #tpu.memory_space<vmem>>, vector<16x800xf32>
    %79 = arith.truncf %78 : vector<16x800xf32> to vector<16x800xbf16>
    %c304 = arith.constant 304 : index
    %c0_49 = arith.constant 0 : index
    %80 = vector.load %arg6[%c304, %c0_49] : memref<400x800xbf16, #tpu.memory_space<vmem>>, vector<16x800xbf16>
    tpu.vector_store %arg6[%c304, %c0_49], %79 {strides = array<i32>} : memref<400x800xbf16, #tpu.memory_space<vmem>>, vector<16x800xbf16>,
    %c0_50 = arith.constant 0 : index
    %c80_51 = arith.constant 80 : index
    %81 = vector.load %arg5[%c0_50, %c80_51] : memref<16x896xf32, #tpu.memory_space<vmem>>, vector<16x800xf32>
    %82 = arith.truncf %81 : vector<16x800xf32> to vector<16x800xbf16>
    %c320 = arith.constant 320 : index
    %c0_52 = arith.constant 0 : index
    %83 = vector.load %arg6[%c320, %c0_52] : memref<400x800xbf16, #tpu.memory_space<vmem>>, vector<16x800xbf16>
    tpu.vector_store %arg6[%c320, %c0_52], %82 {strides = array<i32>} : memref<400x800xbf16, #tpu.memory_space<vmem>>, vector<16x800xbf16>,
    %c0_53 = arith.constant 0 : index
    %c81 = arith.constant 81 : index
    %84 = vector.load %arg5[%c0_53, %c81] : memref<16x896xf32, #tpu.memory_space<vmem>>, vector<16x800xf32>
    %85 = arith.truncf %84 : vector<16x800xf32> to vector<16x800xbf16>
    %c336 = arith.constant 336 : index
    %c0_54 = arith.constant 0 : index
    %86 = vector.load %arg6[%c336, %c0_54] : memref<400x800xbf16, #tpu.memory_space<vmem>>, vector<16x800xbf16>
    tpu.vector_store %arg6[%c336, %c0_54], %85 {strides = array<i32>} : memref<400x800xbf16, #tpu.memory_space<vmem>>, vector<16x800xbf16>,
    %c0_55 = arith.constant 0 : index
    %c82 = arith.constant 82 : index
    %87 = vector.load %arg5[%c0_55, %c82] : memref<16x896xf32, #tpu.memory_space<vmem>>, vector<16x800xf32>
    %88 = arith.truncf %87 : vector<16x800xf32> to vector<16x800xbf16>
    %c352 = arith.constant 352 : index
    %c0_56 = arith.constant 0 : index
    %89 = vector.load %arg6[%c352, %c0_56] : memref<400x800xbf16, #tpu.memory_space<vmem>>, vector<16x800xbf16>
    tpu.vector_store %arg6[%c352, %c0_56], %88 {strides = array<i32>} : memref<400x800xbf16, #tpu.memory_space<vmem>>, vector<16x800xbf16>,
    %c0_57 = arith.constant 0 : index
    %c83 = arith.constant 83 : index
    %90 = vector.load %arg5[%c0_57, %c83] : memref<16x896xf32, #tpu.memory_space<vmem>>, vector<16x800xf32>
    %91 = arith.truncf %90 : vector<16x800xf32> to vector<16x800xbf16>
    %c368 = arith.constant 368 : index
    %c0_58 = arith.constant 0 : index
    %92 = vector.load %arg6[%c368, %c0_58] : memref<400x800xbf16, #tpu.memory_space<vmem>>, vector<16x800xbf16>
    tpu.vector_store %arg6[%c368, %c0_58], %91 {strides = array<i32>} : memref<400x800xbf16, #tpu.memory_space<vmem>>, vector<16x800xbf16>,
    %c0_59 = arith.constant 0 : index
    %c84 = arith.constant 84 : index
    %93 = vector.load %arg5[%c0_59, %c84] : memref<16x896xf32, #tpu.memory_space<vmem>>, vector<16x800xf32>
    %94 = arith.truncf %93 : vector<16x800xf32> to vector<16x800xbf16>
    %c384 = arith.constant 384 : index
    %c0_60 = arith.constant 0 : index
    %95 = vector.load %arg6[%c384, %c0_60] : memref<400x800xbf16, #tpu.memory_space<vmem>>, vector<16x800xbf16>
    tpu.vector_store %arg6[%c384, %c0_60], %94 {strides = array<i32>} : memref<400x800xbf16, #tpu.memory_space<vmem>>, vector<16x800xbf16>,
    %c0_61 = arith.constant 0 : index
    %c0_62 = arith.constant 0 : index
    %96 = vector.load %arg2[%c0_61, %c0_62] : memref<64x512xbf16, #tpu.memory_space<vmem>>, vector<16x400xbf16>
    %c0_63 = arith.constant 0 : index
    %c0_64 = arith.constant 0 : index
    %97 = vector.load %arg3[%c0_63, %c0_64] : memref<80x128xf32, #tpu.memory_space<vmem>>, vector<16x1xf32>
    %c0_65 = arith.constant 0 : index
    %c0_66 = arith.constant 0 : index
    %98 = vector.load %arg6[%c0_65, %c0_66] : memref<400x800xbf16, #tpu.memory_space<vmem>>, vector<400x800xbf16>
    %cst_67 = arith.constant dense<0.000000e+00> : vector<16x800xf32>
    %99 = tpu.matmul %96, %98, %cst_67 {dimension_numbers = #tpu.dot_dimension_numbers<[1], [0], [0], [1], [0, 0, 1, 1], [], []>} : vector<16x400xbf16>, vector<400x800xbf16>, vector<16x800xf32> -> vector<16x800xf32>
    %100 = vector.broadcast %97 : vector<16x1xf32> to vector<16x800xf32>
    %101 = arith.addf %99, %100 : vector<16x800xf32>
    %cst_68 = arith.constant 0.000000e+00 : f32
    %102 = vector.broadcast %cst_68 : f32 to vector<16x800xf32>
    %103 = arith.cmpf ogt, %101, %102 : vector<16x800xf32>
    %cst_69 = arith.constant 3.000000e-01 : f32
    %104 = vector.broadcast %cst_69 : f32 to vector<16x800xf32>
    %105 = arith.mulf %104, %101 : vector<16x800xf32>
    %106 = arith.select %103, %101, %105 : vector<16x800xi1>, vector<16x800xf32>
    %c0_70 = arith.constant 0 : index
    %c0_71 = arith.constant 0 : index
    %107 = vector.load %arg5[%c0_70, %c0_71] : memref<16x896xf32, #tpu.memory_space<vmem>>, vector<16x800xf32>
    tpu.vector_store %arg5[%c0_70, %c0_71], %106 {strides = array<i32>} : memref<16x896xf32, #tpu.memory_space<vmem>>, vector<16x800xf32>,
    %c0_72 = arith.constant 0 : index
    %c0_73 = arith.constant 0 : index
    %108 = vector.load %arg5[%c0_72, %c0_73] : memref<16x896xf32, #tpu.memory_space<vmem>>, vector<16x800xf32>
    %109 = arith.truncf %108 : vector<16x800xf32> to vector<16x800xbf16>
    %c0_74 = arith.constant 0 : index
    %c0_75 = arith.constant 0 : index
    %110 = vector.load %arg6[%c0_74, %c0_75] : memref<400x800xbf16, #tpu.memory_space<vmem>>, vector<16x800xbf16>
    tpu.vector_store %arg6[%c0_74, %c0_75], %109 {strides = array<i32>} : memref<400x800xbf16, #tpu.memory_space<vmem>>, vector<16x800xbf16>,
    %c0_76 = arith.constant 0 : index
    %c1_77 = arith.constant 1 : index
    %111 = vector.load %arg5[%c0_76, %c1_77] : memref<16x896xf32, #tpu.memory_space<vmem>>, vector<16x800xf32>
    %112 = arith.truncf %111 : vector<16x800xf32> to vector<16x800xbf16>
    %c16_78 = arith.constant 16 : index
    %c0_79 = arith.constant 0 : index
    %113 = vector.load %arg6[%c16_78, %c0_79] : memref<400x800xbf16, #tpu.memory_space<vmem>>, vector<16x800xbf16>
    tpu.vector_store %arg6[%c16_78, %c0_79], %112 {strides = array<i32>} : memref<400x800xbf16, #tpu.memory_space<vmem>>, vector<16x800xbf16>,
    %c0_80 = arith.constant 0 : index
    %c2_81 = arith.constant 2 : index
    %114 = vector.load %arg5[%c0_80, %c2_81] : memref<16x896xf32, #tpu.memory_space<vmem>>, vector<16x800xf32>
    %115 = arith.truncf %114 : vector<16x800xf32> to vector<16x800xbf16>
    %c32_82 = arith.constant 32 : index
    %c0_83 = arith.constant 0 : index
    %116 = vector.load %arg6[%c32_82, %c0_83] : memref<400x800xbf16, #tpu.memory_space<vmem>>, vector<16x800xbf16>
    tpu.vector_store %arg6[%c32_82, %c0_83], %115 {strides = array<i32>} : memref<400x800xbf16, #tpu.memory_space<vmem>>, vector<16x800xbf16>,
    %c0_84 = arith.constant 0 : index
    %c3_85 = arith.constant 3 : index
    %117 = vector.load %arg5[%c0_84, %c3_85] : memref<16x896xf32, #tpu.memory_space<vmem>>, vector<16x800xf32>
    %118 = arith.truncf %117 : vector<16x800xf32> to vector<16x800xbf16>
    %c48_86 = arith.constant 48 : index
    %c0_87 = arith.constant 0 : index
    %119 = vector.load %arg6[%c48_86, %c0_87] : memref<400x800xbf16, #tpu.memory_space<vmem>>, vector<16x800xbf16>
    tpu.vector_store %arg6[%c48_86, %c0_87], %118 {strides = array<i32>} : memref<400x800xbf16, #tpu.memory_space<vmem>>, vector<16x800xbf16>,
    %c0_88 = arith.constant 0 : index
    %c4_89 = arith.constant 4 : index
    %120 = vector.load %arg5[%c0_88, %c4_89] : memref<16x896xf32, #tpu.memory_space<vmem>>, vector<16x800xf32>
    %121 = arith.truncf %120 : vector<16x800xf32> to vector<16x800xbf16>
    %c64_90 = arith.constant 64 : index
    %c0_91 = arith.constant 0 : index
    %122 = vector.load %arg6[%c64_90, %c0_91] : memref<400x800xbf16, #tpu.memory_space<vmem>>, vector<16x800xbf16>
    tpu.vector_store %arg6[%c64_90, %c0_91], %121 {strides = array<i32>} : memref<400x800xbf16, #tpu.memory_space<vmem>>, vector<16x800xbf16>,
    %c0_92 = arith.constant 0 : index
    %c20_93 = arith.constant 20 : index
    %123 = vector.load %arg5[%c0_92, %c20_93] : memref<16x896xf32, #tpu.memory_space<vmem>>, vector<16x800xf32>
    %124 = arith.truncf %123 : vector<16x800xf32> to vector<16x800xbf16>
    %c80_94 = arith.constant 80 : index
    %c0_95 = arith.constant 0 : index
    %125 = vector.load %arg6[%c80_94, %c0_95] : memref<400x800xbf16, #tpu.memory_space<vmem>>, vector<16x800xbf16>
    tpu.vector_store %arg6[%c80_94, %c0_95], %124 {strides = array<i32>} : memref<400x800xbf16, #tpu.memory_space<vmem>>, vector<16x800xbf16>,
    %c0_96 = arith.constant 0 : index
    %c21_97 = arith.constant 21 : index
    %126 = vector.load %arg5[%c0_96, %c21_97] : memref<16x896xf32, #tpu.memory_space<vmem>>, vector<16x800xf32>
    %127 = arith.truncf %126 : vector<16x800xf32> to vector<16x800xbf16>
    %c96_98 = arith.constant 96 : index
    %c0_99 = arith.constant 0 : index
    %128 = vector.load %arg6[%c96_98, %c0_99] : memref<400x800xbf16, #tpu.memory_space<vmem>>, vector<16x800xbf16>
    tpu.vector_store %arg6[%c96_98, %c0_99], %127 {strides = array<i32>} : memref<400x800xbf16, #tpu.memory_space<vmem>>, vector<16x800xbf16>,
    %c0_100 = arith.constant 0 : index
    %c22_101 = arith.constant 22 : index
    %129 = vector.load %arg5[%c0_100, %c22_101] : memref<16x896xf32, #tpu.memory_space<vmem>>, vector<16x800xf32>
    %130 = arith.truncf %129 : vector<16x800xf32> to vector<16x800xbf16>
    %c112_102 = arith.constant 112 : index
    %c0_103 = arith.constant 0 : index
    %131 = vector.load %arg6[%c112_102, %c0_103] : memref<400x800xbf16, #tpu.memory_space<vmem>>, vector<16x800xbf16>
    tpu.vector_store %arg6[%c112_102, %c0_103], %130 {strides = array<i32>} : memref<400x800xbf16, #tpu.memory_space<vmem>>, vector<16x800xbf16>,
    %c0_104 = arith.constant 0 : index
    %c23_105 = arith.constant 23 : index
    %132 = vector.load %arg5[%c0_104, %c23_105] : memref<16x896xf32, #tpu.memory_space<vmem>>, vector<16x800xf32>
    %133 = arith.truncf %132 : vector<16x800xf32> to vector<16x800xbf16>
    %c128_106 = arith.constant 128 : index
    %c0_107 = arith.constant 0 : index
    %134 = vector.load %arg6[%c128_106, %c0_107] : memref<400x800xbf16, #tpu.memory_space<vmem>>, vector<16x800xbf16>
    tpu.vector_store %arg6[%c128_106, %c0_107], %133 {strides = array<i32>} : memref<400x800xbf16, #tpu.memory_space<vmem>>, vector<16x800xbf16>,
    %c0_108 = arith.constant 0 : index
    %c24_109 = arith.constant 24 : index
    %135 = vector.load %arg5[%c0_108, %c24_109] : memref<16x896xf32, #tpu.memory_space<vmem>>, vector<16x800xf32>
    %136 = arith.truncf %135 : vector<16x800xf32> to vector<16x800xbf16>
    %c144_110 = arith.constant 144 : index
    %c0_111 = arith.constant 0 : index
    %137 = vector.load %arg6[%c144_110, %c0_111] : memref<400x800xbf16, #tpu.memory_space<vmem>>, vector<16x800xbf16>
    tpu.vector_store %arg6[%c144_110, %c0_111], %136 {strides = array<i32>} : memref<400x800xbf16, #tpu.memory_space<vmem>>, vector<16x800xbf16>,
    %c0_112 = arith.constant 0 : index
    %c40_113 = arith.constant 40 : index
    %138 = vector.load %arg5[%c0_112, %c40_113] : memref<16x896xf32, #tpu.memory_space<vmem>>, vector<16x800xf32>
    %139 = arith.truncf %138 : vector<16x800xf32> to vector<16x800xbf16>
    %c160_114 = arith.constant 160 : index
    %c0_115 = arith.constant 0 : index
    %140 = vector.load %arg6[%c160_114, %c0_115] : memref<400x800xbf16, #tpu.memory_space<vmem>>, vector<16x800xbf16>
    tpu.vector_store %arg6[%c160_114, %c0_115], %139 {strides = array<i32>} : memref<400x800xbf16, #tpu.memory_space<vmem>>, vector<16x800xbf16>,
    %c0_116 = arith.constant 0 : index
    %c41_117 = arith.constant 41 : index
    %141 = vector.load %arg5[%c0_116, %c41_117] : memref<16x896xf32, #tpu.memory_space<vmem>>, vector<16x800xf32>
    %142 = arith.truncf %141 : vector<16x800xf32> to vector<16x800xbf16>
    %c176_118 = arith.constant 176 : index
    %c0_119 = arith.constant 0 : index
    %143 = vector.load %arg6[%c176_118, %c0_119] : memref<400x800xbf16, #tpu.memory_space<vmem>>, vector<16x800xbf16>
    tpu.vector_store %arg6[%c176_118, %c0_119], %142 {strides = array<i32>} : memref<400x800xbf16, #tpu.memory_space<vmem>>, vector<16x800xbf16>,
    %c0_120 = arith.constant 0 : index
    %c42_121 = arith.constant 42 : index
    %144 = vector.load %arg5[%c0_120, %c42_121] : memref<16x896xf32, #tpu.memory_space<vmem>>, vector<16x800xf32>
    %145 = arith.truncf %144 : vector<16x800xf32> to vector<16x800xbf16>
    %c192_122 = arith.constant 192 : index
    %c0_123 = arith.constant 0 : index
    %146 = vector.load %arg6[%c192_122, %c0_123] : memref<400x800xbf16, #tpu.memory_space<vmem>>, vector<16x800xbf16>
    tpu.vector_store %arg6[%c192_122, %c0_123], %145 {strides = array<i32>} : memref<400x800xbf16, #tpu.memory_space<vmem>>, vector<16x800xbf16>,
    %c0_124 = arith.constant 0 : index
    %c43_125 = arith.constant 43 : index
    %147 = vector.load %arg5[%c0_124, %c43_125] : memref<16x896xf32, #tpu.memory_space<vmem>>, vector<16x800xf32>
    %148 = arith.truncf %147 : vector<16x800xf32> to vector<16x800xbf16>
    %c208_126 = arith.constant 208 : index
    %c0_127 = arith.constant 0 : index
    %149 = vector.load %arg6[%c208_126, %c0_127] : memref<400x800xbf16, #tpu.memory_space<vmem>>, vector<16x800xbf16>
    tpu.vector_store %arg6[%c208_126, %c0_127], %148 {strides = array<i32>} : memref<400x800xbf16, #tpu.memory_space<vmem>>, vector<16x800xbf16>,
    %c0_128 = arith.constant 0 : index
    %c44_129 = arith.constant 44 : index
    %150 = vector.load %arg5[%c0_128, %c44_129] : memref<16x896xf32, #tpu.memory_space<vmem>>, vector<16x800xf32>
    %151 = arith.truncf %150 : vector<16x800xf32> to vector<16x800xbf16>
    %c224_130 = arith.constant 224 : index
    %c0_131 = arith.constant 0 : index
    %152 = vector.load %arg6[%c224_130, %c0_131] : memref<400x800xbf16, #tpu.memory_space<vmem>>, vector<16x800xbf16>
    tpu.vector_store %arg6[%c224_130, %c0_131], %151 {strides = array<i32>} : memref<400x800xbf16, #tpu.memory_space<vmem>>, vector<16x800xbf16>,
    %c0_132 = arith.constant 0 : index
    %c60_133 = arith.constant 60 : index
    %153 = vector.load %arg5[%c0_132, %c60_133] : memref<16x896xf32, #tpu.memory_space<vmem>>, vector<16x800xf32>
    %154 = arith.truncf %153 : vector<16x800xf32> to vector<16x800xbf16>
    %c240_134 = arith.constant 240 : index
    %c0_135 = arith.constant 0 : index
    %155 = vector.load %arg6[%c240_134, %c0_135] : memref<400x800xbf16, #tpu.memory_space<vmem>>, vector<16x800xbf16>
    tpu.vector_store %arg6[%c240_134, %c0_135], %154 {strides = array<i32>} : memref<400x800xbf16, #tpu.memory_space<vmem>>, vector<16x800xbf16>,
    %c0_136 = arith.constant 0 : index
    %c61_137 = arith.constant 61 : index
    %156 = vector.load %arg5[%c0_136, %c61_137] : memref<16x896xf32, #tpu.memory_space<vmem>>, vector<16x800xf32>
    %157 = arith.truncf %156 : vector<16x800xf32> to vector<16x800xbf16>
    %c256_138 = arith.constant 256 : index
    %c0_139 = arith.constant 0 : index
    %158 = vector.load %arg6[%c256_138, %c0_139] : memref<400x800xbf16, #tpu.memory_space<vmem>>, vector<16x800xbf16>
    tpu.vector_store %arg6[%c256_138, %c0_139], %157 {strides = array<i32>} : memref<400x800xbf16, #tpu.memory_space<vmem>>, vector<16x800xbf16>,
    %c0_140 = arith.constant 0 : index
    %c62_141 = arith.constant 62 : index
    %159 = vector.load %arg5[%c0_140, %c62_141] : memref<16x896xf32, #tpu.memory_space<vmem>>, vector<16x800xf32>
    %160 = arith.truncf %159 : vector<16x800xf32> to vector<16x800xbf16>
    %c272_142 = arith.constant 272 : index
    %c0_143 = arith.constant 0 : index
    %161 = vector.load %arg6[%c272_142, %c0_143] : memref<400x800xbf16, #tpu.memory_space<vmem>>, vector<16x800xbf16>
    tpu.vector_store %arg6[%c272_142, %c0_143], %160 {strides = array<i32>} : memref<400x800xbf16, #tpu.memory_space<vmem>>, vector<16x800xbf16>,
    %c0_144 = arith.constant 0 : index
    %c63_145 = arith.constant 63 : index
    %162 = vector.load %arg5[%c0_144, %c63_145] : memref<16x896xf32, #tpu.memory_space<vmem>>, vector<16x800xf32>
    %163 = arith.truncf %162 : vector<16x800xf32> to vector<16x800xbf16>
    %c288_146 = arith.constant 288 : index
    %c0_147 = arith.constant 0 : index
    %164 = vector.load %arg6[%c288_146, %c0_147] : memref<400x800xbf16, #tpu.memory_space<vmem>>, vector<16x800xbf16>
    tpu.vector_store %arg6[%c288_146, %c0_147], %163 {strides = array<i32>} : memref<400x800xbf16, #tpu.memory_space<vmem>>, vector<16x800xbf16>,
    %c0_148 = arith.constant 0 : index
    %c64_149 = arith.constant 64 : index
    %165 = vector.load %arg5[%c0_148, %c64_149] : memref<16x896xf32, #tpu.memory_space<vmem>>, vector<16x800xf32>
    %166 = arith.truncf %165 : vector<16x800xf32> to vector<16x800xbf16>
    %c304_150 = arith.constant 304 : index
    %c0_151 = arith.constant 0 : index
    %167 = vector.load %arg6[%c304_150, %c0_151] : memref<400x800xbf16, #tpu.memory_space<vmem>>, vector<16x800xbf16>
    tpu.vector_store %arg6[%c304_150, %c0_151], %166 {strides = array<i32>} : memref<400x800xbf16, #tpu.memory_space<vmem>>, vector<16x800xbf16>,
    %c0_152 = arith.constant 0 : index
    %c80_153 = arith.constant 80 : index
    %168 = vector.load %arg5[%c0_152, %c80_153] : memref<16x896xf32, #tpu.memory_space<vmem>>, vector<16x800xf32>
    %169 = arith.truncf %168 : vector<16x800xf32> to vector<16x800xbf16>
    %c320_154 = arith.constant 320 : index
    %c0_155 = arith.constant 0 : index
    %170 = vector.load %arg6[%c320_154, %c0_155] : memref<400x800xbf16, #tpu.memory_space<vmem>>, vector<16x800xbf16>
    tpu.vector_store %arg6[%c320_154, %c0_155], %169 {strides = array<i32>} : memref<400x800xbf16, #tpu.memory_space<vmem>>, vector<16x800xbf16>,
    %c0_156 = arith.constant 0 : index
    %c81_157 = arith.constant 81 : index
    %171 = vector.load %arg5[%c0_156, %c81_157] : memref<16x896xf32, #tpu.memory_space<vmem>>, vector<16x800xf32>
    %172 = arith.truncf %171 : vector<16x800xf32> to vector<16x800xbf16>
    %c336_158 = arith.constant 336 : index
    %c0_159 = arith.constant 0 : index
    %173 = vector.load %arg6[%c336_158, %c0_159] : memref<400x800xbf16, #tpu.memory_space<vmem>>, vector<16x800xbf16>
    tpu.vector_store %arg6[%c336_158, %c0_159], %172 {strides = array<i32>} : memref<400x800xbf16, #tpu.memory_space<vmem>>, vector<16x800xbf16>,
    %c0_160 = arith.constant 0 : index
    %c82_161 = arith.constant 82 : index
    %174 = vector.load %arg5[%c0_160, %c82_161] : memref<16x896xf32, #tpu.memory_space<vmem>>, vector<16x800xf32>
    %175 = arith.truncf %174 : vector<16x800xf32> to vector<16x800xbf16>
    %c352_162 = arith.constant 352 : index
    %c0_163 = arith.constant 0 : index
    %176 = vector.load %arg6[%c352_162, %c0_163] : memref<400x800xbf16, #tpu.memory_space<vmem>>, vector<16x800xbf16>
    tpu.vector_store %arg6[%c352_162, %c0_163], %175 {strides = array<i32>} : memref<400x800xbf16, #tpu.memory_space<vmem>>, vector<16x800xbf16>,
    %c0_164 = arith.constant 0 : index
    %c83_165 = arith.constant 83 : index
    %177 = vector.load %arg5[%c0_164, %c83_165] : memref<16x896xf32, #tpu.memory_space<vmem>>, vector<16x800xf32>
    %178 = arith.truncf %177 : vector<16x800xf32> to vector<16x800xbf16>
    %c368_166 = arith.constant 368 : index
    %c0_167 = arith.constant 0 : index
    %179 = vector.load %arg6[%c368_166, %c0_167] : memref<400x800xbf16, #tpu.memory_space<vmem>>, vector<16x800xbf16>
    tpu.vector_store %arg6[%c368_166, %c0_167], %178 {strides = array<i32>} : memref<400x800xbf16, #tpu.memory_space<vmem>>, vector<16x800xbf16>,
    %c0_168 = arith.constant 0 : index
    %c84_169 = arith.constant 84 : index
    %180 = vector.load %arg5[%c0_168, %c84_169] : memref<16x896xf32, #tpu.memory_space<vmem>>, vector<16x800xf32>
    %181 = arith.truncf %180 : vector<16x800xf32> to vector<16x800xbf16>
    %c384_170 = arith.constant 384 : index
    %c0_171 = arith.constant 0 : index
    %182 = vector.load %arg6[%c384_170, %c0_171] : memref<400x800xbf16, #tpu.memory_space<vmem>>, vector<16x800xbf16>
    tpu.vector_store %arg6[%c384_170, %c0_171], %181 {strides = array<i32>} : memref<400x800xbf16, #tpu.memory_space<vmem>>, vector<16x800xbf16>,
    %c16_172 = arith.constant 16 : index
    %c0_173 = arith.constant 0 : index
    %183 = vector.load %arg2[%c16_172, %c0_173] : memref<64x512xbf16, #tpu.memory_space<vmem>>, vector<16x400xbf16>
    %c0_174 = arith.constant 0 : index
    %c1_175 = arith.constant 1 : index
    %184 = vector.load %arg3[%c0_174, %c1_175] : memref<80x128xf32, #tpu.memory_space<vmem>>, vector<16x1xf32>
    %c0_176 = arith.constant 0 : index
    %c0_177 = arith.constant 0 : index
    %185 = vector.load %arg6[%c0_176, %c0_177] : memref<400x800xbf16, #tpu.memory_space<vmem>>, vector<400x800xbf16>
    %cst_178 = arith.constant dense<0.000000e+00> : vector<16x800xf32>
    %186 = tpu.matmul %183, %185, %cst_178 {dimension_numbers = #tpu.dot_dimension_numbers<[1], [0], [0], [1], [0, 0, 1, 1], [], []>} : vector<16x400xbf16>, vector<400x800xbf16>, vector<16x800xf32> -> vector<16x800xf32>
    %187 = vector.broadcast %184 : vector<16x1xf32> to vector<16x800xf32>
    %188 = arith.addf %186, %187 : vector<16x800xf32>
    %cst_179 = arith.constant 0.000000e+00 : f32
    %189 = vector.broadcast %cst_179 : f32 to vector<16x800xf32>
    %190 = arith.cmpf ogt, %188, %189 : vector<16x800xf32>
    %cst_180 = arith.constant 3.000000e-01 : f32
    %191 = vector.broadcast %cst_180 : f32 to vector<16x800xf32>
    %192 = arith.mulf %191, %188 : vector<16x800xf32>
    %193 = arith.select %190, %188, %192 : vector<16x800xi1>, vector<16x800xf32>
    %c0_181 = arith.constant 0 : index
    %c0_182 = arith.constant 0 : index
    %194 = vector.load %arg5[%c0_181, %c0_182] : memref<16x896xf32, #tpu.memory_space<vmem>>, vector<16x800xf32>
    tpu.vector_store %arg5[%c0_181, %c0_182], %193 {strides = array<i32>} : memref<16x896xf32, #tpu.memory_space<vmem>>, vector<16x800xf32>,
    %c0_183 = arith.constant 0 : index
    %c0_184 = arith.constant 0 : index
    %195 = vector.load %arg5[%c0_183, %c0_184] : memref<16x896xf32, #tpu.memory_space<vmem>>, vector<16x800xf32>
    %196 = arith.truncf %195 : vector<16x800xf32> to vector<16x800xbf16>
    %c0_185 = arith.constant 0 : index
    %c0_186 = arith.constant 0 : index
    %197 = vector.load %arg6[%c0_185, %c0_186] : memref<400x800xbf16, #tpu.memory_space<vmem>>, vector<16x800xbf16>
    tpu.vector_store %arg6[%c0_185, %c0_186], %196 {strides = array<i32>} : memref<400x800xbf16, #tpu.memory_space<vmem>>, vector<16x800xbf16>,
    %c0_187 = arith.constant 0 : index
    %c1_188 = arith.constant 1 : index
    %198 = vector.load %arg5[%c0_187, %c1_188] : memref<16x896xf32, #tpu.memory_space<vmem>>, vector<16x800xf32>
    %199 = arith.truncf %198 : vector<16x800xf32> to vector<16x800xbf16>
    %c16_189 = arith.constant 16 : index
    %c0_190 = arith.constant 0 : index
    %200 = vector.load %arg6[%c16_189, %c0_190] : memref<400x800xbf16, #tpu.memory_space<vmem>>, vector<16x800xbf16>
    tpu.vector_store %arg6[%c16_189, %c0_190], %199 {strides = array<i32>} : memref<400x800xbf16, #tpu.memory_space<vmem>>, vector<16x800xbf16>,
    %c0_191 = arith.constant 0 : index
    %c2_192 = arith.constant 2 : index
    %201 = vector.load %arg5[%c0_191, %c2_192] : memref<16x896xf32, #tpu.memory_space<vmem>>, vector<16x800xf32>
    %202 = arith.truncf %201 : vector<16x800xf32> to vector<16x800xbf16>
    %c32_193 = arith.constant 32 : index
    %c0_194 = arith.constant 0 : index
    %203 = vector.load %arg6[%c32_193, %c0_194] : memref<400x800xbf16, #tpu.memory_space<vmem>>, vector<16x800xbf16>
    tpu.vector_store %arg6[%c32_193, %c0_194], %202 {strides = array<i32>} : memref<400x800xbf16, #tpu.memory_space<vmem>>, vector<16x800xbf16>,
    %c0_195 = arith.constant 0 : index
    %c3_196 = arith.constant 3 : index
    %204 = vector.load %arg5[%c0_195, %c3_196] : memref<16x896xf32, #tpu.memory_space<vmem>>, vector<16x800xf32>
    %205 = arith.truncf %204 : vector<16x800xf32> to vector<16x800xbf16>
    %c48_197 = arith.constant 48 : index
    %c0_198 = arith.constant 0 : index
    %206 = vector.load %arg6[%c48_197, %c0_198] : memref<400x800xbf16, #tpu.memory_space<vmem>>, vector<16x800xbf16>
    tpu.vector_store %arg6[%c48_197, %c0_198], %205 {strides = array<i32>} : memref<400x800xbf16, #tpu.memory_space<vmem>>, vector<16x800xbf16>,
    %c0_199 = arith.constant 0 : index
    %c4_200 = arith.constant 4 : index
    %207 = vector.load %arg5[%c0_199, %c4_200] : memref<16x896xf32, #tpu.memory_space<vmem>>, vector<16x800xf32>
    %208 = arith.truncf %207 : vector<16x800xf32> to vector<16x800xbf16>
    %c64_201 = arith.constant 64 : index
    %c0_202 = arith.constant 0 : index
    %209 = vector.load %arg6[%c64_201, %c0_202] : memref<400x800xbf16, #tpu.memory_space<vmem>>, vector<16x800xbf16>
    tpu.vector_store %arg6[%c64_201, %c0_202], %208 {strides = array<i32>} : memref<400x800xbf16, #tpu.memory_space<vmem>>, vector<16x800xbf16>,
    %c0_203 = arith.constant 0 : index
    %c20_204 = arith.constant 20 : index
    %210 = vector.load %arg5[%c0_203, %c20_204] : memref<16x896xf32, #tpu.memory_space<vmem>>, vector<16x800xf32>
    %211 = arith.truncf %210 : vector<16x800xf32> to vector<16x800xbf16>
    %c80_205 = arith.constant 80 : index
    %c0_206 = arith.constant 0 : index
    %212 = vector.load %arg6[%c80_205, %c0_206] : memref<400x800xbf16, #tpu.memory_space<vmem>>, vector<16x800xbf16>
    tpu.vector_store %arg6[%c80_205, %c0_206], %211 {strides = array<i32>} : memref<400x800xbf16, #tpu.memory_space<vmem>>, vector<16x800xbf16>,
    %c0_207 = arith.constant 0 : index
    %c21_208 = arith.constant 21 : index
    %213 = vector.load %arg5[%c0_207, %c21_208] : memref<16x896xf32, #tpu.memory_space<vmem>>, vector<16x800xf32>
    %214 = arith.truncf %213 : vector<16x800xf32> to vector<16x800xbf16>
    %c96_209 = arith.constant 96 : index
    %c0_210 = arith.constant 0 : index
    %215 = vector.load %arg6[%c96_209, %c0_210] : memref<400x800xbf16, #tpu.memory_space<vmem>>, vector<16x800xbf16>
    tpu.vector_store %arg6[%c96_209, %c0_210], %214 {strides = array<i32>} : memref<400x800xbf16, #tpu.memory_space<vmem>>, vector<16x800xbf16>,
    %c0_211 = arith.constant 0 : index
    %c22_212 = arith.constant 22 : index
    %216 = vector.load %arg5[%c0_211, %c22_212] : memref<16x896xf32, #tpu.memory_space<vmem>>, vector<16x800xf32>
    %217 = arith.truncf %216 : vector<16x800xf32> to vector<16x800xbf16>
    %c112_213 = arith.constant 112 : index
    %c0_214 = arith.constant 0 : index
    %218 = vector.load %arg6[%c112_213, %c0_214] : memref<400x800xbf16, #tpu.memory_space<vmem>>, vector<16x800xbf16>
    tpu.vector_store %arg6[%c112_213, %c0_214], %217 {strides = array<i32>} : memref<400x800xbf16, #tpu.memory_space<vmem>>, vector<16x800xbf16>,
    %c0_215 = arith.constant 0 : index
    %c23_216 = arith.constant 23 : index
    %219 = vector.load %arg5[%c0_215, %c23_216] : memref<16x896xf32, #tpu.memory_space<vmem>>, vector<16x800xf32>
    %220 = arith.truncf %219 : vector<16x800xf32> to vector<16x800xbf16>
    %c128_217 = arith.constant 128 : index
    %c0_218 = arith.constant 0 : index
    %221 = vector.load %arg6[%c128_217, %c0_218] : memref<400x800xbf16, #tpu.memory_space<vmem>>, vector<16x800xbf16>
    tpu.vector_store %arg6[%c128_217, %c0_218], %220 {strides = array<i32>} : memref<400x800xbf16, #tpu.memory_space<vmem>>, vector<16x800xbf16>,
    %c0_219 = arith.constant 0 : index
    %c24_220 = arith.constant 24 : index
    %222 = vector.load %arg5[%c0_219, %c24_220] : memref<16x896xf32, #tpu.memory_space<vmem>>, vector<16x800xf32>
    %223 = arith.truncf %222 : vector<16x800xf32> to vector<16x800xbf16>
    %c144_221 = arith.constant 144 : index
    %c0_222 = arith.constant 0 : index
    %224 = vector.load %arg6[%c144_221, %c0_222] : memref<400x800xbf16, #tpu.memory_space<vmem>>, vector<16x800xbf16>
    tpu.vector_store %arg6[%c144_221, %c0_222], %223 {strides = array<i32>} : memref<400x800xbf16, #tpu.memory_space<vmem>>, vector<16x800xbf16>,
    %c0_223 = arith.constant 0 : index
    %c40_224 = arith.constant 40 : index
    %225 = vector.load %arg5[%c0_223, %c40_224] : memref<16x896xf32, #tpu.memory_space<vmem>>, vector<16x800xf32>
    %226 = arith.truncf %225 : vector<16x800xf32> to vector<16x800xbf16>
    %c160_225 = arith.constant 160 : index
    %c0_226 = arith.constant 0 : index
    %227 = vector.load %arg6[%c160_225, %c0_226] : memref<400x800xbf16, #tpu.memory_space<vmem>>, vector<16x800xbf16>
    tpu.vector_store %arg6[%c160_225, %c0_226], %226 {strides = array<i32>} : memref<400x800xbf16, #tpu.memory_space<vmem>>, vector<16x800xbf16>,
    %c0_227 = arith.constant 0 : index
    %c41_228 = arith.constant 41 : index
    %228 = vector.load %arg5[%c0_227, %c41_228] : memref<16x896xf32, #tpu.memory_space<vmem>>, vector<16x800xf32>
    %229 = arith.truncf %228 : vector<16x800xf32> to vector<16x800xbf16>
    %c176_229 = arith.constant 176 : index
    %c0_230 = arith.constant 0 : index
    %230 = vector.load %arg6[%c176_229, %c0_230] : memref<400x800xbf16, #tpu.memory_space<vmem>>, vector<16x800xbf16>
    tpu.vector_store %arg6[%c176_229, %c0_230], %229 {strides = array<i32>} : memref<400x800xbf16, #tpu.memory_space<vmem>>, vector<16x800xbf16>,
    %c0_231 = arith.constant 0 : index
    %c42_232 = arith.constant 42 : index
    %231 = vector.load %arg5[%c0_231, %c42_232] : memref<16x896xf32, #tpu.memory_space<vmem>>, vector<16x800xf32>
    %232 = arith.truncf %231 : vector<16x800xf32> to vector<16x800xbf16>
    %c192_233 = arith.constant 192 : index
    %c0_234 = arith.constant 0 : index
    %233 = vector.load %arg6[%c192_233, %c0_234] : memref<400x800xbf16, #tpu.memory_space<vmem>>, vector<16x800xbf16>
    tpu.vector_store %arg6[%c192_233, %c0_234], %232 {strides = array<i32>} : memref<400x800xbf16, #tpu.memory_space<vmem>>, vector<16x800xbf16>,
    %c0_235 = arith.constant 0 : index
    %c43_236 = arith.constant 43 : index
    %234 = vector.load %arg5[%c0_235, %c43_236] : memref<16x896xf32, #tpu.memory_space<vmem>>, vector<16x800xf32>
    %235 = arith.truncf %234 : vector<16x800xf32> to vector<16x800xbf16>
    %c208_237 = arith.constant 208 : index
    %c0_238 = arith.constant 0 : index
    %236 = vector.load %arg6[%c208_237, %c0_238] : memref<400x800xbf16, #tpu.memory_space<vmem>>, vector<16x800xbf16>
    tpu.vector_store %arg6[%c208_237, %c0_238], %235 {strides = array<i32>} : memref<400x800xbf16, #tpu.memory_space<vmem>>, vector<16x800xbf16>,
    %c0_239 = arith.constant 0 : index
    %c44_240 = arith.constant 44 : index
    %237 = vector.load %arg5[%c0_239, %c44_240] : memref<16x896xf32, #tpu.memory_space<vmem>>, vector<16x800xf32>
    %238 = arith.truncf %237 : vector<16x800xf32> to vector<16x800xbf16>
    %c224_241 = arith.constant 224 : index
    %c0_242 = arith.constant 0 : index
    %239 = vector.load %arg6[%c224_241, %c0_242] : memref<400x800xbf16, #tpu.memory_space<vmem>>, vector<16x800xbf16>
    tpu.vector_store %arg6[%c224_241, %c0_242], %238 {strides = array<i32>} : memref<400x800xbf16, #tpu.memory_space<vmem>>, vector<16x800xbf16>,
    %c0_243 = arith.constant 0 : index
    %c60_244 = arith.constant 60 : index
    %240 = vector.load %arg5[%c0_243, %c60_244] : memref<16x896xf32, #tpu.memory_space<vmem>>, vector<16x800xf32>
    %241 = arith.truncf %240 : vector<16x800xf32> to vector<16x800xbf16>
    %c240_245 = arith.constant 240 : index
    %c0_246 = arith.constant 0 : index
    %242 = vector.load %arg6[%c240_245, %c0_246] : memref<400x800xbf16, #tpu.memory_space<vmem>>, vector<16x800xbf16>
    tpu.vector_store %arg6[%c240_245, %c0_246], %241 {strides = array<i32>} : memref<400x800xbf16, #tpu.memory_space<vmem>>, vector<16x800xbf16>,
    %c0_247 = arith.constant 0 : index
    %c61_248 = arith.constant 61 : index
    %243 = vector.load %arg5[%c0_247, %c61_248] : memref<16x896xf32, #tpu.memory_space<vmem>>, vector<16x800xf32>
    %244 = arith.truncf %243 : vector<16x800xf32> to vector<16x800xbf16>
    %c256_249 = arith.constant 256 : index
    %c0_250 = arith.constant 0 : index
    %245 = vector.load %arg6[%c256_249, %c0_250] : memref<400x800xbf16, #tpu.memory_space<vmem>>, vector<16x800xbf16>
    tpu.vector_store %arg6[%c256_249, %c0_250], %244 {strides = array<i32>} : memref<400x800xbf16, #tpu.memory_space<vmem>>, vector<16x800xbf16>,
    %c0_251 = arith.constant 0 : index
    %c62_252 = arith.constant 62 : index
    %246 = vector.load %arg5[%c0_251, %c62_252] : memref<16x896xf32, #tpu.memory_space<vmem>>, vector<16x800xf32>
    %247 = arith.truncf %246 : vector<16x800xf32> to vector<16x800xbf16>
    %c272_253 = arith.constant 272 : index
    %c0_254 = arith.constant 0 : index
    %248 = vector.load %arg6[%c272_253, %c0_254] : memref<400x800xbf16, #tpu.memory_space<vmem>>, vector<16x800xbf16>
    tpu.vector_store %arg6[%c272_253, %c0_254], %247 {strides = array<i32>} : memref<400x800xbf16, #tpu.memory_space<vmem>>, vector<16x800xbf16>,
    %c0_255 = arith.constant 0 : index
    %c63_256 = arith.constant 63 : index
    %249 = vector.load %arg5[%c0_255, %c63_256] : memref<16x896xf32, #tpu.memory_space<vmem>>, vector<16x800xf32>
    %250 = arith.truncf %249 : vector<16x800xf32> to vector<16x800xbf16>
    %c288_257 = arith.constant 288 : index
    %c0_258 = arith.constant 0 : index
    %251 = vector.load %arg6[%c288_257, %c0_258] : memref<400x800xbf16, #tpu.memory_space<vmem>>, vector<16x800xbf16>
    tpu.vector_store %arg6[%c288_257, %c0_258], %250 {strides = array<i32>} : memref<400x800xbf16, #tpu.memory_space<vmem>>, vector<16x800xbf16>,
    %c0_259 = arith.constant 0 : index
    %c64_260 = arith.constant 64 : index
    %252 = vector.load %arg5[%c0_259, %c64_260] : memref<16x896xf32, #tpu.memory_space<vmem>>, vector<16x800xf32>
    %253 = arith.truncf %252 : vector<16x800xf32> to vector<16x800xbf16>
    %c304_261 = arith.constant 304 : index
    %c0_262 = arith.constant 0 : index
    %254 = vector.load %arg6[%c304_261, %c0_262] : memref<400x800xbf16, #tpu.memory_space<vmem>>, vector<16x800xbf16>
    tpu.vector_store %arg6[%c304_261, %c0_262], %253 {strides = array<i32>} : memref<400x800xbf16, #tpu.memory_space<vmem>>, vector<16x800xbf16>,
    %c0_263 = arith.constant 0 : index
    %c80_264 = arith.constant 80 : index
    %255 = vector.load %arg5[%c0_263, %c80_264] : memref<16x896xf32, #tpu.memory_space<vmem>>, vector<16x800xf32>
    %256 = arith.truncf %255 : vector<16x800xf32> to vector<16x800xbf16>
    %c320_265 = arith.constant 320 : index
    %c0_266 = arith.constant 0 : index
    %257 = vector.load %arg6[%c320_265, %c0_266] : memref<400x800xbf16, #tpu.memory_space<vmem>>, vector<16x800xbf16>
    tpu.vector_store %arg6[%c320_265, %c0_266], %256 {strides = array<i32>} : memref<400x800xbf16, #tpu.memory_space<vmem>>, vector<16x800xbf16>,
    %c0_267 = arith.constant 0 : index
    %c81_268 = arith.constant 81 : index
    %258 = vector.load %arg5[%c0_267, %c81_268] : memref<16x896xf32, #tpu.memory_space<vmem>>, vector<16x800xf32>
    %259 = arith.truncf %258 : vector<16x800xf32> to vector<16x800xbf16>
    %c336_269 = arith.constant 336 : index
    %c0_270 = arith.constant 0 : index
    %260 = vector.load %arg6[%c336_269, %c0_270] : memref<400x800xbf16, #tpu.memory_space<vmem>>, vector<16x800xbf16>
    tpu.vector_store %arg6[%c336_269, %c0_270], %259 {strides = array<i32>} : memref<400x800xbf16, #tpu.memory_space<vmem>>, vector<16x800xbf16>,
    %c0_271 = arith.constant 0 : index
    %c82_272 = arith.constant 82 : index
    %261 = vector.load %arg5[%c0_271, %c82_272] : memref<16x896xf32, #tpu.memory_space<vmem>>, vector<16x800xf32>
    %262 = arith.truncf %261 : vector<16x800xf32> to vector<16x800xbf16>
    %c352_273 = arith.constant 352 : index
    %c0_274 = arith.constant 0 : index
    %263 = vector.load %arg6[%c352_273, %c0_274] : memref<400x800xbf16, #tpu.memory_space<vmem>>, vector<16x800xbf16>
    tpu.vector_store %arg6[%c352_273, %c0_274], %262 {strides = array<i32>} : memref<400x800xbf16, #tpu.memory_space<vmem>>, vector<16x800xbf16>,
    %c0_275 = arith.constant 0 : index
    %c83_276 = arith.constant 83 : index
    %264 = vector.load %arg5[%c0_275, %c83_276] : memref<16x896xf32, #tpu.memory_space<vmem>>, vector<16x800xf32>
    %265 = arith.truncf %264 : vector<16x800xf32> to vector<16x800xbf16>
    %c368_277 = arith.constant 368 : index
    %c0_278 = arith.constant 0 : index
    %266 = vector.load %arg6[%c368_277, %c0_278] : memref<400x800xbf16, #tpu.memory_space<vmem>>, vector<16x800xbf16>
    tpu.vector_store %arg6[%c368_277, %c0_278], %265 {strides = array<i32>} : memref<400x800xbf16, #tpu.memory_space<vmem>>, vector<16x800xbf16>,
    %c0_279 = arith.constant 0 : index
    %c84_280 = arith.constant 84 : index
    %267 = vector.load %arg5[%c0_279, %c84_280] : memref<16x896xf32, #tpu.memory_space<vmem>>, vector<16x800xf32>
    %268 = arith.truncf %267 : vector<16x800xf32> to vector<16x800xbf16>
    %c384_281 = arith.constant 384 : index
    %c0_282 = arith.constant 0 : index
    %269 = vector.load %arg6[%c384_281, %c0_282] : memref<400x800xbf16, #tpu.memory_space<vmem>>, vector<16x800xbf16>
    tpu.vector_store %arg6[%c384_281, %c0_282], %268 {strides = array<i32>} : memref<400x800xbf16, #tpu.memory_space<vmem>>, vector<16x800xbf16>,
    %c32_283 = arith.constant 32 : index
    %c0_284 = arith.constant 0 : index
    %270 = vector.load %arg2[%c32_283, %c0_284] : memref<64x512xbf16, #tpu.memory_space<vmem>>, vector<16x400xbf16>
    %c0_285 = arith.constant 0 : index
    %c2_286 = arith.constant 2 : index
    %271 = vector.load %arg3[%c0_285, %c2_286] : memref<80x128xf32, #tpu.memory_space<vmem>>, vector<16x1xf32>
    %c0_287 = arith.constant 0 : index
    %c0_288 = arith.constant 0 : index
    %272 = vector.load %arg6[%c0_287, %c0_288] : memref<400x800xbf16, #tpu.memory_space<vmem>>, vector<400x800xbf16>
    %cst_289 = arith.constant dense<0.000000e+00> : vector<16x800xf32>
    %273 = tpu.matmul %270, %272, %cst_289 {dimension_numbers = #tpu.dot_dimension_numbers<[1], [0], [0], [1], [0, 0, 1, 1], [], []>} : vector<16x400xbf16>, vector<400x800xbf16>, vector<16x800xf32> -> vector<16x800xf32>
    %274 = vector.broadcast %271 : vector<16x1xf32> to vector<16x800xf32>
    %275 = arith.addf %273, %274 : vector<16x800xf32>
    %cst_290 = arith.constant 0.000000e+00 : f32
    %276 = vector.broadcast %cst_290 : f32 to vector<16x800xf32>
    %277 = arith.cmpf ogt, %275, %276 : vector<16x800xf32>
    %cst_291 = arith.constant 3.000000e-01 : f32
    %278 = vector.broadcast %cst_291 : f32 to vector<16x800xf32>
    %279 = arith.mulf %278, %275 : vector<16x800xf32>
    %280 = arith.select %277, %275, %279 : vector<16x800xi1>, vector<16x800xf32>
    %c0_292 = arith.constant 0 : index
    %c0_293 = arith.constant 0 : index
    %281 = vector.load %arg5[%c0_292, %c0_293] : memref<16x896xf32, #tpu.memory_space<vmem>>, vector<16x800xf32>
    tpu.vector_store %arg5[%c0_292, %c0_293], %280 {strides = array<i32>} : memref<16x896xf32, #tpu.memory_space<vmem>>, vector<16x800xf32>,
    %c0_294 = arith.constant 0 : index
    %c0_295 = arith.constant 0 : index
    %282 = vector.load %arg5[%c0_294, %c0_295] : memref<16x896xf32, #tpu.memory_space<vmem>>, vector<16x800xf32>
    %283 = arith.truncf %282 : vector<16x800xf32> to vector<16x800xbf16>
    %c0_296 = arith.constant 0 : index
    %c0_297 = arith.constant 0 : index
    %284 = vector.load %arg6[%c0_296, %c0_297] : memref<400x800xbf16, #tpu.memory_space<vmem>>, vector<16x800xbf16>
    tpu.vector_store %arg6[%c0_296, %c0_297], %283 {strides = array<i32>} : memref<400x800xbf16, #tpu.memory_space<vmem>>, vector<16x800xbf16>,
    %c0_298 = arith.constant 0 : index
    %c1_299 = arith.constant 1 : index
    %285 = vector.load %arg5[%c0_298, %c1_299] : memref<16x896xf32, #tpu.memory_space<vmem>>, vector<16x800xf32>
    %286 = arith.truncf %285 : vector<16x800xf32> to vector<16x800xbf16>
    %c16_300 = arith.constant 16 : index
    %c0_301 = arith.constant 0 : index
    %287 = vector.load %arg6[%c16_300, %c0_301] : memref<400x800xbf16, #tpu.memory_space<vmem>>, vector<16x800xbf16>
    tpu.vector_store %arg6[%c16_300, %c0_301], %286 {strides = array<i32>} : memref<400x800xbf16, #tpu.memory_space<vmem>>, vector<16x800xbf16>,
    %c0_302 = arith.constant 0 : index
    %c2_303 = arith.constant 2 : index
    %288 = vector.load %arg5[%c0_302, %c2_303] : memref<16x896xf32, #tpu.memory_space<vmem>>, vector<16x800xf32>
    %289 = arith.truncf %288 : vector<16x800xf32> to vector<16x800xbf16>
    %c32_304 = arith.constant 32 : index
    %c0_305 = arith.constant 0 : index
    %290 = vector.load %arg6[%c32_304, %c0_305] : memref<400x800xbf16, #tpu.memory_space<vmem>>, vector<16x800xbf16>
    tpu.vector_store %arg6[%c32_304, %c0_305], %289 {strides = array<i32>} : memref<400x800xbf16, #tpu.memory_space<vmem>>, vector<16x800xbf16>,
    %c0_306 = arith.constant 0 : index
    %c3_307 = arith.constant 3 : index
    %291 = vector.load %arg5[%c0_306, %c3_307] : memref<16x896xf32, #tpu.memory_space<vmem>>, vector<16x800xf32>
    %292 = arith.truncf %291 : vector<16x800xf32> to vector<16x800xbf16>
    %c48_308 = arith.constant 48 : index
    %c0_309 = arith.constant 0 : index
    %293 = vector.load %arg6[%c48_308, %c0_309] : memref<400x800xbf16, #tpu.memory_space<vmem>>, vector<16x800xbf16>
    tpu.vector_store %arg6[%c48_308, %c0_309], %292 {strides = array<i32>} : memref<400x800xbf16, #tpu.memory_space<vmem>>, vector<16x800xbf16>,
    %c0_310 = arith.constant 0 : index
    %c4_311 = arith.constant 4 : index
    %294 = vector.load %arg5[%c0_310, %c4_311] : memref<16x896xf32, #tpu.memory_space<vmem>>, vector<16x800xf32>
    %295 = arith.truncf %294 : vector<16x800xf32> to vector<16x800xbf16>
    %c64_312 = arith.constant 64 : index
    %c0_313 = arith.constant 0 : index
    %296 = vector.load %arg6[%c64_312, %c0_313] : memref<400x800xbf16, #tpu.memory_space<vmem>>, vector<16x800xbf16>
    tpu.vector_store %arg6[%c64_312, %c0_313], %295 {strides = array<i32>} : memref<400x800xbf16, #tpu.memory_space<vmem>>, vector<16x800xbf16>,
    %c0_314 = arith.constant 0 : index
    %c20_315 = arith.constant 20 : index
    %297 = vector.load %arg5[%c0_314, %c20_315] : memref<16x896xf32, #tpu.memory_space<vmem>>, vector<16x800xf32>
    %298 = arith.truncf %297 : vector<16x800xf32> to vector<16x800xbf16>
    %c80_316 = arith.constant 80 : index
    %c0_317 = arith.constant 0 : index
    %299 = vector.load %arg6[%c80_316, %c0_317] : memref<400x800xbf16, #tpu.memory_space<vmem>>, vector<16x800xbf16>
    tpu.vector_store %arg6[%c80_316, %c0_317], %298 {strides = array<i32>} : memref<400x800xbf16, #tpu.memory_space<vmem>>, vector<16x800xbf16>,
    %c0_318 = arith.constant 0 : index
    %c21_319 = arith.constant 21 : index
    %300 = vector.load %arg5[%c0_318, %c21_319] : memref<16x896xf32, #tpu.memory_space<vmem>>, vector<16x800xf32>
    %301 = arith.truncf %300 : vector<16x800xf32> to vector<16x800xbf16>
    %c96_320 = arith.constant 96 : index
    %c0_321 = arith.constant 0 : index
    %302 = vector.load %arg6[%c96_320, %c0_321] : memref<400x800xbf16, #tpu.memory_space<vmem>>, vector<16x800xbf16>
    tpu.vector_store %arg6[%c96_320, %c0_321], %301 {strides = array<i32>} : memref<400x800xbf16, #tpu.memory_space<vmem>>, vector<16x800xbf16>,
    %c0_322 = arith.constant 0 : index
    %c22_323 = arith.constant 22 : index
    %303 = vector.load %arg5[%c0_322, %c22_323] : memref<16x896xf32, #tpu.memory_space<vmem>>, vector<16x800xf32>
    %304 = arith.truncf %303 : vector<16x800xf32> to vector<16x800xbf16>
    %c112_324 = arith.constant 112 : index
    %c0_325 = arith.constant 0 : index
    %305 = vector.load %arg6[%c112_324, %c0_325] : memref<400x800xbf16, #tpu.memory_space<vmem>>, vector<16x800xbf16>
    tpu.vector_store %arg6[%c112_324, %c0_325], %304 {strides = array<i32>} : memref<400x800xbf16, #tpu.memory_space<vmem>>, vector<16x800xbf16>,
    %c0_326 = arith.constant 0 : index
    %c23_327 = arith.constant 23 : index
    %306 = vector.load %arg5[%c0_326, %c23_327] : memref<16x896xf32, #tpu.memory_space<vmem>>, vector<16x800xf32>
    %307 = arith.truncf %306 : vector<16x800xf32> to vector<16x800xbf16>
    %c128_328 = arith.constant 128 : index
    %c0_329 = arith.constant 0 : index
    %308 = vector.load %arg6[%c128_328, %c0_329] : memref<400x800xbf16, #tpu.memory_space<vmem>>, vector<16x800xbf16>
    tpu.vector_store %arg6[%c128_328, %c0_329], %307 {strides = array<i32>} : memref<400x800xbf16, #tpu.memory_space<vmem>>, vector<16x800xbf16>,
    %c0_330 = arith.constant 0 : index
    %c24_331 = arith.constant 24 : index
    %309 = vector.load %arg5[%c0_330, %c24_331] : memref<16x896xf32, #tpu.memory_space<vmem>>, vector<16x800xf32>
    %310 = arith.truncf %309 : vector<16x800xf32> to vector<16x800xbf16>
    %c144_332 = arith.constant 144 : index
    %c0_333 = arith.constant 0 : index
    %311 = vector.load %arg6[%c144_332, %c0_333] : memref<400x800xbf16, #tpu.memory_space<vmem>>, vector<16x800xbf16>
    tpu.vector_store %arg6[%c144_332, %c0_333], %310 {strides = array<i32>} : memref<400x800xbf16, #tpu.memory_space<vmem>>, vector<16x800xbf16>,
    %c0_334 = arith.constant 0 : index
    %c40_335 = arith.constant 40 : index
    %312 = vector.load %arg5[%c0_334, %c40_335] : memref<16x896xf32, #tpu.memory_space<vmem>>, vector<16x800xf32>
    %313 = arith.truncf %312 : vector<16x800xf32> to vector<16x800xbf16>
    %c160_336 = arith.constant 160 : index
    %c0_337 = arith.constant 0 : index
    %314 = vector.load %arg6[%c160_336, %c0_337] : memref<400x800xbf16, #tpu.memory_space<vmem>>, vector<16x800xbf16>
    tpu.vector_store %arg6[%c160_336, %c0_337], %313 {strides = array<i32>} : memref<400x800xbf16, #tpu.memory_space<vmem>>, vector<16x800xbf16>,
    %c0_338 = arith.constant 0 : index
    %c41_339 = arith.constant 41 : index
    %315 = vector.load %arg5[%c0_338, %c41_339] : memref<16x896xf32, #tpu.memory_space<vmem>>, vector<16x800xf32>
    %316 = arith.truncf %315 : vector<16x800xf32> to vector<16x800xbf16>
    %c176_340 = arith.constant 176 : index
    %c0_341 = arith.constant 0 : index
    %317 = vector.load %arg6[%c176_340, %c0_341] : memref<400x800xbf16, #tpu.memory_space<vmem>>, vector<16x800xbf16>
    tpu.vector_store %arg6[%c176_340, %c0_341], %316 {strides = array<i32>} : memref<400x800xbf16, #tpu.memory_space<vmem>>, vector<16x800xbf16>,
    %c0_342 = arith.constant 0 : index
    %c42_343 = arith.constant 42 : index
    %318 = vector.load %arg5[%c0_342, %c42_343] : memref<16x896xf32, #tpu.memory_space<vmem>>, vector<16x800xf32>
    %319 = arith.truncf %318 : vector<16x800xf32> to vector<16x800xbf16>
    %c192_344 = arith.constant 192 : index
    %c0_345 = arith.constant 0 : index
    %320 = vector.load %arg6[%c192_344, %c0_345] : memref<400x800xbf16, #tpu.memory_space<vmem>>, vector<16x800xbf16>
    tpu.vector_store %arg6[%c192_344, %c0_345], %319 {strides = array<i32>} : memref<400x800xbf16, #tpu.memory_space<vmem>>, vector<16x800xbf16>,
    %c0_346 = arith.constant 0 : index
    %c43_347 = arith.constant 43 : index
    %321 = vector.load %arg5[%c0_346, %c43_347] : memref<16x896xf32, #tpu.memory_space<vmem>>, vector<16x800xf32>
    %322 = arith.truncf %321 : vector<16x800xf32> to vector<16x800xbf16>
    %c208_348 = arith.constant 208 : index
    %c0_349 = arith.constant 0 : index
    %323 = vector.load %arg6[%c208_348, %c0_349] : memref<400x800xbf16, #tpu.memory_space<vmem>>, vector<16x800xbf16>
    tpu.vector_store %arg6[%c208_348, %c0_349], %322 {strides = array<i32>} : memref<400x800xbf16, #tpu.memory_space<vmem>>, vector<16x800xbf16>,
    %c0_350 = arith.constant 0 : index
    %c44_351 = arith.constant 44 : index
    %324 = vector.load %arg5[%c0_350, %c44_351] : memref<16x896xf32, #tpu.memory_space<vmem>>, vector<16x800xf32>
    %325 = arith.truncf %324 : vector<16x800xf32> to vector<16x800xbf16>
    %c224_352 = arith.constant 224 : index
    %c0_353 = arith.constant 0 : index
    %326 = vector.load %arg6[%c224_352, %c0_353] : memref<400x800xbf16, #tpu.memory_space<vmem>>, vector<16x800xbf16>
    tpu.vector_store %arg6[%c224_352, %c0_353], %325 {strides = array<i32>} : memref<400x800xbf16, #tpu.memory_space<vmem>>, vector<16x800xbf16>,
    %c0_354 = arith.constant 0 : index
    %c60_355 = arith.constant 60 : index
    %327 = vector.load %arg5[%c0_354, %c60_355] : memref<16x896xf32, #tpu.memory_space<vmem>>, vector<16x800xf32>
    %328 = arith.truncf %327 : vector<16x800xf32> to vector<16x800xbf16>
    %c240_356 = arith.constant 240 : index
    %c0_357 = arith.constant 0 : index
    %329 = vector.load %arg6[%c240_356, %c0_357] : memref<400x800xbf16, #tpu.memory_space<vmem>>, vector<16x800xbf16>
    tpu.vector_store %arg6[%c240_356, %c0_357], %328 {strides = array<i32>} : memref<400x800xbf16, #tpu.memory_space<vmem>>, vector<16x800xbf16>,
    %c0_358 = arith.constant 0 : index
    %c61_359 = arith.constant 61 : index
    %330 = vector.load %arg5[%c0_358, %c61_359] : memref<16x896xf32, #tpu.memory_space<vmem>>, vector<16x800xf32>
    %331 = arith.truncf %330 : vector<16x800xf32> to vector<16x800xbf16>
    %c256_360 = arith.constant 256 : index
    %c0_361 = arith.constant 0 : index
    %332 = vector.load %arg6[%c256_360, %c0_361] : memref<400x800xbf16, #tpu.memory_space<vmem>>, vector<16x800xbf16>
    tpu.vector_store %arg6[%c256_360, %c0_361], %331 {strides = array<i32>} : memref<400x800xbf16, #tpu.memory_space<vmem>>, vector<16x800xbf16>,
    %c0_362 = arith.constant 0 : index
    %c62_363 = arith.constant 62 : index
    %333 = vector.load %arg5[%c0_362, %c62_363] : memref<16x896xf32, #tpu.memory_space<vmem>>, vector<16x800xf32>
    %334 = arith.truncf %333 : vector<16x800xf32> to vector<16x800xbf16>
    %c272_364 = arith.constant 272 : index
    %c0_365 = arith.constant 0 : index
    %335 = vector.load %arg6[%c272_364, %c0_365] : memref<400x800xbf16, #tpu.memory_space<vmem>>, vector<16x800xbf16>
    tpu.vector_store %arg6[%c272_364, %c0_365], %334 {strides = array<i32>} : memref<400x800xbf16, #tpu.memory_space<vmem>>, vector<16x800xbf16>,
    %c0_366 = arith.constant 0 : index
    %c63_367 = arith.constant 63 : index
    %336 = vector.load %arg5[%c0_366, %c63_367] : memref<16x896xf32, #tpu.memory_space<vmem>>, vector<16x800xf32>
    %337 = arith.truncf %336 : vector<16x800xf32> to vector<16x800xbf16>
    %c288_368 = arith.constant 288 : index
    %c0_369 = arith.constant 0 : index
    %338 = vector.load %arg6[%c288_368, %c0_369] : memref<400x800xbf16, #tpu.memory_space<vmem>>, vector<16x800xbf16>
    tpu.vector_store %arg6[%c288_368, %c0_369], %337 {strides = array<i32>} : memref<400x800xbf16, #tpu.memory_space<vmem>>, vector<16x800xbf16>,
    %c0_370 = arith.constant 0 : index
    %c64_371 = arith.constant 64 : index
    %339 = vector.load %arg5[%c0_370, %c64_371] : memref<16x896xf32, #tpu.memory_space<vmem>>, vector<16x800xf32>
    %340 = arith.truncf %339 : vector<16x800xf32> to vector<16x800xbf16>
    %c304_372 = arith.constant 304 : index
    %c0_373 = arith.constant 0 : index
    %341 = vector.load %arg6[%c304_372, %c0_373] : memref<400x800xbf16, #tpu.memory_space<vmem>>, vector<16x800xbf16>
    tpu.vector_store %arg6[%c304_372, %c0_373], %340 {strides = array<i32>} : memref<400x800xbf16, #tpu.memory_space<vmem>>, vector<16x800xbf16>,
    %c0_374 = arith.constant 0 : index
    %c80_375 = arith.constant 80 : index
    %342 = vector.load %arg5[%c0_374, %c80_375] : memref<16x896xf32, #tpu.memory_space<vmem>>, vector<16x800xf32>
    %343 = arith.truncf %342 : vector<16x800xf32> to vector<16x800xbf16>
    %c320_376 = arith.constant 320 : index
    %c0_377 = arith.constant 0 : index
    %344 = vector.load %arg6[%c320_376, %c0_377] : memref<400x800xbf16, #tpu.memory_space<vmem>>, vector<16x800xbf16>
    tpu.vector_store %arg6[%c320_376, %c0_377], %343 {strides = array<i32>} : memref<400x800xbf16, #tpu.memory_space<vmem>>, vector<16x800xbf16>,
    %c0_378 = arith.constant 0 : index
    %c81_379 = arith.constant 81 : index
    %345 = vector.load %arg5[%c0_378, %c81_379] : memref<16x896xf32, #tpu.memory_space<vmem>>, vector<16x800xf32>
    %346 = arith.truncf %345 : vector<16x800xf32> to vector<16x800xbf16>
    %c336_380 = arith.constant 336 : index
    %c0_381 = arith.constant 0 : index
    %347 = vector.load %arg6[%c336_380, %c0_381] : memref<400x800xbf16, #tpu.memory_space<vmem>>, vector<16x800xbf16>
    tpu.vector_store %arg6[%c336_380, %c0_381], %346 {strides = array<i32>} : memref<400x800xbf16, #tpu.memory_space<vmem>>, vector<16x800xbf16>,
    %c0_382 = arith.constant 0 : index
    %c82_383 = arith.constant 82 : index
    %348 = vector.load %arg5[%c0_382, %c82_383] : memref<16x896xf32, #tpu.memory_space<vmem>>, vector<16x800xf32>
    %349 = arith.truncf %348 : vector<16x800xf32> to vector<16x800xbf16>
    %c352_384 = arith.constant 352 : index
    %c0_385 = arith.constant 0 : index
    %350 = vector.load %arg6[%c352_384, %c0_385] : memref<400x800xbf16, #tpu.memory_space<vmem>>, vector<16x800xbf16>
    tpu.vector_store %arg6[%c352_384, %c0_385], %349 {strides = array<i32>} : memref<400x800xbf16, #tpu.memory_space<vmem>>, vector<16x800xbf16>,
    %c0_386 = arith.constant 0 : index
    %c83_387 = arith.constant 83 : index
    %351 = vector.load %arg5[%c0_386, %c83_387] : memref<16x896xf32, #tpu.memory_space<vmem>>, vector<16x800xf32>
    %352 = arith.truncf %351 : vector<16x800xf32> to vector<16x800xbf16>
    %c368_388 = arith.constant 368 : index
    %c0_389 = arith.constant 0 : index
    %353 = vector.load %arg6[%c368_388, %c0_389] : memref<400x800xbf16, #tpu.memory_space<vmem>>, vector<16x800xbf16>
    tpu.vector_store %arg6[%c368_388, %c0_389], %352 {strides = array<i32>} : memref<400x800xbf16, #tpu.memory_space<vmem>>, vector<16x800xbf16>,
    %c0_390 = arith.constant 0 : index
    %c84_391 = arith.constant 84 : index
    %354 = vector.load %arg5[%c0_390, %c84_391] : memref<16x896xf32, #tpu.memory_space<vmem>>, vector<16x800xf32>
    %355 = arith.truncf %354 : vector<16x800xf32> to vector<16x800xbf16>
    %c384_392 = arith.constant 384 : index
    %c0_393 = arith.constant 0 : index
    %356 = vector.load %arg6[%c384_392, %c0_393] : memref<400x800xbf16, #tpu.memory_space<vmem>>, vector<16x800xbf16>
    tpu.vector_store %arg6[%c384_392, %c0_393], %355 {strides = array<i32>} : memref<400x800xbf16, #tpu.memory_space<vmem>>, vector<16x800xbf16>,
    %c48_394 = arith.constant 48 : index
    %c0_395 = arith.constant 0 : index
    %357 = vector.load %arg2[%c48_394, %c0_395] : memref<64x512xbf16, #tpu.memory_space<vmem>>, vector<16x400xbf16>
    %c0_396 = arith.constant 0 : index
    %c3_397 = arith.constant 3 : index
    %358 = vector.load %arg3[%c0_396, %c3_397] : memref<80x128xf32, #tpu.memory_space<vmem>>, vector<16x1xf32>
    %c0_398 = arith.constant 0 : index
    %c0_399 = arith.constant 0 : index
    %359 = vector.load %arg6[%c0_398, %c0_399] : memref<400x800xbf16, #tpu.memory_space<vmem>>, vector<400x800xbf16>
    %cst_400 = arith.constant dense<0.000000e+00> : vector<16x800xf32>
    %360 = tpu.matmul %357, %359, %cst_400 {dimension_numbers = #tpu.dot_dimension_numbers<[1], [0], [0], [1], [0, 0, 1, 1], [], []>} : vector<16x400xbf16>, vector<400x800xbf16>, vector<16x800xf32> -> vector<16x800xf32>
    %361 = vector.broadcast %358 : vector<16x1xf32> to vector<16x800xf32>
    %362 = arith.addf %360, %361 : vector<16x800xf32>
    %cst_401 = arith.constant 0.000000e+00 : f32
    %363 = vector.broadcast %cst_401 : f32 to vector<16x800xf32>
    %364 = arith.cmpf ogt, %362, %363 : vector<16x800xf32>
    %cst_402 = arith.constant 3.000000e-01 : f32
    %365 = vector.broadcast %cst_402 : f32 to vector<16x800xf32>
    %366 = arith.mulf %365, %362 : vector<16x800xf32>
    %367 = arith.select %364, %362, %366 : vector<16x800xi1>, vector<16x800xf32>
    %c0_403 = arith.constant 0 : index
    %c0_404 = arith.constant 0 : index
    %368 = vector.load %arg5[%c0_403, %c0_404] : memref<16x896xf32, #tpu.memory_space<vmem>>, vector<16x800xf32>
    tpu.vector_store %arg5[%c0_403, %c0_404], %367 {strides = array<i32>} : memref<16x896xf32, #tpu.memory_space<vmem>>, vector<16x800xf32>,
    %cst_405 = arith.constant 0.000000e+00 : f32
    %369 = vector.broadcast %cst_405 : f32 to vector<16x4xf32>
    %c0_406 = arith.constant 0 : index
    %c0_407 = arith.constant 0 : index
    %370 = vector.load %arg5[%c0_406, %c0_407] : memref<16x896xf32, #tpu.memory_space<vmem>>, vector<16x4xf32>
    %371 = arith.addf %369, %370 : vector<16x4xf32>
    %c0_408 = arith.constant 0 : index
    %c20_409 = arith.constant 20 : index
    %372 = vector.load %arg5[%c0_408, %c20_409] : memref<16x896xf32, #tpu.memory_space<vmem>>, vector<16x4xf32>
    %373 = arith.addf %371, %372 : vector<16x4xf32>
    %c0_410 = arith.constant 0 : index
    %c40_411 = arith.constant 40 : index
    %374 = vector.load %arg5[%c0_410, %c40_411] : memref<16x896xf32, #tpu.memory_space<vmem>>, vector<16x4xf32>
    %375 = arith.addf %373, %374 : vector<16x4xf32>
    %c0_412 = arith.constant 0 : index
    %c60_413 = arith.constant 60 : index
    %376 = vector.load %arg5[%c0_412, %c60_413] : memref<16x896xf32, #tpu.memory_space<vmem>>, vector<16x4xf32>
    %377 = arith.addf %375, %376 : vector<16x4xf32>
    %cst_414 = arith.constant dense<0.000000e+00> : vector<16xf32>
    %378 = vector.multi_reduction <add>, %377, %cst_414 [1] : vector<16x4xf32> to vector<16xf32>
    %379 = vector.shape_cast %378 : vector<16xf32> to vector<16x1xf32>
    %cst_415 = arith.constant 6.250000e-02 : f32
    %380 = vector.broadcast %cst_415 : f32 to vector<16x1xf32>
    %381 = arith.mulf %379, %380 : vector<16x1xf32>
    %cst_416 = arith.constant 0.000000e+00 : f32
    %382 = vector.broadcast %cst_416 : f32 to vector<16x4xf32>
    %c0_417 = arith.constant 0 : index
    %c400 = arith.constant 400 : index
    %383 = vector.load %arg5[%c0_417, %c400] : memref<16x896xf32, #tpu.memory_space<vmem>>, vector<16x4xf32>
    %384 = arith.addf %382, %383 : vector<16x4xf32>
    %c0_418 = arith.constant 0 : index
    %c420 = arith.constant 420 : index
    %385 = vector.load %arg5[%c0_418, %c420] : memref<16x896xf32, #tpu.memory_space<vmem>>, vector<16x4xf32>
    %386 = arith.addf %384, %385 : vector<16x4xf32>
    %c0_419 = arith.constant 0 : index
    %c440 = arith.constant 440 : index
    %387 = vector.load %arg5[%c0_419, %c440] : memref<16x896xf32, #tpu.memory_space<vmem>>, vector<16x4xf32>
    %388 = arith.addf %386, %387 : vector<16x4xf32>
    %c0_420 = arith.constant 0 : index
    %c460 = arith.constant 460 : index
    %389 = vector.load %arg5[%c0_420, %c460] : memref<16x896xf32, #tpu.memory_space<vmem>>, vector<16x4xf32>
    %390 = arith.addf %388, %389 : vector<16x4xf32>
    %cst_421 = arith.constant dense<0.000000e+00> : vector<16xf32>
    %391 = vector.multi_reduction <add>, %390, %cst_421 [1] : vector<16x4xf32> to vector<16xf32>
    %392 = vector.shape_cast %391 : vector<16xf32> to vector<16x1xf32>
    %cst_422 = arith.constant 6.250000e-02 : f32
    %393 = vector.broadcast %cst_422 : f32 to vector<16x1xf32>
    %394 = arith.mulf %392, %393 : vector<16x1xf32>
    %395 = tpu.concatenate %381, %394 in 1 : vector<16x1xf32>, vector<16x1xf32> -> vector<16x2xf32>
    %c16_423 = arith.constant 16 : index
    %c0_424 = arith.constant 0 : index
    %396 = vector.load %arg3[%c16_423, %c0_424] : memref<80x128xf32, #tpu.memory_space<vmem>>, vector<50x16xf32>
    %c16_425 = arith.constant 16 : index
    %c16_426 = arith.constant 16 : index
    %397 = vector.load %arg3[%c16_425, %c16_426] : memref<80x128xf32, #tpu.memory_space<vmem>>, vector<50x1xf32>
    %c66 = arith.constant 66 : index
    %c0_427 = arith.constant 0 : index
    %398 = vector.load %arg3[%c66, %c0_427] : memref<80x128xf32, #tpu.memory_space<vmem>>, vector<10x50xf32>
    %c66_428 = arith.constant 66 : index
    %c50 = arith.constant 50 : index
    %399 = vector.load %arg3[%c66_428, %c50] : memref<80x128xf32, #tpu.memory_space<vmem>>, vector<10x1xf32>
    %c76 = arith.constant 76 : index
    %c0_429 = arith.constant 0 : index
    %400 = vector.load %arg3[%c76, %c0_429] : memref<80x128xf32, #tpu.memory_space<vmem>>, vector<1x10xf32>
    %c76_430 = arith.constant 76 : index
    %c10 = arith.constant 10 : index
    %401 = vector.load %arg3[%c76_430, %c10] : memref<80x128xf32, #tpu.memory_space<vmem>>, vector<1x1xf32>
    %cst_431 = arith.constant dense<0.000000e+00> : vector<50x2xf32>
    %402 = tpu.matmul %396, %395, %cst_431 {dimension_numbers = #tpu.dot_dimension_numbers<[1], [0], [0], [1], [0, 0, 1, 1], [], []>} : vector<50x16xf32>, vector<16x2xf32>, vector<50x2xf32> -> vector<50x2xf32>
    %403 = vector.broadcast %397 : vector<50x1xf32> to vector<50x2xf32>
    %404 = arith.addf %402, %403 : vector<50x2xf32>
    %cst_432 = arith.constant 0.000000e+00 : f32
    %405 = vector.broadcast %cst_432 : f32 to vector<50x2xf32>
    %406 = arith.cmpf ogt, %404, %405 : vector<50x2xf32>
    %cst_433 = arith.constant 3.000000e-01 : f32
    %407 = vector.broadcast %cst_433 : f32 to vector<50x2xf32>
    %408 = arith.mulf %407, %404 : vector<50x2xf32>
    %409 = arith.select %406, %404, %408 : vector<50x2xi1>, vector<50x2xf32>
    %cst_434 = arith.constant dense<0.000000e+00> : vector<10x2xf32>
    %410 = tpu.matmul %398, %409, %cst_434 {dimension_numbers = #tpu.dot_dimension_numbers<[1], [0], [0], [1], [0, 0, 1, 1], [], []>} : vector<10x50xf32>, vector<50x2xf32>, vector<10x2xf32> -> vector<10x2xf32>
    %411 = vector.broadcast %399 : vector<10x1xf32> to vector<10x2xf32>
    %412 = arith.addf %410, %411 : vector<10x2xf32>
    %cst_435 = arith.constant 0.000000e+00 : f32
    %413 = vector.broadcast %cst_435 : f32 to vector<10x2xf32>
    %414 = arith.cmpf ogt, %412, %413 : vector<10x2xf32>
    %cst_436 = arith.constant 3.000000e-01 : f32
    %415 = vector.broadcast %cst_436 : f32 to vector<10x2xf32>
    %416 = arith.mulf %415, %412 : vector<10x2xf32>
    %417 = arith.select %414, %412, %416 : vector<10x2xi1>, vector<10x2xf32>
    %cst_437 = arith.constant dense<0.000000e+00> : vector<1x2xf32>
    %418 = tpu.matmul %400, %417, %cst_437 {dimension_numbers = #tpu.dot_dimension_numbers<[1], [0], [0], [1], [0, 0, 1, 1], [], []>} : vector<1x10xf32>, vector<10x2xf32>, vector<1x2xf32> -> vector<1x2xf32>
    %419 = vector.broadcast %401 : vector<1x1xf32> to vector<1x2xf32>
    %420 = arith.addf %418, %419 : vector<1x2xf32>
    %c0_438 = arith.constant 0 : index
    %c0_439 = arith.constant 0 : index
    %421 = vector.load %arg4[%c0_438, %c0_439] : memref<1x2xf32, #tpu.memory_space<vmem>>, vector<1x2xf32>
    tpu.vector_store %arg4[%c0_438, %c0_439], %420 {strides = array<i32>} : memref<1x2xf32, #tpu.memory_space<vmem>>, vector<1x2xf32>,
    return
  }
  func.func @transform_0(%arg0: i32) -> (i32, i32) {
    %c0_i32 = arith.constant 0 : i32
    %c0_i32_0 = arith.constant 0 : i32
    %c0_i32_1 = arith.constant 0 : i32
    return %c0_i32, %c0_i32_0 : i32, i32
  }
  func.func @transform_1(%arg0: i32) -> (i32, i32) {
    %c0_i32 = arith.constant 0 : i32
    %c0_i32_0 = arith.constant 0 : i32
    %c0_i32_1 = arith.constant 0 : i32
    return %c0_i32, %c0_i32_0 : i32, i32
  }
  func.func @transform_2(%arg0: i32) -> (i32, i32) {
    %c0_i32 = arith.constant 0 : i32
    %c0_i32_0 = arith.constant 0 : i32
    %c0_i32_1 = arith.constant 0 : i32
    return %c0_i32, %c0_i32_0 : i32, i32
  }
  func.func @transform_3(%arg0: i32) -> (i32, i32) {
    %c0_i32 = arith.constant 0 : i32
    %c0_i32_0 = arith.constant 0 : i32
    %c0_i32_1 = arith.constant 0 : i32
    return %c0_i32, %c0_i32_0 : i32, i32
  }
}

</mosaic_0001>

<llo_original>
// kernel: tpu_custom_call.1
$region0: #{tpu_custom_call.1}
  #allocation0 [shape = 'u32[]', space=smem, size = 0x4, offset = 0x4, fixed_abs, tag = 'smem constant byte address 0x4 - core index']
  #allocation1 [shape = 'u32[144,128]{1,0:T(1,128)}', space=vmem, size = 0x12000, scoped, tag = 'internal scratch']
  #allocation2 [shape = 'f32[16,896]{1,0:T(8,128)}', space=vmem, size = 0xe000, scoped, tag = 'scratch operand']
  #allocation3 [shape = 'bf16[400,800]{1,0:T(16,128)(2,1)}', space=vmem, size = 0xaf000, scoped, tag = 'scratch operand']
  %s0 = inlined_call_operand.hbm [shape: f32[16,896], index: 0, kind: input, shape index: {}]
  %s1 = inlined_call_operand.hbm [shape: bf16[64,512], index: 1, kind: input, shape index: {}]
  %s2 = inlined_call_operand.hbm [shape: f32[80,128], index: 2, kind: input, shape index: {}]
  %s3 = inlined_call_operand.hbm [shape: f32[1,2], index: 3, kind: output, shape index: {}]
  %s4 = sld [smem:[#allocation0]]
  $region34: #{tpu_custom_call.1} parent=0
    _
  %s6 = ssub.s32 1, %s4
  %s7 = scalar_select 0, %s6, %s4
  $region1: #{tpu_custom_call.1} parent=0
    #allocation4 [shape = 'u8[57344]{0}', space=vmem, size = 0xe000, scoped, tag = 'input window, operand 0, single buffered']
    #allocation5 [shape = 's32[1]{0}', space=sflag, size = 0x4, scoped, tag = 'scoped memory for tpu_custom_call.1']
    #allocation6 [shape = 's32[1]{0}', space=sflag, size = 0x4, scoped, tag = 'scoped memory for tpu_custom_call.1']
    #allocation7 [shape = 'u8[65536]{0}', space=vmem, size = 0x10000, scoped, tag = 'input window, operand 1, single buffered']
    #allocation8 [shape = 's32[1]{0}', space=sflag, size = 0x4, scoped, tag = 'scoped memory for tpu_custom_call.1']
    #allocation9 [shape = 'u8[40960]{0}', space=vmem, size = 0xa000, scoped, tag = 'input window, operand 2, single buffered']
    #allocation10 [shape = 'u8[512]{0}', space=vmem, size = 0x400, scoped, tag = 'output window, operand 0, single buffered']
    %8 = vsyncpa [#allocation5], 0
    %9 = vsyncpa [#allocation8], 0
    %10 = vsyncpa [#allocation6], 0
    // Predicated region
    $region2: #{tpu_custom_call.1} parent=1 // pred_check
      _
    $region3: #{tpu_custom_call.1} parent=1 // pred_check_branch
      %12 = sbr.rel (0) target = $region5
    $region4: #{tpu_custom_call.1} parent=1 // pred_region
      %s14 = ssub.s32 1792, 1792
      %15 = vsyncadd [#allocation5], %s14
      %s16 = sshll.u32 [#allocation4], 4
      %s17 = int_to_ptr.vmem [resolvable:$true] %s16
      %22 = dma.hbm_to_vmem [thread:$0]  %s0, 1792, %s17, [#allocation5], 896, 896, 56
    $region5: #{tpu_custom_call.1} parent=1 // pred_fallthru
      _
    // Predicated region
    $region6: #{tpu_custom_call.1} parent=1 // pred_check
      _
    $region7: #{tpu_custom_call.1} parent=1 // pred_check_branch
      %24 = sbr.rel (0) target = $region9
    $region8: #{tpu_custom_call.1} parent=1 // pred_region
      %s26 = ssub.s32 2048, 2048
      %27 = vsyncadd [#allocation8], %s26
      %s28 = sshll.u32 [#allocation7], 4
      %s29 = int_to_ptr.vmem [resolvable:$true] %s28
      %34 = dma.hbm_to_vmem [thread:$0]  %s1, 2048, %s29, [#allocation8], 256, 256, 16
    $region9: #{tpu_custom_call.1} parent=1 // pred_fallthru
      _
    // Predicated region
    $region10: #{tpu_custom_call.1} parent=1 // pred_check
      _
    $region11: #{tpu_custom_call.1} parent=1 // pred_check_branch
      %36 = sbr.rel (0) target = $region13
    $region12: #{tpu_custom_call.1} parent=1 // pred_region
      %s38 = ssub.s32 1280, 1280
      %39 = vsyncadd [#allocation8], %s38
      %s40 = sshll.u32 [#allocation9], 4
      %s41 = int_to_ptr.vmem [resolvable:$true] %s40
      %46 = dma.hbm_to_vmem [thread:$0]  %s2, 1280, %s41, [#allocation8], 128, 128, 8
    $region13: #{tpu_custom_call.1} parent=1 // pred_fallthru
      _
    // Predicated region
    $region14: #{tpu_custom_call.1} parent=1 // pred_check
      _
    $region15: #{tpu_custom_call.1} parent=1 // pred_check_branch
      %48 = sbr.rel (0) target = $region17
    $region16: #{tpu_custom_call.1} parent=1 // pred_region
      %49 = dma.done [#allocation5], 1792
    $region17: #{tpu_custom_call.1} parent=1 // pred_fallthru
      _
    // Predicated region
    $region18: #{tpu_custom_call.1} parent=1 // pred_check
      _
    $region19: #{tpu_custom_call.1} parent=1 // pred_check_branch
      %51 = sbr.rel (0) target = $region21
    $region20: #{tpu_custom_call.1} parent=1 // pred_region
      %52 = dma.done [#allocation8], 2048
    $region21: #{tpu_custom_call.1} parent=1 // pred_fallthru
      _
    // Predicated region
    $region22: #{tpu_custom_call.1} parent=1 // pred_check
      _
    $region23: #{tpu_custom_call.1} parent=1 // pred_check_branch
      %54 = sbr.rel (0) target = $region25
    $region24: #{tpu_custom_call.1} parent=1 // pred_region
      %55 = dma.done [#allocation8], 1280
    $region25: #{tpu_custom_call.1} parent=1 // pred_fallthru
      _
    %v57 = vld [vmem:[#allocation4] sm:$0xff]
    %v58 = vld [vmem:[#allocation4 + $0x8] sm:$0xff]
    %v59 = vld [vmem:[#allocation4 + $0x10] sm:$0xff]
    %v60 = vld [vmem:[#allocation4 + $0x18] sm:$0xff]
    %v61 = vld [vmem:[#allocation4 + $0x20] sm:$0xff]
    %v62 = vld [vmem:[#allocation4 + $0x28] sm:$0xff]
    %v63 = vld [vmem:[#allocation4 + $0x30] sm:$0xff]
    %v64 = vld [vmem:[#allocation4 + $0x38] sm:$0xff]
    %v65 = vld [vmem:[#allocation4 + $0x40] sm:$0xff]
    %v66 = vld [vmem:[#allocation4 + $0x48] sm:$0xff]
    %v67 = vld [vmem:[#allocation4 + $0x50] sm:$0xff]
    %v68 = vld [vmem:[#allocation4 + $0x58] sm:$0xff]
    %v69 = vld [vmem:[#allocation4 + $0x60] sm:$0xff]
    %v70 = vld [vmem:[#allocation4 + $0x68] sm:$0xff]
    %v71 = vadd.f32 %v57, %v58
    %v72 = vadd.f32 %v71, %v59
    %v73 = vadd.f32 %v72, %v60
    %v74 = vadd.f32 %v73, %v61
    %v75 = vadd.f32 %v74, %v62
    %vm76 = vcmask 261120
    %v77 = vsel %vm76, %v63, 0.0
    %v78 = vadd.f32 %v75, %v77
    %79 = vadd.xlane.f32.xlu0 %v78
    %v80 = vpop.xlane.xlu0 %79
    %v81 = vadd.f32 %v64, %v65
    %v82 = vadd.f32 %v81, %v66
    %v83 = vadd.f32 %v82, %v67
    %v84 = vadd.f32 %v83, %v68
    %v85 = vadd.f32 %v84, %v69
    %v86 = vsel %vm76, %v70, 0.0
    %v87 = vadd.f32 %v85, %v86
    %88 = vadd.xlane.f32.xlu0 %v87
    %v89 = vpop.xlane.xlu0 %88
    %v90 = vmul.f32 %v80, 0.00125
    %v91 = vmul.f32 %v89, 0.00125
    %v92 = vmul.f32 %v57, %v57
    %v93 = vmul.f32 %v58, %v58
    %v94 = vmul.f32 %v59, %v59
    %v95 = vmul.f32 %v60, %v60
    %v96 = vmul.f32 %v61, %v61
    %v97 = vmul.f32 %v62, %v62
    %v98 = vmul.f32 %v63, %v63
    %v99 = vmul.f32 %v64, %v64
    %v100 = vmul.f32 %v65, %v65
    %v101 = vmul.f32 %v66, %v66
    %v102 = vmul.f32 %v67, %v67
    %v103 = vmul.f32 %v68, %v68
    %v104 = vmul.f32 %v69, %v69
    %v105 = vmul.f32 %v70, %v70
    %v106 = vadd.f32 %v92, %v93
    %v107 = vadd.f32 %v106, %v94
    %v108 = vadd.f32 %v107, %v95
    %v109 = vadd.f32 %v108, %v96
    %v110 = vadd.f32 %v109, %v97
    %v111 = vsel %vm76, %v98, 0.0
    %v112 = vadd.f32 %v110, %v111
    %113 = vadd.xlane.f32.xlu0 %v112
    %v114 = vpop.xlane.xlu0 %113
    %v115 = vadd.f32 %v99, %v100
    %v116 = vadd.f32 %v115, %v101
    %v117 = vadd.f32 %v116, %v102
    %v118 = vadd.f32 %v117, %v103
    %v119 = vadd.f32 %v118, %v104
    %v120 = vsel %vm76, %v105, 0.0
    %v121 = vadd.f32 %v119, %v120
    %122 = vadd.xlane.f32.xlu0 %v121
    %v123 = vpop.xlane.xlu0 %122
    %v124 = vmul.f32 %v114, 0.00125
    %v125 = vmul.f32 %v123, 0.00125
    %v126 = vmul.f32 %v90, %v90
    %v127 = vmul.f32 %v91, %v91
    %v128 = vsub.f32 %v124, %v126
    %v129 = vsub.f32 %v125, %v127
    %v130 = vadd.f32 %v128, 1e-05
    %v131 = vadd.f32 %v129, 1e-05
    %v132 = vrsqrt.pop %v130
    %v133 = vrsqrt.pop %v131
    %v134 = vsub.f32 %v57, %v90
    %v135 = vsub.f32 %v58, %v90
    %v136 = vsub.f32 %v59, %v90
    %v137 = vsub.f32 %v60, %v90
    %v138 = vsub.f32 %v61, %v90
    %v139 = vsub.f32 %v62, %v90
    %v140 = vsub.f32 %v63, %v90
    %v141 = vsub.f32 %v64, %v91
    %v142 = vsub.f32 %v65, %v91
    %v143 = vsub.f32 %v66, %v91
    %v144 = vsub.f32 %v67, %v91
    %v145 = vsub.f32 %v68, %v91
    %v146 = vsub.f32 %v69, %v91
    %v147 = vsub.f32 %v70, %v91
    %v148 = vmul.f32 %v134, %v132
    %v149 = vmul.f32 %v135, %v132
    %v150 = vmul.f32 %v136, %v132
    %v151 = vmul.f32 %v137, %v132
    %v152 = vmul.f32 %v138, %v132
    %v153 = vmul.f32 %v139, %v132
    %v154 = vmul.f32 %v140, %v132
    %v155 = vmul.f32 %v141, %v133
    %v156 = vmul.f32 %v142, %v133
    %v157 = vmul.f32 %v143, %v133
    %v158 = vmul.f32 %v144, %v133
    %v159 = vmul.f32 %v145, %v133
    %v160 = vmul.f32 %v146, %v133
    %v161 = vmul.f32 %v147, %v133
    %162 = vst [vmem:[#allocation2] sm:$0xff] %v148
    %163 = vst [vmem:[#allocation2 + $0x8] sm:$0xff] %v149
    %164 = vst [vmem:[#allocation2 + $0x10] sm:$0xff] %v150
    %165 = vst [vmem:[#allocation2 + $0x18] sm:$0xff] %v151
    %166 = vst [vmem:[#allocation2 + $0x20] sm:$0xff] %v152
    %167 = vst [vmem:[#allocation2 + $0x28] sm:$0xff] %v153
    %168 = vst [vmem:[#allocation2 + $0x30] sm:$0xff] %v154
    %169 = vst [vmem:[#allocation2 + $0x38] sm:$0xff] %v155
    %170 = vst [vmem:[#allocation2 + $0x40] sm:$0xff] %v156
    %171 = vst [vmem:[#allocation2 + $0x48] sm:$0xff] %v157
    %172 = vst [vmem:[#allocation2 + $0x50] sm:$0xff] %v158
    %173 = vst [vmem:[#allocation2 + $0x58] sm:$0xff] %v159
    %174 = vst [vmem:[#allocation2 + $0x60] sm:$0xff] %v160
    %175 = vst [vmem:[#allocation2 + $0x68] sm:$0xff] %v161
    %v176 = vld [vmem:[#allocation2] sm:$0xff]
    %v177 = vld [vmem:[#allocation2 + $0x8] sm:$0xff]
    %v178 = vld [vmem:[#allocation2 + $0x10] sm:$0xff]
    %v179 = vld [vmem:[#allocation2 + $0x18] sm:$0xff]
    %v180 = vld [vmem:[#allocation2 + $0x20] sm:$0xff]
    %v181 = vld [vmem:[#allocation2 + $0x28] sm:$0xff]
    %v182 = vld [vmem:[#allocation2 + $0x30] sm:$0xff]
    %v183 = vld [vmem:[#allocation2 + $0x38] sm:$0xff]
    %v184 = vld [vmem:[#allocation2 + $0x40] sm:$0xff]
    %v185 = vld [vmem:[#allocation2 + $0x48] sm:$0xff]
    %v186 = vld [vmem:[#allocation2 + $0x50] sm:$0xff]
    %v187 = vld [vmem:[#allocation2 + $0x58] sm:$0xff]
    %v188 = vld [vmem:[#allocation2 + $0x60] sm:$0xff]
    %v189 = vld [vmem:[#allocation2 + $0x68] sm:$0xff]
    %v190 = vpack.c.bf16 %v183, %v176
    %v191 = vpack.c.bf16 %v184, %v177
    %v192 = vpack.c.bf16 %v185, %v178
    %v193 = vpack.c.bf16 %v186, %v179
    %v194 = vpack.c.bf16 %v187, %v180
    %v195 = vpack.c.bf16 %v188, %v181
    %v196 = vpack.c.bf16 %v189, %v182
    %197 = vst [vmem:[#allocation3] sm:$0xff] %v190
    %198 = vst [vmem:[#allocation3 + $0x8] sm:$0xff] %v191
    %199 = vst [vmem:[#allocation3 + $0x10] sm:$0xff] %v192
    %200 = vst [vmem:[#allocation3 + $0x18] sm:$0xff] %v193
    %201 = vst [vmem:[#allocation3 + $0x20] sm:$0xff] %v194
    %202 = vst [vmem:[#allocation3 + $0x28] sm:$0xff] %v195
    %203 = vst.msk [vmem:[#allocation3 + $0x30] sm:$0xff] %vm76, %v196
    %v204 = vld [vmem:[#allocation2] sm:$0xff]
    %v205 = vld [vmem:[#allocation2 + $0x8] sm:$0xff]
    %v206 = vld [vmem:[#allocation2 + $0x10] sm:$0xff]
    %v207 = vld [vmem:[#allocation2 + $0x18] sm:$0xff]
    %v208 = vld [vmem:[#allocation2 + $0x20] sm:$0xff]
    %v209 = vld [vmem:[#allocation2 + $0x28] sm:$0xff]
    %v210 = vld [vmem:[#allocation2 + $0x30] sm:$0xff]
    %v211 = vld [vmem:[#allocation2 + $0x38] sm:$0xff]
    %v212 = vld [vmem:[#allocation2 + $0x40] sm:$0xff]
    %v213 = vld [vmem:[#allocation2 + $0x48] sm:$0xff]
    %v214 = vld [vmem:[#allocation2 + $0x50] sm:$0xff]
    %v215 = vld [vmem:[#allocation2 + $0x58] sm:$0xff]
    %v216 = vld [vmem:[#allocation2 + $0x60] sm:$0xff]
    %v217 = vld [vmem:[#allocation2 + $0x68] sm:$0xff]
    %v218 = vpack.c.bf16 %v211, %v204
    %v219 = vpack.c.bf16 %v212, %v205
    %v220 = vpack.c.bf16 %v213, %v206
    %v221 = vpack.c.bf16 %v214, %v207
    %v222 = vpack.c.bf16 %v215, %v208
    %v223 = vpack.c.bf16 %v216, %v209
    %v224 = vpack.c.bf16 %v217, %v210
    %232 = vrot.lane.b32.xlu0 %v218, 127
    %v233 = vpop.permute.xlu0 %232
    %234 = vrot.lane.b32.xlu0 %v219, 127
    %v235 = vpop.permute.xlu0 %234
    %236 = vrot.lane.b32.xlu0 %v220, 127
    %v237 = vpop.permute.xlu0 %236
    %238 = vrot.lane.b32.xlu0 %v221, 127
    %v239 = vpop.permute.xlu0 %238
    %240 = vrot.lane.b32.xlu0 %v222, 127
    %v241 = vpop.permute.xlu0 %240
    %242 = vrot.lane.b32.xlu0 %v223, 127
    %v243 = vpop.permute.xlu0 %242
    %244 = vrot.lane.b32.xlu0 %v224, 127
    %v245 = vpop.permute.xlu0 %244
    %vm246 = vcmask 1039360
    %v247 = vsel %vm246, %v233, %v235
    %v248 = vsel %vm246, %v235, %v237
    %v249 = vsel %vm246, %v237, %v239
    %v250 = vsel %vm246, %v239, %v241
    %v251 = vsel %vm246, %v241, %v243
    %v252 = vsel %vm246, %v243, %v245
    %260 = vst [vmem:[#allocation3 + $0x38] sm:$0xff] %v247
    %261 = vst [vmem:[#allocation3 + $0x40] sm:$0xff] %v248
    %262 = vst [vmem:[#allocation3 + $0x48] sm:$0xff] %v249
    %263 = vst [vmem:[#allocation3 + $0x50] sm:$0xff] %v250
    %264 = vst [vmem:[#allocation3 + $0x58] sm:$0xff] %v251
    %265 = vst [vmem:[#allocation3 + $0x60] sm:$0xff] %v252
    %266 = vst.msk [vmem:[#allocation3 + $0x68] sm:$0xff] %vm76, %v245
    %v267 = vld [vmem:[#allocation2] sm:$0xff]
    %v268 = vld [vmem:[#allocation2 + $0x8] sm:$0xff]
    %v269 = vld [vmem:[#allocation2 + $0x10] sm:$0xff]
    %v270 = vld [vmem:[#allocation2 + $0x18] sm:$0xff]
    %v271 = vld [vmem:[#allocation2 + $0x20] sm:$0xff]
    %v272 = vld [vmem:[#allocation2 + $0x28] sm:$0xff]
    %v273 = vld [vmem:[#allocation2 + $0x30] sm:$0xff]
    %v274 = vld [vmem:[#allocation2 + $0x38] sm:$0xff]
    %v275 = vld [vmem:[#allocation2 + $0x40] sm:$0xff]
    %v276 = vld [vmem:[#allocation2 + $0x48] sm:$0xff]
    %v277 = vld [vmem:[#allocation2 + $0x50] sm:$0xff]
    %v278 = vld [vmem:[#allocation2 + $0x58] sm:$0xff]
    %v279 = vld [vmem:[#allocation2 + $0x60] sm:$0xff]
    %v280 = vld [vmem:[#allocation2 + $0x68] sm:$0xff]
    %v281 = vpack.c.bf16 %v274, %v267
    %v282 = vpack.c.bf16 %v275, %v268
    %v283 = vpack.c.bf16 %v276, %v269
    %v284 = vpack.c.bf16 %v277, %v270
    %v285 = vpack.c.bf16 %v278, %v271
    %v286 = vpack.c.bf16 %v279, %v272
    %v287 = vpack.c.bf16 %v280, %v273
    %295 = vrot.lane.b32.xlu0 %v281, 126
    %v296 = vpop.permute.xlu0 %295
    %297 = vrot.lane.b32.xlu0 %v282, 126
    %v298 = vpop.permute.xlu0 %297
    %299 = vrot.lane.b32.xlu0 %v283, 126
    %v300 = vpop.permute.xlu0 %299
    %301 = vrot.lane.b32.xlu0 %v284, 126
    %v302 = vpop.permute.xlu0 %301
    %303 = vrot.lane.b32.xlu0 %v285, 126
    %v304 = vpop.permute.xlu0 %303
    %305 = vrot.lane.b32.xlu0 %v286, 126
    %v306 = vpop.permute.xlu0 %305
    %307 = vrot.lane.b32.xlu0 %v287, 126
    %v308 = vpop.permute.xlu0 %307
    %vm309 = vcmask 1031168
    %v310 = vsel %vm309, %v296, %v298
    %v311 = vsel %vm309, %v298, %v300
    %v312 = vsel %vm309, %v300, %v302
    %v313 = vsel %vm309, %v302, %v304
    %v314 = vsel %vm309, %v304, %v306
    %v315 = vsel %vm309, %v306, %v308
    %323 = vst [vmem:[#allocation3 + $0x70] sm:$0xff] %v310
    %324 = vst [vmem:[#allocation3 + $0x78] sm:$0xff] %v311
    %325 = vst [vmem:[#allocation3 + $0x80] sm:$0xff] %v312
    %326 = vst [vmem:[#allocation3 + $0x88] sm:$0xff] %v313
    %327 = vst [vmem:[#allocation3 + $0x90] sm:$0xff] %v314
    %328 = vst [vmem:[#allocation3 + $0x98] sm:$0xff] %v315
    %329 = vst.msk [vmem:[#allocation3 + $0xa0] sm:$0xff] %vm76, %v308
    %v330 = vld [vmem:[#allocation2] sm:$0xff]
    %v331 = vld [vmem:[#allocation2 + $0x8] sm:$0xff]
    %v332 = vld [vmem:[#allocation2 + $0x10] sm:$0xff]
    %v333 = vld [vmem:[#allocation2 + $0x18] sm:$0xff]
    %v334 = vld [vmem:[#allocation2 + $0x20] sm:$0xff]
    %v335 = vld [vmem:[#allocation2 + $0x28] sm:$0xff]
    %v336 = vld [vmem:[#allocation2 + $0x30] sm:$0xff]
    %v337 = vld [vmem:[#allocation2 + $0x38] sm:$0xff]
    %v338 = vld [vmem:[#allocation2 + $0x40] sm:$0xff]
    %v339 = vld [vmem:[#allocation2 + $0x48] sm:$0xff]
    %v340 = vld [vmem:[#allocation2 + $0x50] sm:$0xff]
    %v341 = vld [vmem:[#allocation2 + $0x58] sm:$0xff]
    %v342 = vld [vmem:[#allocation2 + $0x60] sm:$0xff]
    %v343 = vld [vmem:[#allocation2 + $0x68] sm:$0xff]
    %v344 = vpack.c.bf16 %v337, %v330
    %v345 = vpack.c.bf16 %v338, %v331
    %v346 = vpack.c.bf16 %v339, %v332
    %v347 = vpack.c.bf16 %v340, %v333
    %v348 = vpack.c.bf16 %v341, %v334
    %v349 = vpack.c.bf16 %v342, %v335
    %v350 = vpack.c.bf16 %v343, %v336
    %358 = vrot.lane.b32.xlu0 %v344, 125
    %v359 = vpop.permute.xlu0 %358
    %360 = vrot.lane.b32.xlu0 %v345, 125
    %v361 = vpop.permute.xlu0 %360
    %362 = vrot.lane.b32.xlu0 %v346, 125
    %v363 = vpop.permute.xlu0 %362
    %364 = vrot.lane.b32.xlu0 %v347, 125
    %v365 = vpop.permute.xlu0 %364
    %366 = vrot.lane.b32.xlu0 %v348, 125
    %v367 = vpop.permute.xlu0 %366
    %368 = vrot.lane.b32.xlu0 %v349, 125
    %v369 = vpop.permute.xlu0 %368
    %370 = vrot.lane.b32.xlu0 %v350, 125
    %v371 = vpop.permute.xlu0 %370
    %vm372 = vcmask 1022976
    %v373 = vsel %vm372, %v359, %v361
    %v374 = vsel %vm372, %v361, %v363
    %v375 = vsel %vm372, %v363, %v365
    %v376 = vsel %vm372, %v365, %v367
    %v377 = vsel %vm372, %v367, %v369
    %v378 = vsel %vm372, %v369, %v371
    %386 = vst [vmem:[#allocation3 + $0xa8] sm:$0xff] %v373
    %387 = vst [vmem:[#allocation3 + $0xb0] sm:$0xff] %v374
    %388 = vst [vmem:[#allocation3 + $0xb8] sm:$0xff] %v375
    %389 = vst [vmem:[#allocation3 + $0xc0] sm:$0xff] %v376
    %390 = vst [vmem:[#allocation3 + $0xc8] sm:$0xff] %v377
    %391 = vst [vmem:[#allocation3 + $0xd0] sm:$0xff] %v378
    %392 = vst.msk [vmem:[#allocation3 + $0xd8] sm:$0xff] %vm76, %v371
    %v393 = vld [vmem:[#allocation2] sm:$0xff]
    %v394 = vld [vmem:[#allocation2 + $0x8] sm:$0xff]
    %v395 = vld [vmem:[#allocation2 + $0x10] sm:$0xff]
    %v396 = vld [vmem:[#allocation2 + $0x18] sm:$0xff]
    %v397 = vld [vmem:[#allocation2 + $0x20] sm:$0xff]
    %v398 = vld [vmem:[#allocation2 + $0x28] sm:$0xff]
    %v399 = vld [vmem:[#allocation2 + $0x30] sm:$0xff]
    %v400 = vld [vmem:[#allocation2 + $0x38] sm:$0xff]
    %v401 = vld [vmem:[#allocation2 + $0x40] sm:$0xff]
    %v402 = vld [vmem:[#allocation2 + $0x48] sm:$0xff]
    %v403 = vld [vmem:[#allocation2 + $0x50] sm:$0xff]
    %v404 = vld [vmem:[#allocation2 + $0x58] sm:$0xff]
    %v405 = vld [vmem:[#allocation2 + $0x60] sm:$0xff]
    %v406 = vld [vmem:[#allocation2 + $0x68] sm:$0xff]
    %v407 = vpack.c.bf16 %v400, %v393
    %v408 = vpack.c.bf16 %v401, %v394
    %v409 = vpack.c.bf16 %v402, %v395
    %v410 = vpack.c.bf16 %v403, %v396
    %v411 = vpack.c.bf16 %v404, %v397
    %v412 = vpack.c.bf16 %v405, %v398
    %v413 = vpack.c.bf16 %v406, %v399
    %421 = vrot.lane.b32.xlu0 %v407, 124
    %v422 = vpop.permute.xlu0 %421
    %423 = vrot.lane.b32.xlu0 %v408, 124
    %v424 = vpop.permute.xlu0 %423
    %425 = vrot.lane.b32.xlu0 %v409, 124
    %v426 = vpop.permute.xlu0 %425
    %427 = vrot.lane.b32.xlu0 %v410, 124
    %v428 = vpop.permute.xlu0 %427
    %429 = vrot.lane.b32.xlu0 %v411, 124
    %v430 = vpop.permute.xlu0 %429
    %431 = vrot.lane.b32.xlu0 %v412, 124
    %v432 = vpop.permute.xlu0 %431
    %433 = vrot.lane.b32.xlu0 %v413, 124
    %v434 = vpop.permute.xlu0 %433
    %vm435 = vcmask 1014784
    %v436 = vsel %vm435, %v422, %v424
    %v437 = vsel %vm435, %v424, %v426
    %v438 = vsel %vm435, %v426, %v428
    %v439 = vsel %vm435, %v428, %v430
    %v440 = vsel %vm435, %v430, %v432
    %v441 = vsel %vm435, %v432, %v434
    %449 = vst [vmem:[#allocation3 + $0xe0] sm:$0xff] %v436
    %450 = vst [vmem:[#allocation3 + $0xe8] sm:$0xff] %v437
    %451 = vst [vmem:[#allocation3 + $0xf0] sm:$0xff] %v438
    %452 = vst [vmem:[#allocation3 + $0xf8] sm:$0xff] %v439
    %453 = vst [vmem:[#allocation3 + $0x100] sm:$0xff] %v440
    %454 = vst [vmem:[#allocation3 + $0x108] sm:$0xff] %v441
    %455 = vst.msk [vmem:[#allocation3 + $0x110] sm:$0xff] %vm76, %v434
    %v456 = vld [vmem:[#allocation2] sm:$0xff]
    %v457 = vld [vmem:[#allocation2 + $0x8] sm:$0xff]
    %v458 = vld [vmem:[#allocation2 + $0x10] sm:$0xff]
    %v459 = vld [vmem:[#allocation2 + $0x18] sm:$0xff]
    %v460 = vld [vmem:[#allocation2 + $0x20] sm:$0xff]
    %v461 = vld [vmem:[#allocation2 + $0x28] sm:$0xff]
    %v462 = vld [vmem:[#allocation2 + $0x30] sm:$0xff]
    %v463 = vld [vmem:[#allocation2 + $0x38] sm:$0xff]
    %v464 = vld [vmem:[#allocation2 + $0x40] sm:$0xff]
    %v465 = vld [vmem:[#allocation2 + $0x48] sm:$0xff]
    %v466 = vld [vmem:[#allocation2 + $0x50] sm:$0xff]
    %v467 = vld [vmem:[#allocation2 + $0x58] sm:$0xff]
    %v468 = vld [vmem:[#allocation2 + $0x60] sm:$0xff]
    %v469 = vld [vmem:[#allocation2 + $0x68] sm:$0xff]
    %v470 = vpack.c.bf16 %v463, %v456
    %v471 = vpack.c.bf16 %v464, %v457
    %v472 = vpack.c.bf16 %v465, %v458
    %v473 = vpack.c.bf16 %v466, %v459
    %v474 = vpack.c.bf16 %v467, %v460
    %v475 = vpack.c.bf16 %v468, %v461
    %v476 = vpack.c.bf16 %v469, %v462
    %484 = vrot.lane.b32.xlu0 %v470, 108
    %v485 = vpop.permute.xlu0 %484
    %486 = vrot.lane.b32.xlu0 %v471, 108
    %v487 = vpop.permute.xlu0 %486
    %488 = vrot.lane.b32.xlu0 %v472, 108
    %v489 = vpop.permute.xlu0 %488
    %490 = vrot.lane.b32.xlu0 %v473, 108
    %v491 = vpop.permute.xlu0 %490
    %492 = vrot.lane.b32.xlu0 %v474, 108
    %v493 = vpop.permute.xlu0 %492
    %494 = vrot.lane.b32.xlu0 %v475, 108
    %v495 = vpop.permute.xlu0 %494
    %496 = vrot.lane.b32.xlu0 %v476, 108
    %v497 = vpop.permute.xlu0 %496
    %vm498 = vcmask 883712
    %v499 = vsel %vm498, %v485, %v487
    %v500 = vsel %vm498, %v487, %v489
    %v501 = vsel %vm498, %v489, %v491
    %v502 = vsel %vm498, %v491, %v493
    %v503 = vsel %vm498, %v493, %v495
    %v504 = vsel %vm498, %v495, %v497
    %512 = vst [vmem:[#allocation3 + $0x118] sm:$0xff] %v499
    %513 = vst [vmem:[#allocation3 + $0x120] sm:$0xff] %v500
    %514 = vst [vmem:[#allocation3 + $0x128] sm:$0xff] %v501
    %515 = vst [vmem:[#allocation3 + $0x130] sm:$0xff] %v502
    %516 = vst [vmem:[#allocation3 + $0x138] sm:$0xff] %v503
    %517 = vst [vmem:[#allocation3 + $0x140] sm:$0xff] %v504
    %518 = vst.msk [vmem:[#allocation3 + $0x148] sm:$0xff] %vm76, %v497
    %v519 = vld [vmem:[#allocation2] sm:$0xff]
    %v520 = vld [vmem:[#allocation2 + $0x8] sm:$0xff]
    %v521 = vld [vmem:[#allocation2 + $0x10] sm:$0xff]
    %v522 = vld [vmem:[#allocation2 + $0x18] sm:$0xff]
    %v523 = vld [vmem:[#allocation2 + $0x20] sm:$0xff]
    %v524 = vld [vmem:[#allocation2 + $0x28] sm:$0xff]
    %v525 = vld [vmem:[#allocation2 + $0x30] sm:$0xff]
    %v526 = vld [vmem:[#allocation2 + $0x38] sm:$0xff]
    %v527 = vld [vmem:[#allocation2 + $0x40] sm:$0xff]
    %v528 = vld [vmem:[#allocation2 + $0x48] sm:$0xff]
    %v529 = vld [vmem:[#allocation2 + $0x50] sm:$0xff]
    %v530 = vld [vmem:[#allocation2 + $0x58] sm:$0xff]
    %v531 = vld [vmem:[#allocation2 + $0x60] sm:$0xff]
    %v532 = vld [vmem:[#allocation2 + $0x68] sm:$0xff]
    %v533 = vpack.c.bf16 %v526, %v519
    %v534 = vpack.c.bf16 %v527, %v520
    %v535 = vpack.c.bf16 %v528, %v521
    %v536 = vpack.c.bf16 %v529, %v522
    %v537 = vpack.c.bf16 %v530, %v523
    %v538 = vpack.c.bf16 %v531, %v524
    %v539 = vpack.c.bf16 %v532, %v525
    %547 = vrot.lane.b32.xlu0 %v533, 107
    %v548 = vpop.permute.xlu0 %547
    %549 = vrot.lane.b32.xlu0 %v534, 107
    %v550 = vpop.permute.xlu0 %549
    %551 = vrot.lane.b32.xlu0 %v535, 107
    %v552 = vpop.permute.xlu0 %551
    %553 = vrot.lane.b32.xlu0 %v536, 107
    %v554 = vpop.permute.xlu0 %553
    %555 = vrot.lane.b32.xlu0 %v537, 107
    %v556 = vpop.permute.xlu0 %555
    %557 = vrot.lane.b32.xlu0 %v538, 107
    %v558 = vpop.permute.xlu0 %557
    %559 = vrot.lane.b32.xlu0 %v539, 107
    %v560 = vpop.permute.xlu0 %559
    %vm561 = vcmask 875520
    %v562 = vsel %vm561, %v548, %v550
    %v563 = vsel %vm561, %v550, %v552
    %v564 = vsel %vm561, %v552, %v554
    %v565 = vsel %vm561, %v554, %v556
    %v566 = vsel %vm561, %v556, %v558
    %v567 = vsel %vm561, %v558, %v560
    %575 = vst [vmem:[#allocation3 + $0x150] sm:$0xff] %v562
    %576 = vst [vmem:[#allocation3 + $0x158] sm:$0xff] %v563
    %577 = vst [vmem:[#allocation3 + $0x160] sm:$0xff] %v564
    %578 = vst [vmem:[#allocation3 + $0x168] sm:$0xff] %v565
    %579 = vst [vmem:[#allocation3 + $0x170] sm:$0xff] %v566
    %580 = vst [vmem:[#allocation3 + $0x178] sm:$0xff] %v567
    %581 = vst.msk [vmem:[#allocation3 + $0x180] sm:$0xff] %vm76, %v560
    %v582 = vld [vmem:[#allocation2] sm:$0xff]
    %v583 = vld [vmem:[#allocation2 + $0x8] sm:$0xff]
    %v584 = vld [vmem:[#allocation2 + $0x10] sm:$0xff]
    %v585 = vld [vmem:[#allocation2 + $0x18] sm:$0xff]
    %v586 = vld [vmem:[#allocation2 + $0x20] sm:$0xff]
    %v587 = vld [vmem:[#allocation2 + $0x28] sm:$0xff]
    %v588 = vld [vmem:[#allocation2 + $0x30] sm:$0xff]
    %v589 = vld [vmem:[#allocation2 + $0x38] sm:$0xff]
    %v590 = vld [vmem:[#allocation2 + $0x40] sm:$0xff]
    %v591 = vld [vmem:[#allocation2 + $0x48] sm:$0xff]
    %v592 = vld [vmem:[#allocation2 + $0x50] sm:$0xff]
    %v593 = vld [vmem:[#allocation2 + $0x58] sm:$0xff]
    %v594 = vld [vmem:[#allocation2 + $0x60] sm:$0xff]
    %v595 = vld [vmem:[#allocation2 + $0x68] sm:$0xff]
    %v596 = vpack.c.bf16 %v589, %v582
    %v597 = vpack.c.bf16 %v590, %v583
    %v598 = vpack.c.bf16 %v591, %v584
    %v599 = vpack.c.bf16 %v592, %v585
    %v600 = vpack.c.bf16 %v593, %v586
    %v601 = vpack.c.bf16 %v594, %v587
    %v602 = vpack.c.bf16 %v595, %v588
    %610 = vrot.lane.b32.xlu0 %v596, 106
    %v611 = vpop.permute.xlu0 %610
    %612 = vrot.lane.b32.xlu0 %v597, 106
    %v613 = vpop.permute.xlu0 %612
    %614 = vrot.lane.b32.xlu0 %v598, 106
    %v615 = vpop.permute.xlu0 %614
    %616 = vrot.lane.b32.xlu0 %v599, 106
    %v617 = vpop.permute.xlu0 %616
    %618 = vrot.lane.b32.xlu0 %v600, 106
    %v619 = vpop.permute.xlu0 %618
    %620 = vrot.lane.b32.xlu0 %v601, 106
    %v621 = vpop.permute.xlu0 %620
    %622 = vrot.lane.b32.xlu0 %v602, 106
    %v623 = vpop.permute.xlu0 %622
    %vm624 = vcmask 867328
    %v625 = vsel %vm624, %v611, %v613
    %v626 = vsel %vm624, %v613, %v615
    %v627 = vsel %vm624, %v615, %v617
    %v628 = vsel %vm624, %v617, %v619
    %v629 = vsel %vm624, %v619, %v621
    %v630 = vsel %vm624, %v621, %v623
    %638 = vst [vmem:[#allocation3 + $0x188] sm:$0xff] %v625
    %639 = vst [vmem:[#allocation3 + $0x190] sm:$0xff] %v626
    %640 = vst [vmem:[#allocation3 + $0x198] sm:$0xff] %v627
    %641 = vst [vmem:[#allocation3 + $0x1a0] sm:$0xff] %v628
    %642 = vst [vmem:[#allocation3 + $0x1a8] sm:$0xff] %v629
    %643 = vst [vmem:[#allocation3 + $0x1b0] sm:$0xff] %v630
    %644 = vst.msk [vmem:[#allocation3 + $0x1b8] sm:$0xff] %vm76, %v623
    %v645 = vld [vmem:[#allocation2] sm:$0xff]
    %v646 = vld [vmem:[#allocation2 + $0x8] sm:$0xff]
    %v647 = vld [vmem:[#allocation2 + $0x10] sm:$0xff]
    %v648 = vld [vmem:[#allocation2 + $0x18] sm:$0xff]
    %v649 = vld [vmem:[#allocation2 + $0x20] sm:$0xff]
    %v650 = vld [vmem:[#allocation2 + $0x28] sm:$0xff]
    %v651 = vld [vmem:[#allocation2 + $0x30] sm:$0xff]
    %v652 = vld [vmem:[#allocation2 + $0x38] sm:$0xff]
    %v653 = vld [vmem:[#allocation2 + $0x40] sm:$0xff]
    %v654 = vld [vmem:[#allocation2 + $0x48] sm:$0xff]
    %v655 = vld [vmem:[#allocation2 + $0x50] sm:$0xff]
    %v656 = vld [vmem:[#allocation2 + $0x58] sm:$0xff]
    %v657 = vld [vmem:[#allocation2 + $0x60] sm:$0xff]
    %v658 = vld [vmem:[#allocation2 + $0x68] sm:$0xff]
    %v659 = vpack.c.bf16 %v652, %v645
    %v660 = vpack.c.bf16 %v653, %v646
    %v661 = vpack.c.bf16 %v654, %v647
    %v662 = vpack.c.bf16 %v655, %v648
    %v663 = vpack.c.bf16 %v656, %v649
    %v664 = vpack.c.bf16 %v657, %v650
    %v665 = vpack.c.bf16 %v658, %v651
    %673 = vrot.lane.b32.xlu0 %v659, 105
    %v674 = vpop.permute.xlu0 %673
    %675 = vrot.lane.b32.xlu0 %v660, 105
    %v676 = vpop.permute.xlu0 %675
    %677 = vrot.lane.b32.xlu0 %v661, 105
    %v678 = vpop.permute.xlu0 %677
    %679 = vrot.lane.b32.xlu0 %v662, 105
    %v680 = vpop.permute.xlu0 %679
    %681 = vrot.lane.b32.xlu0 %v663, 105
    %v682 = vpop.permute.xlu0 %681
    %683 = vrot.lane.b32.xlu0 %v664, 105
    %v684 = vpop.permute.xlu0 %683
    %685 = vrot.lane.b32.xlu0 %v665, 105
    %v686 = vpop.permute.xlu0 %685
    %vm687 = vcmask 859136
    %v688 = vsel %vm687, %v674, %v676
    %v689 = vsel %vm687, %v676, %v678
    %v690 = vsel %vm687, %v678, %v680
    %v691 = vsel %vm687, %v680, %v682
    %v692 = vsel %vm687, %v682, %v684
    %v693 = vsel %vm687, %v684, %v686
    %701 = vst [vmem:[#allocation3 + $0x1c0] sm:$0xff] %v688
    %702 = vst [vmem:[#allocation3 + $0x1c8] sm:$0xff] %v689
    %703 = vst [vmem:[#allocation3 + $0x1d0] sm:$0xff] %v690
    %704 = vst [vmem:[#allocation3 + $0x1d8] sm:$0xff] %v691
    %705 = vst [vmem:[#allocation3 + $0x1e0] sm:$0xff] %v692
    %706 = vst [vmem:[#allocation3 + $0x1e8] sm:$0xff] %v693
    %707 = vst.msk [vmem:[#allocation3 + $0x1f0] sm:$0xff] %vm76, %v686
    %v708 = vld [vmem:[#allocation2] sm:$0xff]
    %v709 = vld [vmem:[#allocation2 + $0x8] sm:$0xff]
    %v710 = vld [vmem:[#allocation2 + $0x10] sm:$0xff]
    %v711 = vld [vmem:[#allocation2 + $0x18] sm:$0xff]
    %v712 = vld [vmem:[#allocation2 + $0x20] sm:$0xff]
    %v713 = vld [vmem:[#allocation2 + $0x28] sm:$0xff]
    %v714 = vld [vmem:[#allocation2 + $0x30] sm:$0xff]
    %v715 = vld [vmem:[#allocation2 + $0x38] sm:$0xff]
    %v716 = vld [vmem:[#allocation2 + $0x40] sm:$0xff]
    %v717 = vld [vmem:[#allocation2 + $0x48] sm:$0xff]
    %v718 = vld [vmem:[#allocation2 + $0x50] sm:$0xff]
    %v719 = vld [vmem:[#allocation2 + $0x58] sm:$0xff]
    %v720 = vld [vmem:[#allocation2 + $0x60] sm:$0xff]
    %v721 = vld [vmem:[#allocation2 + $0x68] sm:$0xff]
    %v722 = vpack.c.bf16 %v715, %v708
    %v723 = vpack.c.bf16 %v716, %v709
    %v724 = vpack.c.bf16 %v717, %v710
    %v725 = vpack.c.bf16 %v718, %v711
    %v726 = vpack.c.bf16 %v719, %v712
    %v727 = vpack.c.bf16 %v720, %v713
    %v728 = vpack.c.bf16 %v721, %v714
    %736 = vrot.lane.b32.xlu0 %v722, 104
    %v737 = vpop.permute.xlu0 %736
    %738 = vrot.lane.b32.xlu0 %v723, 104
    %v739 = vpop.permute.xlu0 %738
    %740 = vrot.lane.b32.xlu0 %v724, 104
    %v741 = vpop.permute.xlu0 %740
    %742 = vrot.lane.b32.xlu0 %v725, 104
    %v743 = vpop.permute.xlu0 %742
    %744 = vrot.lane.b32.xlu0 %v726, 104
    %v745 = vpop.permute.xlu0 %744
    %746 = vrot.lane.b32.xlu0 %v727, 104
    %v747 = vpop.permute.xlu0 %746
    %748 = vrot.lane.b32.xlu0 %v728, 104
    %v749 = vpop.permute.xlu0 %748
    %vm750 = vcmask 850944
    %v751 = vsel %vm750, %v737, %v739
    %v752 = vsel %vm750, %v739, %v741
    %v753 = vsel %vm750, %v741, %v743
    %v754 = vsel %vm750, %v743, %v745
    %v755 = vsel %vm750, %v745, %v747
    %v756 = vsel %vm750, %v747, %v749
    %764 = vst [vmem:[#allocation3 + $0x1f8] sm:$0xff] %v751
    %765 = vst [vmem:[#allocation3 + $0x200] sm:$0xff] %v752
    %766 = vst [vmem:[#allocation3 + $0x208] sm:$0xff] %v753
    %767 = vst [vmem:[#allocation3 + $0x210] sm:$0xff] %v754
    %768 = vst [vmem:[#allocation3 + $0x218] sm:$0xff] %v755
    %769 = vst [vmem:[#allocation3 + $0x220] sm:$0xff] %v756
    %770 = vst.msk [vmem:[#allocation3 + $0x228] sm:$0xff] %vm76, %v749
    %v771 = vld [vmem:[#allocation2] sm:$0xff]
    %v772 = vld [vmem:[#allocation2 + $0x8] sm:$0xff]
    %v773 = vld [vmem:[#allocation2 + $0x10] sm:$0xff]
    %v774 = vld [vmem:[#allocation2 + $0x18] sm:$0xff]
    %v775 = vld [vmem:[#allocation2 + $0x20] sm:$0xff]
    %v776 = vld [vmem:[#allocation2 + $0x28] sm:$0xff]
    %v777 = vld [vmem:[#allocation2 + $0x30] sm:$0xff]
    %v778 = vld [vmem:[#allocation2 + $0x38] sm:$0xff]
    %v779 = vld [vmem:[#allocation2 + $0x40] sm:$0xff]
    %v780 = vld [vmem:[#allocation2 + $0x48] sm:$0xff]
    %v781 = vld [vmem:[#allocation2 + $0x50] sm:$0xff]
    %v782 = vld [vmem:[#allocation2 + $0x58] sm:$0xff]
    %v783 = vld [vmem:[#allocation2 + $0x60] sm:$0xff]
    %v784 = vld [vmem:[#allocation2 + $0x68] sm:$0xff]
    %v785 = vpack.c.bf16 %v778, %v771
    %v786 = vpack.c.bf16 %v779, %v772
    %v787 = vpack.c.bf16 %v780, %v773
    %v788 = vpack.c.bf16 %v781, %v774
    %v789 = vpack.c.bf16 %v782, %v775
    %v790 = vpack.c.bf16 %v783, %v776
    %v791 = vpack.c.bf16 %v784, %v777
    %799 = vrot.lane.b32.xlu0 %v785, 88
    %v800 = vpop.permute.xlu0 %799
    %801 = vrot.lane.b32.xlu0 %v786, 88
    %v802 = vpop.permute.xlu0 %801
    %803 = vrot.lane.b32.xlu0 %v787, 88
    %v804 = vpop.permute.xlu0 %803
    %805 = vrot.lane.b32.xlu0 %v788, 88
    %v806 = vpop.permute.xlu0 %805
    %807 = vrot.lane.b32.xlu0 %v789, 88
    %v808 = vpop.permute.xlu0 %807
    %809 = vrot.lane.b32.xlu0 %v790, 88
    %v810 = vpop.permute.xlu0 %809
    %811 = vrot.lane.b32.xlu0 %v791, 88
    %v812 = vpop.permute.xlu0 %811
    %vm813 = vcmask 719872
    %v814 = vsel %vm813, %v800, %v802
    %v815 = vsel %vm813, %v802, %v804
    %v816 = vsel %vm813, %v804, %v806
    %v817 = vsel %vm813, %v806, %v808
    %v818 = vsel %vm813, %v808, %v810
    %v819 = vsel %vm813, %v810, %v812
    %827 = vst [vmem:[#allocation3 + $0x230] sm:$0xff] %v814
    %828 = vst [vmem:[#allocation3 + $0x238] sm:$0xff] %v815
    %829 = vst [vmem:[#allocation3 + $0x240] sm:$0xff] %v816
    %830 = vst [vmem:[#allocation3 + $0x248] sm:$0xff] %v817
    %831 = vst [vmem:[#allocation3 + $0x250] sm:$0xff] %v818
    %832 = vst [vmem:[#allocation3 + $0x258] sm:$0xff] %v819
    %833 = vst.msk [vmem:[#allocation3 + $0x260] sm:$0xff] %vm76, %v812
    %v834 = vld [vmem:[#allocation2] sm:$0xff]
    %v835 = vld [vmem:[#allocation2 + $0x8] sm:$0xff]
    %v836 = vld [vmem:[#allocation2 + $0x10] sm:$0xff]
    %v837 = vld [vmem:[#allocation2 + $0x18] sm:$0xff]
    %v838 = vld [vmem:[#allocation2 + $0x20] sm:$0xff]
    %v839 = vld [vmem:[#allocation2 + $0x28] sm:$0xff]
    %v840 = vld [vmem:[#allocation2 + $0x30] sm:$0xff]
    %v841 = vld [vmem:[#allocation2 + $0x38] sm:$0xff]
    %v842 = vld [vmem:[#allocation2 + $0x40] sm:$0xff]
    %v843 = vld [vmem:[#allocation2 + $0x48] sm:$0xff]
    %v844 = vld [vmem:[#allocation2 + $0x50] sm:$0xff]
    %v845 = vld [vmem:[#allocation2 + $0x58] sm:$0xff]
    %v846 = vld [vmem:[#allocation2 + $0x60] sm:$0xff]
    %v847 = vld [vmem:[#allocation2 + $0x68] sm:$0xff]
    %v848 = vpack.c.bf16 %v841, %v834
    %v849 = vpack.c.bf16 %v842, %v835
    %v850 = vpack.c.bf16 %v843, %v836
    %v851 = vpack.c.bf16 %v844, %v837
    %v852 = vpack.c.bf16 %v845, %v838
    %v853 = vpack.c.bf16 %v846, %v839
    %v854 = vpack.c.bf16 %v847, %v840
    %862 = vrot.lane.b32.xlu0 %v848, 87
    %v863 = vpop.permute.xlu0 %862
    %864 = vrot.lane.b32.xlu0 %v849, 87
    %v865 = vpop.permute.xlu0 %864
    %866 = vrot.lane.b32.xlu0 %v850, 87
    %v867 = vpop.permute.xlu0 %866
    %868 = vrot.lane.b32.xlu0 %v851, 87
    %v869 = vpop.permute.xlu0 %868
    %870 = vrot.lane.b32.xlu0 %v852, 87
    %v871 = vpop.permute.xlu0 %870
    %872 = vrot.lane.b32.xlu0 %v853, 87
    %v873 = vpop.permute.xlu0 %872
    %874 = vrot.lane.b32.xlu0 %v854, 87
    %v875 = vpop.permute.xlu0 %874
    %vm876 = vcmask 711680
    %v877 = vsel %vm876, %v863, %v865
    %v878 = vsel %vm876, %v865, %v867
    %v879 = vsel %vm876, %v867, %v869
    %v880 = vsel %vm876, %v869, %v871
    %v881 = vsel %vm876, %v871, %v873
    %v882 = vsel %vm876, %v873, %v875
    %890 = vst [vmem:[#allocation3 + $0x268] sm:$0xff] %v877
    %891 = vst [vmem:[#allocation3 + $0x270] sm:$0xff] %v878
    %892 = vst [vmem:[#allocation3 + $0x278] sm:$0xff] %v879
    %893 = vst [vmem:[#allocation3 + $0x280] sm:$0xff] %v880
    %894 = vst [vmem:[#allocation3 + $0x288] sm:$0xff] %v881
    %895 = vst [vmem:[#allocation3 + $0x290] sm:$0xff] %v882
    %896 = vst.msk [vmem:[#allocation3 + $0x298] sm:$0xff] %vm76, %v875
    %v897 = vld [vmem:[#allocation2] sm:$0xff]
    %v898 = vld [vmem:[#allocation2 + $0x8] sm:$0xff]
    %v899 = vld [vmem:[#allocation2 + $0x10] sm:$0xff]
    %v900 = vld [vmem:[#allocation2 + $0x18] sm:$0xff]
    %v901 = vld [vmem:[#allocation2 + $0x20] sm:$0xff]
    %v902 = vld [vmem:[#allocation2 + $0x28] sm:$0xff]
    %v903 = vld [vmem:[#allocation2 + $0x30] sm:$0xff]
    %v904 = vld [vmem:[#allocation2 + $0x38] sm:$0xff]
    %v905 = vld [vmem:[#allocation2 + $0x40] sm:$0xff]
    %v906 = vld [vmem:[#allocation2 + $0x48] sm:$0xff]
    %v907 = vld [vmem:[#allocation2 + $0x50] sm:$0xff]
    %v908 = vld [vmem:[#allocation2 + $0x58] sm:$0xff]
    %v909 = vld [vmem:[#allocation2 + $0x60] sm:$0xff]
    %v910 = vld [vmem:[#allocation2 + $0x68] sm:$0xff]
    %v911 = vpack.c.bf16 %v904, %v897
    %v912 = vpack.c.bf16 %v905, %v898
    %v913 = vpack.c.bf16 %v906, %v899
    %v914 = vpack.c.bf16 %v907, %v900
    %v915 = vpack.c.bf16 %v908, %v901
    %v916 = vpack.c.bf16 %v909, %v902
    %v917 = vpack.c.bf16 %v910, %v903
    %925 = vrot.lane.b32.xlu0 %v911, 86
    %v926 = vpop.permute.xlu0 %925
    %927 = vrot.lane.b32.xlu0 %v912, 86
    %v928 = vpop.permute.xlu0 %927
    %929 = vrot.lane.b32.xlu0 %v913, 86
    %v930 = vpop.permute.xlu0 %929
    %931 = vrot.lane.b32.xlu0 %v914, 86
    %v932 = vpop.permute.xlu0 %931
    %933 = vrot.lane.b32.xlu0 %v915, 86
    %v934 = vpop.permute.xlu0 %933
    %935 = vrot.lane.b32.xlu0 %v916, 86
    %v936 = vpop.permute.xlu0 %935
    %937 = vrot.lane.b32.xlu0 %v917, 86
    %v938 = vpop.permute.xlu0 %937
    %vm939 = vcmask 703488
    %v940 = vsel %vm939, %v926, %v928
    %v941 = vsel %vm939, %v928, %v930
    %v942 = vsel %vm939, %v930, %v932
    %v943 = vsel %vm939, %v932, %v934
    %v944 = vsel %vm939, %v934, %v936
    %v945 = vsel %vm939, %v936, %v938
    %953 = vst [vmem:[#allocation3 + $0x2a0] sm:$0xff] %v940
    %954 = vst [vmem:[#allocation3 + $0x2a8] sm:$0xff] %v941
    %955 = vst [vmem:[#allocation3 + $0x2b0] sm:$0xff] %v942
    %956 = vst [vmem:[#allocation3 + $0x2b8] sm:$0xff] %v943
    %957 = vst [vmem:[#allocation3 + $0x2c0] sm:$0xff] %v944
    %958 = vst [vmem:[#allocation3 + $0x2c8] sm:$0xff] %v945
    %959 = vst.msk [vmem:[#allocation3 + $0x2d0] sm:$0xff] %vm76, %v938
    %v960 = vld [vmem:[#allocation2] sm:$0xff]
    %v961 = vld [vmem:[#allocation2 + $0x8] sm:$0xff]
    %v962 = vld [vmem:[#allocation2 + $0x10] sm:$0xff]
    %v963 = vld [vmem:[#allocation2 + $0x18] sm:$0xff]
    %v964 = vld [vmem:[#allocation2 + $0x20] sm:$0xff]
    %v965 = vld [vmem:[#allocation2 + $0x28] sm:$0xff]
    %v966 = vld [vmem:[#allocation2 + $0x30] sm:$0xff]
    %v967 = vld [vmem:[#allocation2 + $0x38] sm:$0xff]
    %v968 = vld [vmem:[#allocation2 + $0x40] sm:$0xff]
    %v969 = vld [vmem:[#allocation2 + $0x48] sm:$0xff]
    %v970 = vld [vmem:[#allocation2 + $0x50] sm:$0xff]
    %v971 = vld [vmem:[#allocation2 + $0x58] sm:$0xff]
    %v972 = vld [vmem:[#allocation2 + $0x60] sm:$0xff]
    %v973 = vld [vmem:[#allocation2 + $0x68] sm:$0xff]
    %v974 = vpack.c.bf16 %v967, %v960
    %v975 = vpack.c.bf16 %v968, %v961
    %v976 = vpack.c.bf16 %v969, %v962
    %v977 = vpack.c.bf16 %v970, %v963
    %v978 = vpack.c.bf16 %v971, %v964
    %v979 = vpack.c.bf16 %v972, %v965
    %v980 = vpack.c.bf16 %v973, %v966
    %988 = vrot.lane.b32.xlu0 %v974, 85
    %v989 = vpop.permute.xlu0 %988
    %990 = vrot.lane.b32.xlu0 %v975, 85
    %v991 = vpop.permute.xlu0 %990
    %992 = vrot.lane.b32.xlu0 %v976, 85
    %v993 = vpop.permute.xlu0 %992
    %994 = vrot.lane.b32.xlu0 %v977, 85
    %v995 = vpop.permute.xlu0 %994
    %996 = vrot.lane.b32.xlu0 %v978, 85
    %v997 = vpop.permute.xlu0 %996
    %998 = vrot.lane.b32.xlu0 %v979, 85
    %v999 = vpop.permute.xlu0 %998
    %1000 = vrot.lane.b32.xlu0 %v980, 85
    %v1001 = vpop.permute.xlu0 %1000
    %vm1002 = vcmask 695296
    %v1003 = vsel %vm1002, %v989, %v991
    %v1004 = vsel %vm1002, %v991, %v993
    %v1005 = vsel %vm1002, %v993, %v995
    %v1006 = vsel %vm1002, %v995, %v997
    %v1007 = vsel %vm1002, %v997, %v999
    %v1008 = vsel %vm1002, %v999, %v1001
    %1016 = vst [vmem:[#allocation3 + $0x2d8] sm:$0xff] %v1003
    %1017 = vst [vmem:[#allocation3 + $0x2e0] sm:$0xff] %v1004
    %1018 = vst [vmem:[#allocation3 + $0x2e8] sm:$0xff] %v1005
    %1019 = vst [vmem:[#allocation3 + $0x2f0] sm:$0xff] %v1006
    %1020 = vst [vmem:[#allocation3 + $0x2f8] sm:$0xff] %v1007
    %1021 = vst [vmem:[#allocation3 + $0x300] sm:$0xff] %v1008
    %1022 = vst.msk [vmem:[#allocation3 + $0x308] sm:$0xff] %vm76, %v1001
    %v1023 = vld [vmem:[#allocation2] sm:$0xff]
    %v1024 = vld [vmem:[#allocation2 + $0x8] sm:$0xff]
    %v1025 = vld [vmem:[#allocation2 + $0x10] sm:$0xff]
    %v1026 = vld [vmem:[#allocation2 + $0x18] sm:$0xff]
    %v1027 = vld [vmem:[#allocation2 + $0x20] sm:$0xff]
    %v1028 = vld [vmem:[#allocation2 + $0x28] sm:$0xff]
    %v1029 = vld [vmem:[#allocation2 + $0x30] sm:$0xff]
    %v1030 = vld [vmem:[#allocation2 + $0x38] sm:$0xff]
    %v1031 = vld [vmem:[#allocation2 + $0x40] sm:$0xff]
    %v1032 = vld [vmem:[#allocation2 + $0x48] sm:$0xff]
    %v1033 = vld [vmem:[#allocation2 + $0x50] sm:$0xff]
    %v1034 = vld [vmem:[#allocation2 + $0x58] sm:$0xff]
    %v1035 = vld [vmem:[#allocation2 + $0x60] sm:$0xff]
    %v1036 = vld [vmem:[#allocation2 + $0x68] sm:$0xff]
    %v1037 = vpack.c.bf16 %v1030, %v1023
    %v1038 = vpack.c.bf16 %v1031, %v1024
    %v1039 = vpack.c.bf16 %v1032, %v1025
    %v1040 = vpack.c.bf16 %v1033, %v1026
    %v1041 = vpack.c.bf16 %v1034, %v1027
    %v1042 = vpack.c.bf16 %v1035, %v1028
    %v1043 = vpack.c.bf16 %v1036, %v1029
    %1051 = vrot.lane.b32.xlu0 %v1037, 84
    %v1052 = vpop.permute.xlu0 %1051
    %1053 = vrot.lane.b32.xlu0 %v1038, 84
    %v1054 = vpop.permute.xlu0 %1053
    %1055 = vrot.lane.b32.xlu0 %v1039, 84
    %v1056 = vpop.permute.xlu0 %1055
    %1057 = vrot.lane.b32.xlu0 %v1040, 84
    %v1058 = vpop.permute.xlu0 %1057
    %1059 = vrot.lane.b32.xlu0 %v1041, 84
    %v1060 = vpop.permute.xlu0 %1059
    %1061 = vrot.lane.b32.xlu0 %v1042, 84
    %v1062 = vpop.permute.xlu0 %1061
    %1063 = vrot.lane.b32.xlu0 %v1043, 84
    %v1064 = vpop.permute.xlu0 %1063
    %vm1065 = vcmask 687104
    %v1066 = vsel %vm1065, %v1052, %v1054
    %v1067 = vsel %vm1065, %v1054, %v1056
    %v1068 = vsel %vm1065, %v1056, %v1058
    %v1069 = vsel %vm1065, %v1058, %v1060
    %v1070 = vsel %vm1065, %v1060, %v1062
    %v1071 = vsel %vm1065, %v1062, %v1064
    %1079 = vst [vmem:[#allocation3 + $0x310] sm:$0xff] %v1066
    %1080 = vst [vmem:[#allocation3 + $0x318] sm:$0xff] %v1067
    %1081 = vst [vmem:[#allocation3 + $0x320] sm:$0xff] %v1068
    %1082 = vst [vmem:[#allocation3 + $0x328] sm:$0xff] %v1069
    %1083 = vst [vmem:[#allocation3 + $0x330] sm:$0xff] %v1070
    %1084 = vst [vmem:[#allocation3 + $0x338] sm:$0xff] %v1071
    %1085 = vst.msk [vmem:[#allocation3 + $0x340] sm:$0xff] %vm76, %v1064
    %v1086 = vld [vmem:[#allocation2] sm:$0xff]
    %v1087 = vld [vmem:[#allocation2 + $0x8] sm:$0xff]
    %v1088 = vld [vmem:[#allocation2 + $0x10] sm:$0xff]
    %v1089 = vld [vmem:[#allocation2 + $0x18] sm:$0xff]
    %v1090 = vld [vmem:[#allocation2 + $0x20] sm:$0xff]
    %v1091 = vld [vmem:[#allocation2 + $0x28] sm:$0xff]
    %v1092 = vld [vmem:[#allocation2 + $0x30] sm:$0xff]
    %v1093 = vld [vmem:[#allocation2 + $0x38] sm:$0xff]
    %v1094 = vld [vmem:[#allocation2 + $0x40] sm:$0xff]
    %v1095 = vld [vmem:[#allocation2 + $0x48] sm:$0xff]
    %v1096 = vld [vmem:[#allocation2 + $0x50] sm:$0xff]
    %v1097 = vld [vmem:[#allocation2 + $0x58] sm:$0xff]
    %v1098 = vld [vmem:[#allocation2 + $0x60] sm:$0xff]
    %v1099 = vld [vmem:[#allocation2 + $0x68] sm:$0xff]
    %v1100 = vpack.c.bf16 %v1093, %v1086
    %v1101 = vpack.c.bf16 %v1094, %v1087
    %v1102 = vpack.c.bf16 %v1095, %v1088
    %v1103 = vpack.c.bf16 %v1096, %v1089
    %v1104 = vpack.c.bf16 %v1097, %v1090
    %v1105 = vpack.c.bf16 %v1098, %v1091
    %v1106 = vpack.c.bf16 %v1099, %v1092
    %1114 = vrot.lane.b32.xlu0 %v1100, 68
    %v1115 = vpop.permute.xlu0 %1114
    %1116 = vrot.lane.b32.xlu0 %v1101, 68
    %v1117 = vpop.permute.xlu0 %1116
    %1118 = vrot.lane.b32.xlu0 %v1102, 68
    %v1119 = vpop.permute.xlu0 %1118
    %1120 = vrot.lane.b32.xlu0 %v1103, 68
    %v1121 = vpop.permute.xlu0 %1120
    %1122 = vrot.lane.b32.xlu0 %v1104, 68
    %v1123 = vpop.permute.xlu0 %1122
    %1124 = vrot.lane.b32.xlu0 %v1105, 68
    %v1125 = vpop.permute.xlu0 %1124
    %1126 = vrot.lane.b32.xlu0 %v1106, 68
    %v1127 = vpop.permute.xlu0 %1126
    %vm1128 = vcmask 556032
    %v1129 = vsel %vm1128, %v1115, %v1117
    %v1130 = vsel %vm1128, %v1117, %v1119
    %v1131 = vsel %vm1128, %v1119, %v1121
    %v1132 = vsel %vm1128, %v1121, %v1123
    %v1133 = vsel %vm1128, %v1123, %v1125
    %v1134 = vsel %vm1128, %v1125, %v1127
    %1142 = vst [vmem:[#allocation3 + $0x348] sm:$0xff] %v1129
    %1143 = vst [vmem:[#allocation3 + $0x350] sm:$0xff] %v1130
    %1144 = vst [vmem:[#allocation3 + $0x358] sm:$0xff] %v1131
    %1145 = vst [vmem:[#allocation3 + $0x360] sm:$0xff] %v1132
    %1146 = vst [vmem:[#allocation3 + $0x368] sm:$0xff] %v1133
    %1147 = vst [vmem:[#allocation3 + $0x370] sm:$0xff] %v1134
    %1148 = vst.msk [vmem:[#allocation3 + $0x378] sm:$0xff] %vm76, %v1127
    %v1149 = vld [vmem:[#allocation2] sm:$0xff]
    %v1150 = vld [vmem:[#allocation2 + $0x8] sm:$0xff]
    %v1151 = vld [vmem:[#allocation2 + $0x10] sm:$0xff]
    %v1152 = vld [vmem:[#allocation2 + $0x18] sm:$0xff]
    %v1153 = vld [vmem:[#allocation2 + $0x20] sm:$0xff]
    %v1154 = vld [vmem:[#allocation2 + $0x28] sm:$0xff]
    %v1155 = vld [vmem:[#allocation2 + $0x30] sm:$0xff]
    %v1156 = vld [vmem:[#allocation2 + $0x38] sm:$0xff]
    %v1157 = vld [vmem:[#allocation2 + $0x40] sm:$0xff]
    %v1158 = vld [vmem:[#allocation2 + $0x48] sm:$0xff]
    %v1159 = vld [vmem:[#allocation2 + $0x50] sm:$0xff]
    %v1160 = vld [vmem:[#allocation2 + $0x58] sm:$0xff]
    %v1161 = vld [vmem:[#allocation2 + $0x60] sm:$0xff]
    %v1162 = vld [vmem:[#allocation2 + $0x68] sm:$0xff]
    %v1163 = vpack.c.bf16 %v1156, %v1149
    %v1164 = vpack.c.bf16 %v1157, %v1150
    %v1165 = vpack.c.bf16 %v1158, %v1151
    %v1166 = vpack.c.bf16 %v1159, %v1152
    %v1167 = vpack.c.bf16 %v1160, %v1153
    %v1168 = vpack.c.bf16 %v1161, %v1154
    %v1169 = vpack.c.bf16 %v1162, %v1155
    %1177 = vrot.lane.b32.xlu0 %v1163, 67
    %v1178 = vpop.permute.xlu0 %1177
    %1179 = vrot.lane.b32.xlu0 %v1164, 67
    %v1180 = vpop.permute.xlu0 %1179
    %1181 = vrot.lane.b32.xlu0 %v1165, 67
    %v1182 = vpop.permute.xlu0 %1181
    %1183 = vrot.lane.b32.xlu0 %v1166, 67
    %v1184 = vpop.permute.xlu0 %1183
    %1185 = vrot.lane.b32.xlu0 %v1167, 67
    %v1186 = vpop.permute.xlu0 %1185
    %1187 = vrot.lane.b32.xlu0 %v1168, 67
    %v1188 = vpop.permute.xlu0 %1187
    %1189 = vrot.lane.b32.xlu0 %v1169, 67
    %v1190 = vpop.permute.xlu0 %1189
    %vm1191 = vcmask 547840
    %v1192 = vsel %vm1191, %v1178, %v1180
    %v1193 = vsel %vm1191, %v1180, %v1182
    %v1194 = vsel %vm1191, %v1182, %v1184
    %v1195 = vsel %vm1191, %v1184, %v1186
    %v1196 = vsel %vm1191, %v1186, %v1188
    %v1197 = vsel %vm1191, %v1188, %v1190
    %1205 = vst [vmem:[#allocation3 + $0x380] sm:$0xff] %v1192
    %1206 = vst [vmem:[#allocation3 + $0x388] sm:$0xff] %v1193
    %1207 = vst [vmem:[#allocation3 + $0x390] sm:$0xff] %v1194
    %1208 = vst [vmem:[#allocation3 + $0x398] sm:$0xff] %v1195
    %1209 = vst [vmem:[#allocation3 + $0x3a0] sm:$0xff] %v1196
    %1210 = vst [vmem:[#allocation3 + $0x3a8] sm:$0xff] %v1197
    %1211 = vst.msk [vmem:[#allocation3 + $0x3b0] sm:$0xff] %vm76, %v1190
    %v1212 = vld [vmem:[#allocation2] sm:$0xff]
    %v1213 = vld [vmem:[#allocation2 + $0x8] sm:$0xff]
    %v1214 = vld [vmem:[#allocation2 + $0x10] sm:$0xff]
    %v1215 = vld [vmem:[#allocation2 + $0x18] sm:$0xff]
    %v1216 = vld [vmem:[#allocation2 + $0x20] sm:$0xff]
    %v1217 = vld [vmem:[#allocation2 + $0x28] sm:$0xff]
    %v1218 = vld [vmem:[#allocation2 + $0x30] sm:$0xff]
    %v1219 = vld [vmem:[#allocation2 + $0x38] sm:$0xff]
    %v1220 = vld [vmem:[#allocation2 + $0x40] sm:$0xff]
    %v1221 = vld [vmem:[#allocation2 + $0x48] sm:$0xff]
    %v1222 = vld [vmem:[#allocation2 + $0x50] sm:$0xff]
    %v1223 = vld [vmem:[#allocation2 + $0x58] sm:$0xff]
    %v1224 = vld [vmem:[#allocation2 + $0x60] sm:$0xff]
    %v1225 = vld [vmem:[#allocation2 + $0x68] sm:$0xff]
    %v1226 = vpack.c.bf16 %v1219, %v1212
    %v1227 = vpack.c.bf16 %v1220, %v1213
    %v1228 = vpack.c.bf16 %v1221, %v1214
    %v1229 = vpack.c.bf16 %v1222, %v1215
    %v1230 = vpack.c.bf16 %v1223, %v1216
    %v1231 = vpack.c.bf16 %v1224, %v1217
    %v1232 = vpack.c.bf16 %v1225, %v1218
    %1240 = vrot.lane.b32.xlu0 %v1226, 66
    %v1241 = vpop.permute.xlu0 %1240
    %1242 = vrot.lane.b32.xlu0 %v1227, 66
    %v1243 = vpop.permute.xlu0 %1242
    %1244 = vrot.lane.b32.xlu0 %v1228, 66
    %v1245 = vpop.permute.xlu0 %1244
    %1246 = vrot.lane.b32.xlu0 %v1229, 66
    %v1247 = vpop.permute.xlu0 %1246
    %1248 = vrot.lane.b32.xlu0 %v1230, 66
    %v1249 = vpop.permute.xlu0 %1248
    %1250 = vrot.lane.b32.xlu0 %v1231, 66
    %v1251 = vpop.permute.xlu0 %1250
    %1252 = vrot.lane.b32.xlu0 %v1232, 66
    %v1253 = vpop.permute.xlu0 %1252
    %vm1254 = vcmask 539648
    %v1255 = vsel %vm1254, %v1241, %v1243
    %v1256 = vsel %vm1254, %v1243, %v1245
    %v1257 = vsel %vm1254, %v1245, %v1247
    %v1258 = vsel %vm1254, %v1247, %v1249
    %v1259 = vsel %vm1254, %v1249, %v1251
    %v1260 = vsel %vm1254, %v1251, %v1253
    %1268 = vst [vmem:[#allocation3 + $0x3b8] sm:$0xff] %v1255
    %1269 = vst [vmem:[#allocation3 + $0x3c0] sm:$0xff] %v1256
    %1270 = vst [vmem:[#allocation3 + $0x3c8] sm:$0xff] %v1257
    %1271 = vst [vmem:[#allocation3 + $0x3d0] sm:$0xff] %v1258
    %1272 = vst [vmem:[#allocation3 + $0x3d8] sm:$0xff] %v1259
    %1273 = vst [vmem:[#allocation3 + $0x3e0] sm:$0xff] %v1260
    %1274 = vst.msk [vmem:[#allocation3 + $0x3e8] sm:$0xff] %vm76, %v1253
    %v1275 = vld [vmem:[#allocation2] sm:$0xff]
    %v1276 = vld [vmem:[#allocation2 + $0x8] sm:$0xff]
    %v1277 = vld [vmem:[#allocation2 + $0x10] sm:$0xff]
    %v1278 = vld [vmem:[#allocation2 + $0x18] sm:$0xff]
    %v1279 = vld [vmem:[#allocation2 + $0x20] sm:$0xff]
    %v1280 = vld [vmem:[#allocation2 + $0x28] sm:$0xff]
    %v1281 = vld [vmem:[#allocation2 + $0x30] sm:$0xff]
    %v1282 = vld [vmem:[#allocation2 + $0x38] sm:$0xff]
    %v1283 = vld [vmem:[#allocation2 + $0x40] sm:$0xff]
    %v1284 = vld [vmem:[#allocation2 + $0x48] sm:$0xff]
    %v1285 = vld [vmem:[#allocation2 + $0x50] sm:$0xff]
    %v1286 = vld [vmem:[#allocation2 + $0x58] sm:$0xff]
    %v1287 = vld [vmem:[#allocation2 + $0x60] sm:$0xff]
    %v1288 = vld [vmem:[#allocation2 + $0x68] sm:$0xff]
    %v1289 = vpack.c.bf16 %v1282, %v1275
    %v1290 = vpack.c.bf16 %v1283, %v1276
    %v1291 = vpack.c.bf16 %v1284, %v1277
    %v1292 = vpack.c.bf16 %v1285, %v1278
    %v1293 = vpack.c.bf16 %v1286, %v1279
    %v1294 = vpack.c.bf16 %v1287, %v1280
    %v1295 = vpack.c.bf16 %v1288, %v1281
    %1303 = vrot.lane.b32.xlu0 %v1289, 65
    %v1304 = vpop.permute.xlu0 %1303
    %1305 = vrot.lane.b32.xlu0 %v1290, 65
    %v1306 = vpop.permute.xlu0 %1305
    %1307 = vrot.lane.b32.xlu0 %v1291, 65
    %v1308 = vpop.permute.xlu0 %1307
    %1309 = vrot.lane.b32.xlu0 %v1292, 65
    %v1310 = vpop.permute.xlu0 %1309
    %1311 = vrot.lane.b32.xlu0 %v1293, 65
    %v1312 = vpop.permute.xlu0 %1311
    %1313 = vrot.lane.b32.xlu0 %v1294, 65
    %v1314 = vpop.permute.xlu0 %1313
    %1315 = vrot.lane.b32.xlu0 %v1295, 65
    %v1316 = vpop.permute.xlu0 %1315
    %vm1317 = vcmask 531456
    %v1318 = vsel %vm1317, %v1304, %v1306
    %v1319 = vsel %vm1317, %v1306, %v1308
    %v1320 = vsel %vm1317, %v1308, %v1310
    %v1321 = vsel %vm1317, %v1310, %v1312
    %v1322 = vsel %vm1317, %v1312, %v1314
    %v1323 = vsel %vm1317, %v1314, %v1316
    %1331 = vst [vmem:[#allocation3 + $0x3f0] sm:$0xff] %v1318
    %1332 = vst [vmem:[#allocation3 + $0x3f8] sm:$0xff] %v1319
    %1333 = vst [vmem:[#allocation3 + $0x400] sm:$0xff] %v1320
    %1334 = vst [vmem:[#allocation3 + $0x408] sm:$0xff] %v1321
    %1335 = vst [vmem:[#allocation3 + $0x410] sm:$0xff] %v1322
    %1336 = vst [vmem:[#allocation3 + $0x418] sm:$0xff] %v1323
    %1337 = vst.msk [vmem:[#allocation3 + $0x420] sm:$0xff] %vm76, %v1316
    %v1338 = vld [vmem:[#allocation2] sm:$0xff]
    %v1339 = vld [vmem:[#allocation2 + $0x8] sm:$0xff]
    %v1340 = vld [vmem:[#allocation2 + $0x10] sm:$0xff]
    %v1341 = vld [vmem:[#allocation2 + $0x18] sm:$0xff]
    %v1342 = vld [vmem:[#allocation2 + $0x20] sm:$0xff]
    %v1343 = vld [vmem:[#allocation2 + $0x28] sm:$0xff]
    %v1344 = vld [vmem:[#allocation2 + $0x30] sm:$0xff]
    %v1345 = vld [vmem:[#allocation2 + $0x38] sm:$0xff]
    %v1346 = vld [vmem:[#allocation2 + $0x40] sm:$0xff]
    %v1347 = vld [vmem:[#allocation2 + $0x48] sm:$0xff]
    %v1348 = vld [vmem:[#allocation2 + $0x50] sm:$0xff]
    %v1349 = vld [vmem:[#allocation2 + $0x58] sm:$0xff]
    %v1350 = vld [vmem:[#allocation2 + $0x60] sm:$0xff]
    %v1351 = vld [vmem:[#allocation2 + $0x68] sm:$0xff]
    %v1352 = vpack.c.bf16 %v1345, %v1338
    %v1353 = vpack.c.bf16 %v1346, %v1339
    %v1354 = vpack.c.bf16 %v1347, %v1340
    %v1355 = vpack.c.bf16 %v1348, %v1341
    %v1356 = vpack.c.bf16 %v1349, %v1342
    %v1357 = vpack.c.bf16 %v1350, %v1343
    %v1358 = vpack.c.bf16 %v1351, %v1344
    %1366 = vrot.lane.b32.xlu0 %v1352, 64
    %v1367 = vpop.permute.xlu0 %1366
    %1368 = vrot.lane.b32.xlu0 %v1353, 64
    %v1369 = vpop.permute.xlu0 %1368
    %1370 = vrot.lane.b32.xlu0 %v1354, 64
    %v1371 = vpop.permute.xlu0 %1370
    %1372 = vrot.lane.b32.xlu0 %v1355, 64
    %v1373 = vpop.permute.xlu0 %1372
    %1374 = vrot.lane.b32.xlu0 %v1356, 64
    %v1375 = vpop.permute.xlu0 %1374
    %1376 = vrot.lane.b32.xlu0 %v1357, 64
    %v1377 = vpop.permute.xlu0 %1376
    %1378 = vrot.lane.b32.xlu0 %v1358, 64
    %v1379 = vpop.permute.xlu0 %1378
    %vm1380 = vcmask 523264
    %v1381 = vsel %vm1380, %v1367, %v1369
    %v1382 = vsel %vm1380, %v1369, %v1371
    %v1383 = vsel %vm1380, %v1371, %v1373
    %v1384 = vsel %vm1380, %v1373, %v1375
    %v1385 = vsel %vm1380, %v1375, %v1377
    %v1386 = vsel %vm1380, %v1377, %v1379
    %1394 = vst [vmem:[#allocation3 + $0x428] sm:$0xff] %v1381
    %1395 = vst [vmem:[#allocation3 + $0x430] sm:$0xff] %v1382
    %1396 = vst [vmem:[#allocation3 + $0x438] sm:$0xff] %v1383
    %1397 = vst [vmem:[#allocation3 + $0x440] sm:$0xff] %v1384
    %1398 = vst [vmem:[#allocation3 + $0x448] sm:$0xff] %v1385
    %1399 = vst [vmem:[#allocation3 + $0x450] sm:$0xff] %v1386
    %1400 = vst.msk [vmem:[#allocation3 + $0x458] sm:$0xff] %vm76, %v1379
    %v1401 = vld [vmem:[#allocation2] sm:$0xff]
    %v1402 = vld [vmem:[#allocation2 + $0x8] sm:$0xff]
    %v1403 = vld [vmem:[#allocation2 + $0x10] sm:$0xff]
    %v1404 = vld [vmem:[#allocation2 + $0x18] sm:$0xff]
    %v1405 = vld [vmem:[#allocation2 + $0x20] sm:$0xff]
    %v1406 = vld [vmem:[#allocation2 + $0x28] sm:$0xff]
    %v1407 = vld [vmem:[#allocation2 + $0x30] sm:$0xff]
    %v1408 = vld [vmem:[#allocation2 + $0x38] sm:$0xff]
    %v1409 = vld [vmem:[#allocation2 + $0x40] sm:$0xff]
    %v1410 = vld [vmem:[#allocation2 + $0x48] sm:$0xff]
    %v1411 = vld [vmem:[#allocation2 + $0x50] sm:$0xff]
    %v1412 = vld [vmem:[#allocation2 + $0x58] sm:$0xff]
    %v1413 = vld [vmem:[#allocation2 + $0x60] sm:$0xff]
    %v1414 = vld [vmem:[#allocation2 + $0x68] sm:$0xff]
    %v1415 = vpack.c.bf16 %v1408, %v1401
    %v1416 = vpack.c.bf16 %v1409, %v1402
    %v1417 = vpack.c.bf16 %v1410, %v1403
    %v1418 = vpack.c.bf16 %v1411, %v1404
    %v1419 = vpack.c.bf16 %v1412, %v1405
    %v1420 = vpack.c.bf16 %v1413, %v1406
    %v1421 = vpack.c.bf16 %v1414, %v1407
    %1429 = vrot.lane.b32.xlu0 %v1415, 48
    %v1430 = vpop.permute.xlu0 %1429
    %1431 = vrot.lane.b32.xlu0 %v1416, 48
    %v1432 = vpop.permute.xlu0 %1431
    %1433 = vrot.lane.b32.xlu0 %v1417, 48
    %v1434 = vpop.permute.xlu0 %1433
    %1435 = vrot.lane.b32.xlu0 %v1418, 48
    %v1436 = vpop.permute.xlu0 %1435
    %1437 = vrot.lane.b32.xlu0 %v1419, 48
    %v1438 = vpop.permute.xlu0 %1437
    %1439 = vrot.lane.b32.xlu0 %v1420, 48
    %v1440 = vpop.permute.xlu0 %1439
    %1441 = vrot.lane.b32.xlu0 %v1421, 48
    %v1442 = vpop.permute.xlu0 %1441
    %vm1443 = vcmask 392192
    %v1444 = vsel %vm1443, %v1430, %v1432
    %v1445 = vsel %vm1443, %v1432, %v1434
    %v1446 = vsel %vm1443, %v1434, %v1436
    %v1447 = vsel %vm1443, %v1436, %v1438
    %v1448 = vsel %vm1443, %v1438, %v1440
    %v1449 = vsel %vm1443, %v1440, %v1442
    %1457 = vst [vmem:[#allocation3 + $0x460] sm:$0xff] %v1444
    %1458 = vst [vmem:[#allocation3 + $0x468] sm:$0xff] %v1445
    %1459 = vst [vmem:[#allocation3 + $0x470] sm:$0xff] %v1446
    %1460 = vst [vmem:[#allocation3 + $0x478] sm:$0xff] %v1447
    %1461 = vst [vmem:[#allocation3 + $0x480] sm:$0xff] %v1448
    %1462 = vst [vmem:[#allocation3 + $0x488] sm:$0xff] %v1449
    %1463 = vst.msk [vmem:[#allocation3 + $0x490] sm:$0xff] %vm76, %v1442
    %v1464 = vld [vmem:[#allocation2] sm:$0xff]
    %v1465 = vld [vmem:[#allocation2 + $0x8] sm:$0xff]
    %v1466 = vld [vmem:[#allocation2 + $0x10] sm:$0xff]
    %v1467 = vld [vmem:[#allocation2 + $0x18] sm:$0xff]
    %v1468 = vld [vmem:[#allocation2 + $0x20] sm:$0xff]
    %v1469 = vld [vmem:[#allocation2 + $0x28] sm:$0xff]
    %v1470 = vld [vmem:[#allocation2 + $0x30] sm:$0xff]
    %v1471 = vld [vmem:[#allocation2 + $0x38] sm:$0xff]
    %v1472 = vld [vmem:[#allocation2 + $0x40] sm:$0xff]
    %v1473 = vld [vmem:[#allocation2 + $0x48] sm:$0xff]
    %v1474 = vld [vmem:[#allocation2 + $0x50] sm:$0xff]
    %v1475 = vld [vmem:[#allocation2 + $0x58] sm:$0xff]
    %v1476 = vld [vmem:[#allocation2 + $0x60] sm:$0xff]
    %v1477 = vld [vmem:[#allocation2 + $0x68] sm:$0xff]
    %v1478 = vpack.c.bf16 %v1471, %v1464
    %v1479 = vpack.c.bf16 %v1472, %v1465
    %v1480 = vpack.c.bf16 %v1473, %v1466
    %v1481 = vpack.c.bf16 %v1474, %v1467
    %v1482 = vpack.c.bf16 %v1475, %v1468
    %v1483 = vpack.c.bf16 %v1476, %v1469
    %v1484 = vpack.c.bf16 %v1477, %v1470
    %1492 = vrot.lane.b32.xlu0 %v1478, 47
    %v1493 = vpop.permute.xlu0 %1492
    %1494 = vrot.lane.b32.xlu0 %v1479, 47
    %v1495 = vpop.permute.xlu0 %1494
    %1496 = vrot.lane.b32.xlu0 %v1480, 47
    %v1497 = vpop.permute.xlu0 %1496
    %1498 = vrot.lane.b32.xlu0 %v1481, 47
    %v1499 = vpop.permute.xlu0 %1498
    %1500 = vrot.lane.b32.xlu0 %v1482, 47
    %v1501 = vpop.permute.xlu0 %1500
    %1502 = vrot.lane.b32.xlu0 %v1483, 47
    %v1503 = vpop.permute.xlu0 %1502
    %1504 = vrot.lane.b32.xlu0 %v1484, 47
    %v1505 = vpop.permute.xlu0 %1504
    %vm1506 = vcmask 384000
    %v1507 = vsel %vm1506, %v1493, %v1495
    %v1508 = vsel %vm1506, %v1495, %v1497
    %v1509 = vsel %vm1506, %v1497, %v1499
    %v1510 = vsel %vm1506, %v1499, %v1501
    %v1511 = vsel %vm1506, %v1501, %v1503
    %v1512 = vsel %vm1506, %v1503, %v1505
    %1520 = vst [vmem:[#allocation3 + $0x498] sm:$0xff] %v1507
    %1521 = vst [vmem:[#allocation3 + $0x4a0] sm:$0xff] %v1508
    %1522 = vst [vmem:[#allocation3 + $0x4a8] sm:$0xff] %v1509
    %1523 = vst [vmem:[#allocation3 + $0x4b0] sm:$0xff] %v1510
    %1524 = vst [vmem:[#allocation3 + $0x4b8] sm:$0xff] %v1511
    %1525 = vst [vmem:[#allocation3 + $0x4c0] sm:$0xff] %v1512
    %1526 = vst.msk [vmem:[#allocation3 + $0x4c8] sm:$0xff] %vm76, %v1505
    %v1527 = vld [vmem:[#allocation2] sm:$0xff]
    %v1528 = vld [vmem:[#allocation2 + $0x8] sm:$0xff]
    %v1529 = vld [vmem:[#allocation2 + $0x10] sm:$0xff]
    %v1530 = vld [vmem:[#allocation2 + $0x18] sm:$0xff]
    %v1531 = vld [vmem:[#allocation2 + $0x20] sm:$0xff]
    %v1532 = vld [vmem:[#allocation2 + $0x28] sm:$0xff]
    %v1533 = vld [vmem:[#allocation2 + $0x30] sm:$0xff]
    %v1534 = vld [vmem:[#allocation2 + $0x38] sm:$0xff]
    %v1535 = vld [vmem:[#allocation2 + $0x40] sm:$0xff]
    %v1536 = vld [vmem:[#allocation2 + $0x48] sm:$0xff]
    %v1537 = vld [vmem:[#allocation2 + $0x50] sm:$0xff]
    %v1538 = vld [vmem:[#allocation2 + $0x58] sm:$0xff]
    %v1539 = vld [vmem:[#allocation2 + $0x60] sm:$0xff]
    %v1540 = vld [vmem:[#allocation2 + $0x68] sm:$0xff]
    %v1541 = vpack.c.bf16 %v1534, %v1527
    %v1542 = vpack.c.bf16 %v1535, %v1528
    %v1543 = vpack.c.bf16 %v1536, %v1529
    %v1544 = vpack.c.bf16 %v1537, %v1530
    %v1545 = vpack.c.bf16 %v1538, %v1531
    %v1546 = vpack.c.bf16 %v1539, %v1532
    %v1547 = vpack.c.bf16 %v1540, %v1533
    %1555 = vrot.lane.b32.xlu0 %v1541, 46
    %v1556 = vpop.permute.xlu0 %1555
    %1557 = vrot.lane.b32.xlu0 %v1542, 46
    %v1558 = vpop.permute.xlu0 %1557
    %1559 = vrot.lane.b32.xlu0 %v1543, 46
    %v1560 = vpop.permute.xlu0 %1559
    %1561 = vrot.lane.b32.xlu0 %v1544, 46
    %v1562 = vpop.permute.xlu0 %1561
    %1563 = vrot.lane.b32.xlu0 %v1545, 46
    %v1564 = vpop.permute.xlu0 %1563
    %1565 = vrot.lane.b32.xlu0 %v1546, 46
    %v1566 = vpop.permute.xlu0 %1565
    %1567 = vrot.lane.b32.xlu0 %v1547, 46
    %v1568 = vpop.permute.xlu0 %1567
    %vm1569 = vcmask 375808
    %v1570 = vsel %vm1569, %v1556, %v1558
    %v1571 = vsel %vm1569, %v1558, %v1560
    %v1572 = vsel %vm1569, %v1560, %v1562
    %v1573 = vsel %vm1569, %v1562, %v1564
    %v1574 = vsel %vm1569, %v1564, %v1566
    %v1575 = vsel %vm1569, %v1566, %v1568
    %1583 = vst [vmem:[#allocation3 + $0x4d0] sm:$0xff] %v1570
    %1584 = vst [vmem:[#allocation3 + $0x4d8] sm:$0xff] %v1571
    %1585 = vst [vmem:[#allocation3 + $0x4e0] sm:$0xff] %v1572
    %1586 = vst [vmem:[#allocation3 + $0x4e8] sm:$0xff] %v1573
    %1587 = vst [vmem:[#allocation3 + $0x4f0] sm:$0xff] %v1574
    %1588 = vst [vmem:[#allocation3 + $0x4f8] sm:$0xff] %v1575
    %1589 = vst.msk [vmem:[#allocation3 + $0x500] sm:$0xff] %vm76, %v1568
    %v1590 = vld [vmem:[#allocation2] sm:$0xff]
    %v1591 = vld [vmem:[#allocation2 + $0x8] sm:$0xff]
    %v1592 = vld [vmem:[#allocation2 + $0x10] sm:$0xff]
    %v1593 = vld [vmem:[#allocation2 + $0x18] sm:$0xff]
    %v1594 = vld [vmem:[#allocation2 + $0x20] sm:$0xff]
    %v1595 = vld [vmem:[#allocation2 + $0x28] sm:$0xff]
    %v1596 = vld [vmem:[#allocation2 + $0x30] sm:$0xff]
    %v1597 = vld [vmem:[#allocation2 + $0x38] sm:$0xff]
    %v1598 = vld [vmem:[#allocation2 + $0x40] sm:$0xff]
    %v1599 = vld [vmem:[#allocation2 + $0x48] sm:$0xff]
    %v1600 = vld [vmem:[#allocation2 + $0x50] sm:$0xff]
    %v1601 = vld [vmem:[#allocation2 + $0x58] sm:$0xff]
    %v1602 = vld [vmem:[#allocation2 + $0x60] sm:$0xff]
    %v1603 = vld [vmem:[#allocation2 + $0x68] sm:$0xff]
    %v1604 = vpack.c.bf16 %v1597, %v1590
    %v1605 = vpack.c.bf16 %v1598, %v1591
    %v1606 = vpack.c.bf16 %v1599, %v1592
    %v1607 = vpack.c.bf16 %v1600, %v1593
    %v1608 = vpack.c.bf16 %v1601, %v1594
    %v1609 = vpack.c.bf16 %v1602, %v1595
    %v1610 = vpack.c.bf16 %v1603, %v1596
    %1618 = vrot.lane.b32.xlu0 %v1604, 45
    %v1619 = vpop.permute.xlu0 %1618
    %1620 = vrot.lane.b32.xlu0 %v1605, 45
    %v1621 = vpop.permute.xlu0 %1620
    %1622 = vrot.lane.b32.xlu0 %v1606, 45
    %v1623 = vpop.permute.xlu0 %1622
    %1624 = vrot.lane.b32.xlu0 %v1607, 45
    %v1625 = vpop.permute.xlu0 %1624
    %1626 = vrot.lane.b32.xlu0 %v1608, 45
    %v1627 = vpop.permute.xlu0 %1626
    %1628 = vrot.lane.b32.xlu0 %v1609, 45
    %v1629 = vpop.permute.xlu0 %1628
    %1630 = vrot.lane.b32.xlu0 %v1610, 45
    %v1631 = vpop.permute.xlu0 %1630
    %vm1632 = vcmask 367616
    %v1633 = vsel %vm1632, %v1619, %v1621
    %v1634 = vsel %vm1632, %v1621, %v1623
    %v1635 = vsel %vm1632, %v1623, %v1625
    %v1636 = vsel %vm1632, %v1625, %v1627
    %v1637 = vsel %vm1632, %v1627, %v1629
    %v1638 = vsel %vm1632, %v1629, %v1631
    %1646 = vst [vmem:[#allocation3 + $0x508] sm:$0xff] %v1633
    %1647 = vst [vmem:[#allocation3 + $0x510] sm:$0xff] %v1634
    %1648 = vst [vmem:[#allocation3 + $0x518] sm:$0xff] %v1635
    %1649 = vst [vmem:[#allocation3 + $0x520] sm:$0xff] %v1636
    %1650 = vst [vmem:[#allocation3 + $0x528] sm:$0xff] %v1637
    %1651 = vst [vmem:[#allocation3 + $0x530] sm:$0xff] %v1638
    %1652 = vst.msk [vmem:[#allocation3 + $0x538] sm:$0xff] %vm76, %v1631
    %v1653 = vld [vmem:[#allocation2] sm:$0xff]
    %v1654 = vld [vmem:[#allocation2 + $0x8] sm:$0xff]
    %v1655 = vld [vmem:[#allocation2 + $0x10] sm:$0xff]
    %v1656 = vld [vmem:[#allocation2 + $0x18] sm:$0xff]
    %v1657 = vld [vmem:[#allocation2 + $0x20] sm:$0xff]
    %v1658 = vld [vmem:[#allocation2 + $0x28] sm:$0xff]
    %v1659 = vld [vmem:[#allocation2 + $0x30] sm:$0xff]
    %v1660 = vld [vmem:[#allocation2 + $0x38] sm:$0xff]
    %v1661 = vld [vmem:[#allocation2 + $0x40] sm:$0xff]
    %v1662 = vld [vmem:[#allocation2 + $0x48] sm:$0xff]
    %v1663 = vld [vmem:[#allocation2 + $0x50] sm:$0xff]
    %v1664 = vld [vmem:[#allocation2 + $0x58] sm:$0xff]
    %v1665 = vld [vmem:[#allocation2 + $0x60] sm:$0xff]
    %v1666 = vld [vmem:[#allocation2 + $0x68] sm:$0xff]
    %v1667 = vpack.c.bf16 %v1660, %v1653
    %v1668 = vpack.c.bf16 %v1661, %v1654
    %v1669 = vpack.c.bf16 %v1662, %v1655
    %v1670 = vpack.c.bf16 %v1663, %v1656
    %v1671 = vpack.c.bf16 %v1664, %v1657
    %v1672 = vpack.c.bf16 %v1665, %v1658
    %v1673 = vpack.c.bf16 %v1666, %v1659
    %1681 = vrot.lane.b32.xlu0 %v1667, 44
    %v1682 = vpop.permute.xlu0 %1681
    %1683 = vrot.lane.b32.xlu0 %v1668, 44
    %v1684 = vpop.permute.xlu0 %1683
    %1685 = vrot.lane.b32.xlu0 %v1669, 44
    %v1686 = vpop.permute.xlu0 %1685
    %1687 = vrot.lane.b32.xlu0 %v1670, 44
    %v1688 = vpop.permute.xlu0 %1687
    %1689 = vrot.lane.b32.xlu0 %v1671, 44
    %v1690 = vpop.permute.xlu0 %1689
    %1691 = vrot.lane.b32.xlu0 %v1672, 44
    %v1692 = vpop.permute.xlu0 %1691
    %1693 = vrot.lane.b32.xlu0 %v1673, 44
    %v1694 = vpop.permute.xlu0 %1693
    %vm1695 = vcmask 359424
    %v1696 = vsel %vm1695, %v1682, %v1684
    %v1697 = vsel %vm1695, %v1684, %v1686
    %v1698 = vsel %vm1695, %v1686, %v1688
    %v1699 = vsel %vm1695, %v1688, %v1690
    %v1700 = vsel %vm1695, %v1690, %v1692
    %v1701 = vsel %vm1695, %v1692, %v1694
    %1709 = vst [vmem:[#allocation3 + $0x540] sm:$0xff] %v1696
    %1710 = vst [vmem:[#allocation3 + $0x548] sm:$0xff] %v1697
    %1711 = vst [vmem:[#allocation3 + $0x550] sm:$0xff] %v1698
    %1712 = vst [vmem:[#allocation3 + $0x558] sm:$0xff] %v1699
    %1713 = vst [vmem:[#allocation3 + $0x560] sm:$0xff] %v1700
    %1714 = vst [vmem:[#allocation3 + $0x568] sm:$0xff] %v1701
    %1715 = vst.msk [vmem:[#allocation3 + $0x570] sm:$0xff] %vm76, %v1694
    %v1716 = vld [vmem:[#allocation7] sm:$0xff]
    %v1717 = vld [vmem:[#allocation7 + $0x8] sm:$0xff]
    %v1718 = vld [vmem:[#allocation7 + $0x10] sm:$0xff]
    %v1719 = vld [vmem:[#allocation7 + $0x18] sm:$0xff]
    %v1720 = vld [vmem:[#allocation9] sm:$0xff]
    %v1721 = vld [vmem:[#allocation9 + $0x8] sm:$0xff]
    %v1722 = vld [vmem:[#allocation3] sm:$0xff]
    %v1723 = vld [vmem:[#allocation3 + $0x8] sm:$0xff]
    %v1724 = vld [vmem:[#allocation3 + $0x10] sm:$0xff]
    %v1725 = vld [vmem:[#allocation3 + $0x18] sm:$0xff]
    %v1726 = vld [vmem:[#allocation3 + $0x20] sm:$0xff]
    %v1727 = vld [vmem:[#allocation3 + $0x28] sm:$0xff]
    %v1728 = vld [vmem:[#allocation3 + $0x30] sm:$0xff]
    %v1729 = vld [vmem:[#allocation3 + $0x38] sm:$0xff]
    %v1730 = vld [vmem:[#allocation3 + $0x40] sm:$0xff]
    %v1731 = vld [vmem:[#allocation3 + $0x48] sm:$0xff]
    %v1732 = vld [vmem:[#allocation3 + $0x50] sm:$0xff]
    %v1733 = vld [vmem:[#allocation3 + $0x58] sm:$0xff]
    %v1734 = vld [vmem:[#allocation3 + $0x60] sm:$0xff]
    %v1735 = vld [vmem:[#allocation3 + $0x68] sm:$0xff]
    %v1736 = vld [vmem:[#allocation3 + $0x70] sm:$0xff]
    %v1737 = vld [vmem:[#allocation3 + $0x78] sm:$0xff]
    %v1738 = vld [vmem:[#allocation3 + $0x80] sm:$0xff]
    %v1739 = vld [vmem:[#allocation3 + $0x88] sm:$0xff]
    %v1740 = vld [vmem:[#allocation3 + $0x90] sm:$0xff]
    %v1741 = vld [vmem:[#allocation3 + $0x98] sm:$0xff]
    %v1742 = vld [vmem:[#allocation3 + $0xa0] sm:$0xff]
    %v1743 = vld [vmem:[#allocation3 + $0xa8] sm:$0xff]
    %v1744 = vld [vmem:[#allocation3 + $0xb0] sm:$0xff]
    %v1745 = vld [vmem:[#allocation3 + $0xb8] sm:$0xff]
    %v1746 = vld [vmem:[#allocation3 + $0xc0] sm:$0xff]
    %v1747 = vld [vmem:[#allocation3 + $0xc8] sm:$0xff]
    %v1748 = vld [vmem:[#allocation3 + $0xd0] sm:$0xff]
    %v1749 = vld [vmem:[#allocation3 + $0xd8] sm:$0xff]
    %v1750 = vld [vmem:[#allocation3 + $0xe0] sm:$0xff]
    %v1751 = vld [vmem:[#allocation3 + $0xe8] sm:$0xff]
    %v1752 = vld [vmem:[#allocation3 + $0xf0] sm:$0xff]
    %v1753 = vld [vmem:[#allocation3 + $0xf8] sm:$0xff]
    %v1754 = vld [vmem:[#allocation3 + $0x100] sm:$0xff]
    %v1755 = vld [vmem:[#allocation3 + $0x108] sm:$0xff]
    %v1756 = vld [vmem:[#allocation3 + $0x110] sm:$0xff]
    %v1757 = vld [vmem:[#allocation3 + $0x118] sm:$0xff]
    %v1758 = vld [vmem:[#allocation3 + $0x120] sm:$0xff]
    %v1759 = vld [vmem:[#allocation3 + $0x128] sm:$0xff]
    %v1760 = vld [vmem:[#allocation3 + $0x130] sm:$0xff]
    %v1761 = vld [vmem:[#allocation3 + $0x138] sm:$0xff]
    %v1762 = vld [vmem:[#allocation3 + $0x140] sm:$0xff]
    %v1763 = vld [vmem:[#allocation3 + $0x148] sm:$0xff]
    %v1764 = vld [vmem:[#allocation3 + $0x150] sm:$0xff]
    %v1765 = vld [vmem:[#allocation3 + $0x158] sm:$0xff]
    %v1766 = vld [vmem:[#allocation3 + $0x160] sm:$0xff]
    %v1767 = vld [vmem:[#allocation3 + $0x168] sm:$0xff]
    %v1768 = vld [vmem:[#allocation3 + $0x170] sm:$0xff]
    %v1769 = vld [vmem:[#allocation3 + $0x178] sm:$0xff]
    %v1770 = vld [vmem:[#allocation3 + $0x180] sm:$0xff]
    %v1771 = vld [vmem:[#allocation3 + $0x188] sm:$0xff]
    %v1772 = vld [vmem:[#allocation3 + $0x190] sm:$0xff]
    %v1773 = vld [vmem:[#allocation3 + $0x198] sm:$0xff]
    %v1774 = vld [vmem:[#allocation3 + $0x1a0] sm:$0xff]
    %v1775 = vld [vmem:[#allocation3 + $0x1a8] sm:$0xff]
    %v1776 = vld [vmem:[#allocation3 + $0x1b0] sm:$0xff]
    %v1777 = vld [vmem:[#allocation3 + $0x1b8] sm:$0xff]
    %v1778 = vld [vmem:[#allocation3 + $0x1c0] sm:$0xff]
    %v1779 = vld [vmem:[#allocation3 + $0x1c8] sm:$0xff]
    %v1780 = vld [vmem:[#allocation3 + $0x1d0] sm:$0xff]
    %v1781 = vld [vmem:[#allocation3 + $0x1d8] sm:$0xff]
    %v1782 = vld [vmem:[#allocation3 + $0x1e0] sm:$0xff]
    %v1783 = vld [vmem:[#allocation3 + $0x1e8] sm:$0xff]
    %v1784 = vld [vmem:[#allocation3 + $0x1f0] sm:$0xff]
    %v1785 = vld [vmem:[#allocation3 + $0x1f8] sm:$0xff]
    %v1786 = vld [vmem:[#allocation3 + $0x200] sm:$0xff]
    %v1787 = vld [vmem:[#allocation3 + $0x208] sm:$0xff]
    %v1788 = vld [vmem:[#allocation3 + $0x210] sm:$0xff]
    %v1789 = vld [vmem:[#allocation3 + $0x218] sm:$0xff]
    %v1790 = vld [vmem:[#allocation3 + $0x220] sm:$0xff]
    %v1791 = vld [vmem:[#allocation3 + $0x228] sm:$0xff]
    %v1792 = vld [vmem:[#allocation3 + $0x230] sm:$0xff]
    %v1793 = vld [vmem:[#allocation3 + $0x238] sm:$0xff]
    %v1794 = vld [vmem:[#allocation3 + $0x240] sm:$0xff]
    %v1795 = vld [vmem:[#allocation3 + $0x248] sm:$0xff]
    %v1796 = vld [vmem:[#allocation3 + $0x250] sm:$0xff]
    %v1797 = vld [vmem:[#allocation3 + $0x258] sm:$0xff]
    %v1798 = vld [vmem:[#allocation3 + $0x260] sm:$0xff]
    %v1799 = vld [vmem:[#allocation3 + $0x268] sm:$0xff]
    %v1800 = vld [vmem:[#allocation3 + $0x270] sm:$0xff]
    %v1801 = vld [vmem:[#allocation3 + $0x278] sm:$0xff]
    %v1802 = vld [vmem:[#allocation3 + $0x280] sm:$0xff]
    %v1803 = vld [vmem:[#allocation3 + $0x288] sm:$0xff]
    %v1804 = vld [vmem:[#allocation3 + $0x290] sm:$0xff]
    %v1805 = vld [vmem:[#allocation3 + $0x298] sm:$0xff]
    %v1806 = vld [vmem:[#allocation3 + $0x2a0] sm:$0xff]
    %v1807 = vld [vmem:[#allocation3 + $0x2a8] sm:$0xff]
    %v1808 = vld [vmem:[#allocation3 + $0x2b0] sm:$0xff]
    %v1809 = vld [vmem:[#allocation3 + $0x2b8] sm:$0xff]
    %v1810 = vld [vmem:[#allocation3 + $0x2c0] sm:$0xff]
    %v1811 = vld [vmem:[#allocation3 + $0x2c8] sm:$0xff]
    %v1812 = vld [vmem:[#allocation3 + $0x2d0] sm:$0xff]
    %v1813 = vld [vmem:[#allocation3 + $0x2d8] sm:$0xff]
    %v1814 = vld [vmem:[#allocation3 + $0x2e0] sm:$0xff]
    %v1815 = vld [vmem:[#allocation3 + $0x2e8] sm:$0xff]
    %v1816 = vld [vmem:[#allocation3 + $0x2f0] sm:$0xff]
    %v1817 = vld [vmem:[#allocation3 + $0x2f8] sm:$0xff]
    %v1818 = vld [vmem:[#allocation3 + $0x300] sm:$0xff]
    %v1819 = vld [vmem:[#allocation3 + $0x308] sm:$0xff]
    %v1820 = vld [vmem:[#allocation3 + $0x310] sm:$0xff]
    %v1821 = vld [vmem:[#allocation3 + $0x318] sm:$0xff]
    %v1822 = vld [vmem:[#allocation3 + $0x320] sm:$0xff]
    %v1823 = vld [vmem:[#allocation3 + $0x328] sm:$0xff]
    %v1824 = vld [vmem:[#allocation3 + $0x330] sm:$0xff]
    %v1825 = vld [vmem:[#allocation3 + $0x338] sm:$0xff]
    %v1826 = vld [vmem:[#allocation3 + $0x340] sm:$0xff]
    %v1827 = vld [vmem:[#allocation3 + $0x348] sm:$0xff]
    %v1828 = vld [vmem:[#allocation3 + $0x350] sm:$0xff]
    %v1829 = vld [vmem:[#allocation3 + $0x358] sm:$0xff]
    %v1830 = vld [vmem:[#allocation3 + $0x360] sm:$0xff]
    %v1831 = vld [vmem:[#allocation3 + $0x368] sm:$0xff]
    %v1832 = vld [vmem:[#allocation3 + $0x370] sm:$0xff]
    %v1833 = vld [vmem:[#allocation3 + $0x378] sm:$0xff]
    %v1834 = vld [vmem:[#allocation3 + $0x380] sm:$0xff]
    %v1835 = vld [vmem:[#allocation3 + $0x388] sm:$0xff]
    %v1836 = vld [vmem:[#allocation3 + $0x390] sm:$0xff]
    %v1837 = vld [vmem:[#allocation3 + $0x398] sm:$0xff]
    %v1838 = vld [vmem:[#allocation3 + $0x3a0] sm:$0xff]
    %v1839 = vld [vmem:[#allocation3 + $0x3a8] sm:$0xff]
    %v1840 = vld [vmem:[#allocation3 + $0x3b0] sm:$0xff]
    %v1841 = vld [vmem:[#allocation3 + $0x3b8] sm:$0xff]
    %v1842 = vld [vmem:[#allocation3 + $0x3c0] sm:$0xff]
    %v1843 = vld [vmem:[#allocation3 + $0x3c8] sm:$0xff]
    %v1844 = vld [vmem:[#allocation3 + $0x3d0] sm:$0xff]
    %v1845 = vld [vmem:[#allocation3 + $0x3d8] sm:$0xff]
    %v1846 = vld [vmem:[#allocation3 + $0x3e0] sm:$0xff]
    %v1847 = vld [vmem:[#allocation3 + $0x3e8] sm:$0xff]
    %v1848 = vld [vmem:[#allocation3 + $0x3f0] sm:$0xff]
    %v1849 = vld [vmem:[#allocation3 + $0x3f8] sm:$0xff]
    %v1850 = vld [vmem:[#allocation3 + $0x400] sm:$0xff]
    %v1851 = vld [vmem:[#allocation3 + $0x408] sm:$0xff]
    %v1852 = vld [vmem:[#allocation3 + $0x410] sm:$0xff]
    %v1853 = vld [vmem:[#allocation3 + $0x418] sm:$0xff]
    %v1854 = vld [vmem:[#allocation3 + $0x420] sm:$0xff]
    %v1855 = vld [vmem:[#allocation3 + $0x428] sm:$0xff]
    %v1856 = vld [vmem:[#allocation3 + $0x430] sm:$0xff]
    %v1857 = vld [vmem:[#allocation3 + $0x438] sm:$0xff]
    %v1858 = vld [vmem:[#allocation3 + $0x440] sm:$0xff]
    %v1859 = vld [vmem:[#allocation3 + $0x448] sm:$0xff]
    %v1860 = vld [vmem:[#allocation3 + $0x450] sm:$0xff]
    %v1861 = vld [vmem:[#allocation3 + $0x458] sm:$0xff]
    %v1862 = vld [vmem:[#allocation3 + $0x460] sm:$0xff]
    %v1863 = vld [vmem:[#allocation3 + $0x468] sm:$0xff]
    %v1864 = vld [vmem:[#allocation3 + $0x470] sm:$0xff]
    %v1865 = vld [vmem:[#allocation3 + $0x478] sm:$0xff]
    %v1866 = vld [vmem:[#allocation3 + $0x480] sm:$0xff]
    %v1867 = vld [vmem:[#allocation3 + $0x488] sm:$0xff]
    %v1868 = vld [vmem:[#allocation3 + $0x490] sm:$0xff]
    %v1869 = vld [vmem:[#allocation3 + $0x498] sm:$0xff]
    %v1870 = vld [vmem:[#allocation3 + $0x4a0] sm:$0xff]
    %v1871 = vld [vmem:[#allocation3 + $0x4a8] sm:$0xff]
    %v1872 = vld [vmem:[#allocation3 + $0x4b0] sm:$0xff]
    %v1873 = vld [vmem:[#allocation3 + $0x4b8] sm:$0xff]
    %v1874 = vld [vmem:[#allocation3 + $0x4c0] sm:$0xff]
    %v1875 = vld [vmem:[#allocation3 + $0x4c8] sm:$0xff]
    %v1876 = vld [vmem:[#allocation3 + $0x4d0] sm:$0xff]
    %v1877 = vld [vmem:[#allocation3 + $0x4d8] sm:$0xff]
    %v1878 = vld [vmem:[#allocation3 + $0x4e0] sm:$0xff]
    %v1879 = vld [vmem:[#allocation3 + $0x4e8] sm:$0xff]
    %v1880 = vld [vmem:[#allocation3 + $0x4f0] sm:$0xff]
    %v1881 = vld [vmem:[#allocation3 + $0x4f8] sm:$0xff]
    %v1882 = vld [vmem:[#allocation3 + $0x500] sm:$0xff]
    %v1883 = vld [vmem:[#allocation3 + $0x508] sm:$0xff]
    %v1884 = vld [vmem:[#allocation3 + $0x510] sm:$0xff]
    %v1885 = vld [vmem:[#allocation3 + $0x518] sm:$0xff]
    %v1886 = vld [vmem:[#allocation3 + $0x520] sm:$0xff]
    %v1887 = vld [vmem:[#allocation3 + $0x528] sm:$0xff]
    %v1888 = vld [vmem:[#allocation3 + $0x530] sm:$0xff]
    %v1889 = vld [vmem:[#allocation3 + $0x538] sm:$0xff]
    %v1890 = vld [vmem:[#allocation3 + $0x540] sm:$0xff]
    %v1891 = vld [vmem:[#allocation3 + $0x548] sm:$0xff]
    %v1892 = vld [vmem:[#allocation3 + $0x550] sm:$0xff]
    %v1893 = vld [vmem:[#allocation3 + $0x558] sm:$0xff]
    %v1894 = vld [vmem:[#allocation3 + $0x560] sm:$0xff]
    %v1895 = vld [vmem:[#allocation3 + $0x568] sm:$0xff]
    %v1896 = vld [vmem:[#allocation3 + $0x570] sm:$0xff]
    %1898 = vset.pattern.permute.xlu0 0
    %1899 = vperm.xlu0 %1898, %v1720
    %v1900 = vpop.permute.xlu0 %1899
    %1903 = vset.pattern.permute.xlu0 0
    %1904 = vperm.xlu0 %1903, %v1721
    %v1905 = vpop.permute.xlu0 %1904
    %v1911 = vunpack.c.l.b16 %v1716
    %v1912 = vunpack.c.h.b16 %v1716
    %v1913 = vunpack.c.l.b16 %v1717
    %v1914 = vunpack.c.h.b16 %v1717
    %v1915 = vunpack.c.l.b16 %v1718
    %v1916 = vunpack.c.h.b16 %v1718
    %v1917 = vunpack.c.l.b16 %v1719
    %v1918 = vunpack.c.h.b16 %v1719
    %v1919 = vpack.c.b16 %v1915, %v1911
    %v1920 = vpack.c.b16 %v1916, %v1912
    %v1921 = vpack.c.b16 %v1917, %v1913
    %v1922 = vpack.c.b16 %v1918, %v1914
    %vm1926 = vcmask 130048
    %v1928 = vsel %vm1926, %v1922, 0
    %1930 = vmatprep.subr.bf16.mxu0 %v1723
    %1931 = vmatpush1.bf16.msra.mxu0 %v1722
    %1932 = vmatprep.subr.bf16.mxu0 %v1730
    %1933 = vmatpush1.bf16.msra.mxu0 %v1729
    %1934 = vmatprep.subr.bf16.mxu0 %v1737
    %1935 = vmatpush1.bf16.msra.mxu0 %v1736
    %1936 = vmatprep.subr.bf16.mxu0 %v1744
    %1937 = vmatpush1.bf16.msra.mxu0 %v1743
    %1938 = vmatprep.subr.bf16.mxu0 %v1751
    %1939 = vmatpush1.bf16.msra.mxu0 %v1750
    %1940 = vmatprep.subr.bf16.mxu0 %v1758
    %1941 = vmatpush1.bf16.msra.mxu0 %v1757
    %1942 = vmatprep.subr.bf16.mxu0 %v1765
    %1943 = vmatpush1.bf16.msra.mxu0 %v1764
    %1944 = vmatprep.subr.bf16.mxu0 %v1772
    %1945 = vmatpush1.bf16.msra.mxu0 %v1771
    %1946 = vmatprep.subr.bf16.mxu0 %v1779
    %1947 = vmatpush1.bf16.msra.mxu0 %v1778
    %1948 = vmatprep.subr.bf16.mxu0 %v1786
    %1949 = vmatpush1.bf16.msra.mxu0 %v1785
    %1950 = vmatprep.subr.bf16.mxu0 %v1793
    %1951 = vmatpush1.bf16.msra.mxu0 %v1792
    %1952 = vmatprep.subr.bf16.mxu0 %v1800
    %1953 = vmatpush1.bf16.msra.mxu0 %v1799
    %1954 = vmatprep.subr.bf16.mxu0 %v1807
    %1955 = vmatpush1.bf16.msra.mxu0 %v1806
    %1956 = vmatprep.subr.bf16.mxu0 %v1814
    %1957 = vmatpush1.bf16.msra.mxu0 %v1813
    %1958 = vmatprep.subr.bf16.mxu0 %v1821
    %1959 = vmatpush1.bf16.msra.mxu0 %v1820
    %1960 = vmatprep.subr.bf16.mxu0 %v1828
    %1961 = vmatpush1.bf16.msra.mxu0 %v1827
    %1962 = vmatprep.mubr.bf16.mxu0 %v1920
    %1963 = vmatmul.mubr.bf16.gmra.mrb[0].mxu0 %v1919
    %v1964 = vpop.f32.mrb[0].mxu0
    %v1965 = vadd.f32 %v1900, %v1964
    %v1966 = vpop.f32.mrb[0].mxu0
    %v1967 = vadd.f32 %v1900, %v1966
    %v1968 = vpop.f32.mrb[0].mxu0
    %v1969 = vadd.f32 %v1905, %v1968
    %v1970 = vpop.f32.mrb[0].mxu0
    %v1971 = vadd.f32 %v1905, %v1970
    %1972 = vdwg.mxu0
    %1973 = vmatprep.subr.bf16.mxu0 %v1835
    %1974 = vmatpush1.bf16.msra.mxu0 %v1834
    %1975 = vmatprep.subr.bf16.mxu0 %v1842
    %1976 = vmatpush1.bf16.msra.mxu0 %v1841
    %1977 = vmatprep.subr.bf16.mxu0 %v1849
    %1978 = vmatpush1.bf16.msra.mxu0 %v1848
    %1979 = vmatprep.subr.bf16.mxu0 %v1856
    %1980 = vmatpush1.bf16.msra.mxu0 %v1855
    %1981 = vmatprep.subr.bf16.mxu0 %v1863
    %1982 = vmatpush1.bf16.msra.mxu0 %v1862
    %1983 = vmatprep.subr.bf16.mxu0 %v1870
    %1984 = vmatpush1.bf16.msra.mxu0 %v1869
    %1985 = vmatprep.subr.bf16.mxu0 %v1877
    %1986 = vmatpush1.bf16.msra.mxu0 %v1876
    %1987 = vmatprep.subr.bf16.mxu0 %v1884
    %1988 = vmatpush1.bf16.msra.mxu0 %v1883
    %1989 = vmatprep.subr.bf16.mxu0 %v1891
    %1990 = vmatpush1.bf16.msra.mxu0 %v1890
    %1991 = vmatprep.subr.bf16.mxu0 0
    %1992 = vmatpush1.bf16.msra.mxu0 0
    %1993 = vmatprep.subr.bf16.mxu0 0
    %1994 = vmatpush1.bf16.msra.mxu0 0
    %1995 = vmatprep.subr.bf16.mxu0 0
    %1996 = vmatpush1.bf16.msra.mxu0 0
    %1997 = vmatprep.subr.bf16.mxu0 0
    %1998 = vmatpush1.bf16.msra.mxu0 0
    %1999 = vmatprep.subr.bf16.mxu0 0
    %2000 = vmatpush1.bf16.msra.mxu0 0
    %2001 = vmatprep.subr.bf16.mxu0 0
    %2002 = vmatpush1.bf16.msra.mxu0 0
    %2003 = vmatprep.subr.bf16.mxu0 0
    %2004 = vmatpush1.bf16.msra.mxu0 0
    %2005 = vmatprep.mubr.bf16.mxu0 %v1928
    %2006 = vmatmul.mubr.bf16.gmra.mrb[0].mxu0 %v1921
    %v2007 = vpop.f32.mrb[0].mxu0
    %v2008 = vadd.f32 %v1965, %v2007
    %v2009 = vpop.f32.mrb[0].mxu0
    %v2010 = vadd.f32 %v1967, %v2009
    %v2011 = vpop.f32.mrb[0].mxu0
    %v2012 = vadd.f32 %v1969, %v2011
    %v2013 = vpop.f32.mrb[0].mxu0
    %v2014 = vadd.f32 %v1971, %v2013
    %2015 = vdwg.mxu0
    %2016 = vmatprep.subr.bf16.mxu0 %v1725
    %2017 = vmatpush1.bf16.msra.mxu0 %v1724
    %2018 = vmatprep.subr.bf16.mxu0 %v1732
    %2019 = vmatpush1.bf16.msra.mxu0 %v1731
    %2020 = vmatprep.subr.bf16.mxu0 %v1739
    %2021 = vmatpush1.bf16.msra.mxu0 %v1738
    %2022 = vmatprep.subr.bf16.mxu0 %v1746
    %2023 = vmatpush1.bf16.msra.mxu0 %v1745
    %2024 = vmatprep.subr.bf16.mxu0 %v1753
    %2025 = vmatpush1.bf16.msra.mxu0 %v1752
    %2026 = vmatprep.subr.bf16.mxu0 %v1760
    %2027 = vmatpush1.bf16.msra.mxu0 %v1759
    %2028 = vmatprep.subr.bf16.mxu0 %v1767
    %2029 = vmatpush1.bf16.msra.mxu0 %v1766
    %2030 = vmatprep.subr.bf16.mxu0 %v1774
    %2031 = vmatpush1.bf16.msra.mxu0 %v1773
    %2032 = vmatprep.subr.bf16.mxu0 %v1781
    %2033 = vmatpush1.bf16.msra.mxu0 %v1780
    %2034 = vmatprep.subr.bf16.mxu0 %v1788
    %2035 = vmatpush1.bf16.msra.mxu0 %v1787
    %2036 = vmatprep.subr.bf16.mxu0 %v1795
    %2037 = vmatpush1.bf16.msra.mxu0 %v1794
    %2038 = vmatprep.subr.bf16.mxu0 %v1802
    %2039 = vmatpush1.bf16.msra.mxu0 %v1801
    %2040 = vmatprep.subr.bf16.mxu0 %v1809
    %2041 = vmatpush1.bf16.msra.mxu0 %v1808
    %2042 = vmatprep.subr.bf16.mxu0 %v1816
    %2043 = vmatpush1.bf16.msra.mxu0 %v1815
    %2044 = vmatprep.subr.bf16.mxu0 %v1823
    %2045 = vmatpush1.bf16.msra.mxu0 %v1822
    %2046 = vmatprep.subr.bf16.mxu0 %v1830
    %2047 = vmatpush1.bf16.msra.mxu0 %v1829
    %2048 = vmatprep.mubr.bf16.mxu0 %v1920
    %2049 = vmatmul.mubr.bf16.gmra.mrb[0].mxu0 %v1919
    %v2050 = vpop.f32.mrb[0].mxu0
    %v2051 = vadd.f32 %v1900, %v2050
    %v2052 = vpop.f32.mrb[0].mxu0
    %v2053 = vadd.f32 %v1900, %v2052
    %v2054 = vpop.f32.mrb[0].mxu0
    %v2055 = vadd.f32 %v1905, %v2054
    %v2056 = vpop.f32.mrb[0].mxu0
    %v2057 = vadd.f32 %v1905, %v2056
    %2058 = vdwg.mxu0
    %2059 = vmatprep.subr.bf16.mxu0 %v1837
    %2060 = vmatpush1.bf16.msra.mxu0 %v1836
    %2061 = vmatprep.subr.bf16.mxu0 %v1844
    %2062 = vmatpush1.bf16.msra.mxu0 %v1843
    %2063 = vmatprep.subr.bf16.mxu0 %v1851
    %2064 = vmatpush1.bf16.msra.mxu0 %v1850
    %2065 = vmatprep.subr.bf16.mxu0 %v1858
    %2066 = vmatpush1.bf16.msra.mxu0 %v1857
    %2067 = vmatprep.subr.bf16.mxu0 %v1865
    %2068 = vmatpush1.bf16.msra.mxu0 %v1864
    %2069 = vmatprep.subr.bf16.mxu0 %v1872
    %2070 = vmatpush1.bf16.msra.mxu0 %v1871
    %2071 = vmatprep.subr.bf16.mxu0 %v1879
    %2072 = vmatpush1.bf16.msra.mxu0 %v1878
    %2073 = vmatprep.subr.bf16.mxu0 %v1886
    %2074 = vmatpush1.bf16.msra.mxu0 %v1885
    %2075 = vmatprep.subr.bf16.mxu0 %v1893
    %2076 = vmatpush1.bf16.msra.mxu0 %v1892
    %2077 = vmatprep.subr.bf16.mxu0 0
    %2078 = vmatpush1.bf16.msra.mxu0 0
    %2079 = vmatprep.subr.bf16.mxu0 0
    %2080 = vmatpush1.bf16.msra.mxu0 0
    %2081 = vmatprep.subr.bf16.mxu0 0
    %2082 = vmatpush1.bf16.msra.mxu0 0
    %2083 = vmatprep.subr.bf16.mxu0 0
    %2084 = vmatpush1.bf16.msra.mxu0 0
    %2085 = vmatprep.subr.bf16.mxu0 0
    %2086 = vmatpush1.bf16.msra.mxu0 0
    %2087 = vmatprep.subr.bf16.mxu0 0
    %2088 = vmatpush1.bf16.msra.mxu0 0
    %2089 = vmatprep.subr.bf16.mxu0 0
    %2090 = vmatpush1.bf16.msra.mxu0 0
    %2091 = vmatprep.mubr.bf16.mxu0 %v1928
    %2092 = vmatmul.mubr.bf16.gmra.mrb[0].mxu0 %v1921
    %v2093 = vpop.f32.mrb[0].mxu0
    %v2094 = vadd.f32 %v2051, %v2093
    %v2095 = vpop.f32.mrb[0].mxu0
    %v2096 = vadd.f32 %v2053, %v2095
    %v2097 = vpop.f32.mrb[0].mxu0
    %v2098 = vadd.f32 %v2055, %v2097
    %v2099 = vpop.f32.mrb[0].mxu0
    %v2100 = vadd.f32 %v2057, %v2099
    %2101 = vdwg.mxu0
    %2102 = vmatprep.subr.bf16.mxu0 %v1727
    %2103 = vmatpush1.bf16.msra.mxu0 %v1726
    %2104 = vmatprep.subr.bf16.mxu0 %v1734
    %2105 = vmatpush1.bf16.msra.mxu0 %v1733
    %2106 = vmatprep.subr.bf16.mxu0 %v1741
    %2107 = vmatpush1.bf16.msra.mxu0 %v1740
    %2108 = vmatprep.subr.bf16.mxu0 %v1748
    %2109 = vmatpush1.bf16.msra.mxu0 %v1747
    %2110 = vmatprep.subr.bf16.mxu0 %v1755
    %2111 = vmatpush1.bf16.msra.mxu0 %v1754
    %2112 = vmatprep.subr.bf16.mxu0 %v1762
    %2113 = vmatpush1.bf16.msra.mxu0 %v1761
    %2114 = vmatprep.subr.bf16.mxu0 %v1769
    %2115 = vmatpush1.bf16.msra.mxu0 %v1768
    %2116 = vmatprep.subr.bf16.mxu0 %v1776
    %2117 = vmatpush1.bf16.msra.mxu0 %v1775
    %2118 = vmatprep.subr.bf16.mxu0 %v1783
    %2119 = vmatpush1.bf16.msra.mxu0 %v1782
    %2120 = vmatprep.subr.bf16.mxu0 %v1790
    %2121 = vmatpush1.bf16.msra.mxu0 %v1789
    %2122 = vmatprep.subr.bf16.mxu0 %v1797
    %2123 = vmatpush1.bf16.msra.mxu0 %v1796
    %2124 = vmatprep.subr.bf16.mxu0 %v1804
    %2125 = vmatpush1.bf16.msra.mxu0 %v1803
    %2126 = vmatprep.subr.bf16.mxu0 %v1811
    %2127 = vmatpush1.bf16.msra.mxu0 %v1810
    %2128 = vmatprep.subr.bf16.mxu0 %v1818
    %2129 = vmatpush1.bf16.msra.mxu0 %v1817
    %2130 = vmatprep.subr.bf16.mxu0 %v1825
    %2131 = vmatpush1.bf16.msra.mxu0 %v1824
    %2132 = vmatprep.subr.bf16.mxu0 %v1832
    %2133 = vmatpush1.bf16.msra.mxu0 %v1831
    %2134 = vmatprep.mubr.bf16.mxu0 %v1920
    %2135 = vmatmul.mubr.bf16.gmra.mrb[0].mxu0 %v1919
    %v2136 = vpop.f32.mrb[0].mxu0
    %v2137 = vadd.f32 %v1900, %v2136
    %v2138 = vpop.f32.mrb[0].mxu0
    %v2139 = vadd.f32 %v1900, %v2138
    %v2140 = vpop.f32.mrb[0].mxu0
    %v2141 = vadd.f32 %v1905, %v2140
    %v2142 = vpop.f32.mrb[0].mxu0
    %v2143 = vadd.f32 %v1905, %v2142
    %2144 = vdwg.mxu0
    %2145 = vmatprep.subr.bf16.mxu0 %v1839
    %2146 = vmatpush1.bf16.msra.mxu0 %v1838
    %2147 = vmatprep.subr.bf16.mxu0 %v1846
    %2148 = vmatpush1.bf16.msra.mxu0 %v1845
    %2149 = vmatprep.subr.bf16.mxu0 %v1853
    %2150 = vmatpush1.bf16.msra.mxu0 %v1852
    %2151 = vmatprep.subr.bf16.mxu0 %v1860
    %2152 = vmatpush1.bf16.msra.mxu0 %v1859
    %2153 = vmatprep.subr.bf16.mxu0 %v1867
    %2154 = vmatpush1.bf16.msra.mxu0 %v1866
    %2155 = vmatprep.subr.bf16.mxu0 %v1874
    %2156 = vmatpush1.bf16.msra.mxu0 %v1873
    %2157 = vmatprep.subr.bf16.mxu0 %v1881
    %2158 = vmatpush1.bf16.msra.mxu0 %v1880
    %2159 = vmatprep.subr.bf16.mxu0 %v1888
    %2160 = vmatpush1.bf16.msra.mxu0 %v1887
    %2161 = vmatprep.subr.bf16.mxu0 %v1895
    %2162 = vmatpush1.bf16.msra.mxu0 %v1894
    %2163 = vmatprep.subr.bf16.mxu0 0
    %2164 = vmatpush1.bf16.msra.mxu0 0
    %2165 = vmatprep.subr.bf16.mxu0 0
    %2166 = vmatpush1.bf16.msra.mxu0 0
    %2167 = vmatprep.subr.bf16.mxu0 0
    %2168 = vmatpush1.bf16.msra.mxu0 0
    %2169 = vmatprep.subr.bf16.mxu0 0
    %2170 = vmatpush1.bf16.msra.mxu0 0
    %2171 = vmatprep.subr.bf16.mxu0 0
    %2172 = vmatpush1.bf16.msra.mxu0 0
    %2173 = vmatprep.subr.bf16.mxu0 0
    %2174 = vmatpush1.bf16.msra.mxu0 0
    %2175 = vmatprep.subr.bf16.mxu0 0
    %2176 = vmatpush1.bf16.msra.mxu0 0
    %2177 = vmatprep.mubr.bf16.mxu0 %v1928
    %2178 = vmatmul.mubr.bf16.gmra.mrb[0].mxu0 %v1921
    %v2179 = vpop.f32.mrb[0].mxu0
    %v2180 = vadd.f32 %v2137, %v2179
    %v2181 = vpop.f32.mrb[0].mxu0
    %v2182 = vadd.f32 %v2139, %v2181
    %v2183 = vpop.f32.mrb[0].mxu0
    %v2184 = vadd.f32 %v2141, %v2183
    %v2185 = vpop.f32.mrb[0].mxu0
    %v2186 = vadd.f32 %v2143, %v2185
    %2187 = vdwg.mxu0
    %2188 = vmatprep.subr.bf16.mxu0 0
    %2189 = vmatpush1.bf16.msra.mxu0 %v1728
    %2190 = vmatprep.subr.bf16.mxu0 0
    %2191 = vmatpush1.bf16.msra.mxu0 %v1735
    %2192 = vmatprep.subr.bf16.mxu0 0
    %2193 = vmatpush1.bf16.msra.mxu0 %v1742
    %2194 = vmatprep.subr.bf16.mxu0 0
    %2195 = vmatpush1.bf16.msra.mxu0 %v1749
    %2196 = vmatprep.subr.bf16.mxu0 0
    %2197 = vmatpush1.bf16.msra.mxu0 %v1756
    %2198 = vmatprep.subr.bf16.mxu0 0
    %2199 = vmatpush1.bf16.msra.mxu0 %v1763
    %2200 = vmatprep.subr.bf16.mxu0 0
    %2201 = vmatpush1.bf16.msra.mxu0 %v1770
    %2202 = vmatprep.subr.bf16.mxu0 0
    %2203 = vmatpush1.bf16.msra.mxu0 %v1777
    %2204 = vmatprep.subr.bf16.mxu0 0
    %2205 = vmatpush1.bf16.msra.mxu0 %v1784
    %2206 = vmatprep.subr.bf16.mxu0 0
    %2207 = vmatpush1.bf16.msra.mxu0 %v1791
    %2208 = vmatprep.subr.bf16.mxu0 0
    %2209 = vmatpush1.bf16.msra.mxu0 %v1798
    %2210 = vmatprep.subr.bf16.mxu0 0
    %2211 = vmatpush1.bf16.msra.mxu0 %v1805
    %2212 = vmatprep.subr.bf16.mxu0 0
    %2213 = vmatpush1.bf16.msra.mxu0 %v1812
    %2214 = vmatprep.subr.bf16.mxu0 0
    %2215 = vmatpush1.bf16.msra.mxu0 %v1819
    %2216 = vmatprep.subr.bf16.mxu0 0
    %2217 = vmatpush1.bf16.msra.mxu0 %v1826
    %2218 = vmatprep.subr.bf16.mxu0 0
    %2219 = vmatpush1.bf16.msra.mxu0 %v1833
    %2220 = vmatprep.mubr.bf16.mxu0 %v1920
    %2221 = vmatmul.mubr.bf16.gmra.mrb[0].mxu0 %v1919
    %v2222 = vpop.f32.mrb[0].mxu0
    %v2223 = vadd.f32 %v1900, %v2222
    %v2224 = vpop.f32.mrb[0].mxu0
    %v2225 = vpop.f32.mrb[0].mxu0
    %v2226 = vadd.f32 %v1905, %v2225
    %v2227 = vpop.f32.mrb[0].mxu0
    %2228 = vdwg.mxu0
    %2229 = vmatprep.subr.bf16.mxu0 0
    %2230 = vmatpush1.bf16.msra.mxu0 %v1840
    %2231 = vmatprep.subr.bf16.mxu0 0
    %2232 = vmatpush1.bf16.msra.mxu0 %v1847
    %2233 = vmatprep.subr.bf16.mxu0 0
    %2234 = vmatpush1.bf16.msra.mxu0 %v1854
    %2235 = vmatprep.subr.bf16.mxu0 0
    %2236 = vmatpush1.bf16.msra.mxu0 %v1861
    %2237 = vmatprep.subr.bf16.mxu0 0
    %2238 = vmatpush1.bf16.msra.mxu0 %v1868
    %2239 = vmatprep.subr.bf16.mxu0 0
    %2240 = vmatpush1.bf16.msra.mxu0 %v1875
    %2241 = vmatprep.subr.bf16.mxu0 0
    %2242 = vmatpush1.bf16.msra.mxu0 %v1882
    %2243 = vmatprep.subr.bf16.mxu0 0
    %2244 = vmatpush1.bf16.msra.mxu0 %v1889
    %2245 = vmatprep.subr.bf16.mxu0 0
    %2246 = vmatpush1.bf16.msra.mxu0 %v1896
    %2247 = vmatprep.subr.bf16.mxu0 0
    %2248 = vmatpush1.bf16.msra.mxu0 0
    %2249 = vmatprep.subr.bf16.mxu0 0
    %2250 = vmatpush1.bf16.msra.mxu0 0
    %2251 = vmatprep.subr.bf16.mxu0 0
    %2252 = vmatpush1.bf16.msra.mxu0 0
    %2253 = vmatprep.subr.bf16.mxu0 0
    %2254 = vmatpush1.bf16.msra.mxu0 0
    %2255 = vmatprep.subr.bf16.mxu0 0
    %2256 = vmatpush1.bf16.msra.mxu0 0
    %2257 = vmatprep.subr.bf16.mxu0 0
    %2258 = vmatpush1.bf16.msra.mxu0 0
    %2259 = vmatprep.subr.bf16.mxu0 0
    %2260 = vmatpush1.bf16.msra.mxu0 0
    %2261 = vmatprep.mubr.bf16.mxu0 %v1928
    %2262 = vmatmul.mubr.bf16.gmra.mrb[0].mxu0 %v1921
    %v2263 = vpop.f32.mrb[0].mxu0
    %v2264 = vadd.f32 %v2223, %v2263
    %v2265 = vpop.f32.mrb[0].mxu0
    %v2266 = vpop.f32.mrb[0].mxu0
    %v2267 = vadd.f32 %v2226, %v2266
    %v2268 = vpop.f32.mrb[0].mxu0
    %2269 = vdwg.mxu0
    %vm2270 = vcmp.gt.f32.partialorder %v2008, 0.0
    %vm2271 = vcmp.gt.f32.partialorder %v2010, 0.0
    %vm2272 = vcmp.gt.f32.partialorder %v2094, 0.0
    %vm2273 = vcmp.gt.f32.partialorder %v2096, 0.0
    %vm2274 = vcmp.gt.f32.partialorder %v2180, 0.0
    %vm2275 = vcmp.gt.f32.partialorder %v2182, 0.0
    %vm2276 = vcmp.gt.f32.partialorder %v2264, 0.0
    %vm2277 = vcmp.gt.f32.partialorder %v2012, 0.0
    %vm2278 = vcmp.gt.f32.partialorder %v2014, 0.0
    %vm2279 = vcmp.gt.f32.partialorder %v2098, 0.0
    %vm2280 = vcmp.gt.f32.partialorder %v2100, 0.0
    %vm2281 = vcmp.gt.f32.partialorder %v2184, 0.0
    %vm2282 = vcmp.gt.f32.partialorder %v2186, 0.0
    %vm2283 = vcmp.gt.f32.partialorder %v2267, 0.0
    %v2284 = vmul.f32 %v2008, 0.3
    %v2285 = vmul.f32 %v2010, 0.3
    %v2286 = vmul.f32 %v2094, 0.3
    %v2287 = vmul.f32 %v2096, 0.3
    %v2288 = vmul.f32 %v2180, 0.3
    %v2289 = vmul.f32 %v2182, 0.3
    %v2290 = vmul.f32 %v2264, 0.3
    %v2291 = vmul.f32 %v2012, 0.3
    %v2292 = vmul.f32 %v2014, 0.3
    %v2293 = vmul.f32 %v2098, 0.3
    %v2294 = vmul.f32 %v2100, 0.3
    %v2295 = vmul.f32 %v2184, 0.3
    %v2296 = vmul.f32 %v2186, 0.3
    %v2297 = vmul.f32 %v2267, 0.3
    %v2298 = vsel %vm2270, %v2008, %v2284
    %v2299 = vsel %vm2271, %v2010, %v2285
    %v2300 = vsel %vm2272, %v2094, %v2286
    %v2301 = vsel %vm2273, %v2096, %v2287
    %v2302 = vsel %vm2274, %v2180, %v2288
    %v2303 = vsel %vm2275, %v2182, %v2289
    %v2304 = vsel %vm2276, %v2264, %v2290
    %v2305 = vsel %vm2277, %v2012, %v2291
    %v2306 = vsel %vm2278, %v2014, %v2292
    %v2307 = vsel %vm2279, %v2098, %v2293
    %v2308 = vsel %vm2280, %v2100, %v2294
    %v2309 = vsel %vm2281, %v2184, %v2295
    %v2310 = vsel %vm2282, %v2186, %v2296
    %v2311 = vsel %vm2283, %v2267, %v2297
    %2312 = vst [vmem:[#allocation2] sm:$0xff] %v2298
    %2313 = vst [vmem:[#allocation2 + $0x8] sm:$0xff] %v2299
    %2314 = vst [vmem:[#allocation2 + $0x10] sm:$0xff] %v2300
    %2315 = vst [vmem:[#allocation2 + $0x18] sm:$0xff] %v2301
    %2316 = vst [vmem:[#allocation2 + $0x20] sm:$0xff] %v2302
    %2317 = vst [vmem:[#allocation2 + $0x28] sm:$0xff] %v2303
    %2318 = vst.msk [vmem:[#allocation2 + $0x30] sm:$0xff] %vm76, %v2304
    %2319 = vst [vmem:[#allocation2 + $0x38] sm:$0xff] %v2305
    %2320 = vst [vmem:[#allocation2 + $0x40] sm:$0xff] %v2306
    %2321 = vst [vmem:[#allocation2 + $0x48] sm:$0xff] %v2307
    %2322 = vst [vmem:[#allocation2 + $0x50] sm:$0xff] %v2308
    %2323 = vst [vmem:[#allocation2 + $0x58] sm:$0xff] %v2309
    %2324 = vst [vmem:[#allocation2 + $0x60] sm:$0xff] %v2310
    %2325 = vst.msk [vmem:[#allocation2 + $0x68] sm:$0xff] %vm76, %v2311
    %v2326 = vld [vmem:[#allocation2] sm:$0xff]
    %v2327 = vld [vmem:[#allocation2 + $0x8] sm:$0xff]
    %v2328 = vld [vmem:[#allocation2 + $0x10] sm:$0xff]
    %v2329 = vld [vmem:[#allocation2 + $0x18] sm:$0xff]
    %v2330 = vld [vmem:[#allocation2 + $0x20] sm:$0xff]
    %v2331 = vld [vmem:[#allocation2 + $0x28] sm:$0xff]
    %v2332 = vld [vmem:[#allocation2 + $0x30] sm:$0xff]
    %v2333 = vld [vmem:[#allocation2 + $0x38] sm:$0xff]
    %v2334 = vld [vmem:[#allocation2 + $0x40] sm:$0xff]
    %v2335 = vld [vmem:[#allocation2 + $0x48] sm:$0xff]
    %v2336 = vld [vmem:[#allocation2 + $0x50] sm:$0xff]
    %v2337 = vld [vmem:[#allocation2 + $0x58] sm:$0xff]
    %v2338 = vld [vmem:[#allocation2 + $0x60] sm:$0xff]
    %v2339 = vld [vmem:[#allocation2 + $0x68] sm:$0xff]
    %v2340 = vpack.c.bf16 %v2333, %v2326
    %v2341 = vpack.c.bf16 %v2334, %v2327
    %v2342 = vpack.c.bf16 %v2335, %v2328
    %v2343 = vpack.c.bf16 %v2336, %v2329
    %v2344 = vpack.c.bf16 %v2337, %v2330
    %v2345 = vpack.c.bf16 %v2338, %v2331
    %v2346 = vpack.c.bf16 %v2339, %v2332
    %2347 = vst [vmem:[#allocation3] sm:$0xff] %v2340
    %2348 = vst [vmem:[#allocation3 + $0x8] sm:$0xff] %v2341
    %2349 = vst [vmem:[#allocation3 + $0x10] sm:$0xff] %v2342
    %2350 = vst [vmem:[#allocation3 + $0x18] sm:$0xff] %v2343
    %2351 = vst [vmem:[#allocation3 + $0x20] sm:$0xff] %v2344
    %2352 = vst [vmem:[#allocation3 + $0x28] sm:$0xff] %v2345
    %2353 = vst.msk [vmem:[#allocation3 + $0x30] sm:$0xff] %vm76, %v2346
    %v2354 = vld [vmem:[#allocation2] sm:$0xff]
    %v2355 = vld [vmem:[#allocation2 + $0x8] sm:$0xff]
    %v2356 = vld [vmem:[#allocation2 + $0x10] sm:$0xff]
    %v2357 = vld [vmem:[#allocation2 + $0x18] sm:$0xff]
    %v2358 = vld [vmem:[#allocation2 + $0x20] sm:$0xff]
    %v2359 = vld [vmem:[#allocation2 + $0x28] sm:$0xff]
    %v2360 = vld [vmem:[#allocation2 + $0x30] sm:$0xff]
    %v2361 = vld [vmem:[#allocation2 + $0x38] sm:$0xff]
    %v2362 = vld [vmem:[#allocation2 + $0x40] sm:$0xff]
    %v2363 = vld [vmem:[#allocation2 + $0x48] sm:$0xff]
    %v2364 = vld [vmem:[#allocation2 + $0x50] sm:$0xff]
    %v2365 = vld [vmem:[#allocation2 + $0x58] sm:$0xff]
    %v2366 = vld [vmem:[#allocation2 + $0x60] sm:$0xff]
    %v2367 = vld [vmem:[#allocation2 + $0x68] sm:$0xff]
    %v2368 = vpack.c.bf16 %v2361, %v2354
    %v2369 = vpack.c.bf16 %v2362, %v2355
    %v2370 = vpack.c.bf16 %v2363, %v2356
    %v2371 = vpack.c.bf16 %v2364, %v2357
    %v2372 = vpack.c.bf16 %v2365, %v2358
    %v2373 = vpack.c.bf16 %v2366, %v2359
    %v2374 = vpack.c.bf16 %v2367, %v2360
    %2382 = vrot.lane.b32.xlu0 %v2368, 127
    %v2383 = vpop.permute.xlu0 %2382
    %2384 = vrot.lane.b32.xlu0 %v2369, 127
    %v2385 = vpop.permute.xlu0 %2384
    %2386 = vrot.lane.b32.xlu0 %v2370, 127
    %v2387 = vpop.permute.xlu0 %2386
    %2388 = vrot.lane.b32.xlu0 %v2371, 127
    %v2389 = vpop.permute.xlu0 %2388
    %2390 = vrot.lane.b32.xlu0 %v2372, 127
    %v2391 = vpop.permute.xlu0 %2390
    %2392 = vrot.lane.b32.xlu0 %v2373, 127
    %v2393 = vpop.permute.xlu0 %2392
    %2394 = vrot.lane.b32.xlu0 %v2374, 127
    %v2395 = vpop.permute.xlu0 %2394
    %v2396 = vsel %vm246, %v2383, %v2385
    %v2397 = vsel %vm246, %v2385, %v2387
    %v2398 = vsel %vm246, %v2387, %v2389
    %v2399 = vsel %vm246, %v2389, %v2391
    %v2400 = vsel %vm246, %v2391, %v2393
    %v2401 = vsel %vm246, %v2393, %v2395
    %2409 = vst [vmem:[#allocation3 + $0x38] sm:$0xff] %v2396
    %2410 = vst [vmem:[#allocation3 + $0x40] sm:$0xff] %v2397
    %2411 = vst [vmem:[#allocation3 + $0x48] sm:$0xff] %v2398
    %2412 = vst [vmem:[#allocation3 + $0x50] sm:$0xff] %v2399
    %2413 = vst [vmem:[#allocation3 + $0x58] sm:$0xff] %v2400
    %2414 = vst [vmem:[#allocation3 + $0x60] sm:$0xff] %v2401
    %2415 = vst.msk [vmem:[#allocation3 + $0x68] sm:$0xff] %vm76, %v2395
    %v2416 = vld [vmem:[#allocation2] sm:$0xff]
    %v2417 = vld [vmem:[#allocation2 + $0x8] sm:$0xff]
    %v2418 = vld [vmem:[#allocation2 + $0x10] sm:$0xff]
    %v2419 = vld [vmem:[#allocation2 + $0x18] sm:$0xff]
    %v2420 = vld [vmem:[#allocation2 + $0x20] sm:$0xff]
    %v2421 = vld [vmem:[#allocation2 + $0x28] sm:$0xff]
    %v2422 = vld [vmem:[#allocation2 + $0x30] sm:$0xff]
    %v2423 = vld [vmem:[#allocation2 + $0x38] sm:$0xff]
    %v2424 = vld [vmem:[#allocation2 + $0x40] sm:$0xff]
    %v2425 = vld [vmem:[#allocation2 + $0x48] sm:$0xff]
    %v2426 = vld [vmem:[#allocation2 + $0x50] sm:$0xff]
    %v2427 = vld [vmem:[#allocation2 + $0x58] sm:$0xff]
    %v2428 = vld [vmem:[#allocation2 + $0x60] sm:$0xff]
    %v2429 = vld [vmem:[#allocation2 + $0x68] sm:$0xff]
    %v2430 = vpack.c.bf16 %v2423, %v2416
    %v2431 = vpack.c.bf16 %v2424, %v2417
    %v2432 = vpack.c.bf16 %v2425, %v2418
    %v2433 = vpack.c.bf16 %v2426, %v2419
    %v2434 = vpack.c.bf16 %v2427, %v2420
    %v2435 = vpack.c.bf16 %v2428, %v2421
    %v2436 = vpack.c.bf16 %v2429, %v2422
    %2444 = vrot.lane.b32.xlu0 %v2430, 126
    %v2445 = vpop.permute.xlu0 %2444
    %2446 = vrot.lane.b32.xlu0 %v2431, 126
    %v2447 = vpop.permute.xlu0 %2446
    %2448 = vrot.lane.b32.xlu0 %v2432, 126
    %v2449 = vpop.permute.xlu0 %2448
    %2450 = vrot.lane.b32.xlu0 %v2433, 126
    %v2451 = vpop.permute.xlu0 %2450
    %2452 = vrot.lane.b32.xlu0 %v2434, 126
    %v2453 = vpop.permute.xlu0 %2452
    %2454 = vrot.lane.b32.xlu0 %v2435, 126
    %v2455 = vpop.permute.xlu0 %2454
    %2456 = vrot.lane.b32.xlu0 %v2436, 126
    %v2457 = vpop.permute.xlu0 %2456
    %v2458 = vsel %vm309, %v2445, %v2447
    %v2459 = vsel %vm309, %v2447, %v2449
    %v2460 = vsel %vm309, %v2449, %v2451
    %v2461 = vsel %vm309, %v2451, %v2453
    %v2462 = vsel %vm309, %v2453, %v2455
    %v2463 = vsel %vm309, %v2455, %v2457
    %2471 = vst [vmem:[#allocation3 + $0x70] sm:$0xff] %v2458
    %2472 = vst [vmem:[#allocation3 + $0x78] sm:$0xff] %v2459
    %2473 = vst [vmem:[#allocation3 + $0x80] sm:$0xff] %v2460
    %2474 = vst [vmem:[#allocation3 + $0x88] sm:$0xff] %v2461
    %2475 = vst [vmem:[#allocation3 + $0x90] sm:$0xff] %v2462
    %2476 = vst [vmem:[#allocation3 + $0x98] sm:$0xff] %v2463
    %2477 = vst.msk [vmem:[#allocation3 + $0xa0] sm:$0xff] %vm76, %v2457
    %v2478 = vld [vmem:[#allocation2] sm:$0xff]
    %v2479 = vld [vmem:[#allocation2 + $0x8] sm:$0xff]
    %v2480 = vld [vmem:[#allocation2 + $0x10] sm:$0xff]
    %v2481 = vld [vmem:[#allocation2 + $0x18] sm:$0xff]
    %v2482 = vld [vmem:[#allocation2 + $0x20] sm:$0xff]
    %v2483 = vld [vmem:[#allocation2 + $0x28] sm:$0xff]
    %v2484 = vld [vmem:[#allocation2 + $0x30] sm:$0xff]
    %v2485 = vld [vmem:[#allocation2 + $0x38] sm:$0xff]
    %v2486 = vld [vmem:[#allocation2 + $0x40] sm:$0xff]
    %v2487 = vld [vmem:[#allocation2 + $0x48] sm:$0xff]
    %v2488 = vld [vmem:[#allocation2 + $0x50] sm:$0xff]
    %v2489 = vld [vmem:[#allocation2 + $0x58] sm:$0xff]
    %v2490 = vld [vmem:[#allocation2 + $0x60] sm:$0xff]
    %v2491 = vld [vmem:[#allocation2 + $0x68] sm:$0xff]
    %v2492 = vpack.c.bf16 %v2485, %v2478
    %v2493 = vpack.c.bf16 %v2486, %v2479
    %v2494 = vpack.c.bf16 %v2487, %v2480
    %v2495 = vpack.c.bf16 %v2488, %v2481
    %v2496 = vpack.c.bf16 %v2489, %v2482
    %v2497 = vpack.c.bf16 %v2490, %v2483
    %v2498 = vpack.c.bf16 %v2491, %v2484
    %2506 = vrot.lane.b32.xlu0 %v2492, 125
    %v2507 = vpop.permute.xlu0 %2506
    %2508 = vrot.lane.b32.xlu0 %v2493, 125
    %v2509 = vpop.permute.xlu0 %2508
    %2510 = vrot.lane.b32.xlu0 %v2494, 125
    %v2511 = vpop.permute.xlu0 %2510
    %2512 = vrot.lane.b32.xlu0 %v2495, 125
    %v2513 = vpop.permute.xlu0 %2512
    %2514 = vrot.lane.b32.xlu0 %v2496, 125
    %v2515 = vpop.permute.xlu0 %2514
    %2516 = vrot.lane.b32.xlu0 %v2497, 125
    %v2517 = vpop.permute.xlu0 %2516
    %2518 = vrot.lane.b32.xlu0 %v2498, 125
    %v2519 = vpop.permute.xlu0 %2518
    %v2520 = vsel %vm372, %v2507, %v2509
    %v2521 = vsel %vm372, %v2509, %v2511
    %v2522 = vsel %vm372, %v2511, %v2513
    %v2523 = vsel %vm372, %v2513, %v2515
    %v2524 = vsel %vm372, %v2515, %v2517
    %v2525 = vsel %vm372, %v2517, %v2519
    %2533 = vst [vmem:[#allocation3 + $0xa8] sm:$0xff] %v2520
    %2534 = vst [vmem:[#allocation3 + $0xb0] sm:$0xff] %v2521
    %2535 = vst [vmem:[#allocation3 + $0xb8] sm:$0xff] %v2522
    %2536 = vst [vmem:[#allocation3 + $0xc0] sm:$0xff] %v2523
    %2537 = vst [vmem:[#allocation3 + $0xc8] sm:$0xff] %v2524
    %2538 = vst [vmem:[#allocation3 + $0xd0] sm:$0xff] %v2525
    %2539 = vst.msk [vmem:[#allocation3 + $0xd8] sm:$0xff] %vm76, %v2519
    %v2540 = vld [vmem:[#allocation2] sm:$0xff]
    %v2541 = vld [vmem:[#allocation2 + $0x8] sm:$0xff]
    %v2542 = vld [vmem:[#allocation2 + $0x10] sm:$0xff]
    %v2543 = vld [vmem:[#allocation2 + $0x18] sm:$0xff]
    %v2544 = vld [vmem:[#allocation2 + $0x20] sm:$0xff]
    %v2545 = vld [vmem:[#allocation2 + $0x28] sm:$0xff]
    %v2546 = vld [vmem:[#allocation2 + $0x30] sm:$0xff]
    %v2547 = vld [vmem:[#allocation2 + $0x38] sm:$0xff]
    %v2548 = vld [vmem:[#allocation2 + $0x40] sm:$0xff]
    %v2549 = vld [vmem:[#allocation2 + $0x48] sm:$0xff]
    %v2550 = vld [vmem:[#allocation2 + $0x50] sm:$0xff]
    %v2551 = vld [vmem:[#allocation2 + $0x58] sm:$0xff]
    %v2552 = vld [vmem:[#allocation2 + $0x60] sm:$0xff]
    %v2553 = vld [vmem:[#allocation2 + $0x68] sm:$0xff]
    %v2554 = vpack.c.bf16 %v2547, %v2540
    %v2555 = vpack.c.bf16 %v2548, %v2541
    %v2556 = vpack.c.bf16 %v2549, %v2542
    %v2557 = vpack.c.bf16 %v2550, %v2543
    %v2558 = vpack.c.bf16 %v2551, %v2544
    %v2559 = vpack.c.bf16 %v2552, %v2545
    %v2560 = vpack.c.bf16 %v2553, %v2546
    %2568 = vrot.lane.b32.xlu0 %v2554, 124
    %v2569 = vpop.permute.xlu0 %2568
    %2570 = vrot.lane.b32.xlu0 %v2555, 124
    %v2571 = vpop.permute.xlu0 %2570
    %2572 = vrot.lane.b32.xlu0 %v2556, 124
    %v2573 = vpop.permute.xlu0 %2572
    %2574 = vrot.lane.b32.xlu0 %v2557, 124
    %v2575 = vpop.permute.xlu0 %2574
    %2576 = vrot.lane.b32.xlu0 %v2558, 124
    %v2577 = vpop.permute.xlu0 %2576
    %2578 = vrot.lane.b32.xlu0 %v2559, 124
    %v2579 = vpop.permute.xlu0 %2578
    %2580 = vrot.lane.b32.xlu0 %v2560, 124
    %v2581 = vpop.permute.xlu0 %2580
    %v2582 = vsel %vm435, %v2569, %v2571
    %v2583 = vsel %vm435, %v2571, %v2573
    %v2584 = vsel %vm435, %v2573, %v2575
    %v2585 = vsel %vm435, %v2575, %v2577
    %v2586 = vsel %vm435, %v2577, %v2579
    %v2587 = vsel %vm435, %v2579, %v2581
    %2595 = vst [vmem:[#allocation3 + $0xe0] sm:$0xff] %v2582
    %2596 = vst [vmem:[#allocation3 + $0xe8] sm:$0xff] %v2583
    %2597 = vst [vmem:[#allocation3 + $0xf0] sm:$0xff] %v2584
    %2598 = vst [vmem:[#allocation3 + $0xf8] sm:$0xff] %v2585
    %2599 = vst [vmem:[#allocation3 + $0x100] sm:$0xff] %v2586
    %2600 = vst [vmem:[#allocation3 + $0x108] sm:$0xff] %v2587
    %2601 = vst.msk [vmem:[#allocation3 + $0x110] sm:$0xff] %vm76, %v2581
    %v2602 = vld [vmem:[#allocation2] sm:$0xff]
    %v2603 = vld [vmem:[#allocation2 + $0x8] sm:$0xff]
    %v2604 = vld [vmem:[#allocation2 + $0x10] sm:$0xff]
    %v2605 = vld [vmem:[#allocation2 + $0x18] sm:$0xff]
    %v2606 = vld [vmem:[#allocation2 + $0x20] sm:$0xff]
    %v2607 = vld [vmem:[#allocation2 + $0x28] sm:$0xff]
    %v2608 = vld [vmem:[#allocation2 + $0x30] sm:$0xff]
    %v2609 = vld [vmem:[#allocation2 + $0x38] sm:$0xff]
    %v2610 = vld [vmem:[#allocation2 + $0x40] sm:$0xff]
    %v2611 = vld [vmem:[#allocation2 + $0x48] sm:$0xff]
    %v2612 = vld [vmem:[#allocation2 + $0x50] sm:$0xff]
    %v2613 = vld [vmem:[#allocation2 + $0x58] sm:$0xff]
    %v2614 = vld [vmem:[#allocation2 + $0x60] sm:$0xff]
    %v2615 = vld [vmem:[#allocation2 + $0x68] sm:$0xff]
    %v2616 = vpack.c.bf16 %v2609, %v2602
    %v2617 = vpack.c.bf16 %v2610, %v2603
    %v2618 = vpack.c.bf16 %v2611, %v2604
    %v2619 = vpack.c.bf16 %v2612, %v2605
    %v2620 = vpack.c.bf16 %v2613, %v2606
    %v2621 = vpack.c.bf16 %v2614, %v2607
    %v2622 = vpack.c.bf16 %v2615, %v2608
    %2630 = vrot.lane.b32.xlu0 %v2616, 108
    %v2631 = vpop.permute.xlu0 %2630
    %2632 = vrot.lane.b32.xlu0 %v2617, 108
    %v2633 = vpop.permute.xlu0 %2632
    %2634 = vrot.lane.b32.xlu0 %v2618, 108
    %v2635 = vpop.permute.xlu0 %2634
    %2636 = vrot.lane.b32.xlu0 %v2619, 108
    %v2637 = vpop.permute.xlu0 %2636
    %2638 = vrot.lane.b32.xlu0 %v2620, 108
    %v2639 = vpop.permute.xlu0 %2638
    %2640 = vrot.lane.b32.xlu0 %v2621, 108
    %v2641 = vpop.permute.xlu0 %2640
    %2642 = vrot.lane.b32.xlu0 %v2622, 108
    %v2643 = vpop.permute.xlu0 %2642
    %v2644 = vsel %vm498, %v2631, %v2633
    %v2645 = vsel %vm498, %v2633, %v2635
    %v2646 = vsel %vm498, %v2635, %v2637
    %v2647 = vsel %vm498, %v2637, %v2639
    %v2648 = vsel %vm498, %v2639, %v2641
    %v2649 = vsel %vm498, %v2641, %v2643
    %2657 = vst [vmem:[#allocation3 + $0x118] sm:$0xff] %v2644
    %2658 = vst [vmem:[#allocation3 + $0x120] sm:$0xff] %v2645
    %2659 = vst [vmem:[#allocation3 + $0x128] sm:$0xff] %v2646
    %2660 = vst [vmem:[#allocation3 + $0x130] sm:$0xff] %v2647
    %2661 = vst [vmem:[#allocation3 + $0x138] sm:$0xff] %v2648
    %2662 = vst [vmem:[#allocation3 + $0x140] sm:$0xff] %v2649
    %2663 = vst.msk [vmem:[#allocation3 + $0x148] sm:$0xff] %vm76, %v2643
    %v2664 = vld [vmem:[#allocation2] sm:$0xff]
    %v2665 = vld [vmem:[#allocation2 + $0x8] sm:$0xff]
    %v2666 = vld [vmem:[#allocation2 + $0x10] sm:$0xff]
    %v2667 = vld [vmem:[#allocation2 + $0x18] sm:$0xff]
    %v2668 = vld [vmem:[#allocation2 + $0x20] sm:$0xff]
    %v2669 = vld [vmem:[#allocation2 + $0x28] sm:$0xff]
    %v2670 = vld [vmem:[#allocation2 + $0x30] sm:$0xff]
    %v2671 = vld [vmem:[#allocation2 + $0x38] sm:$0xff]
    %v2672 = vld [vmem:[#allocation2 + $0x40] sm:$0xff]
    %v2673 = vld [vmem:[#allocation2 + $0x48] sm:$0xff]
    %v2674 = vld [vmem:[#allocation2 + $0x50] sm:$0xff]
    %v2675 = vld [vmem:[#allocation2 + $0x58] sm:$0xff]
    %v2676 = vld [vmem:[#allocation2 + $0x60] sm:$0xff]
    %v2677 = vld [vmem:[#allocation2 + $0x68] sm:$0xff]
    %v2678 = vpack.c.bf16 %v2671, %v2664
    %v2679 = vpack.c.bf16 %v2672, %v2665
    %v2680 = vpack.c.bf16 %v2673, %v2666
    %v2681 = vpack.c.bf16 %v2674, %v2667
    %v2682 = vpack.c.bf16 %v2675, %v2668
    %v2683 = vpack.c.bf16 %v2676, %v2669
    %v2684 = vpack.c.bf16 %v2677, %v2670
    %2692 = vrot.lane.b32.xlu0 %v2678, 107
    %v2693 = vpop.permute.xlu0 %2692
    %2694 = vrot.lane.b32.xlu0 %v2679, 107
    %v2695 = vpop.permute.xlu0 %2694
    %2696 = vrot.lane.b32.xlu0 %v2680, 107
    %v2697 = vpop.permute.xlu0 %2696
    %2698 = vrot.lane.b32.xlu0 %v2681, 107
    %v2699 = vpop.permute.xlu0 %2698
    %2700 = vrot.lane.b32.xlu0 %v2682, 107
    %v2701 = vpop.permute.xlu0 %2700
    %2702 = vrot.lane.b32.xlu0 %v2683, 107
    %v2703 = vpop.permute.xlu0 %2702
    %2704 = vrot.lane.b32.xlu0 %v2684, 107
    %v2705 = vpop.permute.xlu0 %2704
    %v2706 = vsel %vm561, %v2693, %v2695
    %v2707 = vsel %vm561, %v2695, %v2697
    %v2708 = vsel %vm561, %v2697, %v2699
    %v2709 = vsel %vm561, %v2699, %v2701
    %v2710 = vsel %vm561, %v2701, %v2703
    %v2711 = vsel %vm561, %v2703, %v2705
    %2719 = vst [vmem:[#allocation3 + $0x150] sm:$0xff] %v2706
    %2720 = vst [vmem:[#allocation3 + $0x158] sm:$0xff] %v2707
    %2721 = vst [vmem:[#allocation3 + $0x160] sm:$0xff] %v2708
    %2722 = vst [vmem:[#allocation3 + $0x168] sm:$0xff] %v2709
    %2723 = vst [vmem:[#allocation3 + $0x170] sm:$0xff] %v2710
    %2724 = vst [vmem:[#allocation3 + $0x178] sm:$0xff] %v2711
    %2725 = vst.msk [vmem:[#allocation3 + $0x180] sm:$0xff] %vm76, %v2705
    %v2726 = vld [vmem:[#allocation2] sm:$0xff]
    %v2727 = vld [vmem:[#allocation2 + $0x8] sm:$0xff]
    %v2728 = vld [vmem:[#allocation2 + $0x10] sm:$0xff]
    %v2729 = vld [vmem:[#allocation2 + $0x18] sm:$0xff]
    %v2730 = vld [vmem:[#allocation2 + $0x20] sm:$0xff]
    %v2731 = vld [vmem:[#allocation2 + $0x28] sm:$0xff]
    %v2732 = vld [vmem:[#allocation2 + $0x30] sm:$0xff]
    %v2733 = vld [vmem:[#allocation2 + $0x38] sm:$0xff]
    %v2734 = vld [vmem:[#allocation2 + $0x40] sm:$0xff]
    %v2735 = vld [vmem:[#allocation2 + $0x48] sm:$0xff]
    %v2736 = vld [vmem:[#allocation2 + $0x50] sm:$0xff]
    %v2737 = vld [vmem:[#allocation2 + $0x58] sm:$0xff]
    %v2738 = vld [vmem:[#allocation2 + $0x60] sm:$0xff]
    %v2739 = vld [vmem:[#allocation2 + $0x68] sm:$0xff]
    %v2740 = vpack.c.bf16 %v2733, %v2726
    %v2741 = vpack.c.bf16 %v2734, %v2727
    %v2742 = vpack.c.bf16 %v2735, %v2728
    %v2743 = vpack.c.bf16 %v2736, %v2729
    %v2744 = vpack.c.bf16 %v2737, %v2730
    %v2745 = vpack.c.bf16 %v2738, %v2731
    %v2746 = vpack.c.bf16 %v2739, %v2732
    %2754 = vrot.lane.b32.xlu0 %v2740, 106
    %v2755 = vpop.permute.xlu0 %2754
    %2756 = vrot.lane.b32.xlu0 %v2741, 106
    %v2757 = vpop.permute.xlu0 %2756
    %2758 = vrot.lane.b32.xlu0 %v2742, 106
    %v2759 = vpop.permute.xlu0 %2758
    %2760 = vrot.lane.b32.xlu0 %v2743, 106
    %v2761 = vpop.permute.xlu0 %2760
    %2762 = vrot.lane.b32.xlu0 %v2744, 106
    %v2763 = vpop.permute.xlu0 %2762
    %2764 = vrot.lane.b32.xlu0 %v2745, 106
    %v2765 = vpop.permute.xlu0 %2764
    %2766 = vrot.lane.b32.xlu0 %v2746, 106
    %v2767 = vpop.permute.xlu0 %2766
    %v2768 = vsel %vm624, %v2755, %v2757
    %v2769 = vsel %vm624, %v2757, %v2759
    %v2770 = vsel %vm624, %v2759, %v2761
    %v2771 = vsel %vm624, %v2761, %v2763
    %v2772 = vsel %vm624, %v2763, %v2765
    %v2773 = vsel %vm624, %v2765, %v2767
    %2781 = vst [vmem:[#allocation3 + $0x188] sm:$0xff] %v2768
    %2782 = vst [vmem:[#allocation3 + $0x190] sm:$0xff] %v2769
    %2783 = vst [vmem:[#allocation3 + $0x198] sm:$0xff] %v2770
    %2784 = vst [vmem:[#allocation3 + $0x1a0] sm:$0xff] %v2771
    %2785 = vst [vmem:[#allocation3 + $0x1a8] sm:$0xff] %v2772
    %2786 = vst [vmem:[#allocation3 + $0x1b0] sm:$0xff] %v2773
    %2787 = vst.msk [vmem:[#allocation3 + $0x1b8] sm:$0xff] %vm76, %v2767
    %v2788 = vld [vmem:[#allocation2] sm:$0xff]
    %v2789 = vld [vmem:[#allocation2 + $0x8] sm:$0xff]
    %v2790 = vld [vmem:[#allocation2 + $0x10] sm:$0xff]
    %v2791 = vld [vmem:[#allocation2 + $0x18] sm:$0xff]
    %v2792 = vld [vmem:[#allocation2 + $0x20] sm:$0xff]
    %v2793 = vld [vmem:[#allocation2 + $0x28] sm:$0xff]
    %v2794 = vld [vmem:[#allocation2 + $0x30] sm:$0xff]
    %v2795 = vld [vmem:[#allocation2 + $0x38] sm:$0xff]
    %v2796 = vld [vmem:[#allocation2 + $0x40] sm:$0xff]
    %v2797 = vld [vmem:[#allocation2 + $0x48] sm:$0xff]
    %v2798 = vld [vmem:[#allocation2 + $0x50] sm:$0xff]
    %v2799 = vld [vmem:[#allocation2 + $0x58] sm:$0xff]
    %v2800 = vld [vmem:[#allocation2 + $0x60] sm:$0xff]
    %v2801 = vld [vmem:[#allocation2 + $0x68] sm:$0xff]
    %v2802 = vpack.c.bf16 %v2795, %v2788
    %v2803 = vpack.c.bf16 %v2796, %v2789
    %v2804 = vpack.c.bf16 %v2797, %v2790
    %v2805 = vpack.c.bf16 %v2798, %v2791
    %v2806 = vpack.c.bf16 %v2799, %v2792
    %v2807 = vpack.c.bf16 %v2800, %v2793
    %v2808 = vpack.c.bf16 %v2801, %v2794
    %2816 = vrot.lane.b32.xlu0 %v2802, 105
    %v2817 = vpop.permute.xlu0 %2816
    %2818 = vrot.lane.b32.xlu0 %v2803, 105
    %v2819 = vpop.permute.xlu0 %2818
    %2820 = vrot.lane.b32.xlu0 %v2804, 105
    %v2821 = vpop.permute.xlu0 %2820
    %2822 = vrot.lane.b32.xlu0 %v2805, 105
    %v2823 = vpop.permute.xlu0 %2822
    %2824 = vrot.lane.b32.xlu0 %v2806, 105
    %v2825 = vpop.permute.xlu0 %2824
    %2826 = vrot.lane.b32.xlu0 %v2807, 105
    %v2827 = vpop.permute.xlu0 %2826
    %2828 = vrot.lane.b32.xlu0 %v2808, 105
    %v2829 = vpop.permute.xlu0 %2828
    %v2830 = vsel %vm687, %v2817, %v2819
    %v2831 = vsel %vm687, %v2819, %v2821
    %v2832 = vsel %vm687, %v2821, %v2823
    %v2833 = vsel %vm687, %v2823, %v2825
    %v2834 = vsel %vm687, %v2825, %v2827
    %v2835 = vsel %vm687, %v2827, %v2829
    %2843 = vst [vmem:[#allocation3 + $0x1c0] sm:$0xff] %v2830
    %2844 = vst [vmem:[#allocation3 + $0x1c8] sm:$0xff] %v2831
    %2845 = vst [vmem:[#allocation3 + $0x1d0] sm:$0xff] %v2832
    %2846 = vst [vmem:[#allocation3 + $0x1d8] sm:$0xff] %v2833
    %2847 = vst [vmem:[#allocation3 + $0x1e0] sm:$0xff] %v2834
    %2848 = vst [vmem:[#allocation3 + $0x1e8] sm:$0xff] %v2835
    %2849 = vst.msk [vmem:[#allocation3 + $0x1f0] sm:$0xff] %vm76, %v2829
    %v2850 = vld [vmem:[#allocation2] sm:$0xff]
    %v2851 = vld [vmem:[#allocation2 + $0x8] sm:$0xff]
    %v2852 = vld [vmem:[#allocation2 + $0x10] sm:$0xff]
    %v2853 = vld [vmem:[#allocation2 + $0x18] sm:$0xff]
    %v2854 = vld [vmem:[#allocation2 + $0x20] sm:$0xff]
    %v2855 = vld [vmem:[#allocation2 + $0x28] sm:$0xff]
    %v2856 = vld [vmem:[#allocation2 + $0x30] sm:$0xff]
    %v2857 = vld [vmem:[#allocation2 + $0x38] sm:$0xff]
    %v2858 = vld [vmem:[#allocation2 + $0x40] sm:$0xff]
    %v2859 = vld [vmem:[#allocation2 + $0x48] sm:$0xff]
    %v2860 = vld [vmem:[#allocation2 + $0x50] sm:$0xff]
    %v2861 = vld [vmem:[#allocation2 + $0x58] sm:$0xff]
    %v2862 = vld [vmem:[#allocation2 + $0x60] sm:$0xff]
    %v2863 = vld [vmem:[#allocation2 + $0x68] sm:$0xff]
    %v2864 = vpack.c.bf16 %v2857, %v2850
    %v2865 = vpack.c.bf16 %v2858, %v2851
    %v2866 = vpack.c.bf16 %v2859, %v2852
    %v2867 = vpack.c.bf16 %v2860, %v2853
    %v2868 = vpack.c.bf16 %v2861, %v2854
    %v2869 = vpack.c.bf16 %v2862, %v2855
    %v2870 = vpack.c.bf16 %v2863, %v2856
    %2878 = vrot.lane.b32.xlu0 %v2864, 104
    %v2879 = vpop.permute.xlu0 %2878
    %2880 = vrot.lane.b32.xlu0 %v2865, 104
    %v2881 = vpop.permute.xlu0 %2880
    %2882 = vrot.lane.b32.xlu0 %v2866, 104
    %v2883 = vpop.permute.xlu0 %2882
    %2884 = vrot.lane.b32.xlu0 %v2867, 104
    %v2885 = vpop.permute.xlu0 %2884
    %2886 = vrot.lane.b32.xlu0 %v2868, 104
    %v2887 = vpop.permute.xlu0 %2886
    %2888 = vrot.lane.b32.xlu0 %v2869, 104
    %v2889 = vpop.permute.xlu0 %2888
    %2890 = vrot.lane.b32.xlu0 %v2870, 104
    %v2891 = vpop.permute.xlu0 %2890
    %v2892 = vsel %vm750, %v2879, %v2881
    %v2893 = vsel %vm750, %v2881, %v2883
    %v2894 = vsel %vm750, %v2883, %v2885
    %v2895 = vsel %vm750, %v2885, %v2887
    %v2896 = vsel %vm750, %v2887, %v2889
    %v2897 = vsel %vm750, %v2889, %v2891
    %2905 = vst [vmem:[#allocation3 + $0x1f8] sm:$0xff] %v2892
    %2906 = vst [vmem:[#allocation3 + $0x200] sm:$0xff] %v2893
    %2907 = vst [vmem:[#allocation3 + $0x208] sm:$0xff] %v2894
    %2908 = vst [vmem:[#allocation3 + $0x210] sm:$0xff] %v2895
    %2909 = vst [vmem:[#allocation3 + $0x218] sm:$0xff] %v2896
    %2910 = vst [vmem:[#allocation3 + $0x220] sm:$0xff] %v2897
    %2911 = vst.msk [vmem:[#allocation3 + $0x228] sm:$0xff] %vm76, %v2891
    %v2912 = vld [vmem:[#allocation2] sm:$0xff]
    %v2913 = vld [vmem:[#allocation2 + $0x8] sm:$0xff]
    %v2914 = vld [vmem:[#allocation2 + $0x10] sm:$0xff]
    %v2915 = vld [vmem:[#allocation2 + $0x18] sm:$0xff]
    %v2916 = vld [vmem:[#allocation2 + $0x20] sm:$0xff]
    %v2917 = vld [vmem:[#allocation2 + $0x28] sm:$0xff]
    %v2918 = vld [vmem:[#allocation2 + $0x30] sm:$0xff]
    %v2919 = vld [vmem:[#allocation2 + $0x38] sm:$0xff]
    %v2920 = vld [vmem:[#allocation2 + $0x40] sm:$0xff]
    %v2921 = vld [vmem:[#allocation2 + $0x48] sm:$0xff]
    %v2922 = vld [vmem:[#allocation2 + $0x50] sm:$0xff]
    %v2923 = vld [vmem:[#allocation2 + $0x58] sm:$0xff]
    %v2924 = vld [vmem:[#allocation2 + $0x60] sm:$0xff]
    %v2925 = vld [vmem:[#allocation2 + $0x68] sm:$0xff]
    %v2926 = vpack.c.bf16 %v2919, %v2912
    %v2927 = vpack.c.bf16 %v2920, %v2913
    %v2928 = vpack.c.bf16 %v2921, %v2914
    %v2929 = vpack.c.bf16 %v2922, %v2915
    %v2930 = vpack.c.bf16 %v2923, %v2916
    %v2931 = vpack.c.bf16 %v2924, %v2917
    %v2932 = vpack.c.bf16 %v2925, %v2918
    %2940 = vrot.lane.b32.xlu0 %v2926, 88
    %v2941 = vpop.permute.xlu0 %2940
    %2942 = vrot.lane.b32.xlu0 %v2927, 88
    %v2943 = vpop.permute.xlu0 %2942
    %2944 = vrot.lane.b32.xlu0 %v2928, 88
    %v2945 = vpop.permute.xlu0 %2944
    %2946 = vrot.lane.b32.xlu0 %v2929, 88
    %v2947 = vpop.permute.xlu0 %2946
    %2948 = vrot.lane.b32.xlu0 %v2930, 88
    %v2949 = vpop.permute.xlu0 %2948
    %2950 = vrot.lane.b32.xlu0 %v2931, 88
    %v2951 = vpop.permute.xlu0 %2950
    %2952 = vrot.lane.b32.xlu0 %v2932, 88
    %v2953 = vpop.permute.xlu0 %2952
    %v2954 = vsel %vm813, %v2941, %v2943
    %v2955 = vsel %vm813, %v2943, %v2945
    %v2956 = vsel %vm813, %v2945, %v2947
    %v2957 = vsel %vm813, %v2947, %v2949
    %v2958 = vsel %vm813, %v2949, %v2951
    %v2959 = vsel %vm813, %v2951, %v2953
    %2967 = vst [vmem:[#allocation3 + $0x230] sm:$0xff] %v2954
    %2968 = vst [vmem:[#allocation3 + $0x238] sm:$0xff] %v2955
    %2969 = vst [vmem:[#allocation3 + $0x240] sm:$0xff] %v2956
    %2970 = vst [vmem:[#allocation3 + $0x248] sm:$0xff] %v2957
    %2971 = vst [vmem:[#allocation3 + $0x250] sm:$0xff] %v2958
    %2972 = vst [vmem:[#allocation3 + $0x258] sm:$0xff] %v2959
    %2973 = vst.msk [vmem:[#allocation3 + $0x260] sm:$0xff] %vm76, %v2953
    %v2974 = vld [vmem:[#allocation2] sm:$0xff]
    %v2975 = vld [vmem:[#allocation2 + $0x8] sm:$0xff]
    %v2976 = vld [vmem:[#allocation2 + $0x10] sm:$0xff]
    %v2977 = vld [vmem:[#allocation2 + $0x18] sm:$0xff]
    %v2978 = vld [vmem:[#allocation2 + $0x20] sm:$0xff]
    %v2979 = vld [vmem:[#allocation2 + $0x28] sm:$0xff]
    %v2980 = vld [vmem:[#allocation2 + $0x30] sm:$0xff]
    %v2981 = vld [vmem:[#allocation2 + $0x38] sm:$0xff]
    %v2982 = vld [vmem:[#allocation2 + $0x40] sm:$0xff]
    %v2983 = vld [vmem:[#allocation2 + $0x48] sm:$0xff]
    %v2984 = vld [vmem:[#allocation2 + $0x50] sm:$0xff]
    %v2985 = vld [vmem:[#allocation2 + $0x58] sm:$0xff]
    %v2986 = vld [vmem:[#allocation2 + $0x60] sm:$0xff]
    %v2987 = vld [vmem:[#allocation2 + $0x68] sm:$0xff]
    %v2988 = vpack.c.bf16 %v2981, %v2974
    %v2989 = vpack.c.bf16 %v2982, %v2975
    %v2990 = vpack.c.bf16 %v2983, %v2976
    %v2991 = vpack.c.bf16 %v2984, %v2977
    %v2992 = vpack.c.bf16 %v2985, %v2978
    %v2993 = vpack.c.bf16 %v2986, %v2979
    %v2994 = vpack.c.bf16 %v2987, %v2980
    %3002 = vrot.lane.b32.xlu0 %v2988, 87
    %v3003 = vpop.permute.xlu0 %3002
    %3004 = vrot.lane.b32.xlu0 %v2989, 87
    %v3005 = vpop.permute.xlu0 %3004
    %3006 = vrot.lane.b32.xlu0 %v2990, 87
    %v3007 = vpop.permute.xlu0 %3006
    %3008 = vrot.lane.b32.xlu0 %v2991, 87
    %v3009 = vpop.permute.xlu0 %3008
    %3010 = vrot.lane.b32.xlu0 %v2992, 87
    %v3011 = vpop.permute.xlu0 %3010
    %3012 = vrot.lane.b32.xlu0 %v2993, 87
    %v3013 = vpop.permute.xlu0 %3012
    %3014 = vrot.lane.b32.xlu0 %v2994, 87
    %v3015 = vpop.permute.xlu0 %3014
    %v3016 = vsel %vm876, %v3003, %v3005
    %v3017 = vsel %vm876, %v3005, %v3007
    %v3018 = vsel %vm876, %v3007, %v3009
    %v3019 = vsel %vm876, %v3009, %v3011
    %v3020 = vsel %vm876, %v3011, %v3013
    %v3021 = vsel %vm876, %v3013, %v3015
    %3029 = vst [vmem:[#allocation3 + $0x268] sm:$0xff] %v3016
    %3030 = vst [vmem:[#allocation3 + $0x270] sm:$0xff] %v3017
    %3031 = vst [vmem:[#allocation3 + $0x278] sm:$0xff] %v3018
    %3032 = vst [vmem:[#allocation3 + $0x280] sm:$0xff] %v3019
    %3033 = vst [vmem:[#allocation3 + $0x288] sm:$0xff] %v3020
    %3034 = vst [vmem:[#allocation3 + $0x290] sm:$0xff] %v3021
    %3035 = vst.msk [vmem:[#allocation3 + $0x298] sm:$0xff] %vm76, %v3015
    %v3036 = vld [vmem:[#allocation2] sm:$0xff]
    %v3037 = vld [vmem:[#allocation2 + $0x8] sm:$0xff]
    %v3038 = vld [vmem:[#allocation2 + $0x10] sm:$0xff]
    %v3039 = vld [vmem:[#allocation2 + $0x18] sm:$0xff]
    %v3040 = vld [vmem:[#allocation2 + $0x20] sm:$0xff]
    %v3041 = vld [vmem:[#allocation2 + $0x28] sm:$0xff]
    %v3042 = vld [vmem:[#allocation2 + $0x30] sm:$0xff]
    %v3043 = vld [vmem:[#allocation2 + $0x38] sm:$0xff]
    %v3044 = vld [vmem:[#allocation2 + $0x40] sm:$0xff]
    %v3045 = vld [vmem:[#allocation2 + $0x48] sm:$0xff]
    %v3046 = vld [vmem:[#allocation2 + $0x50] sm:$0xff]
    %v3047 = vld [vmem:[#allocation2 + $0x58] sm:$0xff]
    %v3048 = vld [vmem:[#allocation2 + $0x60] sm:$0xff]
    %v3049 = vld [vmem:[#allocation2 + $0x68] sm:$0xff]
    %v3050 = vpack.c.bf16 %v3043, %v3036
    %v3051 = vpack.c.bf16 %v3044, %v3037
    %v3052 = vpack.c.bf16 %v3045, %v3038
    %v3053 = vpack.c.bf16 %v3046, %v3039
    %v3054 = vpack.c.bf16 %v3047, %v3040
    %v3055 = vpack.c.bf16 %v3048, %v3041
    %v3056 = vpack.c.bf16 %v3049, %v3042
    %3064 = vrot.lane.b32.xlu0 %v3050, 86
    %v3065 = vpop.permute.xlu0 %3064
    %3066 = vrot.lane.b32.xlu0 %v3051, 86
    %v3067 = vpop.permute.xlu0 %3066
    %3068 = vrot.lane.b32.xlu0 %v3052, 86
    %v3069 = vpop.permute.xlu0 %3068
    %3070 = vrot.lane.b32.xlu0 %v3053, 86
    %v3071 = vpop.permute.xlu0 %3070
    %3072 = vrot.lane.b32.xlu0 %v3054, 86
    %v3073 = vpop.permute.xlu0 %3072
    %3074 = vrot.lane.b32.xlu0 %v3055, 86
    %v3075 = vpop.permute.xlu0 %3074
    %3076 = vrot.lane.b32.xlu0 %v3056, 86
    %v3077 = vpop.permute.xlu0 %3076
    %v3078 = vsel %vm939, %v3065, %v3067
    %v3079 = vsel %vm939, %v3067, %v3069
    %v3080 = vsel %vm939, %v3069, %v3071
    %v3081 = vsel %vm939, %v3071, %v3073
    %v3082 = vsel %vm939, %v3073, %v3075
    %v3083 = vsel %vm939, %v3075, %v3077
    %3091 = vst [vmem:[#allocation3 + $0x2a0] sm:$0xff] %v3078
    %3092 = vst [vmem:[#allocation3 + $0x2a8] sm:$0xff] %v3079
    %3093 = vst [vmem:[#allocation3 + $0x2b0] sm:$0xff] %v3080
    %3094 = vst [vmem:[#allocation3 + $0x2b8] sm:$0xff] %v3081
    %3095 = vst [vmem:[#allocation3 + $0x2c0] sm:$0xff] %v3082
    %3096 = vst [vmem:[#allocation3 + $0x2c8] sm:$0xff] %v3083
    %3097 = vst.msk [vmem:[#allocation3 + $0x2d0] sm:$0xff] %vm76, %v3077
    %v3098 = vld [vmem:[#allocation2] sm:$0xff]
    %v3099 = vld [vmem:[#allocation2 + $0x8] sm:$0xff]
    %v3100 = vld [vmem:[#allocation2 + $0x10] sm:$0xff]
    %v3101 = vld [vmem:[#allocation2 + $0x18] sm:$0xff]
    %v3102 = vld [vmem:[#allocation2 + $0x20] sm:$0xff]
    %v3103 = vld [vmem:[#allocation2 + $0x28] sm:$0xff]
    %v3104 = vld [vmem:[#allocation2 + $0x30] sm:$0xff]
    %v3105 = vld [vmem:[#allocation2 + $0x38] sm:$0xff]
    %v3106 = vld [vmem:[#allocation2 + $0x40] sm:$0xff]
    %v3107 = vld [vmem:[#allocation2 + $0x48] sm:$0xff]
    %v3108 = vld [vmem:[#allocation2 + $0x50] sm:$0xff]
    %v3109 = vld [vmem:[#allocation2 + $0x58] sm:$0xff]
    %v3110 = vld [vmem:[#allocation2 + $0x60] sm:$0xff]
    %v3111 = vld [vmem:[#allocation2 + $0x68] sm:$0xff]
    %v3112 = vpack.c.bf16 %v3105, %v3098
    %v3113 = vpack.c.bf16 %v3106, %v3099
    %v3114 = vpack.c.bf16 %v3107, %v3100
    %v3115 = vpack.c.bf16 %v3108, %v3101
    %v3116 = vpack.c.bf16 %v3109, %v3102
    %v3117 = vpack.c.bf16 %v3110, %v3103
    %v3118 = vpack.c.bf16 %v3111, %v3104
    %3126 = vrot.lane.b32.xlu0 %v3112, 85
    %v3127 = vpop.permute.xlu0 %3126
    %3128 = vrot.lane.b32.xlu0 %v3113, 85
    %v3129 = vpop.permute.xlu0 %3128
    %3130 = vrot.lane.b32.xlu0 %v3114, 85
    %v3131 = vpop.permute.xlu0 %3130
    %3132 = vrot.lane.b32.xlu0 %v3115, 85
    %v3133 = vpop.permute.xlu0 %3132
    %3134 = vrot.lane.b32.xlu0 %v3116, 85
    %v3135 = vpop.permute.xlu0 %3134
    %3136 = vrot.lane.b32.xlu0 %v3117, 85
    %v3137 = vpop.permute.xlu0 %3136
    %3138 = vrot.lane.b32.xlu0 %v3118, 85
    %v3139 = vpop.permute.xlu0 %3138
    %v3140 = vsel %vm1002, %v3127, %v3129
    %v3141 = vsel %vm1002, %v3129, %v3131
    %v3142 = vsel %vm1002, %v3131, %v3133
    %v3143 = vsel %vm1002, %v3133, %v3135
    %v3144 = vsel %vm1002, %v3135, %v3137
    %v3145 = vsel %vm1002, %v3137, %v3139
    %3153 = vst [vmem:[#allocation3 + $0x2d8] sm:$0xff] %v3140
    %3154 = vst [vmem:[#allocation3 + $0x2e0] sm:$0xff] %v3141
    %3155 = vst [vmem:[#allocation3 + $0x2e8] sm:$0xff] %v3142
    %3156 = vst [vmem:[#allocation3 + $0x2f0] sm:$0xff] %v3143
    %3157 = vst [vmem:[#allocation3 + $0x2f8] sm:$0xff] %v3144
    %3158 = vst [vmem:[#allocation3 + $0x300] sm:$0xff] %v3145
    %3159 = vst.msk [vmem:[#allocation3 + $0x308] sm:$0xff] %vm76, %v3139
    %v3160 = vld [vmem:[#allocation2] sm:$0xff]
    %v3161 = vld [vmem:[#allocation2 + $0x8] sm:$0xff]
    %v3162 = vld [vmem:[#allocation2 + $0x10] sm:$0xff]
    %v3163 = vld [vmem:[#allocation2 + $0x18] sm:$0xff]
    %v3164 = vld [vmem:[#allocation2 + $0x20] sm:$0xff]
    %v3165 = vld [vmem:[#allocation2 + $0x28] sm:$0xff]
    %v3166 = vld [vmem:[#allocation2 + $0x30] sm:$0xff]
    %v3167 = vld [vmem:[#allocation2 + $0x38] sm:$0xff]
    %v3168 = vld [vmem:[#allocation2 + $0x40] sm:$0xff]
    %v3169 = vld [vmem:[#allocation2 + $0x48] sm:$0xff]
    %v3170 = vld [vmem:[#allocation2 + $0x50] sm:$0xff]
    %v3171 = vld [vmem:[#allocation2 + $0x58] sm:$0xff]
    %v3172 = vld [vmem:[#allocation2 + $0x60] sm:$0xff]
    %v3173 = vld [vmem:[#allocation2 + $0x68] sm:$0xff]
    %v3174 = vpack.c.bf16 %v3167, %v3160
    %v3175 = vpack.c.bf16 %v3168, %v3161
    %v3176 = vpack.c.bf16 %v3169, %v3162
    %v3177 = vpack.c.bf16 %v3170, %v3163
    %v3178 = vpack.c.bf16 %v3171, %v3164
    %v3179 = vpack.c.bf16 %v3172, %v3165
    %v3180 = vpack.c.bf16 %v3173, %v3166
    %3188 = vrot.lane.b32.xlu0 %v3174, 84
    %v3189 = vpop.permute.xlu0 %3188
    %3190 = vrot.lane.b32.xlu0 %v3175, 84
    %v3191 = vpop.permute.xlu0 %3190
    %3192 = vrot.lane.b32.xlu0 %v3176, 84
    %v3193 = vpop.permute.xlu0 %3192
    %3194 = vrot.lane.b32.xlu0 %v3177, 84
    %v3195 = vpop.permute.xlu0 %3194
    %3196 = vrot.lane.b32.xlu0 %v3178, 84
    %v3197 = vpop.permute.xlu0 %3196
    %3198 = vrot.lane.b32.xlu0 %v3179, 84
    %v3199 = vpop.permute.xlu0 %3198
    %3200 = vrot.lane.b32.xlu0 %v3180, 84
    %v3201 = vpop.permute.xlu0 %3200
    %v3202 = vsel %vm1065, %v3189, %v3191
    %v3203 = vsel %vm1065, %v3191, %v3193
    %v3204 = vsel %vm1065, %v3193, %v3195
    %v3205 = vsel %vm1065, %v3195, %v3197
    %v3206 = vsel %vm1065, %v3197, %v3199
    %v3207 = vsel %vm1065, %v3199, %v3201
    %3215 = vst [vmem:[#allocation3 + $0x310] sm:$0xff] %v3202
    %3216 = vst [vmem:[#allocation3 + $0x318] sm:$0xff] %v3203
    %3217 = vst [vmem:[#allocation3 + $0x320] sm:$0xff] %v3204
    %3218 = vst [vmem:[#allocation3 + $0x328] sm:$0xff] %v3205
    %3219 = vst [vmem:[#allocation3 + $0x330] sm:$0xff] %v3206
    %3220 = vst [vmem:[#allocation3 + $0x338] sm:$0xff] %v3207
    %3221 = vst.msk [vmem:[#allocation3 + $0x340] sm:$0xff] %vm76, %v3201
    %v3222 = vld [vmem:[#allocation2] sm:$0xff]
    %v3223 = vld [vmem:[#allocation2 + $0x8] sm:$0xff]
    %v3224 = vld [vmem:[#allocation2 + $0x10] sm:$0xff]
    %v3225 = vld [vmem:[#allocation2 + $0x18] sm:$0xff]
    %v3226 = vld [vmem:[#allocation2 + $0x20] sm:$0xff]
    %v3227 = vld [vmem:[#allocation2 + $0x28] sm:$0xff]
    %v3228 = vld [vmem:[#allocation2 + $0x30] sm:$0xff]
    %v3229 = vld [vmem:[#allocation2 + $0x38] sm:$0xff]
    %v3230 = vld [vmem:[#allocation2 + $0x40] sm:$0xff]
    %v3231 = vld [vmem:[#allocation2 + $0x48] sm:$0xff]
    %v3232 = vld [vmem:[#allocation2 + $0x50] sm:$0xff]
    %v3233 = vld [vmem:[#allocation2 + $0x58] sm:$0xff]
    %v3234 = vld [vmem:[#allocation2 + $0x60] sm:$0xff]
    %v3235 = vld [vmem:[#allocation2 + $0x68] sm:$0xff]
    %v3236 = vpack.c.bf16 %v3229, %v3222
    %v3237 = vpack.c.bf16 %v3230, %v3223
    %v3238 = vpack.c.bf16 %v3231, %v3224
    %v3239 = vpack.c.bf16 %v3232, %v3225
    %v3240 = vpack.c.bf16 %v3233, %v3226
    %v3241 = vpack.c.bf16 %v3234, %v3227
    %v3242 = vpack.c.bf16 %v3235, %v3228
    %3250 = vrot.lane.b32.xlu0 %v3236, 68
    %v3251 = vpop.permute.xlu0 %3250
    %3252 = vrot.lane.b32.xlu0 %v3237, 68
    %v3253 = vpop.permute.xlu0 %3252
    %3254 = vrot.lane.b32.xlu0 %v3238, 68
    %v3255 = vpop.permute.xlu0 %3254
    %3256 = vrot.lane.b32.xlu0 %v3239, 68
    %v3257 = vpop.permute.xlu0 %3256
    %3258 = vrot.lane.b32.xlu0 %v3240, 68
    %v3259 = vpop.permute.xlu0 %3258
    %3260 = vrot.lane.b32.xlu0 %v3241, 68
    %v3261 = vpop.permute.xlu0 %3260
    %3262 = vrot.lane.b32.xlu0 %v3242, 68
    %v3263 = vpop.permute.xlu0 %3262
    %v3264 = vsel %vm1128, %v3251, %v3253
    %v3265 = vsel %vm1128, %v3253, %v3255
    %v3266 = vsel %vm1128, %v3255, %v3257
    %v3267 = vsel %vm1128, %v3257, %v3259
    %v3268 = vsel %vm1128, %v3259, %v3261
    %v3269 = vsel %vm1128, %v3261, %v3263
    %3277 = vst [vmem:[#allocation3 + $0x348] sm:$0xff] %v3264
    %3278 = vst [vmem:[#allocation3 + $0x350] sm:$0xff] %v3265
    %3279 = vst [vmem:[#allocation3 + $0x358] sm:$0xff] %v3266
    %3280 = vst [vmem:[#allocation3 + $0x360] sm:$0xff] %v3267
    %3281 = vst [vmem:[#allocation3 + $0x368] sm:$0xff] %v3268
    %3282 = vst [vmem:[#allocation3 + $0x370] sm:$0xff] %v3269
    %3283 = vst.msk [vmem:[#allocation3 + $0x378] sm:$0xff] %vm76, %v3263
    %v3284 = vld [vmem:[#allocation2] sm:$0xff]
    %v3285 = vld [vmem:[#allocation2 + $0x8] sm:$0xff]
    %v3286 = vld [vmem:[#allocation2 + $0x10] sm:$0xff]
    %v3287 = vld [vmem:[#allocation2 + $0x18] sm:$0xff]
    %v3288 = vld [vmem:[#allocation2 + $0x20] sm:$0xff]
    %v3289 = vld [vmem:[#allocation2 + $0x28] sm:$0xff]
    %v3290 = vld [vmem:[#allocation2 + $0x30] sm:$0xff]
    %v3291 = vld [vmem:[#allocation2 + $0x38] sm:$0xff]
    %v3292 = vld [vmem:[#allocation2 + $0x40] sm:$0xff]
    %v3293 = vld [vmem:[#allocation2 + $0x48] sm:$0xff]
    %v3294 = vld [vmem:[#allocation2 + $0x50] sm:$0xff]
    %v3295 = vld [vmem:[#allocation2 + $0x58] sm:$0xff]
    %v3296 = vld [vmem:[#allocation2 + $0x60] sm:$0xff]
    %v3297 = vld [vmem:[#allocation2 + $0x68] sm:$0xff]
    %v3298 = vpack.c.bf16 %v3291, %v3284
    %v3299 = vpack.c.bf16 %v3292, %v3285
    %v3300 = vpack.c.bf16 %v3293, %v3286
    %v3301 = vpack.c.bf16 %v3294, %v3287
    %v3302 = vpack.c.bf16 %v3295, %v3288
    %v3303 = vpack.c.bf16 %v3296, %v3289
    %v3304 = vpack.c.bf16 %v3297, %v3290
    %3312 = vrot.lane.b32.xlu0 %v3298, 67
    %v3313 = vpop.permute.xlu0 %3312
    %3314 = vrot.lane.b32.xlu0 %v3299, 67
    %v3315 = vpop.permute.xlu0 %3314
    %3316 = vrot.lane.b32.xlu0 %v3300, 67
    %v3317 = vpop.permute.xlu0 %3316
    %3318 = vrot.lane.b32.xlu0 %v3301, 67
    %v3319 = vpop.permute.xlu0 %3318
    %3320 = vrot.lane.b32.xlu0 %v3302, 67
    %v3321 = vpop.permute.xlu0 %3320
    %3322 = vrot.lane.b32.xlu0 %v3303, 67
    %v3323 = vpop.permute.xlu0 %3322
    %3324 = vrot.lane.b32.xlu0 %v3304, 67
    %v3325 = vpop.permute.xlu0 %3324
    %v3326 = vsel %vm1191, %v3313, %v3315
    %v3327 = vsel %vm1191, %v3315, %v3317
    %v3328 = vsel %vm1191, %v3317, %v3319
    %v3329 = vsel %vm1191, %v3319, %v3321
    %v3330 = vsel %vm1191, %v3321, %v3323
    %v3331 = vsel %vm1191, %v3323, %v3325
    %3339 = vst [vmem:[#allocation3 + $0x380] sm:$0xff] %v3326
    %3340 = vst [vmem:[#allocation3 + $0x388] sm:$0xff] %v3327
    %3341 = vst [vmem:[#allocation3 + $0x390] sm:$0xff] %v3328
    %3342 = vst [vmem:[#allocation3 + $0x398] sm:$0xff] %v3329
    %3343 = vst [vmem:[#allocation3 + $0x3a0] sm:$0xff] %v3330
    %3344 = vst [vmem:[#allocation3 + $0x3a8] sm:$0xff] %v3331
    %3345 = vst.msk [vmem:[#allocation3 + $0x3b0] sm:$0xff] %vm76, %v3325
    %v3346 = vld [vmem:[#allocation2] sm:$0xff]
    %v3347 = vld [vmem:[#allocation2 + $0x8] sm:$0xff]
    %v3348 = vld [vmem:[#allocation2 + $0x10] sm:$0xff]
    %v3349 = vld [vmem:[#allocation2 + $0x18] sm:$0xff]
    %v3350 = vld [vmem:[#allocation2 + $0x20] sm:$0xff]
    %v3351 = vld [vmem:[#allocation2 + $0x28] sm:$0xff]
    %v3352 = vld [vmem:[#allocation2 + $0x30] sm:$0xff]
    %v3353 = vld [vmem:[#allocation2 + $0x38] sm:$0xff]
    %v3354 = vld [vmem:[#allocation2 + $0x40] sm:$0xff]
    %v3355 = vld [vmem:[#allocation2 + $0x48] sm:$0xff]
    %v3356 = vld [vmem:[#allocation2 + $0x50] sm:$0xff]
    %v3357 = vld [vmem:[#allocation2 + $0x58] sm:$0xff]
    %v3358 = vld [vmem:[#allocation2 + $0x60] sm:$0xff]
    %v3359 = vld [vmem:[#allocation2 + $0x68] sm:$0xff]
    %v3360 = vpack.c.bf16 %v3353, %v3346
    %v3361 = vpack.c.bf16 %v3354, %v3347
    %v3362 = vpack.c.bf16 %v3355, %v3348
    %v3363 = vpack.c.bf16 %v3356, %v3349
    %v3364 = vpack.c.bf16 %v3357, %v3350
    %v3365 = vpack.c.bf16 %v3358, %v3351
    %v3366 = vpack.c.bf16 %v3359, %v3352
    %3374 = vrot.lane.b32.xlu0 %v3360, 66
    %v3375 = vpop.permute.xlu0 %3374
    %3376 = vrot.lane.b32.xlu0 %v3361, 66
    %v3377 = vpop.permute.xlu0 %3376
    %3378 = vrot.lane.b32.xlu0 %v3362, 66
    %v3379 = vpop.permute.xlu0 %3378
    %3380 = vrot.lane.b32.xlu0 %v3363, 66
    %v3381 = vpop.permute.xlu0 %3380
    %3382 = vrot.lane.b32.xlu0 %v3364, 66
    %v3383 = vpop.permute.xlu0 %3382
    %3384 = vrot.lane.b32.xlu0 %v3365, 66
    %v3385 = vpop.permute.xlu0 %3384
    %3386 = vrot.lane.b32.xlu0 %v3366, 66
    %v3387 = vpop.permute.xlu0 %3386
    %v3388 = vsel %vm1254, %v3375, %v3377
    %v3389 = vsel %vm1254, %v3377, %v3379
    %v3390 = vsel %vm1254, %v3379, %v3381
    %v3391 = vsel %vm1254, %v3381, %v3383
    %v3392 = vsel %vm1254, %v3383, %v3385
    %v3393 = vsel %vm1254, %v3385, %v3387
    %3401 = vst [vmem:[#allocation3 + $0x3b8] sm:$0xff] %v3388
    %3402 = vst [vmem:[#allocation3 + $0x3c0] sm:$0xff] %v3389
    %3403 = vst [vmem:[#allocation3 + $0x3c8] sm:$0xff] %v3390
    %3404 = vst [vmem:[#allocation3 + $0x3d0] sm:$0xff] %v3391
    %3405 = vst [vmem:[#allocation3 + $0x3d8] sm:$0xff] %v3392
    %3406 = vst [vmem:[#allocation3 + $0x3e0] sm:$0xff] %v3393
    %3407 = vst.msk [vmem:[#allocation3 + $0x3e8] sm:$0xff] %vm76, %v3387
    %v3408 = vld [vmem:[#allocation2] sm:$0xff]
    %v3409 = vld [vmem:[#allocation2 + $0x8] sm:$0xff]
    %v3410 = vld [vmem:[#allocation2 + $0x10] sm:$0xff]
    %v3411 = vld [vmem:[#allocation2 + $0x18] sm:$0xff]
    %v3412 = vld [vmem:[#allocation2 + $0x20] sm:$0xff]
    %v3413 = vld [vmem:[#allocation2 + $0x28] sm:$0xff]
    %v3414 = vld [vmem:[#allocation2 + $0x30] sm:$0xff]
    %v3415 = vld [vmem:[#allocation2 + $0x38] sm:$0xff]
    %v3416 = vld [vmem:[#allocation2 + $0x40] sm:$0xff]
    %v3417 = vld [vmem:[#allocation2 + $0x48] sm:$0xff]
    %v3418 = vld [vmem:[#allocation2 + $0x50] sm:$0xff]
    %v3419 = vld [vmem:[#allocation2 + $0x58] sm:$0xff]
    %v3420 = vld [vmem:[#allocation2 + $0x60] sm:$0xff]
    %v3421 = vld [vmem:[#allocation2 + $0x68] sm:$0xff]
    %v3422 = vpack.c.bf16 %v3415, %v3408
    %v3423 = vpack.c.bf16 %v3416, %v3409
    %v3424 = vpack.c.bf16 %v3417, %v3410
    %v3425 = vpack.c.bf16 %v3418, %v3411
    %v3426 = vpack.c.bf16 %v3419, %v3412
    %v3427 = vpack.c.bf16 %v3420, %v3413
    %v3428 = vpack.c.bf16 %v3421, %v3414
    %3436 = vrot.lane.b32.xlu0 %v3422, 65
    %v3437 = vpop.permute.xlu0 %3436
    %3438 = vrot.lane.b32.xlu0 %v3423, 65
    %v3439 = vpop.permute.xlu0 %3438
    %3440 = vrot.lane.b32.xlu0 %v3424, 65
    %v3441 = vpop.permute.xlu0 %3440
    %3442 = vrot.lane.b32.xlu0 %v3425, 65
    %v3443 = vpop.permute.xlu0 %3442
    %3444 = vrot.lane.b32.xlu0 %v3426, 65
    %v3445 = vpop.permute.xlu0 %3444
    %3446 = vrot.lane.b32.xlu0 %v3427, 65
    %v3447 = vpop.permute.xlu0 %3446
    %3448 = vrot.lane.b32.xlu0 %v3428, 65
    %v3449 = vpop.permute.xlu0 %3448
    %v3450 = vsel %vm1317, %v3437, %v3439
    %v3451 = vsel %vm1317, %v3439, %v3441
    %v3452 = vsel %vm1317, %v3441, %v3443
    %v3453 = vsel %vm1317, %v3443, %v3445
    %v3454 = vsel %vm1317, %v3445, %v3447
    %v3455 = vsel %vm1317, %v3447, %v3449
    %3463 = vst [vmem:[#allocation3 + $0x3f0] sm:$0xff] %v3450
    %3464 = vst [vmem:[#allocation3 + $0x3f8] sm:$0xff] %v3451
    %3465 = vst [vmem:[#allocation3 + $0x400] sm:$0xff] %v3452
    %3466 = vst [vmem:[#allocation3 + $0x408] sm:$0xff] %v3453
    %3467 = vst [vmem:[#allocation3 + $0x410] sm:$0xff] %v3454
    %3468 = vst [vmem:[#allocation3 + $0x418] sm:$0xff] %v3455
    %3469 = vst.msk [vmem:[#allocation3 + $0x420] sm:$0xff] %vm76, %v3449
    %v3470 = vld [vmem:[#allocation2] sm:$0xff]
    %v3471 = vld [vmem:[#allocation2 + $0x8] sm:$0xff]
    %v3472 = vld [vmem:[#allocation2 + $0x10] sm:$0xff]
    %v3473 = vld [vmem:[#allocation2 + $0x18] sm:$0xff]
    %v3474 = vld [vmem:[#allocation2 + $0x20] sm:$0xff]
    %v3475 = vld [vmem:[#allocation2 + $0x28] sm:$0xff]
    %v3476 = vld [vmem:[#allocation2 + $0x30] sm:$0xff]
    %v3477 = vld [vmem:[#allocation2 + $0x38] sm:$0xff]
    %v3478 = vld [vmem:[#allocation2 + $0x40] sm:$0xff]
    %v3479 = vld [vmem:[#allocation2 + $0x48] sm:$0xff]
    %v3480 = vld [vmem:[#allocation2 + $0x50] sm:$0xff]
    %v3481 = vld [vmem:[#allocation2 + $0x58] sm:$0xff]
    %v3482 = vld [vmem:[#allocation2 + $0x60] sm:$0xff]
    %v3483 = vld [vmem:[#allocation2 + $0x68] sm:$0xff]
    %v3484 = vpack.c.bf16 %v3477, %v3470
    %v3485 = vpack.c.bf16 %v3478, %v3471
    %v3486 = vpack.c.bf16 %v3479, %v3472
    %v3487 = vpack.c.bf16 %v3480, %v3473
    %v3488 = vpack.c.bf16 %v3481, %v3474
    %v3489 = vpack.c.bf16 %v3482, %v3475
    %v3490 = vpack.c.bf16 %v3483, %v3476
    %3498 = vrot.lane.b32.xlu0 %v3484, 64
    %v3499 = vpop.permute.xlu0 %3498
    %3500 = vrot.lane.b32.xlu0 %v3485, 64
    %v3501 = vpop.permute.xlu0 %3500
    %3502 = vrot.lane.b32.xlu0 %v3486, 64
    %v3503 = vpop.permute.xlu0 %3502
    %3504 = vrot.lane.b32.xlu0 %v3487, 64
    %v3505 = vpop.permute.xlu0 %3504
    %3506 = vrot.lane.b32.xlu0 %v3488, 64
    %v3507 = vpop.permute.xlu0 %3506
    %3508 = vrot.lane.b32.xlu0 %v3489, 64
    %v3509 = vpop.permute.xlu0 %3508
    %3510 = vrot.lane.b32.xlu0 %v3490, 64
    %v3511 = vpop.permute.xlu0 %3510
    %v3512 = vsel %vm1380, %v3499, %v3501
    %v3513 = vsel %vm1380, %v3501, %v3503
    %v3514 = vsel %vm1380, %v3503, %v3505
    %v3515 = vsel %vm1380, %v3505, %v3507
    %v3516 = vsel %vm1380, %v3507, %v3509
    %v3517 = vsel %vm1380, %v3509, %v3511
    %3525 = vst [vmem:[#allocation3 + $0x428] sm:$0xff] %v3512
    %3526 = vst [vmem:[#allocation3 + $0x430] sm:$0xff] %v3513
    %3527 = vst [vmem:[#allocation3 + $0x438] sm:$0xff] %v3514
    %3528 = vst [vmem:[#allocation3 + $0x440] sm:$0xff] %v3515
    %3529 = vst [vmem:[#allocation3 + $0x448] sm:$0xff] %v3516
    %3530 = vst [vmem:[#allocation3 + $0x450] sm:$0xff] %v3517
    %3531 = vst.msk [vmem:[#allocation3 + $0x458] sm:$0xff] %vm76, %v3511
    %v3532 = vld [vmem:[#allocation2] sm:$0xff]
    %v3533 = vld [vmem:[#allocation2 + $0x8] sm:$0xff]
    %v3534 = vld [vmem:[#allocation2 + $0x10] sm:$0xff]
    %v3535 = vld [vmem:[#allocation2 + $0x18] sm:$0xff]
    %v3536 = vld [vmem:[#allocation2 + $0x20] sm:$0xff]
    %v3537 = vld [vmem:[#allocation2 + $0x28] sm:$0xff]
    %v3538 = vld [vmem:[#allocation2 + $0x30] sm:$0xff]
    %v3539 = vld [vmem:[#allocation2 + $0x38] sm:$0xff]
    %v3540 = vld [vmem:[#allocation2 + $0x40] sm:$0xff]
    %v3541 = vld [vmem:[#allocation2 + $0x48] sm:$0xff]
    %v3542 = vld [vmem:[#allocation2 + $0x50] sm:$0xff]
    %v3543 = vld [vmem:[#allocation2 + $0x58] sm:$0xff]
    %v3544 = vld [vmem:[#allocation2 + $0x60] sm:$0xff]
    %v3545 = vld [vmem:[#allocation2 + $0x68] sm:$0xff]
    %v3546 = vpack.c.bf16 %v3539, %v3532
    %v3547 = vpack.c.bf16 %v3540, %v3533
    %v3548 = vpack.c.bf16 %v3541, %v3534
    %v3549 = vpack.c.bf16 %v3542, %v3535
    %v3550 = vpack.c.bf16 %v3543, %v3536
    %v3551 = vpack.c.bf16 %v3544, %v3537
    %v3552 = vpack.c.bf16 %v3545, %v3538
    %3560 = vrot.lane.b32.xlu0 %v3546, 48
    %v3561 = vpop.permute.xlu0 %3560
    %3562 = vrot.lane.b32.xlu0 %v3547, 48
    %v3563 = vpop.permute.xlu0 %3562
    %3564 = vrot.lane.b32.xlu0 %v3548, 48
    %v3565 = vpop.permute.xlu0 %3564
    %3566 = vrot.lane.b32.xlu0 %v3549, 48
    %v3567 = vpop.permute.xlu0 %3566
    %3568 = vrot.lane.b32.xlu0 %v3550, 48
    %v3569 = vpop.permute.xlu0 %3568
    %3570 = vrot.lane.b32.xlu0 %v3551, 48
    %v3571 = vpop.permute.xlu0 %3570
    %3572 = vrot.lane.b32.xlu0 %v3552, 48
    %v3573 = vpop.permute.xlu0 %3572
    %v3574 = vsel %vm1443, %v3561, %v3563
    %v3575 = vsel %vm1443, %v3563, %v3565
    %v3576 = vsel %vm1443, %v3565, %v3567
    %v3577 = vsel %vm1443, %v3567, %v3569
    %v3578 = vsel %vm1443, %v3569, %v3571
    %v3579 = vsel %vm1443, %v3571, %v3573
    %3587 = vst [vmem:[#allocation3 + $0x460] sm:$0xff] %v3574
    %3588 = vst [vmem:[#allocation3 + $0x468] sm:$0xff] %v3575
    %3589 = vst [vmem:[#allocation3 + $0x470] sm:$0xff] %v3576
    %3590 = vst [vmem:[#allocation3 + $0x478] sm:$0xff] %v3577
    %3591 = vst [vmem:[#allocation3 + $0x480] sm:$0xff] %v3578
    %3592 = vst [vmem:[#allocation3 + $0x488] sm:$0xff] %v3579
    %3593 = vst.msk [vmem:[#allocation3 + $0x490] sm:$0xff] %vm76, %v3573
    %v3594 = vld [vmem:[#allocation2] sm:$0xff]
    %v3595 = vld [vmem:[#allocation2 + $0x8] sm:$0xff]
    %v3596 = vld [vmem:[#allocation2 + $0x10] sm:$0xff]
    %v3597 = vld [vmem:[#allocation2 + $0x18] sm:$0xff]
    %v3598 = vld [vmem:[#allocation2 + $0x20] sm:$0xff]
    %v3599 = vld [vmem:[#allocation2 + $0x28] sm:$0xff]
    %v3600 = vld [vmem:[#allocation2 + $0x30] sm:$0xff]
    %v3601 = vld [vmem:[#allocation2 + $0x38] sm:$0xff]
    %v3602 = vld [vmem:[#allocation2 + $0x40] sm:$0xff]
    %v3603 = vld [vmem:[#allocation2 + $0x48] sm:$0xff]
    %v3604 = vld [vmem:[#allocation2 + $0x50] sm:$0xff]
    %v3605 = vld [vmem:[#allocation2 + $0x58] sm:$0xff]
    %v3606 = vld [vmem:[#allocation2 + $0x60] sm:$0xff]
    %v3607 = vld [vmem:[#allocation2 + $0x68] sm:$0xff]
    %v3608 = vpack.c.bf16 %v3601, %v3594
    %v3609 = vpack.c.bf16 %v3602, %v3595
    %v3610 = vpack.c.bf16 %v3603, %v3596
    %v3611 = vpack.c.bf16 %v3604, %v3597
    %v3612 = vpack.c.bf16 %v3605, %v3598
    %v3613 = vpack.c.bf16 %v3606, %v3599
    %v3614 = vpack.c.bf16 %v3607, %v3600
    %3622 = vrot.lane.b32.xlu0 %v3608, 47
    %v3623 = vpop.permute.xlu0 %3622
    %3624 = vrot.lane.b32.xlu0 %v3609, 47
    %v3625 = vpop.permute.xlu0 %3624
    %3626 = vrot.lane.b32.xlu0 %v3610, 47
    %v3627 = vpop.permute.xlu0 %3626
    %3628 = vrot.lane.b32.xlu0 %v3611, 47
    %v3629 = vpop.permute.xlu0 %3628
    %3630 = vrot.lane.b32.xlu0 %v3612, 47
    %v3631 = vpop.permute.xlu0 %3630
    %3632 = vrot.lane.b32.xlu0 %v3613, 47
    %v3633 = vpop.permute.xlu0 %3632
    %3634 = vrot.lane.b32.xlu0 %v3614, 47
    %v3635 = vpop.permute.xlu0 %3634
    %v3636 = vsel %vm1506, %v3623, %v3625
    %v3637 = vsel %vm1506, %v3625, %v3627
    %v3638 = vsel %vm1506, %v3627, %v3629
    %v3639 = vsel %vm1506, %v3629, %v3631
    %v3640 = vsel %vm1506, %v3631, %v3633
    %v3641 = vsel %vm1506, %v3633, %v3635
    %3649 = vst [vmem:[#allocation3 + $0x498] sm:$0xff] %v3636
    %3650 = vst [vmem:[#allocation3 + $0x4a0] sm:$0xff] %v3637
    %3651 = vst [vmem:[#allocation3 + $0x4a8] sm:$0xff] %v3638
    %3652 = vst [vmem:[#allocation3 + $0x4b0] sm:$0xff] %v3639
    %3653 = vst [vmem:[#allocation3 + $0x4b8] sm:$0xff] %v3640
    %3654 = vst [vmem:[#allocation3 + $0x4c0] sm:$0xff] %v3641
    %3655 = vst.msk [vmem:[#allocation3 + $0x4c8] sm:$0xff] %vm76, %v3635
    %v3656 = vld [vmem:[#allocation2] sm:$0xff]
    %v3657 = vld [vmem:[#allocation2 + $0x8] sm:$0xff]
    %v3658 = vld [vmem:[#allocation2 + $0x10] sm:$0xff]
    %v3659 = vld [vmem:[#allocation2 + $0x18] sm:$0xff]
    %v3660 = vld [vmem:[#allocation2 + $0x20] sm:$0xff]
    %v3661 = vld [vmem:[#allocation2 + $0x28] sm:$0xff]
    %v3662 = vld [vmem:[#allocation2 + $0x30] sm:$0xff]
    %v3663 = vld [vmem:[#allocation2 + $0x38] sm:$0xff]
    %v3664 = vld [vmem:[#allocation2 + $0x40] sm:$0xff]
    %v3665 = vld [vmem:[#allocation2 + $0x48] sm:$0xff]
    %v3666 = vld [vmem:[#allocation2 + $0x50] sm:$0xff]
    %v3667 = vld [vmem:[#allocation2 + $0x58] sm:$0xff]
    %v3668 = vld [vmem:[#allocation2 + $0x60] sm:$0xff]
    %v3669 = vld [vmem:[#allocation2 + $0x68] sm:$0xff]
    %v3670 = vpack.c.bf16 %v3663, %v3656
    %v3671 = vpack.c.bf16 %v3664, %v3657
    %v3672 = vpack.c.bf16 %v3665, %v3658
    %v3673 = vpack.c.bf16 %v3666, %v3659
    %v3674 = vpack.c.bf16 %v3667, %v3660
    %v3675 = vpack.c.bf16 %v3668, %v3661
    %v3676 = vpack.c.bf16 %v3669, %v3662
    %3684 = vrot.lane.b32.xlu0 %v3670, 46
    %v3685 = vpop.permute.xlu0 %3684
    %3686 = vrot.lane.b32.xlu0 %v3671, 46
    %v3687 = vpop.permute.xlu0 %3686
    %3688 = vrot.lane.b32.xlu0 %v3672, 46
    %v3689 = vpop.permute.xlu0 %3688
    %3690 = vrot.lane.b32.xlu0 %v3673, 46
    %v3691 = vpop.permute.xlu0 %3690
    %3692 = vrot.lane.b32.xlu0 %v3674, 46
    %v3693 = vpop.permute.xlu0 %3692
    %3694 = vrot.lane.b32.xlu0 %v3675, 46
    %v3695 = vpop.permute.xlu0 %3694
    %3696 = vrot.lane.b32.xlu0 %v3676, 46
    %v3697 = vpop.permute.xlu0 %3696
    %v3698 = vsel %vm1569, %v3685, %v3687
    %v3699 = vsel %vm1569, %v3687, %v3689
    %v3700 = vsel %vm1569, %v3689, %v3691
    %v3701 = vsel %vm1569, %v3691, %v3693
    %v3702 = vsel %vm1569, %v3693, %v3695
    %v3703 = vsel %vm1569, %v3695, %v3697
    %3711 = vst [vmem:[#allocation3 + $0x4d0] sm:$0xff] %v3698
    %3712 = vst [vmem:[#allocation3 + $0x4d8] sm:$0xff] %v3699
    %3713 = vst [vmem:[#allocation3 + $0x4e0] sm:$0xff] %v3700
    %3714 = vst [vmem:[#allocation3 + $0x4e8] sm:$0xff] %v3701
    %3715 = vst [vmem:[#allocation3 + $0x4f0] sm:$0xff] %v3702
    %3716 = vst [vmem:[#allocation3 + $0x4f8] sm:$0xff] %v3703
    %3717 = vst.msk [vmem:[#allocation3 + $0x500] sm:$0xff] %vm76, %v3697
    %v3718 = vld [vmem:[#allocation2] sm:$0xff]
    %v3719 = vld [vmem:[#allocation2 + $0x8] sm:$0xff]
    %v3720 = vld [vmem:[#allocation2 + $0x10] sm:$0xff]
    %v3721 = vld [vmem:[#allocation2 + $0x18] sm:$0xff]
    %v3722 = vld [vmem:[#allocation2 + $0x20] sm:$0xff]
    %v3723 = vld [vmem:[#allocation2 + $0x28] sm:$0xff]
    %v3724 = vld [vmem:[#allocation2 + $0x30] sm:$0xff]
    %v3725 = vld [vmem:[#allocation2 + $0x38] sm:$0xff]
    %v3726 = vld [vmem:[#allocation2 + $0x40] sm:$0xff]
    %v3727 = vld [vmem:[#allocation2 + $0x48] sm:$0xff]
    %v3728 = vld [vmem:[#allocation2 + $0x50] sm:$0xff]
    %v3729 = vld [vmem:[#allocation2 + $0x58] sm:$0xff]
    %v3730 = vld [vmem:[#allocation2 + $0x60] sm:$0xff]
    %v3731 = vld [vmem:[#allocation2 + $0x68] sm:$0xff]
    %v3732 = vpack.c.bf16 %v3725, %v3718
    %v3733 = vpack.c.bf16 %v3726, %v3719
    %v3734 = vpack.c.bf16 %v3727, %v3720
    %v3735 = vpack.c.bf16 %v3728, %v3721
    %v3736 = vpack.c.bf16 %v3729, %v3722
    %v3737 = vpack.c.bf16 %v3730, %v3723
    %v3738 = vpack.c.bf16 %v3731, %v3724
    %3746 = vrot.lane.b32.xlu0 %v3732, 45
    %v3747 = vpop.permute.xlu0 %3746
    %3748 = vrot.lane.b32.xlu0 %v3733, 45
    %v3749 = vpop.permute.xlu0 %3748
    %3750 = vrot.lane.b32.xlu0 %v3734, 45
    %v3751 = vpop.permute.xlu0 %3750
    %3752 = vrot.lane.b32.xlu0 %v3735, 45
    %v3753 = vpop.permute.xlu0 %3752
    %3754 = vrot.lane.b32.xlu0 %v3736, 45
    %v3755 = vpop.permute.xlu0 %3754
    %3756 = vrot.lane.b32.xlu0 %v3737, 45
    %v3757 = vpop.permute.xlu0 %3756
    %3758 = vrot.lane.b32.xlu0 %v3738, 45
    %v3759 = vpop.permute.xlu0 %3758
    %v3760 = vsel %vm1632, %v3747, %v3749
    %v3761 = vsel %vm1632, %v3749, %v3751
    %v3762 = vsel %vm1632, %v3751, %v3753
    %v3763 = vsel %vm1632, %v3753, %v3755
    %v3764 = vsel %vm1632, %v3755, %v3757
    %v3765 = vsel %vm1632, %v3757, %v3759
    %3773 = vst [vmem:[#allocation3 + $0x508] sm:$0xff] %v3760
    %3774 = vst [vmem:[#allocation3 + $0x510] sm:$0xff] %v3761
    %3775 = vst [vmem:[#allocation3 + $0x518] sm:$0xff] %v3762
    %3776 = vst [vmem:[#allocation3 + $0x520] sm:$0xff] %v3763
    %3777 = vst [vmem:[#allocation3 + $0x528] sm:$0xff] %v3764
    %3778 = vst [vmem:[#allocation3 + $0x530] sm:$0xff] %v3765
    %3779 = vst.msk [vmem:[#allocation3 + $0x538] sm:$0xff] %vm76, %v3759
    %v3780 = vld [vmem:[#allocation2] sm:$0xff]
    %v3781 = vld [vmem:[#allocation2 + $0x8] sm:$0xff]
    %v3782 = vld [vmem:[#allocation2 + $0x10] sm:$0xff]
    %v3783 = vld [vmem:[#allocation2 + $0x18] sm:$0xff]
    %v3784 = vld [vmem:[#allocation2 + $0x20] sm:$0xff]
    %v3785 = vld [vmem:[#allocation2 + $0x28] sm:$0xff]
    %v3786 = vld [vmem:[#allocation2 + $0x30] sm:$0xff]
    %v3787 = vld [vmem:[#allocation2 + $0x38] sm:$0xff]
    %v3788 = vld [vmem:[#allocation2 + $0x40] sm:$0xff]
    %v3789 = vld [vmem:[#allocation2 + $0x48] sm:$0xff]
    %v3790 = vld [vmem:[#allocation2 + $0x50] sm:$0xff]
    %v3791 = vld [vmem:[#allocation2 + $0x58] sm:$0xff]
    %v3792 = vld [vmem:[#allocation2 + $0x60] sm:$0xff]
    %v3793 = vld [vmem:[#allocation2 + $0x68] sm:$0xff]
    %v3794 = vpack.c.bf16 %v3787, %v3780
    %v3795 = vpack.c.bf16 %v3788, %v3781
    %v3796 = vpack.c.bf16 %v3789, %v3782
    %v3797 = vpack.c.bf16 %v3790, %v3783
    %v3798 = vpack.c.bf16 %v3791, %v3784
    %v3799 = vpack.c.bf16 %v3792, %v3785
    %v3800 = vpack.c.bf16 %v3793, %v3786
    %3808 = vrot.lane.b32.xlu0 %v3794, 44
    %v3809 = vpop.permute.xlu0 %3808
    %3810 = vrot.lane.b32.xlu0 %v3795, 44
    %v3811 = vpop.permute.xlu0 %3810
    %3812 = vrot.lane.b32.xlu0 %v3796, 44
    %v3813 = vpop.permute.xlu0 %3812
    %3814 = vrot.lane.b32.xlu0 %v3797, 44
    %v3815 = vpop.permute.xlu0 %3814
    %3816 = vrot.lane.b32.xlu0 %v3798, 44
    %v3817 = vpop.permute.xlu0 %3816
    %3818 = vrot.lane.b32.xlu0 %v3799, 44
    %v3819 = vpop.permute.xlu0 %3818
    %3820 = vrot.lane.b32.xlu0 %v3800, 44
    %v3821 = vpop.permute.xlu0 %3820
    %v3822 = vsel %vm1695, %v3809, %v3811
    %v3823 = vsel %vm1695, %v3811, %v3813
    %v3824 = vsel %vm1695, %v3813, %v3815
    %v3825 = vsel %vm1695, %v3815, %v3817
    %v3826 = vsel %vm1695, %v3817, %v3819
    %v3827 = vsel %vm1695, %v3819, %v3821
    %3835 = vst [vmem:[#allocation3 + $0x540] sm:$0xff] %v3822
    %3836 = vst [vmem:[#allocation3 + $0x548] sm:$0xff] %v3823
    %3837 = vst [vmem:[#allocation3 + $0x550] sm:$0xff] %v3824
    %3838 = vst [vmem:[#allocation3 + $0x558] sm:$0xff] %v3825
    %3839 = vst [vmem:[#allocation3 + $0x560] sm:$0xff] %v3826
    %3840 = vst [vmem:[#allocation3 + $0x568] sm:$0xff] %v3827
    %3841 = vst.msk [vmem:[#allocation3 + $0x570] sm:$0xff] %vm76, %v3821
    %v3842 = vld [vmem:[#allocation7 + $0x20] sm:$0xff]
    %v3843 = vld [vmem:[#allocation7 + $0x28] sm:$0xff]
    %v3844 = vld [vmem:[#allocation7 + $0x30] sm:$0xff]
    %v3845 = vld [vmem:[#allocation7 + $0x38] sm:$0xff]
    %v3846 = vld [vmem:[#allocation9] sm:$0xff]
    %v3847 = vld [vmem:[#allocation9 + $0x8] sm:$0xff]
    %v3848 = vld [vmem:[#allocation3] sm:$0xff]
    %v3849 = vld [vmem:[#allocation3 + $0x8] sm:$0xff]
    %v3850 = vld [vmem:[#allocation3 + $0x10] sm:$0xff]
    %v3851 = vld [vmem:[#allocation3 + $0x18] sm:$0xff]
    %v3852 = vld [vmem:[#allocation3 + $0x20] sm:$0xff]
    %v3853 = vld [vmem:[#allocation3 + $0x28] sm:$0xff]
    %v3854 = vld [vmem:[#allocation3 + $0x30] sm:$0xff]
    %v3855 = vld [vmem:[#allocation3 + $0x38] sm:$0xff]
    %v3856 = vld [vmem:[#allocation3 + $0x40] sm:$0xff]
    %v3857 = vld [vmem:[#allocation3 + $0x48] sm:$0xff]
    %v3858 = vld [vmem:[#allocation3 + $0x50] sm:$0xff]
    %v3859 = vld [vmem:[#allocation3 + $0x58] sm:$0xff]
    %v3860 = vld [vmem:[#allocation3 + $0x60] sm:$0xff]
    %v3861 = vld [vmem:[#allocation3 + $0x68] sm:$0xff]
    %v3862 = vld [vmem:[#allocation3 + $0x70] sm:$0xff]
    %v3863 = vld [vmem:[#allocation3 + $0x78] sm:$0xff]
    %v3864 = vld [vmem:[#allocation3 + $0x80] sm:$0xff]
    %v3865 = vld [vmem:[#allocation3 + $0x88] sm:$0xff]
    %v3866 = vld [vmem:[#allocation3 + $0x90] sm:$0xff]
    %v3867 = vld [vmem:[#allocation3 + $0x98] sm:$0xff]
    %v3868 = vld [vmem:[#allocation3 + $0xa0] sm:$0xff]
    %v3869 = vld [vmem:[#allocation3 + $0xa8] sm:$0xff]
    %v3870 = vld [vmem:[#allocation3 + $0xb0] sm:$0xff]
    %v3871 = vld [vmem:[#allocation3 + $0xb8] sm:$0xff]
    %v3872 = vld [vmem:[#allocation3 + $0xc0] sm:$0xff]
    %v3873 = vld [vmem:[#allocation3 + $0xc8] sm:$0xff]
    %v3874 = vld [vmem:[#allocation3 + $0xd0] sm:$0xff]
    %v3875 = vld [vmem:[#allocation3 + $0xd8] sm:$0xff]
    %v3876 = vld [vmem:[#allocation3 + $0xe0] sm:$0xff]
    %v3877 = vld [vmem:[#allocation3 + $0xe8] sm:$0xff]
    %v3878 = vld [vmem:[#allocation3 + $0xf0] sm:$0xff]
    %v3879 = vld [vmem:[#allocation3 + $0xf8] sm:$0xff]
    %v3880 = vld [vmem:[#allocation3 + $0x100] sm:$0xff]
    %v3881 = vld [vmem:[#allocation3 + $0x108] sm:$0xff]
    %v3882 = vld [vmem:[#allocation3 + $0x110] sm:$0xff]
    %v3883 = vld [vmem:[#allocation3 + $0x118] sm:$0xff]
    %v3884 = vld [vmem:[#allocation3 + $0x120] sm:$0xff]
    %v3885 = vld [vmem:[#allocation3 + $0x128] sm:$0xff]
    %v3886 = vld [vmem:[#allocation3 + $0x130] sm:$0xff]
    %v3887 = vld [vmem:[#allocation3 + $0x138] sm:$0xff]
    %v3888 = vld [vmem:[#allocation3 + $0x140] sm:$0xff]
    %v3889 = vld [vmem:[#allocation3 + $0x148] sm:$0xff]
    %v3890 = vld [vmem:[#allocation3 + $0x150] sm:$0xff]
    %v3891 = vld [vmem:[#allocation3 + $0x158] sm:$0xff]
    %v3892 = vld [vmem:[#allocation3 + $0x160] sm:$0xff]
    %v3893 = vld [vmem:[#allocation3 + $0x168] sm:$0xff]
    %v3894 = vld [vmem:[#allocation3 + $0x170] sm:$0xff]
    %v3895 = vld [vmem:[#allocation3 + $0x178] sm:$0xff]
    %v3896 = vld [vmem:[#allocation3 + $0x180] sm:$0xff]
    %v3897 = vld [vmem:[#allocation3 + $0x188] sm:$0xff]
    %v3898 = vld [vmem:[#allocation3 + $0x190] sm:$0xff]
    %v3899 = vld [vmem:[#allocation3 + $0x198] sm:$0xff]
    %v3900 = vld [vmem:[#allocation3 + $0x1a0] sm:$0xff]
    %v3901 = vld [vmem:[#allocation3 + $0x1a8] sm:$0xff]
    %v3902 = vld [vmem:[#allocation3 + $0x1b0] sm:$0xff]
    %v3903 = vld [vmem:[#allocation3 + $0x1b8] sm:$0xff]
    %v3904 = vld [vmem:[#allocation3 + $0x1c0] sm:$0xff]
    %v3905 = vld [vmem:[#allocation3 + $0x1c8] sm:$0xff]
    %v3906 = vld [vmem:[#allocation3 + $0x1d0] sm:$0xff]
    %v3907 = vld [vmem:[#allocation3 + $0x1d8] sm:$0xff]
    %v3908 = vld [vmem:[#allocation3 + $0x1e0] sm:$0xff]
    %v3909 = vld [vmem:[#allocation3 + $0x1e8] sm:$0xff]
    %v3910 = vld [vmem:[#allocation3 + $0x1f0] sm:$0xff]
    %v3911 = vld [vmem:[#allocation3 + $0x1f8] sm:$0xff]
    %v3912 = vld [vmem:[#allocation3 + $0x200] sm:$0xff]
    %v3913 = vld [vmem:[#allocation3 + $0x208] sm:$0xff]
    %v3914 = vld [vmem:[#allocation3 + $0x210] sm:$0xff]
    %v3915 = vld [vmem:[#allocation3 + $0x218] sm:$0xff]
    %v3916 = vld [vmem:[#allocation3 + $0x220] sm:$0xff]
    %v3917 = vld [vmem:[#allocation3 + $0x228] sm:$0xff]
    %v3918 = vld [vmem:[#allocation3 + $0x230] sm:$0xff]
    %v3919 = vld [vmem:[#allocation3 + $0x238] sm:$0xff]
    %v3920 = vld [vmem:[#allocation3 + $0x240] sm:$0xff]
    %v3921 = vld [vmem:[#allocation3 + $0x248] sm:$0xff]
    %v3922 = vld [vmem:[#allocation3 + $0x250] sm:$0xff]
    %v3923 = vld [vmem:[#allocation3 + $0x258] sm:$0xff]
    %v3924 = vld [vmem:[#allocation3 + $0x260] sm:$0xff]
    %v3925 = vld [vmem:[#allocation3 + $0x268] sm:$0xff]
    %v3926 = vld [vmem:[#allocation3 + $0x270] sm:$0xff]
    %v3927 = vld [vmem:[#allocation3 + $0x278] sm:$0xff]
    %v3928 = vld [vmem:[#allocation3 + $0x280] sm:$0xff]
    %v3929 = vld [vmem:[#allocation3 + $0x288] sm:$0xff]
    %v3930 = vld [vmem:[#allocation3 + $0x290] sm:$0xff]
    %v3931 = vld [vmem:[#allocation3 + $0x298] sm:$0xff]
    %v3932 = vld [vmem:[#allocation3 + $0x2a0] sm:$0xff]
    %v3933 = vld [vmem:[#allocation3 + $0x2a8] sm:$0xff]
    %v3934 = vld [vmem:[#allocation3 + $0x2b0] sm:$0xff]
    %v3935 = vld [vmem:[#allocation3 + $0x2b8] sm:$0xff]
    %v3936 = vld [vmem:[#allocation3 + $0x2c0] sm:$0xff]
    %v3937 = vld [vmem:[#allocation3 + $0x2c8] sm:$0xff]
    %v3938 = vld [vmem:[#allocation3 + $0x2d0] sm:$0xff]
    %v3939 = vld [vmem:[#allocation3 + $0x2d8] sm:$0xff]
    %v3940 = vld [vmem:[#allocation3 + $0x2e0] sm:$0xff]
    %v3941 = vld [vmem:[#allocation3 + $0x2e8] sm:$0xff]
    %v3942 = vld [vmem:[#allocation3 + $0x2f0] sm:$0xff]
    %v3943 = vld [vmem:[#allocation3 + $0x2f8] sm:$0xff]
    %v3944 = vld [vmem:[#allocation3 + $0x300] sm:$0xff]
    %v3945 = vld [vmem:[#allocation3 + $0x308] sm:$0xff]
    %v3946 = vld [vmem:[#allocation3 + $0x310] sm:$0xff]
    %v3947 = vld [vmem:[#allocation3 + $0x318] sm:$0xff]
    %v3948 = vld [vmem:[#allocation3 + $0x320] sm:$0xff]
    %v3949 = vld [vmem:[#allocation3 + $0x328] sm:$0xff]
    %v3950 = vld [vmem:[#allocation3 + $0x330] sm:$0xff]
    %v3951 = vld [vmem:[#allocation3 + $0x338] sm:$0xff]
    %v3952 = vld [vmem:[#allocation3 + $0x340] sm:$0xff]
    %v3953 = vld [vmem:[#allocation3 + $0x348] sm:$0xff]
    %v3954 = vld [vmem:[#allocation3 + $0x350] sm:$0xff]
    %v3955 = vld [vmem:[#allocation3 + $0x358] sm:$0xff]
    %v3956 = vld [vmem:[#allocation3 + $0x360] sm:$0xff]
    %v3957 = vld [vmem:[#allocation3 + $0x368] sm:$0xff]
    %v3958 = vld [vmem:[#allocation3 + $0x370] sm:$0xff]
    %v3959 = vld [vmem:[#allocation3 + $0x378] sm:$0xff]
    %v3960 = vld [vmem:[#allocation3 + $0x380] sm:$0xff]
    %v3961 = vld [vmem:[#allocation3 + $0x388] sm:$0xff]
    %v3962 = vld [vmem:[#allocation3 + $0x390] sm:$0xff]
    %v3963 = vld [vmem:[#allocation3 + $0x398] sm:$0xff]
    %v3964 = vld [vmem:[#allocation3 + $0x3a0] sm:$0xff]
    %v3965 = vld [vmem:[#allocation3 + $0x3a8] sm:$0xff]
    %v3966 = vld [vmem:[#allocation3 + $0x3b0] sm:$0xff]
    %v3967 = vld [vmem:[#allocation3 + $0x3b8] sm:$0xff]
    %v3968 = vld [vmem:[#allocation3 + $0x3c0] sm:$0xff]
    %v3969 = vld [vmem:[#allocation3 + $0x3c8] sm:$0xff]
    %v3970 = vld [vmem:[#allocation3 + $0x3d0] sm:$0xff]
    %v3971 = vld [vmem:[#allocation3 + $0x3d8] sm:$0xff]
    %v3972 = vld [vmem:[#allocation3 + $0x3e0] sm:$0xff]
    %v3973 = vld [vmem:[#allocation3 + $0x3e8] sm:$0xff]
    %v3974 = vld [vmem:[#allocation3 + $0x3f0] sm:$0xff]
    %v3975 = vld [vmem:[#allocation3 + $0x3f8] sm:$0xff]
    %v3976 = vld [vmem:[#allocation3 + $0x400] sm:$0xff]
    %v3977 = vld [vmem:[#allocation3 + $0x408] sm:$0xff]
    %v3978 = vld [vmem:[#allocation3 + $0x410] sm:$0xff]
    %v3979 = vld [vmem:[#allocation3 + $0x418] sm:$0xff]
    %v3980 = vld [vmem:[#allocation3 + $0x420] sm:$0xff]
    %v3981 = vld [vmem:[#allocation3 + $0x428] sm:$0xff]
    %v3982 = vld [vmem:[#allocation3 + $0x430] sm:$0xff]
    %v3983 = vld [vmem:[#allocation3 + $0x438] sm:$0xff]
    %v3984 = vld [vmem:[#allocation3 + $0x440] sm:$0xff]
    %v3985 = vld [vmem:[#allocation3 + $0x448] sm:$0xff]
    %v3986 = vld [vmem:[#allocation3 + $0x450] sm:$0xff]
    %v3987 = vld [vmem:[#allocation3 + $0x458] sm:$0xff]
    %v3988 = vld [vmem:[#allocation3 + $0x460] sm:$0xff]
    %v3989 = vld [vmem:[#allocation3 + $0x468] sm:$0xff]
    %v3990 = vld [vmem:[#allocation3 + $0x470] sm:$0xff]
    %v3991 = vld [vmem:[#allocation3 + $0x478] sm:$0xff]
    %v3992 = vld [vmem:[#allocation3 + $0x480] sm:$0xff]
    %v3993 = vld [vmem:[#allocation3 + $0x488] sm:$0xff]
    %v3994 = vld [vmem:[#allocation3 + $0x490] sm:$0xff]
    %v3995 = vld [vmem:[#allocation3 + $0x498] sm:$0xff]
    %v3996 = vld [vmem:[#allocation3 + $0x4a0] sm:$0xff]
    %v3997 = vld [vmem:[#allocation3 + $0x4a8] sm:$0xff]
    %v3998 = vld [vmem:[#allocation3 + $0x4b0] sm:$0xff]
    %v3999 = vld [vmem:[#allocation3 + $0x4b8] sm:$0xff]
    %v4000 = vld [vmem:[#allocation3 + $0x4c0] sm:$0xff]
    %v4001 = vld [vmem:[#allocation3 + $0x4c8] sm:$0xff]
    %v4002 = vld [vmem:[#allocation3 + $0x4d0] sm:$0xff]
    %v4003 = vld [vmem:[#allocation3 + $0x4d8] sm:$0xff]
    %v4004 = vld [vmem:[#allocation3 + $0x4e0] sm:$0xff]
    %v4005 = vld [vmem:[#allocation3 + $0x4e8] sm:$0xff]
    %v4006 = vld [vmem:[#allocation3 + $0x4f0] sm:$0xff]
    %v4007 = vld [vmem:[#allocation3 + $0x4f8] sm:$0xff]
    %v4008 = vld [vmem:[#allocation3 + $0x500] sm:$0xff]
    %v4009 = vld [vmem:[#allocation3 + $0x508] sm:$0xff]
    %v4010 = vld [vmem:[#allocation3 + $0x510] sm:$0xff]
    %v4011 = vld [vmem:[#allocation3 + $0x518] sm:$0xff]
    %v4012 = vld [vmem:[#allocation3 + $0x520] sm:$0xff]
    %v4013 = vld [vmem:[#allocation3 + $0x528] sm:$0xff]
    %v4014 = vld [vmem:[#allocation3 + $0x530] sm:$0xff]
    %v4015 = vld [vmem:[#allocation3 + $0x538] sm:$0xff]
    %v4016 = vld [vmem:[#allocation3 + $0x540] sm:$0xff]
    %v4017 = vld [vmem:[#allocation3 + $0x548] sm:$0xff]
    %v4018 = vld [vmem:[#allocation3 + $0x550] sm:$0xff]
    %v4019 = vld [vmem:[#allocation3 + $0x558] sm:$0xff]
    %v4020 = vld [vmem:[#allocation3 + $0x560] sm:$0xff]
    %v4021 = vld [vmem:[#allocation3 + $0x568] sm:$0xff]
    %v4022 = vld [vmem:[#allocation3 + $0x570] sm:$0xff]
    %4024 = vset.pattern.permute.xlu0 1
    %4025 = vperm.xlu0 %4024, %v3846
    %v4026 = vpop.permute.xlu0 %4025
    %4029 = vset.pattern.permute.xlu0 1
    %4030 = vperm.xlu0 %4029, %v3847
    %v4031 = vpop.permute.xlu0 %4030
    %v4037 = vunpack.c.l.b16 %v3842
    %v4038 = vunpack.c.h.b16 %v3842
    %v4039 = vunpack.c.l.b16 %v3843
    %v4040 = vunpack.c.h.b16 %v3843
    %v4041 = vunpack.c.l.b16 %v3844
    %v4042 = vunpack.c.h.b16 %v3844
    %v4043 = vunpack.c.l.b16 %v3845
    %v4044 = vunpack.c.h.b16 %v3845
    %v4045 = vpack.c.b16 %v4041, %v4037
    %v4046 = vpack.c.b16 %v4042, %v4038
    %v4047 = vpack.c.b16 %v4043, %v4039
    %v4048 = vpack.c.b16 %v4044, %v4040
    %v4053 = vsel %vm1926, %v4048, 0
    %4055 = vmatprep.subr.bf16.mxu0 %v3849
    %4056 = vmatpush1.bf16.msra.mxu0 %v3848
    %4057 = vmatprep.subr.bf16.mxu0 %v3856
    %4058 = vmatpush1.bf16.msra.mxu0 %v3855
    %4059 = vmatprep.subr.bf16.mxu0 %v3863
    %4060 = vmatpush1.bf16.msra.mxu0 %v3862
    %4061 = vmatprep.subr.bf16.mxu0 %v3870
    %4062 = vmatpush1.bf16.msra.mxu0 %v3869
    %4063 = vmatprep.subr.bf16.mxu0 %v3877
    %4064 = vmatpush1.bf16.msra.mxu0 %v3876
    %4065 = vmatprep.subr.bf16.mxu0 %v3884
    %4066 = vmatpush1.bf16.msra.mxu0 %v3883
    %4067 = vmatprep.subr.bf16.mxu0 %v3891
    %4068 = vmatpush1.bf16.msra.mxu0 %v3890
    %4069 = vmatprep.subr.bf16.mxu0 %v3898
    %4070 = vmatpush1.bf16.msra.mxu0 %v3897
    %4071 = vmatprep.subr.bf16.mxu0 %v3905
    %4072 = vmatpush1.bf16.msra.mxu0 %v3904
    %4073 = vmatprep.subr.bf16.mxu0 %v3912
    %4074 = vmatpush1.bf16.msra.mxu0 %v3911
    %4075 = vmatprep.subr.bf16.mxu0 %v3919
    %4076 = vmatpush1.bf16.msra.mxu0 %v3918
    %4077 = vmatprep.subr.bf16.mxu0 %v3926
    %4078 = vmatpush1.bf16.msra.mxu0 %v3925
    %4079 = vmatprep.subr.bf16.mxu0 %v3933
    %4080 = vmatpush1.bf16.msra.mxu0 %v3932
    %4081 = vmatprep.subr.bf16.mxu0 %v3940
    %4082 = vmatpush1.bf16.msra.mxu0 %v3939
    %4083 = vmatprep.subr.bf16.mxu0 %v3947
    %4084 = vmatpush1.bf16.msra.mxu0 %v3946
    %4085 = vmatprep.subr.bf16.mxu0 %v3954
    %4086 = vmatpush1.bf16.msra.mxu0 %v3953
    %4087 = vmatprep.mubr.bf16.mxu0 %v4046
    %4088 = vmatmul.mubr.bf16.gmra.mrb[0].mxu0 %v4045
    %v4089 = vpop.f32.mrb[0].mxu0
    %v4090 = vadd.f32 %v4026, %v4089
    %v4091 = vpop.f32.mrb[0].mxu0
    %v4092 = vadd.f32 %v4026, %v4091
    %v4093 = vpop.f32.mrb[0].mxu0
    %v4094 = vadd.f32 %v4031, %v4093
    %v4095 = vpop.f32.mrb[0].mxu0
    %v4096 = vadd.f32 %v4031, %v4095
    %4097 = vdwg.mxu0
    %4098 = vmatprep.subr.bf16.mxu0 %v3961
    %4099 = vmatpush1.bf16.msra.mxu0 %v3960
    %4100 = vmatprep.subr.bf16.mxu0 %v3968
    %4101 = vmatpush1.bf16.msra.mxu0 %v3967
    %4102 = vmatprep.subr.bf16.mxu0 %v3975
    %4103 = vmatpush1.bf16.msra.mxu0 %v3974
    %4104 = vmatprep.subr.bf16.mxu0 %v3982
    %4105 = vmatpush1.bf16.msra.mxu0 %v3981
    %4106 = vmatprep.subr.bf16.mxu0 %v3989
    %4107 = vmatpush1.bf16.msra.mxu0 %v3988
    %4108 = vmatprep.subr.bf16.mxu0 %v3996
    %4109 = vmatpush1.bf16.msra.mxu0 %v3995
    %4110 = vmatprep.subr.bf16.mxu0 %v4003
    %4111 = vmatpush1.bf16.msra.mxu0 %v4002
    %4112 = vmatprep.subr.bf16.mxu0 %v4010
    %4113 = vmatpush1.bf16.msra.mxu0 %v4009
    %4114 = vmatprep.subr.bf16.mxu0 %v4017
    %4115 = vmatpush1.bf16.msra.mxu0 %v4016
    %4116 = vmatprep.subr.bf16.mxu0 0
    %4117 = vmatpush1.bf16.msra.mxu0 0
    %4118 = vmatprep.subr.bf16.mxu0 0
    %4119 = vmatpush1.bf16.msra.mxu0 0
    %4120 = vmatprep.subr.bf16.mxu0 0
    %4121 = vmatpush1.bf16.msra.mxu0 0
    %4122 = vmatprep.subr.bf16.mxu0 0
    %4123 = vmatpush1.bf16.msra.mxu0 0
    %4124 = vmatprep.subr.bf16.mxu0 0
    %4125 = vmatpush1.bf16.msra.mxu0 0
    %4126 = vmatprep.subr.bf16.mxu0 0
    %4127 = vmatpush1.bf16.msra.mxu0 0
    %4128 = vmatprep.subr.bf16.mxu0 0
    %4129 = vmatpush1.bf16.msra.mxu0 0
    %4130 = vmatprep.mubr.bf16.mxu0 %v4053
    %4131 = vmatmul.mubr.bf16.gmra.mrb[0].mxu0 %v4047
    %v4132 = vpop.f32.mrb[0].mxu0
    %v4133 = vadd.f32 %v4090, %v4132
    %v4134 = vpop.f32.mrb[0].mxu0
    %v4135 = vadd.f32 %v4092, %v4134
    %v4136 = vpop.f32.mrb[0].mxu0
    %v4137 = vadd.f32 %v4094, %v4136
    %v4138 = vpop.f32.mrb[0].mxu0
    %v4139 = vadd.f32 %v4096, %v4138
    %4140 = vdwg.mxu0
    %4141 = vmatprep.subr.bf16.mxu0 %v3851
    %4142 = vmatpush1.bf16.msra.mxu0 %v3850
    %4143 = vmatprep.subr.bf16.mxu0 %v3858
    %4144 = vmatpush1.bf16.msra.mxu0 %v3857
    %4145 = vmatprep.subr.bf16.mxu0 %v3865
    %4146 = vmatpush1.bf16.msra.mxu0 %v3864
    %4147 = vmatprep.subr.bf16.mxu0 %v3872
    %4148 = vmatpush1.bf16.msra.mxu0 %v3871
    %4149 = vmatprep.subr.bf16.mxu0 %v3879
    %4150 = vmatpush1.bf16.msra.mxu0 %v3878
    %4151 = vmatprep.subr.bf16.mxu0 %v3886
    %4152 = vmatpush1.bf16.msra.mxu0 %v3885
    %4153 = vmatprep.subr.bf16.mxu0 %v3893
    %4154 = vmatpush1.bf16.msra.mxu0 %v3892
    %4155 = vmatprep.subr.bf16.mxu0 %v3900
    %4156 = vmatpush1.bf16.msra.mxu0 %v3899
    %4157 = vmatprep.subr.bf16.mxu0 %v3907
    %4158 = vmatpush1.bf16.msra.mxu0 %v3906
    %4159 = vmatprep.subr.bf16.mxu0 %v3914
    %4160 = vmatpush1.bf16.msra.mxu0 %v3913
    %4161 = vmatprep.subr.bf16.mxu0 %v3921
    %4162 = vmatpush1.bf16.msra.mxu0 %v3920
    %4163 = vmatprep.subr.bf16.mxu0 %v3928
    %4164 = vmatpush1.bf16.msra.mxu0 %v3927
    %4165 = vmatprep.subr.bf16.mxu0 %v3935
    %4166 = vmatpush1.bf16.msra.mxu0 %v3934
    %4167 = vmatprep.subr.bf16.mxu0 %v3942
    %4168 = vmatpush1.bf16.msra.mxu0 %v3941
    %4169 = vmatprep.subr.bf16.mxu0 %v3949
    %4170 = vmatpush1.bf16.msra.mxu0 %v3948
    %4171 = vmatprep.subr.bf16.mxu0 %v3956
    %4172 = vmatpush1.bf16.msra.mxu0 %v3955
    %4173 = vmatprep.mubr.bf16.mxu0 %v4046
    %4174 = vmatmul.mubr.bf16.gmra.mrb[0].mxu0 %v4045
    %v4175 = vpop.f32.mrb[0].mxu0
    %v4176 = vadd.f32 %v4026, %v4175
    %v4177 = vpop.f32.mrb[0].mxu0
    %v4178 = vadd.f32 %v4026, %v4177
    %v4179 = vpop.f32.mrb[0].mxu0
    %v4180 = vadd.f32 %v4031, %v4179
    %v4181 = vpop.f32.mrb[0].mxu0
    %v4182 = vadd.f32 %v4031, %v4181
    %4183 = vdwg.mxu0
    %4184 = vmatprep.subr.bf16.mxu0 %v3963
    %4185 = vmatpush1.bf16.msra.mxu0 %v3962
    %4186 = vmatprep.subr.bf16.mxu0 %v3970
    %4187 = vmatpush1.bf16.msra.mxu0 %v3969
    %4188 = vmatprep.subr.bf16.mxu0 %v3977
    %4189 = vmatpush1.bf16.msra.mxu0 %v3976
    %4190 = vmatprep.subr.bf16.mxu0 %v3984
    %4191 = vmatpush1.bf16.msra.mxu0 %v3983
    %4192 = vmatprep.subr.bf16.mxu0 %v3991
    %4193 = vmatpush1.bf16.msra.mxu0 %v3990
    %4194 = vmatprep.subr.bf16.mxu0 %v3998
    %4195 = vmatpush1.bf16.msra.mxu0 %v3997
    %4196 = vmatprep.subr.bf16.mxu0 %v4005
    %4197 = vmatpush1.bf16.msra.mxu0 %v4004
    %4198 = vmatprep.subr.bf16.mxu0 %v4012
    %4199 = vmatpush1.bf16.msra.mxu0 %v4011
    %4200 = vmatprep.subr.bf16.mxu0 %v4019
    %4201 = vmatpush1.bf16.msra.mxu0 %v4018
    %4202 = vmatprep.subr.bf16.mxu0 0
    %4203 = vmatpush1.bf16.msra.mxu0 0
    %4204 = vmatprep.subr.bf16.mxu0 0
    %4205 = vmatpush1.bf16.msra.mxu0 0
    %4206 = vmatprep.subr.bf16.mxu0 0
    %4207 = vmatpush1.bf16.msra.mxu0 0
    %4208 = vmatprep.subr.bf16.mxu0 0
    %4209 = vmatpush1.bf16.msra.mxu0 0
    %4210 = vmatprep.subr.bf16.mxu0 0
    %4211 = vmatpush1.bf16.msra.mxu0 0
    %4212 = vmatprep.subr.bf16.mxu0 0
    %4213 = vmatpush1.bf16.msra.mxu0 0
    %4214 = vmatprep.subr.bf16.mxu0 0
    %4215 = vmatpush1.bf16.msra.mxu0 0
    %4216 = vmatprep.mubr.bf16.mxu0 %v4053
    %4217 = vmatmul.mubr.bf16.gmra.mrb[0].mxu0 %v4047
    %v4218 = vpop.f32.mrb[0].mxu0
    %v4219 = vadd.f32 %v4176, %v4218
    %v4220 = vpop.f32.mrb[0].mxu0
    %v4221 = vadd.f32 %v4178, %v4220
    %v4222 = vpop.f32.mrb[0].mxu0
    %v4223 = vadd.f32 %v4180, %v4222
    %v4224 = vpop.f32.mrb[0].mxu0
    %v4225 = vadd.f32 %v4182, %v4224
    %4226 = vdwg.mxu0
    %4227 = vmatprep.subr.bf16.mxu0 %v3853
    %4228 = vmatpush1.bf16.msra.mxu0 %v3852
    %4229 = vmatprep.subr.bf16.mxu0 %v3860
    %4230 = vmatpush1.bf16.msra.mxu0 %v3859
    %4231 = vmatprep.subr.bf16.mxu0 %v3867
    %4232 = vmatpush1.bf16.msra.mxu0 %v3866
    %4233 = vmatprep.subr.bf16.mxu0 %v3874
    %4234 = vmatpush1.bf16.msra.mxu0 %v3873
    %4235 = vmatprep.subr.bf16.mxu0 %v3881
    %4236 = vmatpush1.bf16.msra.mxu0 %v3880
    %4237 = vmatprep.subr.bf16.mxu0 %v3888
    %4238 = vmatpush1.bf16.msra.mxu0 %v3887
    %4239 = vmatprep.subr.bf16.mxu0 %v3895
    %4240 = vmatpush1.bf16.msra.mxu0 %v3894
    %4241 = vmatprep.subr.bf16.mxu0 %v3902
    %4242 = vmatpush1.bf16.msra.mxu0 %v3901
    %4243 = vmatprep.subr.bf16.mxu0 %v3909
    %4244 = vmatpush1.bf16.msra.mxu0 %v3908
    %4245 = vmatprep.subr.bf16.mxu0 %v3916
    %4246 = vmatpush1.bf16.msra.mxu0 %v3915
    %4247 = vmatprep.subr.bf16.mxu0 %v3923
    %4248 = vmatpush1.bf16.msra.mxu0 %v3922
    %4249 = vmatprep.subr.bf16.mxu0 %v3930
    %4250 = vmatpush1.bf16.msra.mxu0 %v3929
    %4251 = vmatprep.subr.bf16.mxu0 %v3937
    %4252 = vmatpush1.bf16.msra.mxu0 %v3936
    %4253 = vmatprep.subr.bf16.mxu0 %v3944
    %4254 = vmatpush1.bf16.msra.mxu0 %v3943
    %4255 = vmatprep.subr.bf16.mxu0 %v3951
    %4256 = vmatpush1.bf16.msra.mxu0 %v3950
    %4257 = vmatprep.subr.bf16.mxu0 %v3958
    %4258 = vmatpush1.bf16.msra.mxu0 %v3957
    %4259 = vmatprep.mubr.bf16.mxu0 %v4046
    %4260 = vmatmul.mubr.bf16.gmra.mrb[0].mxu0 %v4045
    %v4261 = vpop.f32.mrb[0].mxu0
    %v4262 = vadd.f32 %v4026, %v4261
    %v4263 = vpop.f32.mrb[0].mxu0
    %v4264 = vadd.f32 %v4026, %v4263
    %v4265 = vpop.f32.mrb[0].mxu0
    %v4266 = vadd.f32 %v4031, %v4265
    %v4267 = vpop.f32.mrb[0].mxu0
    %v4268 = vadd.f32 %v4031, %v4267
    %4269 = vdwg.mxu0
    %4270 = vmatprep.subr.bf16.mxu0 %v3965
    %4271 = vmatpush1.bf16.msra.mxu0 %v3964
    %4272 = vmatprep.subr.bf16.mxu0 %v3972
    %4273 = vmatpush1.bf16.msra.mxu0 %v3971
    %4274 = vmatprep.subr.bf16.mxu0 %v3979
    %4275 = vmatpush1.bf16.msra.mxu0 %v3978
    %4276 = vmatprep.subr.bf16.mxu0 %v3986
    %4277 = vmatpush1.bf16.msra.mxu0 %v3985
    %4278 = vmatprep.subr.bf16.mxu0 %v3993
    %4279 = vmatpush1.bf16.msra.mxu0 %v3992
    %4280 = vmatprep.subr.bf16.mxu0 %v4000
    %4281 = vmatpush1.bf16.msra.mxu0 %v3999
    %4282 = vmatprep.subr.bf16.mxu0 %v4007
    %4283 = vmatpush1.bf16.msra.mxu0 %v4006
    %4284 = vmatprep.subr.bf16.mxu0 %v4014
    %4285 = vmatpush1.bf16.msra.mxu0 %v4013
    %4286 = vmatprep.subr.bf16.mxu0 %v4021
    %4287 = vmatpush1.bf16.msra.mxu0 %v4020
    %4288 = vmatprep.subr.bf16.mxu0 0
    %4289 = vmatpush1.bf16.msra.mxu0 0
    %4290 = vmatprep.subr.bf16.mxu0 0
    %4291 = vmatpush1.bf16.msra.mxu0 0
    %4292 = vmatprep.subr.bf16.mxu0 0
    %4293 = vmatpush1.bf16.msra.mxu0 0
    %4294 = vmatprep.subr.bf16.mxu0 0
    %4295 = vmatpush1.bf16.msra.mxu0 0
    %4296 = vmatprep.subr.bf16.mxu0 0
    %4297 = vmatpush1.bf16.msra.mxu0 0
    %4298 = vmatprep.subr.bf16.mxu0 0
    %4299 = vmatpush1.bf16.msra.mxu0 0
    %4300 = vmatprep.subr.bf16.mxu0 0
    %4301 = vmatpush1.bf16.msra.mxu0 0
    %4302 = vmatprep.mubr.bf16.mxu0 %v4053
    %4303 = vmatmul.mubr.bf16.gmra.mrb[0].mxu0 %v4047
    %v4304 = vpop.f32.mrb[0].mxu0
    %v4305 = vadd.f32 %v4262, %v4304
    %v4306 = vpop.f32.mrb[0].mxu0
    %v4307 = vadd.f32 %v4264, %v4306
    %v4308 = vpop.f32.mrb[0].mxu0
    %v4309 = vadd.f32 %v4266, %v4308
    %v4310 = vpop.f32.mrb[0].mxu0
    %v4311 = vadd.f32 %v4268, %v4310
    %4312 = vdwg.mxu0
    %4313 = vmatprep.subr.bf16.mxu0 0
    %4314 = vmatpush1.bf16.msra.mxu0 %v3854
    %4315 = vmatprep.subr.bf16.mxu0 0
    %4316 = vmatpush1.bf16.msra.mxu0 %v3861
    %4317 = vmatprep.subr.bf16.mxu0 0
    %4318 = vmatpush1.bf16.msra.mxu0 %v3868
    %4319 = vmatprep.subr.bf16.mxu0 0
    %4320 = vmatpush1.bf16.msra.mxu0 %v3875
    %4321 = vmatprep.subr.bf16.mxu0 0
    %4322 = vmatpush1.bf16.msra.mxu0 %v3882
    %4323 = vmatprep.subr.bf16.mxu0 0
    %4324 = vmatpush1.bf16.msra.mxu0 %v3889
    %4325 = vmatprep.subr.bf16.mxu0 0
    %4326 = vmatpush1.bf16.msra.mxu0 %v3896
    %4327 = vmatprep.subr.bf16.mxu0 0
    %4328 = vmatpush1.bf16.msra.mxu0 %v3903
    %4329 = vmatprep.subr.bf16.mxu0 0
    %4330 = vmatpush1.bf16.msra.mxu0 %v3910
    %4331 = vmatprep.subr.bf16.mxu0 0
    %4332 = vmatpush1.bf16.msra.mxu0 %v3917
    %4333 = vmatprep.subr.bf16.mxu0 0
    %4334 = vmatpush1.bf16.msra.mxu0 %v3924
    %4335 = vmatprep.subr.bf16.mxu0 0
    %4336 = vmatpush1.bf16.msra.mxu0 %v3931
    %4337 = vmatprep.subr.bf16.mxu0 0
    %4338 = vmatpush1.bf16.msra.mxu0 %v3938
    %4339 = vmatprep.subr.bf16.mxu0 0
    %4340 = vmatpush1.bf16.msra.mxu0 %v3945
    %4341 = vmatprep.subr.bf16.mxu0 0
    %4342 = vmatpush1.bf16.msra.mxu0 %v3952
    %4343 = vmatprep.subr.bf16.mxu0 0
    %4344 = vmatpush1.bf16.msra.mxu0 %v3959
    %4345 = vmatprep.mubr.bf16.mxu0 %v4046
    %4346 = vmatmul.mubr.bf16.gmra.mrb[0].mxu0 %v4045
    %v4347 = vpop.f32.mrb[0].mxu0
    %v4348 = vadd.f32 %v4026, %v4347
    %v4349 = vpop.f32.mrb[0].mxu0
    %v4350 = vpop.f32.mrb[0].mxu0
    %v4351 = vadd.f32 %v4031, %v4350
    %v4352 = vpop.f32.mrb[0].mxu0
    %4353 = vdwg.mxu0
    %4354 = vmatprep.subr.bf16.mxu0 0
    %4355 = vmatpush1.bf16.msra.mxu0 %v3966
    %4356 = vmatprep.subr.bf16.mxu0 0
    %4357 = vmatpush1.bf16.msra.mxu0 %v3973
    %4358 = vmatprep.subr.bf16.mxu0 0
    %4359 = vmatpush1.bf16.msra.mxu0 %v3980
    %4360 = vmatprep.subr.bf16.mxu0 0
    %4361 = vmatpush1.bf16.msra.mxu0 %v3987
    %4362 = vmatprep.subr.bf16.mxu0 0
    %4363 = vmatpush1.bf16.msra.mxu0 %v3994
    %4364 = vmatprep.subr.bf16.mxu0 0
    %4365 = vmatpush1.bf16.msra.mxu0 %v4001
    %4366 = vmatprep.subr.bf16.mxu0 0
    %4367 = vmatpush1.bf16.msra.mxu0 %v4008
    %4368 = vmatprep.subr.bf16.mxu0 0
    %4369 = vmatpush1.bf16.msra.mxu0 %v4015
    %4370 = vmatprep.subr.bf16.mxu0 0
    %4371 = vmatpush1.bf16.msra.mxu0 %v4022
    %4372 = vmatprep.subr.bf16.mxu0 0
    %4373 = vmatpush1.bf16.msra.mxu0 0
    %4374 = vmatprep.subr.bf16.mxu0 0
    %4375 = vmatpush1.bf16.msra.mxu0 0
    %4376 = vmatprep.subr.bf16.mxu0 0
    %4377 = vmatpush1.bf16.msra.mxu0 0
    %4378 = vmatprep.subr.bf16.mxu0 0
    %4379 = vmatpush1.bf16.msra.mxu0 0
    %4380 = vmatprep.subr.bf16.mxu0 0
    %4381 = vmatpush1.bf16.msra.mxu0 0
    %4382 = vmatprep.subr.bf16.mxu0 0
    %4383 = vmatpush1.bf16.msra.mxu0 0
    %4384 = vmatprep.subr.bf16.mxu0 0
    %4385 = vmatpush1.bf16.msra.mxu0 0
    %4386 = vmatprep.mubr.bf16.mxu0 %v4053
    %4387 = vmatmul.mubr.bf16.gmra.mrb[0].mxu0 %v4047
    %v4388 = vpop.f32.mrb[0].mxu0
    %v4389 = vadd.f32 %v4348, %v4388
    %v4390 = vpop.f32.mrb[0].mxu0
    %v4391 = vpop.f32.mrb[0].mxu0
    %v4392 = vadd.f32 %v4351, %v4391
    %v4393 = vpop.f32.mrb[0].mxu0
    %4394 = vdwg.mxu0
    %vm4395 = vcmp.gt.f32.partialorder %v4133, 0.0
    %vm4396 = vcmp.gt.f32.partialorder %v4135, 0.0
    %vm4397 = vcmp.gt.f32.partialorder %v4219, 0.0
    %vm4398 = vcmp.gt.f32.partialorder %v4221, 0.0
    %vm4399 = vcmp.gt.f32.partialorder %v4305, 0.0
    %vm4400 = vcmp.gt.f32.partialorder %v4307, 0.0
    %vm4401 = vcmp.gt.f32.partialorder %v4389, 0.0
    %vm4402 = vcmp.gt.f32.partialorder %v4137, 0.0
    %vm4403 = vcmp.gt.f32.partialorder %v4139, 0.0
    %vm4404 = vcmp.gt.f32.partialorder %v4223, 0.0
    %vm4405 = vcmp.gt.f32.partialorder %v4225, 0.0
    %vm4406 = vcmp.gt.f32.partialorder %v4309, 0.0
    %vm4407 = vcmp.gt.f32.partialorder %v4311, 0.0
    %vm4408 = vcmp.gt.f32.partialorder %v4392, 0.0
    %v4409 = vmul.f32 %v4133, 0.3
    %v4410 = vmul.f32 %v4135, 0.3
    %v4411 = vmul.f32 %v4219, 0.3
    %v4412 = vmul.f32 %v4221, 0.3
    %v4413 = vmul.f32 %v4305, 0.3
    %v4414 = vmul.f32 %v4307, 0.3
    %v4415 = vmul.f32 %v4389, 0.3
    %v4416 = vmul.f32 %v4137, 0.3
    %v4417 = vmul.f32 %v4139, 0.3
    %v4418 = vmul.f32 %v4223, 0.3
    %v4419 = vmul.f32 %v4225, 0.3
    %v4420 = vmul.f32 %v4309, 0.3
    %v4421 = vmul.f32 %v4311, 0.3
    %v4422 = vmul.f32 %v4392, 0.3
    %v4423 = vsel %vm4395, %v4133, %v4409
    %v4424 = vsel %vm4396, %v4135, %v4410
    %v4425 = vsel %vm4397, %v4219, %v4411
    %v4426 = vsel %vm4398, %v4221, %v4412
    %v4427 = vsel %vm4399, %v4305, %v4413
    %v4428 = vsel %vm4400, %v4307, %v4414
    %v4429 = vsel %vm4401, %v4389, %v4415
    %v4430 = vsel %vm4402, %v4137, %v4416
    %v4431 = vsel %vm4403, %v4139, %v4417
    %v4432 = vsel %vm4404, %v4223, %v4418
    %v4433 = vsel %vm4405, %v4225, %v4419
    %v4434 = vsel %vm4406, %v4309, %v4420
    %v4435 = vsel %vm4407, %v4311, %v4421
    %v4436 = vsel %vm4408, %v4392, %v4422
    %4437 = vst [vmem:[#allocation2] sm:$0xff] %v4423
    %4438 = vst [vmem:[#allocation2 + $0x8] sm:$0xff] %v4424
    %4439 = vst [vmem:[#allocation2 + $0x10] sm:$0xff] %v4425
    %4440 = vst [vmem:[#allocation2 + $0x18] sm:$0xff] %v4426
    %4441 = vst [vmem:[#allocation2 + $0x20] sm:$0xff] %v4427
    %4442 = vst [vmem:[#allocation2 + $0x28] sm:$0xff] %v4428
    %4443 = vst.msk [vmem:[#allocation2 + $0x30] sm:$0xff] %vm76, %v4429
    %4444 = vst [vmem:[#allocation2 + $0x38] sm:$0xff] %v4430
    %4445 = vst [vmem:[#allocation2 + $0x40] sm:$0xff] %v4431
    %4446 = vst [vmem:[#allocation2 + $0x48] sm:$0xff] %v4432
    %4447 = vst [vmem:[#allocation2 + $0x50] sm:$0xff] %v4433
    %4448 = vst [vmem:[#allocation2 + $0x58] sm:$0xff] %v4434
    %4449 = vst [vmem:[#allocation2 + $0x60] sm:$0xff] %v4435
    %4450 = vst.msk [vmem:[#allocation2 + $0x68] sm:$0xff] %vm76, %v4436
    %v4451 = vld [vmem:[#allocation2] sm:$0xff]
    %v4452 = vld [vmem:[#allocation2 + $0x8] sm:$0xff]
    %v4453 = vld [vmem:[#allocation2 + $0x10] sm:$0xff]
    %v4454 = vld [vmem:[#allocation2 + $0x18] sm:$0xff]
    %v4455 = vld [vmem:[#allocation2 + $0x20] sm:$0xff]
    %v4456 = vld [vmem:[#allocation2 + $0x28] sm:$0xff]
    %v4457 = vld [vmem:[#allocation2 + $0x30] sm:$0xff]
    %v4458 = vld [vmem:[#allocation2 + $0x38] sm:$0xff]
    %v4459 = vld [vmem:[#allocation2 + $0x40] sm:$0xff]
    %v4460 = vld [vmem:[#allocation2 + $0x48] sm:$0xff]
    %v4461 = vld [vmem:[#allocation2 + $0x50] sm:$0xff]
    %v4462 = vld [vmem:[#allocation2 + $0x58] sm:$0xff]
    %v4463 = vld [vmem:[#allocation2 + $0x60] sm:$0xff]
    %v4464 = vld [vmem:[#allocation2 + $0x68] sm:$0xff]
    %v4465 = vpack.c.bf16 %v4458, %v4451
    %v4466 = vpack.c.bf16 %v4459, %v4452
    %v4467 = vpack.c.bf16 %v4460, %v4453
    %v4468 = vpack.c.bf16 %v4461, %v4454
    %v4469 = vpack.c.bf16 %v4462, %v4455
    %v4470 = vpack.c.bf16 %v4463, %v4456
    %v4471 = vpack.c.bf16 %v4464, %v4457
    %4472 = vst [vmem:[#allocation3] sm:$0xff] %v4465
    %4473 = vst [vmem:[#allocation3 + $0x8] sm:$0xff] %v4466
    %4474 = vst [vmem:[#allocation3 + $0x10] sm:$0xff] %v4467
    %4475 = vst [vmem:[#allocation3 + $0x18] sm:$0xff] %v4468
    %4476 = vst [vmem:[#allocation3 + $0x20] sm:$0xff] %v4469
    %4477 = vst [vmem:[#allocation3 + $0x28] sm:$0xff] %v4470
    %4478 = vst.msk [vmem:[#allocation3 + $0x30] sm:$0xff] %vm76, %v4471
    %v4479 = vld [vmem:[#allocation2] sm:$0xff]
    %v4480 = vld [vmem:[#allocation2 + $0x8] sm:$0xff]
    %v4481 = vld [vmem:[#allocation2 + $0x10] sm:$0xff]
    %v4482 = vld [vmem:[#allocation2 + $0x18] sm:$0xff]
    %v4483 = vld [vmem:[#allocation2 + $0x20] sm:$0xff]
    %v4484 = vld [vmem:[#allocation2 + $0x28] sm:$0xff]
    %v4485 = vld [vmem:[#allocation2 + $0x30] sm:$0xff]
    %v4486 = vld [vmem:[#allocation2 + $0x38] sm:$0xff]
    %v4487 = vld [vmem:[#allocation2 + $0x40] sm:$0xff]
    %v4488 = vld [vmem:[#allocation2 + $0x48] sm:$0xff]
    %v4489 = vld [vmem:[#allocation2 + $0x50] sm:$0xff]
    %v4490 = vld [vmem:[#allocation2 + $0x58] sm:$0xff]
    %v4491 = vld [vmem:[#allocation2 + $0x60] sm:$0xff]
    %v4492 = vld [vmem:[#allocation2 + $0x68] sm:$0xff]
    %v4493 = vpack.c.bf16 %v4486, %v4479
    %v4494 = vpack.c.bf16 %v4487, %v4480
    %v4495 = vpack.c.bf16 %v4488, %v4481
    %v4496 = vpack.c.bf16 %v4489, %v4482
    %v4497 = vpack.c.bf16 %v4490, %v4483
    %v4498 = vpack.c.bf16 %v4491, %v4484
    %v4499 = vpack.c.bf16 %v4492, %v4485
    %4507 = vrot.lane.b32.xlu0 %v4493, 127
    %v4508 = vpop.permute.xlu0 %4507
    %4509 = vrot.lane.b32.xlu0 %v4494, 127
    %v4510 = vpop.permute.xlu0 %4509
    %4511 = vrot.lane.b32.xlu0 %v4495, 127
    %v4512 = vpop.permute.xlu0 %4511
    %4513 = vrot.lane.b32.xlu0 %v4496, 127
    %v4514 = vpop.permute.xlu0 %4513
    %4515 = vrot.lane.b32.xlu0 %v4497, 127
    %v4516 = vpop.permute.xlu0 %4515
    %4517 = vrot.lane.b32.xlu0 %v4498, 127
    %v4518 = vpop.permute.xlu0 %4517
    %4519 = vrot.lane.b32.xlu0 %v4499, 127
    %v4520 = vpop.permute.xlu0 %4519
    %v4521 = vsel %vm246, %v4508, %v4510
    %v4522 = vsel %vm246, %v4510, %v4512
    %v4523 = vsel %vm246, %v4512, %v4514
    %v4524 = vsel %vm246, %v4514, %v4516
    %v4525 = vsel %vm246, %v4516, %v4518
    %v4526 = vsel %vm246, %v4518, %v4520
    %4534 = vst [vmem:[#allocation3 + $0x38] sm:$0xff] %v4521
    %4535 = vst [vmem:[#allocation3 + $0x40] sm:$0xff] %v4522
    %4536 = vst [vmem:[#allocation3 + $0x48] sm:$0xff] %v4523
    %4537 = vst [vmem:[#allocation3 + $0x50] sm:$0xff] %v4524
    %4538 = vst [vmem:[#allocation3 + $0x58] sm:$0xff] %v4525
    %4539 = vst [vmem:[#allocation3 + $0x60] sm:$0xff] %v4526
    %4540 = vst.msk [vmem:[#allocation3 + $0x68] sm:$0xff] %vm76, %v4520
    %v4541 = vld [vmem:[#allocation2] sm:$0xff]
    %v4542 = vld [vmem:[#allocation2 + $0x8] sm:$0xff]
    %v4543 = vld [vmem:[#allocation2 + $0x10] sm:$0xff]
    %v4544 = vld [vmem:[#allocation2 + $0x18] sm:$0xff]
    %v4545 = vld [vmem:[#allocation2 + $0x20] sm:$0xff]
    %v4546 = vld [vmem:[#allocation2 + $0x28] sm:$0xff]
    %v4547 = vld [vmem:[#allocation2 + $0x30] sm:$0xff]
    %v4548 = vld [vmem:[#allocation2 + $0x38] sm:$0xff]
    %v4549 = vld [vmem:[#allocation2 + $0x40] sm:$0xff]
    %v4550 = vld [vmem:[#allocation2 + $0x48] sm:$0xff]
    %v4551 = vld [vmem:[#allocation2 + $0x50] sm:$0xff]
    %v4552 = vld [vmem:[#allocation2 + $0x58] sm:$0xff]
    %v4553 = vld [vmem:[#allocation2 + $0x60] sm:$0xff]
    %v4554 = vld [vmem:[#allocation2 + $0x68] sm:$0xff]
    %v4555 = vpack.c.bf16 %v4548, %v4541
    %v4556 = vpack.c.bf16 %v4549, %v4542
    %v4557 = vpack.c.bf16 %v4550, %v4543
    %v4558 = vpack.c.bf16 %v4551, %v4544
    %v4559 = vpack.c.bf16 %v4552, %v4545
    %v4560 = vpack.c.bf16 %v4553, %v4546
    %v4561 = vpack.c.bf16 %v4554, %v4547
    %4569 = vrot.lane.b32.xlu0 %v4555, 126
    %v4570 = vpop.permute.xlu0 %4569
    %4571 = vrot.lane.b32.xlu0 %v4556, 126
    %v4572 = vpop.permute.xlu0 %4571
    %4573 = vrot.lane.b32.xlu0 %v4557, 126
    %v4574 = vpop.permute.xlu0 %4573
    %4575 = vrot.lane.b32.xlu0 %v4558, 126
    %v4576 = vpop.permute.xlu0 %4575
    %4577 = vrot.lane.b32.xlu0 %v4559, 126
    %v4578 = vpop.permute.xlu0 %4577
    %4579 = vrot.lane.b32.xlu0 %v4560, 126
    %v4580 = vpop.permute.xlu0 %4579
    %4581 = vrot.lane.b32.xlu0 %v4561, 126
    %v4582 = vpop.permute.xlu0 %4581
    %v4583 = vsel %vm309, %v4570, %v4572
    %v4584 = vsel %vm309, %v4572, %v4574
    %v4585 = vsel %vm309, %v4574, %v4576
    %v4586 = vsel %vm309, %v4576, %v4578
    %v4587 = vsel %vm309, %v4578, %v4580
    %v4588 = vsel %vm309, %v4580, %v4582
    %4596 = vst [vmem:[#allocation3 + $0x70] sm:$0xff] %v4583
    %4597 = vst [vmem:[#allocation3 + $0x78] sm:$0xff] %v4584
    %4598 = vst [vmem:[#allocation3 + $0x80] sm:$0xff] %v4585
    %4599 = vst [vmem:[#allocation3 + $0x88] sm:$0xff] %v4586
    %4600 = vst [vmem:[#allocation3 + $0x90] sm:$0xff] %v4587
    %4601 = vst [vmem:[#allocation3 + $0x98] sm:$0xff] %v4588
    %4602 = vst.msk [vmem:[#allocation3 + $0xa0] sm:$0xff] %vm76, %v4582
    %v4603 = vld [vmem:[#allocation2] sm:$0xff]
    %v4604 = vld [vmem:[#allocation2 + $0x8] sm:$0xff]
    %v4605 = vld [vmem:[#allocation2 + $0x10] sm:$0xff]
    %v4606 = vld [vmem:[#allocation2 + $0x18] sm:$0xff]
    %v4607 = vld [vmem:[#allocation2 + $0x20] sm:$0xff]
    %v4608 = vld [vmem:[#allocation2 + $0x28] sm:$0xff]
    %v4609 = vld [vmem:[#allocation2 + $0x30] sm:$0xff]
    %v4610 = vld [vmem:[#allocation2 + $0x38] sm:$0xff]
    %v4611 = vld [vmem:[#allocation2 + $0x40] sm:$0xff]
    %v4612 = vld [vmem:[#allocation2 + $0x48] sm:$0xff]
    %v4613 = vld [vmem:[#allocation2 + $0x50] sm:$0xff]
    %v4614 = vld [vmem:[#allocation2 + $0x58] sm:$0xff]
    %v4615 = vld [vmem:[#allocation2 + $0x60] sm:$0xff]
    %v4616 = vld [vmem:[#allocation2 + $0x68] sm:$0xff]
    %v4617 = vpack.c.bf16 %v4610, %v4603
    %v4618 = vpack.c.bf16 %v4611, %v4604
    %v4619 = vpack.c.bf16 %v4612, %v4605
    %v4620 = vpack.c.bf16 %v4613, %v4606
    %v4621 = vpack.c.bf16 %v4614, %v4607
    %v4622 = vpack.c.bf16 %v4615, %v4608
    %v4623 = vpack.c.bf16 %v4616, %v4609
    %4631 = vrot.lane.b32.xlu0 %v4617, 125
    %v4632 = vpop.permute.xlu0 %4631
    %4633 = vrot.lane.b32.xlu0 %v4618, 125
    %v4634 = vpop.permute.xlu0 %4633
    %4635 = vrot.lane.b32.xlu0 %v4619, 125
    %v4636 = vpop.permute.xlu0 %4635
    %4637 = vrot.lane.b32.xlu0 %v4620, 125
    %v4638 = vpop.permute.xlu0 %4637
    %4639 = vrot.lane.b32.xlu0 %v4621, 125
    %v4640 = vpop.permute.xlu0 %4639
    %4641 = vrot.lane.b32.xlu0 %v4622, 125
    %v4642 = vpop.permute.xlu0 %4641
    %4643 = vrot.lane.b32.xlu0 %v4623, 125
    %v4644 = vpop.permute.xlu0 %4643
    %v4645 = vsel %vm372, %v4632, %v4634
    %v4646 = vsel %vm372, %v4634, %v4636
    %v4647 = vsel %vm372, %v4636, %v4638
    %v4648 = vsel %vm372, %v4638, %v4640
    %v4649 = vsel %vm372, %v4640, %v4642
    %v4650 = vsel %vm372, %v4642, %v4644
    %4658 = vst [vmem:[#allocation3 + $0xa8] sm:$0xff] %v4645
    %4659 = vst [vmem:[#allocation3 + $0xb0] sm:$0xff] %v4646
    %4660 = vst [vmem:[#allocation3 + $0xb8] sm:$0xff] %v4647
    %4661 = vst [vmem:[#allocation3 + $0xc0] sm:$0xff] %v4648
    %4662 = vst [vmem:[#allocation3 + $0xc8] sm:$0xff] %v4649
    %4663 = vst [vmem:[#allocation3 + $0xd0] sm:$0xff] %v4650
    %4664 = vst.msk [vmem:[#allocation3 + $0xd8] sm:$0xff] %vm76, %v4644
    %v4665 = vld [vmem:[#allocation2] sm:$0xff]
    %v4666 = vld [vmem:[#allocation2 + $0x8] sm:$0xff]
    %v4667 = vld [vmem:[#allocation2 + $0x10] sm:$0xff]
    %v4668 = vld [vmem:[#allocation2 + $0x18] sm:$0xff]
    %v4669 = vld [vmem:[#allocation2 + $0x20] sm:$0xff]
    %v4670 = vld [vmem:[#allocation2 + $0x28] sm:$0xff]
    %v4671 = vld [vmem:[#allocation2 + $0x30] sm:$0xff]
    %v4672 = vld [vmem:[#allocation2 + $0x38] sm:$0xff]
    %v4673 = vld [vmem:[#allocation2 + $0x40] sm:$0xff]
    %v4674 = vld [vmem:[#allocation2 + $0x48] sm:$0xff]
    %v4675 = vld [vmem:[#allocation2 + $0x50] sm:$0xff]
    %v4676 = vld [vmem:[#allocation2 + $0x58] sm:$0xff]
    %v4677 = vld [vmem:[#allocation2 + $0x60] sm:$0xff]
    %v4678 = vld [vmem:[#allocation2 + $0x68] sm:$0xff]
    %v4679 = vpack.c.bf16 %v4672, %v4665
    %v4680 = vpack.c.bf16 %v4673, %v4666
    %v4681 = vpack.c.bf16 %v4674, %v4667
    %v4682 = vpack.c.bf16 %v4675, %v4668
    %v4683 = vpack.c.bf16 %v4676, %v4669
    %v4684 = vpack.c.bf16 %v4677, %v4670
    %v4685 = vpack.c.bf16 %v4678, %v4671
    %4693 = vrot.lane.b32.xlu0 %v4679, 124
    %v4694 = vpop.permute.xlu0 %4693
    %4695 = vrot.lane.b32.xlu0 %v4680, 124
    %v4696 = vpop.permute.xlu0 %4695
    %4697 = vrot.lane.b32.xlu0 %v4681, 124
    %v4698 = vpop.permute.xlu0 %4697
    %4699 = vrot.lane.b32.xlu0 %v4682, 124
    %v4700 = vpop.permute.xlu0 %4699
    %4701 = vrot.lane.b32.xlu0 %v4683, 124
    %v4702 = vpop.permute.xlu0 %4701
    %4703 = vrot.lane.b32.xlu0 %v4684, 124
    %v4704 = vpop.permute.xlu0 %4703
    %4705 = vrot.lane.b32.xlu0 %v4685, 124
    %v4706 = vpop.permute.xlu0 %4705
    %v4707 = vsel %vm435, %v4694, %v4696
    %v4708 = vsel %vm435, %v4696, %v4698
    %v4709 = vsel %vm435, %v4698, %v4700
    %v4710 = vsel %vm435, %v4700, %v4702
    %v4711 = vsel %vm435, %v4702, %v4704
    %v4712 = vsel %vm435, %v4704, %v4706
    %4720 = vst [vmem:[#allocation3 + $0xe0] sm:$0xff] %v4707
    %4721 = vst [vmem:[#allocation3 + $0xe8] sm:$0xff] %v4708
    %4722 = vst [vmem:[#allocation3 + $0xf0] sm:$0xff] %v4709
    %4723 = vst [vmem:[#allocation3 + $0xf8] sm:$0xff] %v4710
    %4724 = vst [vmem:[#allocation3 + $0x100] sm:$0xff] %v4711
    %4725 = vst [vmem:[#allocation3 + $0x108] sm:$0xff] %v4712
    %4726 = vst.msk [vmem:[#allocation3 + $0x110] sm:$0xff] %vm76, %v4706
    %v4727 = vld [vmem:[#allocation2] sm:$0xff]
    %v4728 = vld [vmem:[#allocation2 + $0x8] sm:$0xff]
    %v4729 = vld [vmem:[#allocation2 + $0x10] sm:$0xff]
    %v4730 = vld [vmem:[#allocation2 + $0x18] sm:$0xff]
    %v4731 = vld [vmem:[#allocation2 + $0x20] sm:$0xff]
    %v4732 = vld [vmem:[#allocation2 + $0x28] sm:$0xff]
    %v4733 = vld [vmem:[#allocation2 + $0x30] sm:$0xff]
    %v4734 = vld [vmem:[#allocation2 + $0x38] sm:$0xff]
    %v4735 = vld [vmem:[#allocation2 + $0x40] sm:$0xff]
    %v4736 = vld [vmem:[#allocation2 + $0x48] sm:$0xff]
    %v4737 = vld [vmem:[#allocation2 + $0x50] sm:$0xff]
    %v4738 = vld [vmem:[#allocation2 + $0x58] sm:$0xff]
    %v4739 = vld [vmem:[#allocation2 + $0x60] sm:$0xff]
    %v4740 = vld [vmem:[#allocation2 + $0x68] sm:$0xff]
    %v4741 = vpack.c.bf16 %v4734, %v4727
    %v4742 = vpack.c.bf16 %v4735, %v4728
    %v4743 = vpack.c.bf16 %v4736, %v4729
    %v4744 = vpack.c.bf16 %v4737, %v4730
    %v4745 = vpack.c.bf16 %v4738, %v4731
    %v4746 = vpack.c.bf16 %v4739, %v4732
    %v4747 = vpack.c.bf16 %v4740, %v4733
    %4755 = vrot.lane.b32.xlu0 %v4741, 108
    %v4756 = vpop.permute.xlu0 %4755
    %4757 = vrot.lane.b32.xlu0 %v4742, 108
    %v4758 = vpop.permute.xlu0 %4757
    %4759 = vrot.lane.b32.xlu0 %v4743, 108
    %v4760 = vpop.permute.xlu0 %4759
    %4761 = vrot.lane.b32.xlu0 %v4744, 108
    %v4762 = vpop.permute.xlu0 %4761
    %4763 = vrot.lane.b32.xlu0 %v4745, 108
    %v4764 = vpop.permute.xlu0 %4763
    %4765 = vrot.lane.b32.xlu0 %v4746, 108
    %v4766 = vpop.permute.xlu0 %4765
    %4767 = vrot.lane.b32.xlu0 %v4747, 108
    %v4768 = vpop.permute.xlu0 %4767
    %v4769 = vsel %vm498, %v4756, %v4758
    %v4770 = vsel %vm498, %v4758, %v4760
    %v4771 = vsel %vm498, %v4760, %v4762
    %v4772 = vsel %vm498, %v4762, %v4764
    %v4773 = vsel %vm498, %v4764, %v4766
    %v4774 = vsel %vm498, %v4766, %v4768
    %4782 = vst [vmem:[#allocation3 + $0x118] sm:$0xff] %v4769
    %4783 = vst [vmem:[#allocation3 + $0x120] sm:$0xff] %v4770
    %4784 = vst [vmem:[#allocation3 + $0x128] sm:$0xff] %v4771
    %4785 = vst [vmem:[#allocation3 + $0x130] sm:$0xff] %v4772
    %4786 = vst [vmem:[#allocation3 + $0x138] sm:$0xff] %v4773
    %4787 = vst [vmem:[#allocation3 + $0x140] sm:$0xff] %v4774
    %4788 = vst.msk [vmem:[#allocation3 + $0x148] sm:$0xff] %vm76, %v4768
    %v4789 = vld [vmem:[#allocation2] sm:$0xff]
    %v4790 = vld [vmem:[#allocation2 + $0x8] sm:$0xff]
    %v4791 = vld [vmem:[#allocation2 + $0x10] sm:$0xff]
    %v4792 = vld [vmem:[#allocation2 + $0x18] sm:$0xff]
    %v4793 = vld [vmem:[#allocation2 + $0x20] sm:$0xff]
    %v4794 = vld [vmem:[#allocation2 + $0x28] sm:$0xff]
    %v4795 = vld [vmem:[#allocation2 + $0x30] sm:$0xff]
    %v4796 = vld [vmem:[#allocation2 + $0x38] sm:$0xff]
    %v4797 = vld [vmem:[#allocation2 + $0x40] sm:$0xff]
    %v4798 = vld [vmem:[#allocation2 + $0x48] sm:$0xff]
    %v4799 = vld [vmem:[#allocation2 + $0x50] sm:$0xff]
    %v4800 = vld [vmem:[#allocation2 + $0x58] sm:$0xff]
    %v4801 = vld [vmem:[#allocation2 + $0x60] sm:$0xff]
    %v4802 = vld [vmem:[#allocation2 + $0x68] sm:$0xff]
    %v4803 = vpack.c.bf16 %v4796, %v4789
    %v4804 = vpack.c.bf16 %v4797, %v4790
    %v4805 = vpack.c.bf16 %v4798, %v4791
    %v4806 = vpack.c.bf16 %v4799, %v4792
    %v4807 = vpack.c.bf16 %v4800, %v4793
    %v4808 = vpack.c.bf16 %v4801, %v4794
    %v4809 = vpack.c.bf16 %v4802, %v4795
    %4817 = vrot.lane.b32.xlu0 %v4803, 107
    %v4818 = vpop.permute.xlu0 %4817
    %4819 = vrot.lane.b32.xlu0 %v4804, 107
    %v4820 = vpop.permute.xlu0 %4819
    %4821 = vrot.lane.b32.xlu0 %v4805, 107
    %v4822 = vpop.permute.xlu0 %4821
    %4823 = vrot.lane.b32.xlu0 %v4806, 107
    %v4824 = vpop.permute.xlu0 %4823
    %4825 = vrot.lane.b32.xlu0 %v4807, 107
    %v4826 = vpop.permute.xlu0 %4825
    %4827 = vrot.lane.b32.xlu0 %v4808, 107
    %v4828 = vpop.permute.xlu0 %4827
    %4829 = vrot.lane.b32.xlu0 %v4809, 107
    %v4830 = vpop.permute.xlu0 %4829
    %v4831 = vsel %vm561, %v4818, %v4820
    %v4832 = vsel %vm561, %v4820, %v4822
    %v4833 = vsel %vm561, %v4822, %v4824
    %v4834 = vsel %vm561, %v4824, %v4826
    %v4835 = vsel %vm561, %v4826, %v4828
    %v4836 = vsel %vm561, %v4828, %v4830
    %4844 = vst [vmem:[#allocation3 + $0x150] sm:$0xff] %v4831
    %4845 = vst [vmem:[#allocation3 + $0x158] sm:$0xff] %v4832
    %4846 = vst [vmem:[#allocation3 + $0x160] sm:$0xff] %v4833
    %4847 = vst [vmem:[#allocation3 + $0x168] sm:$0xff] %v4834
    %4848 = vst [vmem:[#allocation3 + $0x170] sm:$0xff] %v4835
    %4849 = vst [vmem:[#allocation3 + $0x178] sm:$0xff] %v4836
    %4850 = vst.msk [vmem:[#allocation3 + $0x180] sm:$0xff] %vm76, %v4830
    %v4851 = vld [vmem:[#allocation2] sm:$0xff]
    %v4852 = vld [vmem:[#allocation2 + $0x8] sm:$0xff]
    %v4853 = vld [vmem:[#allocation2 + $0x10] sm:$0xff]
    %v4854 = vld [vmem:[#allocation2 + $0x18] sm:$0xff]
    %v4855 = vld [vmem:[#allocation2 + $0x20] sm:$0xff]
    %v4856 = vld [vmem:[#allocation2 + $0x28] sm:$0xff]
    %v4857 = vld [vmem:[#allocation2 + $0x30] sm:$0xff]
    %v4858 = vld [vmem:[#allocation2 + $0x38] sm:$0xff]
    %v4859 = vld [vmem:[#allocation2 + $0x40] sm:$0xff]
    %v4860 = vld [vmem:[#allocation2 + $0x48] sm:$0xff]
    %v4861 = vld [vmem:[#allocation2 + $0x50] sm:$0xff]
    %v4862 = vld [vmem:[#allocation2 + $0x58] sm:$0xff]
    %v4863 = vld [vmem:[#allocation2 + $0x60] sm:$0xff]
    %v4864 = vld [vmem:[#allocation2 + $0x68] sm:$0xff]
    %v4865 = vpack.c.bf16 %v4858, %v4851
    %v4866 = vpack.c.bf16 %v4859, %v4852
    %v4867 = vpack.c.bf16 %v4860, %v4853
    %v4868 = vpack.c.bf16 %v4861, %v4854
    %v4869 = vpack.c.bf16 %v4862, %v4855
    %v4870 = vpack.c.bf16 %v4863, %v4856
    %v4871 = vpack.c.bf16 %v4864, %v4857
    %4879 = vrot.lane.b32.xlu0 %v4865, 106
    %v4880 = vpop.permute.xlu0 %4879
    %4881 = vrot.lane.b32.xlu0 %v4866, 106
    %v4882 = vpop.permute.xlu0 %4881
    %4883 = vrot.lane.b32.xlu0 %v4867, 106
    %v4884 = vpop.permute.xlu0 %4883
    %4885 = vrot.lane.b32.xlu0 %v4868, 106
    %v4886 = vpop.permute.xlu0 %4885
    %4887 = vrot.lane.b32.xlu0 %v4869, 106
    %v4888 = vpop.permute.xlu0 %4887
    %4889 = vrot.lane.b32.xlu0 %v4870, 106
    %v4890 = vpop.permute.xlu0 %4889
    %4891 = vrot.lane.b32.xlu0 %v4871, 106
    %v4892 = vpop.permute.xlu0 %4891
    %v4893 = vsel %vm624, %v4880, %v4882
    %v4894 = vsel %vm624, %v4882, %v4884
    %v4895 = vsel %vm624, %v4884, %v4886
    %v4896 = vsel %vm624, %v4886, %v4888
    %v4897 = vsel %vm624, %v4888, %v4890
    %v4898 = vsel %vm624, %v4890, %v4892
    %4906 = vst [vmem:[#allocation3 + $0x188] sm:$0xff] %v4893
    %4907 = vst [vmem:[#allocation3 + $0x190] sm:$0xff] %v4894
    %4908 = vst [vmem:[#allocation3 + $0x198] sm:$0xff] %v4895
    %4909 = vst [vmem:[#allocation3 + $0x1a0] sm:$0xff] %v4896
    %4910 = vst [vmem:[#allocation3 + $0x1a8] sm:$0xff] %v4897
    %4911 = vst [vmem:[#allocation3 + $0x1b0] sm:$0xff] %v4898
    %4912 = vst.msk [vmem:[#allocation3 + $0x1b8] sm:$0xff] %vm76, %v4892
    %v4913 = vld [vmem:[#allocation2] sm:$0xff]
    %v4914 = vld [vmem:[#allocation2 + $0x8] sm:$0xff]
    %v4915 = vld [vmem:[#allocation2 + $0x10] sm:$0xff]
    %v4916 = vld [vmem:[#allocation2 + $0x18] sm:$0xff]
    %v4917 = vld [vmem:[#allocation2 + $0x20] sm:$0xff]
    %v4918 = vld [vmem:[#allocation2 + $0x28] sm:$0xff]
    %v4919 = vld [vmem:[#allocation2 + $0x30] sm:$0xff]
    %v4920 = vld [vmem:[#allocation2 + $0x38] sm:$0xff]
    %v4921 = vld [vmem:[#allocation2 + $0x40] sm:$0xff]
    %v4922 = vld [vmem:[#allocation2 + $0x48] sm:$0xff]
    %v4923 = vld [vmem:[#allocation2 + $0x50] sm:$0xff]
    %v4924 = vld [vmem:[#allocation2 + $0x58] sm:$0xff]
    %v4925 = vld [vmem:[#allocation2 + $0x60] sm:$0xff]
    %v4926 = vld [vmem:[#allocation2 + $0x68] sm:$0xff]
    %v4927 = vpack.c.bf16 %v4920, %v4913
    %v4928 = vpack.c.bf16 %v4921, %v4914
    %v4929 = vpack.c.bf16 %v4922, %v4915
    %v4930 = vpack.c.bf16 %v4923, %v4916
    %v4931 = vpack.c.bf16 %v4924, %v4917
    %v4932 = vpack.c.bf16 %v4925, %v4918
    %v4933 = vpack.c.bf16 %v4926, %v4919
    %4941 = vrot.lane.b32.xlu0 %v4927, 105
    %v4942 = vpop.permute.xlu0 %4941
    %4943 = vrot.lane.b32.xlu0 %v4928, 105
    %v4944 = vpop.permute.xlu0 %4943
    %4945 = vrot.lane.b32.xlu0 %v4929, 105
    %v4946 = vpop.permute.xlu0 %4945
    %4947 = vrot.lane.b32.xlu0 %v4930, 105
    %v4948 = vpop.permute.xlu0 %4947
    %4949 = vrot.lane.b32.xlu0 %v4931, 105
    %v4950 = vpop.permute.xlu0 %4949
    %4951 = vrot.lane.b32.xlu0 %v4932, 105
    %v4952 = vpop.permute.xlu0 %4951
    %4953 = vrot.lane.b32.xlu0 %v4933, 105
    %v4954 = vpop.permute.xlu0 %4953
    %v4955 = vsel %vm687, %v4942, %v4944
    %v4956 = vsel %vm687, %v4944, %v4946
    %v4957 = vsel %vm687, %v4946, %v4948
    %v4958 = vsel %vm687, %v4948, %v4950
    %v4959 = vsel %vm687, %v4950, %v4952
    %v4960 = vsel %vm687, %v4952, %v4954
    %4968 = vst [vmem:[#allocation3 + $0x1c0] sm:$0xff] %v4955
    %4969 = vst [vmem:[#allocation3 + $0x1c8] sm:$0xff] %v4956
    %4970 = vst [vmem:[#allocation3 + $0x1d0] sm:$0xff] %v4957
    %4971 = vst [vmem:[#allocation3 + $0x1d8] sm:$0xff] %v4958
    %4972 = vst [vmem:[#allocation3 + $0x1e0] sm:$0xff] %v4959
    %4973 = vst [vmem:[#allocation3 + $0x1e8] sm:$0xff] %v4960
    %4974 = vst.msk [vmem:[#allocation3 + $0x1f0] sm:$0xff] %vm76, %v4954
    %v4975 = vld [vmem:[#allocation2] sm:$0xff]
    %v4976 = vld [vmem:[#allocation2 + $0x8] sm:$0xff]
    %v4977 = vld [vmem:[#allocation2 + $0x10] sm:$0xff]
    %v4978 = vld [vmem:[#allocation2 + $0x18] sm:$0xff]
    %v4979 = vld [vmem:[#allocation2 + $0x20] sm:$0xff]
    %v4980 = vld [vmem:[#allocation2 + $0x28] sm:$0xff]
    %v4981 = vld [vmem:[#allocation2 + $0x30] sm:$0xff]
    %v4982 = vld [vmem:[#allocation2 + $0x38] sm:$0xff]
    %v4983 = vld [vmem:[#allocation2 + $0x40] sm:$0xff]
    %v4984 = vld [vmem:[#allocation2 + $0x48] sm:$0xff]
    %v4985 = vld [vmem:[#allocation2 + $0x50] sm:$0xff]
    %v4986 = vld [vmem:[#allocation2 + $0x58] sm:$0xff]
    %v4987 = vld [vmem:[#allocation2 + $0x60] sm:$0xff]
    %v4988 = vld [vmem:[#allocation2 + $0x68] sm:$0xff]
    %v4989 = vpack.c.bf16 %v4982, %v4975
    %v4990 = vpack.c.bf16 %v4983, %v4976
    %v4991 = vpack.c.bf16 %v4984, %v4977
    %v4992 = vpack.c.bf16 %v4985, %v4978
    %v4993 = vpack.c.bf16 %v4986, %v4979
    %v4994 = vpack.c.bf16 %v4987, %v4980
    %v4995 = vpack.c.bf16 %v4988, %v4981
    %5003 = vrot.lane.b32.xlu0 %v4989, 104
    %v5004 = vpop.permute.xlu0 %5003
    %5005 = vrot.lane.b32.xlu0 %v4990, 104
    %v5006 = vpop.permute.xlu0 %5005
    %5007 = vrot.lane.b32.xlu0 %v4991, 104
    %v5008 = vpop.permute.xlu0 %5007
    %5009 = vrot.lane.b32.xlu0 %v4992, 104
    %v5010 = vpop.permute.xlu0 %5009
    %5011 = vrot.lane.b32.xlu0 %v4993, 104
    %v5012 = vpop.permute.xlu0 %5011
    %5013 = vrot.lane.b32.xlu0 %v4994, 104
    %v5014 = vpop.permute.xlu0 %5013
    %5015 = vrot.lane.b32.xlu0 %v4995, 104
    %v5016 = vpop.permute.xlu0 %5015
    %v5017 = vsel %vm750, %v5004, %v5006
    %v5018 = vsel %vm750, %v5006, %v5008
    %v5019 = vsel %vm750, %v5008, %v5010
    %v5020 = vsel %vm750, %v5010, %v5012
    %v5021 = vsel %vm750, %v5012, %v5014
    %v5022 = vsel %vm750, %v5014, %v5016
    %5030 = vst [vmem:[#allocation3 + $0x1f8] sm:$0xff] %v5017
    %5031 = vst [vmem:[#allocation3 + $0x200] sm:$0xff] %v5018
    %5032 = vst [vmem:[#allocation3 + $0x208] sm:$0xff] %v5019
    %5033 = vst [vmem:[#allocation3 + $0x210] sm:$0xff] %v5020
    %5034 = vst [vmem:[#allocation3 + $0x218] sm:$0xff] %v5021
    %5035 = vst [vmem:[#allocation3 + $0x220] sm:$0xff] %v5022
    %5036 = vst.msk [vmem:[#allocation3 + $0x228] sm:$0xff] %vm76, %v5016
    %v5037 = vld [vmem:[#allocation2] sm:$0xff]
    %v5038 = vld [vmem:[#allocation2 + $0x8] sm:$0xff]
    %v5039 = vld [vmem:[#allocation2 + $0x10] sm:$0xff]
    %v5040 = vld [vmem:[#allocation2 + $0x18] sm:$0xff]
    %v5041 = vld [vmem:[#allocation2 + $0x20] sm:$0xff]
    %v5042 = vld [vmem:[#allocation2 + $0x28] sm:$0xff]
    %v5043 = vld [vmem:[#allocation2 + $0x30] sm:$0xff]
    %v5044 = vld [vmem:[#allocation2 + $0x38] sm:$0xff]
    %v5045 = vld [vmem:[#allocation2 + $0x40] sm:$0xff]
    %v5046 = vld [vmem:[#allocation2 + $0x48] sm:$0xff]
    %v5047 = vld [vmem:[#allocation2 + $0x50] sm:$0xff]
    %v5048 = vld [vmem:[#allocation2 + $0x58] sm:$0xff]
    %v5049 = vld [vmem:[#allocation2 + $0x60] sm:$0xff]
    %v5050 = vld [vmem:[#allocation2 + $0x68] sm:$0xff]
    %v5051 = vpack.c.bf16 %v5044, %v5037
    %v5052 = vpack.c.bf16 %v5045, %v5038
    %v5053 = vpack.c.bf16 %v5046, %v5039
    %v5054 = vpack.c.bf16 %v5047, %v5040
    %v5055 = vpack.c.bf16 %v5048, %v5041
    %v5056 = vpack.c.bf16 %v5049, %v5042
    %v5057 = vpack.c.bf16 %v5050, %v5043
    %5065 = vrot.lane.b32.xlu0 %v5051, 88
    %v5066 = vpop.permute.xlu0 %5065
    %5067 = vrot.lane.b32.xlu0 %v5052, 88
    %v5068 = vpop.permute.xlu0 %5067
    %5069 = vrot.lane.b32.xlu0 %v5053, 88
    %v5070 = vpop.permute.xlu0 %5069
    %5071 = vrot.lane.b32.xlu0 %v5054, 88
    %v5072 = vpop.permute.xlu0 %5071
    %5073 = vrot.lane.b32.xlu0 %v5055, 88
    %v5074 = vpop.permute.xlu0 %5073
    %5075 = vrot.lane.b32.xlu0 %v5056, 88
    %v5076 = vpop.permute.xlu0 %5075
    %5077 = vrot.lane.b32.xlu0 %v5057, 88
    %v5078 = vpop.permute.xlu0 %5077
    %v5079 = vsel %vm813, %v5066, %v5068
    %v5080 = vsel %vm813, %v5068, %v5070
    %v5081 = vsel %vm813, %v5070, %v5072
    %v5082 = vsel %vm813, %v5072, %v5074
    %v5083 = vsel %vm813, %v5074, %v5076
    %v5084 = vsel %vm813, %v5076, %v5078
    %5092 = vst [vmem:[#allocation3 + $0x230] sm:$0xff] %v5079
    %5093 = vst [vmem:[#allocation3 + $0x238] sm:$0xff] %v5080
    %5094 = vst [vmem:[#allocation3 + $0x240] sm:$0xff] %v5081
    %5095 = vst [vmem:[#allocation3 + $0x248] sm:$0xff] %v5082
    %5096 = vst [vmem:[#allocation3 + $0x250] sm:$0xff] %v5083
    %5097 = vst [vmem:[#allocation3 + $0x258] sm:$0xff] %v5084
    %5098 = vst.msk [vmem:[#allocation3 + $0x260] sm:$0xff] %vm76, %v5078
    %v5099 = vld [vmem:[#allocation2] sm:$0xff]
    %v5100 = vld [vmem:[#allocation2 + $0x8] sm:$0xff]
    %v5101 = vld [vmem:[#allocation2 + $0x10] sm:$0xff]
    %v5102 = vld [vmem:[#allocation2 + $0x18] sm:$0xff]
    %v5103 = vld [vmem:[#allocation2 + $0x20] sm:$0xff]
    %v5104 = vld [vmem:[#allocation2 + $0x28] sm:$0xff]
    %v5105 = vld [vmem:[#allocation2 + $0x30] sm:$0xff]
    %v5106 = vld [vmem:[#allocation2 + $0x38] sm:$0xff]
    %v5107 = vld [vmem:[#allocation2 + $0x40] sm:$0xff]
    %v5108 = vld [vmem:[#allocation2 + $0x48] sm:$0xff]
    %v5109 = vld [vmem:[#allocation2 + $0x50] sm:$0xff]
    %v5110 = vld [vmem:[#allocation2 + $0x58] sm:$0xff]
    %v5111 = vld [vmem:[#allocation2 + $0x60] sm:$0xff]
    %v5112 = vld [vmem:[#allocation2 + $0x68] sm:$0xff]
    %v5113 = vpack.c.bf16 %v5106, %v5099
    %v5114 = vpack.c.bf16 %v5107, %v5100
    %v5115 = vpack.c.bf16 %v5108, %v5101
    %v5116 = vpack.c.bf16 %v5109, %v5102
    %v5117 = vpack.c.bf16 %v5110, %v5103
    %v5118 = vpack.c.bf16 %v5111, %v5104
    %v5119 = vpack.c.bf16 %v5112, %v5105
    %5127 = vrot.lane.b32.xlu0 %v5113, 87
    %v5128 = vpop.permute.xlu0 %5127
    %5129 = vrot.lane.b32.xlu0 %v5114, 87
    %v5130 = vpop.permute.xlu0 %5129
    %5131 = vrot.lane.b32.xlu0 %v5115, 87
    %v5132 = vpop.permute.xlu0 %5131
    %5133 = vrot.lane.b32.xlu0 %v5116, 87
    %v5134 = vpop.permute.xlu0 %5133
    %5135 = vrot.lane.b32.xlu0 %v5117, 87
    %v5136 = vpop.permute.xlu0 %5135
    %5137 = vrot.lane.b32.xlu0 %v5118, 87
    %v5138 = vpop.permute.xlu0 %5137
    %5139 = vrot.lane.b32.xlu0 %v5119, 87
    %v5140 = vpop.permute.xlu0 %5139
    %v5141 = vsel %vm876, %v5128, %v5130
    %v5142 = vsel %vm876, %v5130, %v5132
    %v5143 = vsel %vm876, %v5132, %v5134
    %v5144 = vsel %vm876, %v5134, %v5136
    %v5145 = vsel %vm876, %v5136, %v5138
    %v5146 = vsel %vm876, %v5138, %v5140
    %5154 = vst [vmem:[#allocation3 + $0x268] sm:$0xff] %v5141
    %5155 = vst [vmem:[#allocation3 + $0x270] sm:$0xff] %v5142
    %5156 = vst [vmem:[#allocation3 + $0x278] sm:$0xff] %v5143
    %5157 = vst [vmem:[#allocation3 + $0x280] sm:$0xff] %v5144
    %5158 = vst [vmem:[#allocation3 + $0x288] sm:$0xff] %v5145
    %5159 = vst [vmem:[#allocation3 + $0x290] sm:$0xff] %v5146
    %5160 = vst.msk [vmem:[#allocation3 + $0x298] sm:$0xff] %vm76, %v5140
    %v5161 = vld [vmem:[#allocation2] sm:$0xff]
    %v5162 = vld [vmem:[#allocation2 + $0x8] sm:$0xff]
    %v5163 = vld [vmem:[#allocation2 + $0x10] sm:$0xff]
    %v5164 = vld [vmem:[#allocation2 + $0x18] sm:$0xff]
    %v5165 = vld [vmem:[#allocation2 + $0x20] sm:$0xff]
    %v5166 = vld [vmem:[#allocation2 + $0x28] sm:$0xff]
    %v5167 = vld [vmem:[#allocation2 + $0x30] sm:$0xff]
    %v5168 = vld [vmem:[#allocation2 + $0x38] sm:$0xff]
    %v5169 = vld [vmem:[#allocation2 + $0x40] sm:$0xff]
    %v5170 = vld [vmem:[#allocation2 + $0x48] sm:$0xff]
    %v5171 = vld [vmem:[#allocation2 + $0x50] sm:$0xff]
    %v5172 = vld [vmem:[#allocation2 + $0x58] sm:$0xff]
    %v5173 = vld [vmem:[#allocation2 + $0x60] sm:$0xff]
    %v5174 = vld [vmem:[#allocation2 + $0x68] sm:$0xff]
    %v5175 = vpack.c.bf16 %v5168, %v5161
    %v5176 = vpack.c.bf16 %v5169, %v5162
    %v5177 = vpack.c.bf16 %v5170, %v5163
    %v5178 = vpack.c.bf16 %v5171, %v5164
    %v5179 = vpack.c.bf16 %v5172, %v5165
    %v5180 = vpack.c.bf16 %v5173, %v5166
    %v5181 = vpack.c.bf16 %v5174, %v5167
    %5189 = vrot.lane.b32.xlu0 %v5175, 86
    %v5190 = vpop.permute.xlu0 %5189
    %5191 = vrot.lane.b32.xlu0 %v5176, 86
    %v5192 = vpop.permute.xlu0 %5191
    %5193 = vrot.lane.b32.xlu0 %v5177, 86
    %v5194 = vpop.permute.xlu0 %5193
    %5195 = vrot.lane.b32.xlu0 %v5178, 86
    %v5196 = vpop.permute.xlu0 %5195
    %5197 = vrot.lane.b32.xlu0 %v5179, 86
    %v5198 = vpop.permute.xlu0 %5197
    %5199 = vrot.lane.b32.xlu0 %v5180, 86
    %v5200 = vpop.permute.xlu0 %5199
    %5201 = vrot.lane.b32.xlu0 %v5181, 86
    %v5202 = vpop.permute.xlu0 %5201
    %v5203 = vsel %vm939, %v5190, %v5192
    %v5204 = vsel %vm939, %v5192, %v5194
    %v5205 = vsel %vm939, %v5194, %v5196
    %v5206 = vsel %vm939, %v5196, %v5198
    %v5207 = vsel %vm939, %v5198, %v5200
    %v5208 = vsel %vm939, %v5200, %v5202
    %5216 = vst [vmem:[#allocation3 + $0x2a0] sm:$0xff] %v5203
    %5217 = vst [vmem:[#allocation3 + $0x2a8] sm:$0xff] %v5204
    %5218 = vst [vmem:[#allocation3 + $0x2b0] sm:$0xff] %v5205
    %5219 = vst [vmem:[#allocation3 + $0x2b8] sm:$0xff] %v5206
    %5220 = vst [vmem:[#allocation3 + $0x2c0] sm:$0xff] %v5207
    %5221 = vst [vmem:[#allocation3 + $0x2c8] sm:$0xff] %v5208
    %5222 = vst.msk [vmem:[#allocation3 + $0x2d0] sm:$0xff] %vm76, %v5202
    %v5223 = vld [vmem:[#allocation2] sm:$0xff]
    %v5224 = vld [vmem:[#allocation2 + $0x8] sm:$0xff]
    %v5225 = vld [vmem:[#allocation2 + $0x10] sm:$0xff]
    %v5226 = vld [vmem:[#allocation2 + $0x18] sm:$0xff]
    %v5227 = vld [vmem:[#allocation2 + $0x20] sm:$0xff]
    %v5228 = vld [vmem:[#allocation2 + $0x28] sm:$0xff]
    %v5229 = vld [vmem:[#allocation2 + $0x30] sm:$0xff]
    %v5230 = vld [vmem:[#allocation2 + $0x38] sm:$0xff]
    %v5231 = vld [vmem:[#allocation2 + $0x40] sm:$0xff]
    %v5232 = vld [vmem:[#allocation2 + $0x48] sm:$0xff]
    %v5233 = vld [vmem:[#allocation2 + $0x50] sm:$0xff]
    %v5234 = vld [vmem:[#allocation2 + $0x58] sm:$0xff]
    %v5235 = vld [vmem:[#allocation2 + $0x60] sm:$0xff]
    %v5236 = vld [vmem:[#allocation2 + $0x68] sm:$0xff]
    %v5237 = vpack.c.bf16 %v5230, %v5223
    %v5238 = vpack.c.bf16 %v5231, %v5224
    %v5239 = vpack.c.bf16 %v5232, %v5225
    %v5240 = vpack.c.bf16 %v5233, %v5226
    %v5241 = vpack.c.bf16 %v5234, %v5227
    %v5242 = vpack.c.bf16 %v5235, %v5228
    %v5243 = vpack.c.bf16 %v5236, %v5229
    %5251 = vrot.lane.b32.xlu0 %v5237, 85
    %v5252 = vpop.permute.xlu0 %5251
    %5253 = vrot.lane.b32.xlu0 %v5238, 85
    %v5254 = vpop.permute.xlu0 %5253
    %5255 = vrot.lane.b32.xlu0 %v5239, 85
    %v5256 = vpop.permute.xlu0 %5255
    %5257 = vrot.lane.b32.xlu0 %v5240, 85
    %v5258 = vpop.permute.xlu0 %5257
    %5259 = vrot.lane.b32.xlu0 %v5241, 85
    %v5260 = vpop.permute.xlu0 %5259
    %5261 = vrot.lane.b32.xlu0 %v5242, 85
    %v5262 = vpop.permute.xlu0 %5261
    %5263 = vrot.lane.b32.xlu0 %v5243, 85
    %v5264 = vpop.permute.xlu0 %5263
    %v5265 = vsel %vm1002, %v5252, %v5254
    %v5266 = vsel %vm1002, %v5254, %v5256
    %v5267 = vsel %vm1002, %v5256, %v5258
    %v5268 = vsel %vm1002, %v5258, %v5260
    %v5269 = vsel %vm1002, %v5260, %v5262
    %v5270 = vsel %vm1002, %v5262, %v5264
    %5278 = vst [vmem:[#allocation3 + $0x2d8] sm:$0xff] %v5265
    %5279 = vst [vmem:[#allocation3 + $0x2e0] sm:$0xff] %v5266
    %5280 = vst [vmem:[#allocation3 + $0x2e8] sm:$0xff] %v5267
    %5281 = vst [vmem:[#allocation3 + $0x2f0] sm:$0xff] %v5268
    %5282 = vst [vmem:[#allocation3 + $0x2f8] sm:$0xff] %v5269
    %5283 = vst [vmem:[#allocation3 + $0x300] sm:$0xff] %v5270
    %5284 = vst.msk [vmem:[#allocation3 + $0x308] sm:$0xff] %vm76, %v5264
    %v5285 = vld [vmem:[#allocation2] sm:$0xff]
    %v5286 = vld [vmem:[#allocation2 + $0x8] sm:$0xff]
    %v5287 = vld [vmem:[#allocation2 + $0x10] sm:$0xff]
    %v5288 = vld [vmem:[#allocation2 + $0x18] sm:$0xff]
    %v5289 = vld [vmem:[#allocation2 + $0x20] sm:$0xff]
    %v5290 = vld [vmem:[#allocation2 + $0x28] sm:$0xff]
    %v5291 = vld [vmem:[#allocation2 + $0x30] sm:$0xff]
    %v5292 = vld [vmem:[#allocation2 + $0x38] sm:$0xff]
    %v5293 = vld [vmem:[#allocation2 + $0x40] sm:$0xff]
    %v5294 = vld [vmem:[#allocation2 + $0x48] sm:$0xff]
    %v5295 = vld [vmem:[#allocation2 + $0x50] sm:$0xff]
    %v5296 = vld [vmem:[#allocation2 + $0x58] sm:$0xff]
    %v5297 = vld [vmem:[#allocation2 + $0x60] sm:$0xff]
    %v5298 = vld [vmem:[#allocation2 + $0x68] sm:$0xff]
    %v5299 = vpack.c.bf16 %v5292, %v5285
    %v5300 = vpack.c.bf16 %v5293, %v5286
    %v5301 = vpack.c.bf16 %v5294, %v5287
    %v5302 = vpack.c.bf16 %v5295, %v5288
    %v5303 = vpack.c.bf16 %v5296, %v5289
    %v5304 = vpack.c.bf16 %v5297, %v5290
    %v5305 = vpack.c.bf16 %v5298, %v5291
    %5313 = vrot.lane.b32.xlu0 %v5299, 84
    %v5314 = vpop.permute.xlu0 %5313
    %5315 = vrot.lane.b32.xlu0 %v5300, 84
    %v5316 = vpop.permute.xlu0 %5315
    %5317 = vrot.lane.b32.xlu0 %v5301, 84
    %v5318 = vpop.permute.xlu0 %5317
    %5319 = vrot.lane.b32.xlu0 %v5302, 84
    %v5320 = vpop.permute.xlu0 %5319
    %5321 = vrot.lane.b32.xlu0 %v5303, 84
    %v5322 = vpop.permute.xlu0 %5321
    %5323 = vrot.lane.b32.xlu0 %v5304, 84
    %v5324 = vpop.permute.xlu0 %5323
    %5325 = vrot.lane.b32.xlu0 %v5305, 84
    %v5326 = vpop.permute.xlu0 %5325
    %v5327 = vsel %vm1065, %v5314, %v5316
    %v5328 = vsel %vm1065, %v5316, %v5318
    %v5329 = vsel %vm1065, %v5318, %v5320
    %v5330 = vsel %vm1065, %v5320, %v5322
    %v5331 = vsel %vm1065, %v5322, %v5324
    %v5332 = vsel %vm1065, %v5324, %v5326
    %5340 = vst [vmem:[#allocation3 + $0x310] sm:$0xff] %v5327
    %5341 = vst [vmem:[#allocation3 + $0x318] sm:$0xff] %v5328
    %5342 = vst [vmem:[#allocation3 + $0x320] sm:$0xff] %v5329
    %5343 = vst [vmem:[#allocation3 + $0x328] sm:$0xff] %v5330
    %5344 = vst [vmem:[#allocation3 + $0x330] sm:$0xff] %v5331
    %5345 = vst [vmem:[#allocation3 + $0x338] sm:$0xff] %v5332
    %5346 = vst.msk [vmem:[#allocation3 + $0x340] sm:$0xff] %vm76, %v5326
    %v5347 = vld [vmem:[#allocation2] sm:$0xff]
    %v5348 = vld [vmem:[#allocation2 + $0x8] sm:$0xff]
    %v5349 = vld [vmem:[#allocation2 + $0x10] sm:$0xff]
    %v5350 = vld [vmem:[#allocation2 + $0x18] sm:$0xff]
    %v5351 = vld [vmem:[#allocation2 + $0x20] sm:$0xff]
    %v5352 = vld [vmem:[#allocation2 + $0x28] sm:$0xff]
    %v5353 = vld [vmem:[#allocation2 + $0x30] sm:$0xff]
    %v5354 = vld [vmem:[#allocation2 + $0x38] sm:$0xff]
    %v5355 = vld [vmem:[#allocation2 + $0x40] sm:$0xff]
    %v5356 = vld [vmem:[#allocation2 + $0x48] sm:$0xff]
    %v5357 = vld [vmem:[#allocation2 + $0x50] sm:$0xff]
    %v5358 = vld [vmem:[#allocation2 + $0x58] sm:$0xff]
    %v5359 = vld [vmem:[#allocation2 + $0x60] sm:$0xff]
    %v5360 = vld [vmem:[#allocation2 + $0x68] sm:$0xff]
    %v5361 = vpack.c.bf16 %v5354, %v5347
    %v5362 = vpack.c.bf16 %v5355, %v5348
    %v5363 = vpack.c.bf16 %v5356, %v5349
    %v5364 = vpack.c.bf16 %v5357, %v5350
    %v5365 = vpack.c.bf16 %v5358, %v5351
    %v5366 = vpack.c.bf16 %v5359, %v5352
    %v5367 = vpack.c.bf16 %v5360, %v5353
    %5375 = vrot.lane.b32.xlu0 %v5361, 68
    %v5376 = vpop.permute.xlu0 %5375
    %5377 = vrot.lane.b32.xlu0 %v5362, 68
    %v5378 = vpop.permute.xlu0 %5377
    %5379 = vrot.lane.b32.xlu0 %v5363, 68
    %v5380 = vpop.permute.xlu0 %5379
    %5381 = vrot.lane.b32.xlu0 %v5364, 68
    %v5382 = vpop.permute.xlu0 %5381
    %5383 = vrot.lane.b32.xlu0 %v5365, 68
    %v5384 = vpop.permute.xlu0 %5383
    %5385 = vrot.lane.b32.xlu0 %v5366, 68
    %v5386 = vpop.permute.xlu0 %5385
    %5387 = vrot.lane.b32.xlu0 %v5367, 68
    %v5388 = vpop.permute.xlu0 %5387
    %v5389 = vsel %vm1128, %v5376, %v5378
    %v5390 = vsel %vm1128, %v5378, %v5380
    %v5391 = vsel %vm1128, %v5380, %v5382
    %v5392 = vsel %vm1128, %v5382, %v5384
    %v5393 = vsel %vm1128, %v5384, %v5386
    %v5394 = vsel %vm1128, %v5386, %v5388
    %5402 = vst [vmem:[#allocation3 + $0x348] sm:$0xff] %v5389
    %5403 = vst [vmem:[#allocation3 + $0x350] sm:$0xff] %v5390
    %5404 = vst [vmem:[#allocation3 + $0x358] sm:$0xff] %v5391
    %5405 = vst [vmem:[#allocation3 + $0x360] sm:$0xff] %v5392
    %5406 = vst [vmem:[#allocation3 + $0x368] sm:$0xff] %v5393
    %5407 = vst [vmem:[#allocation3 + $0x370] sm:$0xff] %v5394
    %5408 = vst.msk [vmem:[#allocation3 + $0x378] sm:$0xff] %vm76, %v5388
    %v5409 = vld [vmem:[#allocation2] sm:$0xff]
    %v5410 = vld [vmem:[#allocation2 + $0x8] sm:$0xff]
    %v5411 = vld [vmem:[#allocation2 + $0x10] sm:$0xff]
    %v5412 = vld [vmem:[#allocation2 + $0x18] sm:$0xff]
    %v5413 = vld [vmem:[#allocation2 + $0x20] sm:$0xff]
    %v5414 = vld [vmem:[#allocation2 + $0x28] sm:$0xff]
    %v5415 = vld [vmem:[#allocation2 + $0x30] sm:$0xff]
    %v5416 = vld [vmem:[#allocation2 + $0x38] sm:$0xff]
    %v5417 = vld [vmem:[#allocation2 + $0x40] sm:$0xff]
    %v5418 = vld [vmem:[#allocation2 + $0x48] sm:$0xff]
    %v5419 = vld [vmem:[#allocation2 + $0x50] sm:$0xff]
    %v5420 = vld [vmem:[#allocation2 + $0x58] sm:$0xff]
    %v5421 = vld [vmem:[#allocation2 + $0x60] sm:$0xff]
    %v5422 = vld [vmem:[#allocation2 + $0x68] sm:$0xff]
    %v5423 = vpack.c.bf16 %v5416, %v5409
    %v5424 = vpack.c.bf16 %v5417, %v5410
    %v5425 = vpack.c.bf16 %v5418, %v5411
    %v5426 = vpack.c.bf16 %v5419, %v5412
    %v5427 = vpack.c.bf16 %v5420, %v5413
    %v5428 = vpack.c.bf16 %v5421, %v5414
    %v5429 = vpack.c.bf16 %v5422, %v5415
    %5437 = vrot.lane.b32.xlu0 %v5423, 67
    %v5438 = vpop.permute.xlu0 %5437
    %5439 = vrot.lane.b32.xlu0 %v5424, 67
    %v5440 = vpop.permute.xlu0 %5439
    %5441 = vrot.lane.b32.xlu0 %v5425, 67
    %v5442 = vpop.permute.xlu0 %5441
    %5443 = vrot.lane.b32.xlu0 %v5426, 67
    %v5444 = vpop.permute.xlu0 %5443
    %5445 = vrot.lane.b32.xlu0 %v5427, 67
    %v5446 = vpop.permute.xlu0 %5445
    %5447 = vrot.lane.b32.xlu0 %v5428, 67
    %v5448 = vpop.permute.xlu0 %5447
    %5449 = vrot.lane.b32.xlu0 %v5429, 67
    %v5450 = vpop.permute.xlu0 %5449
    %v5451 = vsel %vm1191, %v5438, %v5440
    %v5452 = vsel %vm1191, %v5440, %v5442
    %v5453 = vsel %vm1191, %v5442, %v5444
    %v5454 = vsel %vm1191, %v5444, %v5446
    %v5455 = vsel %vm1191, %v5446, %v5448
    %v5456 = vsel %vm1191, %v5448, %v5450
    %5464 = vst [vmem:[#allocation3 + $0x380] sm:$0xff] %v5451
    %5465 = vst [vmem:[#allocation3 + $0x388] sm:$0xff] %v5452
    %5466 = vst [vmem:[#allocation3 + $0x390] sm:$0xff] %v5453
    %5467 = vst [vmem:[#allocation3 + $0x398] sm:$0xff] %v5454
    %5468 = vst [vmem:[#allocation3 + $0x3a0] sm:$0xff] %v5455
    %5469 = vst [vmem:[#allocation3 + $0x3a8] sm:$0xff] %v5456
    %5470 = vst.msk [vmem:[#allocation3 + $0x3b0] sm:$0xff] %vm76, %v5450
    %v5471 = vld [vmem:[#allocation2] sm:$0xff]
    %v5472 = vld [vmem:[#allocation2 + $0x8] sm:$0xff]
    %v5473 = vld [vmem:[#allocation2 + $0x10] sm:$0xff]
    %v5474 = vld [vmem:[#allocation2 + $0x18] sm:$0xff]
    %v5475 = vld [vmem:[#allocation2 + $0x20] sm:$0xff]
    %v5476 = vld [vmem:[#allocation2 + $0x28] sm:$0xff]
    %v5477 = vld [vmem:[#allocation2 + $0x30] sm:$0xff]
    %v5478 = vld [vmem:[#allocation2 + $0x38] sm:$0xff]
    %v5479 = vld [vmem:[#allocation2 + $0x40] sm:$0xff]
    %v5480 = vld [vmem:[#allocation2 + $0x48] sm:$0xff]
    %v5481 = vld [vmem:[#allocation2 + $0x50] sm:$0xff]
    %v5482 = vld [vmem:[#allocation2 + $0x58] sm:$0xff]
    %v5483 = vld [vmem:[#allocation2 + $0x60] sm:$0xff]
    %v5484 = vld [vmem:[#allocation2 + $0x68] sm:$0xff]
    %v5485 = vpack.c.bf16 %v5478, %v5471
    %v5486 = vpack.c.bf16 %v5479, %v5472
    %v5487 = vpack.c.bf16 %v5480, %v5473
    %v5488 = vpack.c.bf16 %v5481, %v5474
    %v5489 = vpack.c.bf16 %v5482, %v5475
    %v5490 = vpack.c.bf16 %v5483, %v5476
    %v5491 = vpack.c.bf16 %v5484, %v5477
    %5499 = vrot.lane.b32.xlu0 %v5485, 66
    %v5500 = vpop.permute.xlu0 %5499
    %5501 = vrot.lane.b32.xlu0 %v5486, 66
    %v5502 = vpop.permute.xlu0 %5501
    %5503 = vrot.lane.b32.xlu0 %v5487, 66
    %v5504 = vpop.permute.xlu0 %5503
    %5505 = vrot.lane.b32.xlu0 %v5488, 66
    %v5506 = vpop.permute.xlu0 %5505
    %5507 = vrot.lane.b32.xlu0 %v5489, 66
    %v5508 = vpop.permute.xlu0 %5507
    %5509 = vrot.lane.b32.xlu0 %v5490, 66
    %v5510 = vpop.permute.xlu0 %5509
    %5511 = vrot.lane.b32.xlu0 %v5491, 66
    %v5512 = vpop.permute.xlu0 %5511
    %v5513 = vsel %vm1254, %v5500, %v5502
    %v5514 = vsel %vm1254, %v5502, %v5504
    %v5515 = vsel %vm1254, %v5504, %v5506
    %v5516 = vsel %vm1254, %v5506, %v5508
    %v5517 = vsel %vm1254, %v5508, %v5510
    %v5518 = vsel %vm1254, %v5510, %v5512
    %5526 = vst [vmem:[#allocation3 + $0x3b8] sm:$0xff] %v5513
    %5527 = vst [vmem:[#allocation3 + $0x3c0] sm:$0xff] %v5514
    %5528 = vst [vmem:[#allocation3 + $0x3c8] sm:$0xff] %v5515
    %5529 = vst [vmem:[#allocation3 + $0x3d0] sm:$0xff] %v5516
    %5530 = vst [vmem:[#allocation3 + $0x3d8] sm:$0xff] %v5517
    %5531 = vst [vmem:[#allocation3 + $0x3e0] sm:$0xff] %v5518
    %5532 = vst.msk [vmem:[#allocation3 + $0x3e8] sm:$0xff] %vm76, %v5512
    %v5533 = vld [vmem:[#allocation2] sm:$0xff]
    %v5534 = vld [vmem:[#allocation2 + $0x8] sm:$0xff]
    %v5535 = vld [vmem:[#allocation2 + $0x10] sm:$0xff]
    %v5536 = vld [vmem:[#allocation2 + $0x18] sm:$0xff]
    %v5537 = vld [vmem:[#allocation2 + $0x20] sm:$0xff]
    %v5538 = vld [vmem:[#allocation2 + $0x28] sm:$0xff]
    %v5539 = vld [vmem:[#allocation2 + $0x30] sm:$0xff]
    %v5540 = vld [vmem:[#allocation2 + $0x38] sm:$0xff]
    %v5541 = vld [vmem:[#allocation2 + $0x40] sm:$0xff]
    %v5542 = vld [vmem:[#allocation2 + $0x48] sm:$0xff]
    %v5543 = vld [vmem:[#allocation2 + $0x50] sm:$0xff]
    %v5544 = vld [vmem:[#allocation2 + $0x58] sm:$0xff]
    %v5545 = vld [vmem:[#allocation2 + $0x60] sm:$0xff]
    %v5546 = vld [vmem:[#allocation2 + $0x68] sm:$0xff]
    %v5547 = vpack.c.bf16 %v5540, %v5533
    %v5548 = vpack.c.bf16 %v5541, %v5534
    %v5549 = vpack.c.bf16 %v5542, %v5535
    %v5550 = vpack.c.bf16 %v5543, %v5536
    %v5551 = vpack.c.bf16 %v5544, %v5537
    %v5552 = vpack.c.bf16 %v5545, %v5538
    %v5553 = vpack.c.bf16 %v5546, %v5539
    %5561 = vrot.lane.b32.xlu0 %v5547, 65
    %v5562 = vpop.permute.xlu0 %5561
    %5563 = vrot.lane.b32.xlu0 %v5548, 65
    %v5564 = vpop.permute.xlu0 %5563
    %5565 = vrot.lane.b32.xlu0 %v5549, 65
    %v5566 = vpop.permute.xlu0 %5565
    %5567 = vrot.lane.b32.xlu0 %v5550, 65
    %v5568 = vpop.permute.xlu0 %5567
    %5569 = vrot.lane.b32.xlu0 %v5551, 65
    %v5570 = vpop.permute.xlu0 %5569
    %5571 = vrot.lane.b32.xlu0 %v5552, 65
    %v5572 = vpop.permute.xlu0 %5571
    %5573 = vrot.lane.b32.xlu0 %v5553, 65
    %v5574 = vpop.permute.xlu0 %5573
    %v5575 = vsel %vm1317, %v5562, %v5564
    %v5576 = vsel %vm1317, %v5564, %v5566
    %v5577 = vsel %vm1317, %v5566, %v5568
    %v5578 = vsel %vm1317, %v5568, %v5570
    %v5579 = vsel %vm1317, %v5570, %v5572
    %v5580 = vsel %vm1317, %v5572, %v5574
    %5588 = vst [vmem:[#allocation3 + $0x3f0] sm:$0xff] %v5575
    %5589 = vst [vmem:[#allocation3 + $0x3f8] sm:$0xff] %v5576
    %5590 = vst [vmem:[#allocation3 + $0x400] sm:$0xff] %v5577
    %5591 = vst [vmem:[#allocation3 + $0x408] sm:$0xff] %v5578
    %5592 = vst [vmem:[#allocation3 + $0x410] sm:$0xff] %v5579
    %5593 = vst [vmem:[#allocation3 + $0x418] sm:$0xff] %v5580
    %5594 = vst.msk [vmem:[#allocation3 + $0x420] sm:$0xff] %vm76, %v5574
    %v5595 = vld [vmem:[#allocation2] sm:$0xff]
    %v5596 = vld [vmem:[#allocation2 + $0x8] sm:$0xff]
    %v5597 = vld [vmem:[#allocation2 + $0x10] sm:$0xff]
    %v5598 = vld [vmem:[#allocation2 + $0x18] sm:$0xff]
    %v5599 = vld [vmem:[#allocation2 + $0x20] sm:$0xff]
    %v5600 = vld [vmem:[#allocation2 + $0x28] sm:$0xff]
    %v5601 = vld [vmem:[#allocation2 + $0x30] sm:$0xff]
    %v5602 = vld [vmem:[#allocation2 + $0x38] sm:$0xff]
    %v5603 = vld [vmem:[#allocation2 + $0x40] sm:$0xff]
    %v5604 = vld [vmem:[#allocation2 + $0x48] sm:$0xff]
    %v5605 = vld [vmem:[#allocation2 + $0x50] sm:$0xff]
    %v5606 = vld [vmem:[#allocation2 + $0x58] sm:$0xff]
    %v5607 = vld [vmem:[#allocation2 + $0x60] sm:$0xff]
    %v5608 = vld [vmem:[#allocation2 + $0x68] sm:$0xff]
    %v5609 = vpack.c.bf16 %v5602, %v5595
    %v5610 = vpack.c.bf16 %v5603, %v5596
    %v5611 = vpack.c.bf16 %v5604, %v5597
    %v5612 = vpack.c.bf16 %v5605, %v5598
    %v5613 = vpack.c.bf16 %v5606, %v5599
    %v5614 = vpack.c.bf16 %v5607, %v5600
    %v5615 = vpack.c.bf16 %v5608, %v5601
    %5623 = vrot.lane.b32.xlu0 %v5609, 64
    %v5624 = vpop.permute.xlu0 %5623
    %5625 = vrot.lane.b32.xlu0 %v5610, 64
    %v5626 = vpop.permute.xlu0 %5625
    %5627 = vrot.lane.b32.xlu0 %v5611, 64
    %v5628 = vpop.permute.xlu0 %5627
    %5629 = vrot.lane.b32.xlu0 %v5612, 64
    %v5630 = vpop.permute.xlu0 %5629
    %5631 = vrot.lane.b32.xlu0 %v5613, 64
    %v5632 = vpop.permute.xlu0 %5631
    %5633 = vrot.lane.b32.xlu0 %v5614, 64
    %v5634 = vpop.permute.xlu0 %5633
    %5635 = vrot.lane.b32.xlu0 %v5615, 64
    %v5636 = vpop.permute.xlu0 %5635
    %v5637 = vsel %vm1380, %v5624, %v5626
    %v5638 = vsel %vm1380, %v5626, %v5628
    %v5639 = vsel %vm1380, %v5628, %v5630
    %v5640 = vsel %vm1380, %v5630, %v5632
    %v5641 = vsel %vm1380, %v5632, %v5634
    %v5642 = vsel %vm1380, %v5634, %v5636
    %5650 = vst [vmem:[#allocation3 + $0x428] sm:$0xff] %v5637
    %5651 = vst [vmem:[#allocation3 + $0x430] sm:$0xff] %v5638
    %5652 = vst [vmem:[#allocation3 + $0x438] sm:$0xff] %v5639
    %5653 = vst [vmem:[#allocation3 + $0x440] sm:$0xff] %v5640
    %5654 = vst [vmem:[#allocation3 + $0x448] sm:$0xff] %v5641
    %5655 = vst [vmem:[#allocation3 + $0x450] sm:$0xff] %v5642
    %5656 = vst.msk [vmem:[#allocation3 + $0x458] sm:$0xff] %vm76, %v5636
    %v5657 = vld [vmem:[#allocation2] sm:$0xff]
    %v5658 = vld [vmem:[#allocation2 + $0x8] sm:$0xff]
    %v5659 = vld [vmem:[#allocation2 + $0x10] sm:$0xff]
    %v5660 = vld [vmem:[#allocation2 + $0x18] sm:$0xff]
    %v5661 = vld [vmem:[#allocation2 + $0x20] sm:$0xff]
    %v5662 = vld [vmem:[#allocation2 + $0x28] sm:$0xff]
    %v5663 = vld [vmem:[#allocation2 + $0x30] sm:$0xff]
    %v5664 = vld [vmem:[#allocation2 + $0x38] sm:$0xff]
    %v5665 = vld [vmem:[#allocation2 + $0x40] sm:$0xff]
    %v5666 = vld [vmem:[#allocation2 + $0x48] sm:$0xff]
    %v5667 = vld [vmem:[#allocation2 + $0x50] sm:$0xff]
    %v5668 = vld [vmem:[#allocation2 + $0x58] sm:$0xff]
    %v5669 = vld [vmem:[#allocation2 + $0x60] sm:$0xff]
    %v5670 = vld [vmem:[#allocation2 + $0x68] sm:$0xff]
    %v5671 = vpack.c.bf16 %v5664, %v5657
    %v5672 = vpack.c.bf16 %v5665, %v5658
    %v5673 = vpack.c.bf16 %v5666, %v5659
    %v5674 = vpack.c.bf16 %v5667, %v5660
    %v5675 = vpack.c.bf16 %v5668, %v5661
    %v5676 = vpack.c.bf16 %v5669, %v5662
    %v5677 = vpack.c.bf16 %v5670, %v5663
    %5685 = vrot.lane.b32.xlu0 %v5671, 48
    %v5686 = vpop.permute.xlu0 %5685
    %5687 = vrot.lane.b32.xlu0 %v5672, 48
    %v5688 = vpop.permute.xlu0 %5687
    %5689 = vrot.lane.b32.xlu0 %v5673, 48
    %v5690 = vpop.permute.xlu0 %5689
    %5691 = vrot.lane.b32.xlu0 %v5674, 48
    %v5692 = vpop.permute.xlu0 %5691
    %5693 = vrot.lane.b32.xlu0 %v5675, 48
    %v5694 = vpop.permute.xlu0 %5693
    %5695 = vrot.lane.b32.xlu0 %v5676, 48
    %v5696 = vpop.permute.xlu0 %5695
    %5697 = vrot.lane.b32.xlu0 %v5677, 48
    %v5698 = vpop.permute.xlu0 %5697
    %v5699 = vsel %vm1443, %v5686, %v5688
    %v5700 = vsel %vm1443, %v5688, %v5690
    %v5701 = vsel %vm1443, %v5690, %v5692
    %v5702 = vsel %vm1443, %v5692, %v5694
    %v5703 = vsel %vm1443, %v5694, %v5696
    %v5704 = vsel %vm1443, %v5696, %v5698
    %5712 = vst [vmem:[#allocation3 + $0x460] sm:$0xff] %v5699
    %5713 = vst [vmem:[#allocation3 + $0x468] sm:$0xff] %v5700
    %5714 = vst [vmem:[#allocation3 + $0x470] sm:$0xff] %v5701
    %5715 = vst [vmem:[#allocation3 + $0x478] sm:$0xff] %v5702
    %5716 = vst [vmem:[#allocation3 + $0x480] sm:$0xff] %v5703
    %5717 = vst [vmem:[#allocation3 + $0x488] sm:$0xff] %v5704
    %5718 = vst.msk [vmem:[#allocation3 + $0x490] sm:$0xff] %vm76, %v5698
    %v5719 = vld [vmem:[#allocation2] sm:$0xff]
    %v5720 = vld [vmem:[#allocation2 + $0x8] sm:$0xff]
    %v5721 = vld [vmem:[#allocation2 + $0x10] sm:$0xff]
    %v5722 = vld [vmem:[#allocation2 + $0x18] sm:$0xff]
    %v5723 = vld [vmem:[#allocation2 + $0x20] sm:$0xff]
    %v5724 = vld [vmem:[#allocation2 + $0x28] sm:$0xff]
    %v5725 = vld [vmem:[#allocation2 + $0x30] sm:$0xff]
    %v5726 = vld [vmem:[#allocation2 + $0x38] sm:$0xff]
    %v5727 = vld [vmem:[#allocation2 + $0x40] sm:$0xff]
    %v5728 = vld [vmem:[#allocation2 + $0x48] sm:$0xff]
    %v5729 = vld [vmem:[#allocation2 + $0x50] sm:$0xff]
    %v5730 = vld [vmem:[#allocation2 + $0x58] sm:$0xff]
    %v5731 = vld [vmem:[#allocation2 + $0x60] sm:$0xff]
    %v5732 = vld [vmem:[#allocation2 + $0x68] sm:$0xff]
    %v5733 = vpack.c.bf16 %v5726, %v5719
    %v5734 = vpack.c.bf16 %v5727, %v5720
    %v5735 = vpack.c.bf16 %v5728, %v5721
    %v5736 = vpack.c.bf16 %v5729, %v5722
    %v5737 = vpack.c.bf16 %v5730, %v5723
    %v5738 = vpack.c.bf16 %v5731, %v5724
    %v5739 = vpack.c.bf16 %v5732, %v5725
    %5747 = vrot.lane.b32.xlu0 %v5733, 47
    %v5748 = vpop.permute.xlu0 %5747
    %5749 = vrot.lane.b32.xlu0 %v5734, 47
    %v5750 = vpop.permute.xlu0 %5749
    %5751 = vrot.lane.b32.xlu0 %v5735, 47
    %v5752 = vpop.permute.xlu0 %5751
    %5753 = vrot.lane.b32.xlu0 %v5736, 47
    %v5754 = vpop.permute.xlu0 %5753
    %5755 = vrot.lane.b32.xlu0 %v5737, 47
    %v5756 = vpop.permute.xlu0 %5755
    %5757 = vrot.lane.b32.xlu0 %v5738, 47
    %v5758 = vpop.permute.xlu0 %5757
    %5759 = vrot.lane.b32.xlu0 %v5739, 47
    %v5760 = vpop.permute.xlu0 %5759
    %v5761 = vsel %vm1506, %v5748, %v5750
    %v5762 = vsel %vm1506, %v5750, %v5752
    %v5763 = vsel %vm1506, %v5752, %v5754
    %v5764 = vsel %vm1506, %v5754, %v5756
    %v5765 = vsel %vm1506, %v5756, %v5758
    %v5766 = vsel %vm1506, %v5758, %v5760
    %5774 = vst [vmem:[#allocation3 + $0x498] sm:$0xff] %v5761
    %5775 = vst [vmem:[#allocation3 + $0x4a0] sm:$0xff] %v5762
    %5776 = vst [vmem:[#allocation3 + $0x4a8] sm:$0xff] %v5763
    %5777 = vst [vmem:[#allocation3 + $0x4b0] sm:$0xff] %v5764
    %5778 = vst [vmem:[#allocation3 + $0x4b8] sm:$0xff] %v5765
    %5779 = vst [vmem:[#allocation3 + $0x4c0] sm:$0xff] %v5766
    %5780 = vst.msk [vmem:[#allocation3 + $0x4c8] sm:$0xff] %vm76, %v5760
    %v5781 = vld [vmem:[#allocation2] sm:$0xff]
    %v5782 = vld [vmem:[#allocation2 + $0x8] sm:$0xff]
    %v5783 = vld [vmem:[#allocation2 + $0x10] sm:$0xff]
    %v5784 = vld [vmem:[#allocation2 + $0x18] sm:$0xff]
    %v5785 = vld [vmem:[#allocation2 + $0x20] sm:$0xff]
    %v5786 = vld [vmem:[#allocation2 + $0x28] sm:$0xff]
    %v5787 = vld [vmem:[#allocation2 + $0x30] sm:$0xff]
    %v5788 = vld [vmem:[#allocation2 + $0x38] sm:$0xff]
    %v5789 = vld [vmem:[#allocation2 + $0x40] sm:$0xff]
    %v5790 = vld [vmem:[#allocation2 + $0x48] sm:$0xff]
    %v5791 = vld [vmem:[#allocation2 + $0x50] sm:$0xff]
    %v5792 = vld [vmem:[#allocation2 + $0x58] sm:$0xff]
    %v5793 = vld [vmem:[#allocation2 + $0x60] sm:$0xff]
    %v5794 = vld [vmem:[#allocation2 + $0x68] sm:$0xff]
    %v5795 = vpack.c.bf16 %v5788, %v5781
    %v5796 = vpack.c.bf16 %v5789, %v5782
    %v5797 = vpack.c.bf16 %v5790, %v5783
    %v5798 = vpack.c.bf16 %v5791, %v5784
    %v5799 = vpack.c.bf16 %v5792, %v5785
    %v5800 = vpack.c.bf16 %v5793, %v5786
    %v5801 = vpack.c.bf16 %v5794, %v5787
    %5809 = vrot.lane.b32.xlu0 %v5795, 46
    %v5810 = vpop.permute.xlu0 %5809
    %5811 = vrot.lane.b32.xlu0 %v5796, 46
    %v5812 = vpop.permute.xlu0 %5811
    %5813 = vrot.lane.b32.xlu0 %v5797, 46
    %v5814 = vpop.permute.xlu0 %5813
    %5815 = vrot.lane.b32.xlu0 %v5798, 46
    %v5816 = vpop.permute.xlu0 %5815
    %5817 = vrot.lane.b32.xlu0 %v5799, 46
    %v5818 = vpop.permute.xlu0 %5817
    %5819 = vrot.lane.b32.xlu0 %v5800, 46
    %v5820 = vpop.permute.xlu0 %5819
    %5821 = vrot.lane.b32.xlu0 %v5801, 46
    %v5822 = vpop.permute.xlu0 %5821
    %v5823 = vsel %vm1569, %v5810, %v5812
    %v5824 = vsel %vm1569, %v5812, %v5814
    %v5825 = vsel %vm1569, %v5814, %v5816
    %v5826 = vsel %vm1569, %v5816, %v5818
    %v5827 = vsel %vm1569, %v5818, %v5820
    %v5828 = vsel %vm1569, %v5820, %v5822
    %5836 = vst [vmem:[#allocation3 + $0x4d0] sm:$0xff] %v5823
    %5837 = vst [vmem:[#allocation3 + $0x4d8] sm:$0xff] %v5824
    %5838 = vst [vmem:[#allocation3 + $0x4e0] sm:$0xff] %v5825
    %5839 = vst [vmem:[#allocation3 + $0x4e8] sm:$0xff] %v5826
    %5840 = vst [vmem:[#allocation3 + $0x4f0] sm:$0xff] %v5827
    %5841 = vst [vmem:[#allocation3 + $0x4f8] sm:$0xff] %v5828
    %5842 = vst.msk [vmem:[#allocation3 + $0x500] sm:$0xff] %vm76, %v5822
    %v5843 = vld [vmem:[#allocation2] sm:$0xff]
    %v5844 = vld [vmem:[#allocation2 + $0x8] sm:$0xff]
    %v5845 = vld [vmem:[#allocation2 + $0x10] sm:$0xff]
    %v5846 = vld [vmem:[#allocation2 + $0x18] sm:$0xff]
    %v5847 = vld [vmem:[#allocation2 + $0x20] sm:$0xff]
    %v5848 = vld [vmem:[#allocation2 + $0x28] sm:$0xff]
    %v5849 = vld [vmem:[#allocation2 + $0x30] sm:$0xff]
    %v5850 = vld [vmem:[#allocation2 + $0x38] sm:$0xff]
    %v5851 = vld [vmem:[#allocation2 + $0x40] sm:$0xff]
    %v5852 = vld [vmem:[#allocation2 + $0x48] sm:$0xff]
    %v5853 = vld [vmem:[#allocation2 + $0x50] sm:$0xff]
    %v5854 = vld [vmem:[#allocation2 + $0x58] sm:$0xff]
    %v5855 = vld [vmem:[#allocation2 + $0x60] sm:$0xff]
    %v5856 = vld [vmem:[#allocation2 + $0x68] sm:$0xff]
    %v5857 = vpack.c.bf16 %v5850, %v5843
    %v5858 = vpack.c.bf16 %v5851, %v5844
    %v5859 = vpack.c.bf16 %v5852, %v5845
    %v5860 = vpack.c.bf16 %v5853, %v5846
    %v5861 = vpack.c.bf16 %v5854, %v5847
    %v5862 = vpack.c.bf16 %v5855, %v5848
    %v5863 = vpack.c.bf16 %v5856, %v5849
    %5871 = vrot.lane.b32.xlu0 %v5857, 45
    %v5872 = vpop.permute.xlu0 %5871
    %5873 = vrot.lane.b32.xlu0 %v5858, 45
    %v5874 = vpop.permute.xlu0 %5873
    %5875 = vrot.lane.b32.xlu0 %v5859, 45
    %v5876 = vpop.permute.xlu0 %5875
    %5877 = vrot.lane.b32.xlu0 %v5860, 45
    %v5878 = vpop.permute.xlu0 %5877
    %5879 = vrot.lane.b32.xlu0 %v5861, 45
    %v5880 = vpop.permute.xlu0 %5879
    %5881 = vrot.lane.b32.xlu0 %v5862, 45
    %v5882 = vpop.permute.xlu0 %5881
    %5883 = vrot.lane.b32.xlu0 %v5863, 45
    %v5884 = vpop.permute.xlu0 %5883
    %v5885 = vsel %vm1632, %v5872, %v5874
    %v5886 = vsel %vm1632, %v5874, %v5876
    %v5887 = vsel %vm1632, %v5876, %v5878
    %v5888 = vsel %vm1632, %v5878, %v5880
    %v5889 = vsel %vm1632, %v5880, %v5882
    %v5890 = vsel %vm1632, %v5882, %v5884
    %5898 = vst [vmem:[#allocation3 + $0x508] sm:$0xff] %v5885
    %5899 = vst [vmem:[#allocation3 + $0x510] sm:$0xff] %v5886
    %5900 = vst [vmem:[#allocation3 + $0x518] sm:$0xff] %v5887
    %5901 = vst [vmem:[#allocation3 + $0x520] sm:$0xff] %v5888
    %5902 = vst [vmem:[#allocation3 + $0x528] sm:$0xff] %v5889
    %5903 = vst [vmem:[#allocation3 + $0x530] sm:$0xff] %v5890
    %5904 = vst.msk [vmem:[#allocation3 + $0x538] sm:$0xff] %vm76, %v5884
    %v5905 = vld [vmem:[#allocation2] sm:$0xff]
    %v5906 = vld [vmem:[#allocation2 + $0x8] sm:$0xff]
    %v5907 = vld [vmem:[#allocation2 + $0x10] sm:$0xff]
    %v5908 = vld [vmem:[#allocation2 + $0x18] sm:$0xff]
    %v5909 = vld [vmem:[#allocation2 + $0x20] sm:$0xff]
    %v5910 = vld [vmem:[#allocation2 + $0x28] sm:$0xff]
    %v5911 = vld [vmem:[#allocation2 + $0x30] sm:$0xff]
    %v5912 = vld [vmem:[#allocation2 + $0x38] sm:$0xff]
    %v5913 = vld [vmem:[#allocation2 + $0x40] sm:$0xff]
    %v5914 = vld [vmem:[#allocation2 + $0x48] sm:$0xff]
    %v5915 = vld [vmem:[#allocation2 + $0x50] sm:$0xff]
    %v5916 = vld [vmem:[#allocation2 + $0x58] sm:$0xff]
    %v5917 = vld [vmem:[#allocation2 + $0x60] sm:$0xff]
    %v5918 = vld [vmem:[#allocation2 + $0x68] sm:$0xff]
    %v5919 = vpack.c.bf16 %v5912, %v5905
    %v5920 = vpack.c.bf16 %v5913, %v5906
    %v5921 = vpack.c.bf16 %v5914, %v5907
    %v5922 = vpack.c.bf16 %v5915, %v5908
    %v5923 = vpack.c.bf16 %v5916, %v5909
    %v5924 = vpack.c.bf16 %v5917, %v5910
    %v5925 = vpack.c.bf16 %v5918, %v5911
    %5933 = vrot.lane.b32.xlu0 %v5919, 44
    %v5934 = vpop.permute.xlu0 %5933
    %5935 = vrot.lane.b32.xlu0 %v5920, 44
    %v5936 = vpop.permute.xlu0 %5935
    %5937 = vrot.lane.b32.xlu0 %v5921, 44
    %v5938 = vpop.permute.xlu0 %5937
    %5939 = vrot.lane.b32.xlu0 %v5922, 44
    %v5940 = vpop.permute.xlu0 %5939
    %5941 = vrot.lane.b32.xlu0 %v5923, 44
    %v5942 = vpop.permute.xlu0 %5941
    %5943 = vrot.lane.b32.xlu0 %v5924, 44
    %v5944 = vpop.permute.xlu0 %5943
    %5945 = vrot.lane.b32.xlu0 %v5925, 44
    %v5946 = vpop.permute.xlu0 %5945
    %v5947 = vsel %vm1695, %v5934, %v5936
    %v5948 = vsel %vm1695, %v5936, %v5938
    %v5949 = vsel %vm1695, %v5938, %v5940
    %v5950 = vsel %vm1695, %v5940, %v5942
    %v5951 = vsel %vm1695, %v5942, %v5944
    %v5952 = vsel %vm1695, %v5944, %v5946
    %5960 = vst [vmem:[#allocation3 + $0x540] sm:$0xff] %v5947
    %5961 = vst [vmem:[#allocation3 + $0x548] sm:$0xff] %v5948
    %5962 = vst [vmem:[#allocation3 + $0x550] sm:$0xff] %v5949
    %5963 = vst [vmem:[#allocation3 + $0x558] sm:$0xff] %v5950
    %5964 = vst [vmem:[#allocation3 + $0x560] sm:$0xff] %v5951
    %5965 = vst [vmem:[#allocation3 + $0x568] sm:$0xff] %v5952
    %5966 = vst.msk [vmem:[#allocation3 + $0x570] sm:$0xff] %vm76, %v5946
    %v5967 = vld [vmem:[#allocation7 + $0x40] sm:$0xff]
    %v5968 = vld [vmem:[#allocation7 + $0x48] sm:$0xff]
    %v5969 = vld [vmem:[#allocation7 + $0x50] sm:$0xff]
    %v5970 = vld [vmem:[#allocation7 + $0x58] sm:$0xff]
    %v5971 = vld [vmem:[#allocation9] sm:$0xff]
    %v5972 = vld [vmem:[#allocation9 + $0x8] sm:$0xff]
    %v5973 = vld [vmem:[#allocation3] sm:$0xff]
    %v5974 = vld [vmem:[#allocation3 + $0x8] sm:$0xff]
    %v5975 = vld [vmem:[#allocation3 + $0x10] sm:$0xff]
    %v5976 = vld [vmem:[#allocation3 + $0x18] sm:$0xff]
    %v5977 = vld [vmem:[#allocation3 + $0x20] sm:$0xff]
    %v5978 = vld [vmem:[#allocation3 + $0x28] sm:$0xff]
    %v5979 = vld [vmem:[#allocation3 + $0x30] sm:$0xff]
    %v5980 = vld [vmem:[#allocation3 + $0x38] sm:$0xff]
    %v5981 = vld [vmem:[#allocation3 + $0x40] sm:$0xff]
    %v5982 = vld [vmem:[#allocation3 + $0x48] sm:$0xff]
    %v5983 = vld [vmem:[#allocation3 + $0x50] sm:$0xff]
    %v5984 = vld [vmem:[#allocation3 + $0x58] sm:$0xff]
    %v5985 = vld [vmem:[#allocation3 + $0x60] sm:$0xff]
    %v5986 = vld [vmem:[#allocation3 + $0x68] sm:$0xff]
    %v5987 = vld [vmem:[#allocation3 + $0x70] sm:$0xff]
    %v5988 = vld [vmem:[#allocation3 + $0x78] sm:$0xff]
    %v5989 = vld [vmem:[#allocation3 + $0x80] sm:$0xff]
    %v5990 = vld [vmem:[#allocation3 + $0x88] sm:$0xff]
    %v5991 = vld [vmem:[#allocation3 + $0x90] sm:$0xff]
    %v5992 = vld [vmem:[#allocation3 + $0x98] sm:$0xff]
    %v5993 = vld [vmem:[#allocation3 + $0xa0] sm:$0xff]
    %v5994 = vld [vmem:[#allocation3 + $0xa8] sm:$0xff]
    %v5995 = vld [vmem:[#allocation3 + $0xb0] sm:$0xff]
    %v5996 = vld [vmem:[#allocation3 + $0xb8] sm:$0xff]
    %v5997 = vld [vmem:[#allocation3 + $0xc0] sm:$0xff]
    %v5998 = vld [vmem:[#allocation3 + $0xc8] sm:$0xff]
    %v5999 = vld [vmem:[#allocation3 + $0xd0] sm:$0xff]
    %v6000 = vld [vmem:[#allocation3 + $0xd8] sm:$0xff]
    %v6001 = vld [vmem:[#allocation3 + $0xe0] sm:$0xff]
    %v6002 = vld [vmem:[#allocation3 + $0xe8] sm:$0xff]
    %v6003 = vld [vmem:[#allocation3 + $0xf0] sm:$0xff]
    %v6004 = vld [vmem:[#allocation3 + $0xf8] sm:$0xff]
    %v6005 = vld [vmem:[#allocation3 + $0x100] sm:$0xff]
    %v6006 = vld [vmem:[#allocation3 + $0x108] sm:$0xff]
    %v6007 = vld [vmem:[#allocation3 + $0x110] sm:$0xff]
    %v6008 = vld [vmem:[#allocation3 + $0x118] sm:$0xff]
    %v6009 = vld [vmem:[#allocation3 + $0x120] sm:$0xff]
    %v6010 = vld [vmem:[#allocation3 + $0x128] sm:$0xff]
    %v6011 = vld [vmem:[#allocation3 + $0x130] sm:$0xff]
    %v6012 = vld [vmem:[#allocation3 + $0x138] sm:$0xff]
    %v6013 = vld [vmem:[#allocation3 + $0x140] sm:$0xff]
    %v6014 = vld [vmem:[#allocation3 + $0x148] sm:$0xff]
    %v6015 = vld [vmem:[#allocation3 + $0x150] sm:$0xff]
    %v6016 = vld [vmem:[#allocation3 + $0x158] sm:$0xff]
    %v6017 = vld [vmem:[#allocation3 + $0x160] sm:$0xff]
    %v6018 = vld [vmem:[#allocation3 + $0x168] sm:$0xff]
    %v6019 = vld [vmem:[#allocation3 + $0x170] sm:$0xff]
    %v6020 = vld [vmem:[#allocation3 + $0x178] sm:$0xff]
    %v6021 = vld [vmem:[#allocation3 + $0x180] sm:$0xff]
    %v6022 = vld [vmem:[#allocation3 + $0x188] sm:$0xff]
    %v6023 = vld [vmem:[#allocation3 + $0x190] sm:$0xff]
    %v6024 = vld [vmem:[#allocation3 + $0x198] sm:$0xff]
    %v6025 = vld [vmem:[#allocation3 + $0x1a0] sm:$0xff]
    %v6026 = vld [vmem:[#allocation3 + $0x1a8] sm:$0xff]
    %v6027 = vld [vmem:[#allocation3 + $0x1b0] sm:$0xff]
    %v6028 = vld [vmem:[#allocation3 + $0x1b8] sm:$0xff]
    %v6029 = vld [vmem:[#allocation3 + $0x1c0] sm:$0xff]
    %v6030 = vld [vmem:[#allocation3 + $0x1c8] sm:$0xff]
    %v6031 = vld [vmem:[#allocation3 + $0x1d0] sm:$0xff]
    %v6032 = vld [vmem:[#allocation3 + $0x1d8] sm:$0xff]
    %v6033 = vld [vmem:[#allocation3 + $0x1e0] sm:$0xff]
    %v6034 = vld [vmem:[#allocation3 + $0x1e8] sm:$0xff]
    %v6035 = vld [vmem:[#allocation3 + $0x1f0] sm:$0xff]
    %v6036 = vld [vmem:[#allocation3 + $0x1f8] sm:$0xff]
    %v6037 = vld [vmem:[#allocation3 + $0x200] sm:$0xff]
    %v6038 = vld [vmem:[#allocation3 + $0x208] sm:$0xff]
    %v6039 = vld [vmem:[#allocation3 + $0x210] sm:$0xff]
    %v6040 = vld [vmem:[#allocation3 + $0x218] sm:$0xff]
    %v6041 = vld [vmem:[#allocation3 + $0x220] sm:$0xff]
    %v6042 = vld [vmem:[#allocation3 + $0x228] sm:$0xff]
    %v6043 = vld [vmem:[#allocation3 + $0x230] sm:$0xff]
    %v6044 = vld [vmem:[#allocation3 + $0x238] sm:$0xff]
    %v6045 = vld [vmem:[#allocation3 + $0x240] sm:$0xff]
    %v6046 = vld [vmem:[#allocation3 + $0x248] sm:$0xff]
    %v6047 = vld [vmem:[#allocation3 + $0x250] sm:$0xff]
    %v6048 = vld [vmem:[#allocation3 + $0x258] sm:$0xff]
    %v6049 = vld [vmem:[#allocation3 + $0x260] sm:$0xff]
    %v6050 = vld [vmem:[#allocation3 + $0x268] sm:$0xff]
    %v6051 = vld [vmem:[#allocation3 + $0x270] sm:$0xff]
    %v6052 = vld [vmem:[#allocation3 + $0x278] sm:$0xff]
    %v6053 = vld [vmem:[#allocation3 + $0x280] sm:$0xff]
    %v6054 = vld [vmem:[#allocation3 + $0x288] sm:$0xff]
    %v6055 = vld [vmem:[#allocation3 + $0x290] sm:$0xff]
    %v6056 = vld [vmem:[#allocation3 + $0x298] sm:$0xff]
    %v6057 = vld [vmem:[#allocation3 + $0x2a0] sm:$0xff]
    %v6058 = vld [vmem:[#allocation3 + $0x2a8] sm:$0xff]
    %v6059 = vld [vmem:[#allocation3 + $0x2b0] sm:$0xff]
    %v6060 = vld [vmem:[#allocation3 + $0x2b8] sm:$0xff]
    %v6061 = vld [vmem:[#allocation3 + $0x2c0] sm:$0xff]
    %v6062 = vld [vmem:[#allocation3 + $0x2c8] sm:$0xff]
    %v6063 = vld [vmem:[#allocation3 + $0x2d0] sm:$0xff]
    %v6064 = vld [vmem:[#allocation3 + $0x2d8] sm:$0xff]
    %v6065 = vld [vmem:[#allocation3 + $0x2e0] sm:$0xff]
    %v6066 = vld [vmem:[#allocation3 + $0x2e8] sm:$0xff]
    %v6067 = vld [vmem:[#allocation3 + $0x2f0] sm:$0xff]
    %v6068 = vld [vmem:[#allocation3 + $0x2f8] sm:$0xff]
    %v6069 = vld [vmem:[#allocation3 + $0x300] sm:$0xff]
    %v6070 = vld [vmem:[#allocation3 + $0x308] sm:$0xff]
    %v6071 = vld [vmem:[#allocation3 + $0x310] sm:$0xff]
    %v6072 = vld [vmem:[#allocation3 + $0x318] sm:$0xff]
    %v6073 = vld [vmem:[#allocation3 + $0x320] sm:$0xff]
    %v6074 = vld [vmem:[#allocation3 + $0x328] sm:$0xff]
    %v6075 = vld [vmem:[#allocation3 + $0x330] sm:$0xff]
    %v6076 = vld [vmem:[#allocation3 + $0x338] sm:$0xff]
    %v6077 = vld [vmem:[#allocation3 + $0x340] sm:$0xff]
    %v6078 = vld [vmem:[#allocation3 + $0x348] sm:$0xff]
    %v6079 = vld [vmem:[#allocation3 + $0x350] sm:$0xff]
    %v6080 = vld [vmem:[#allocation3 + $0x358] sm:$0xff]
    %v6081 = vld [vmem:[#allocation3 + $0x360] sm:$0xff]
    %v6082 = vld [vmem:[#allocation3 + $0x368] sm:$0xff]
    %v6083 = vld [vmem:[#allocation3 + $0x370] sm:$0xff]
    %v6084 = vld [vmem:[#allocation3 + $0x378] sm:$0xff]
    %v6085 = vld [vmem:[#allocation3 + $0x380] sm:$0xff]
    %v6086 = vld [vmem:[#allocation3 + $0x388] sm:$0xff]
    %v6087 = vld [vmem:[#allocation3 + $0x390] sm:$0xff]
    %v6088 = vld [vmem:[#allocation3 + $0x398] sm:$0xff]
    %v6089 = vld [vmem:[#allocation3 + $0x3a0] sm:$0xff]
    %v6090 = vld [vmem:[#allocation3 + $0x3a8] sm:$0xff]
    %v6091 = vld [vmem:[#allocation3 + $0x3b0] sm:$0xff]
    %v6092 = vld [vmem:[#allocation3 + $0x3b8] sm:$0xff]
    %v6093 = vld [vmem:[#allocation3 + $0x3c0] sm:$0xff]
    %v6094 = vld [vmem:[#allocation3 + $0x3c8] sm:$0xff]
    %v6095 = vld [vmem:[#allocation3 + $0x3d0] sm:$0xff]
    %v6096 = vld [vmem:[#allocation3 + $0x3d8] sm:$0xff]
    %v6097 = vld [vmem:[#allocation3 + $0x3e0] sm:$0xff]
    %v6098 = vld [vmem:[#allocation3 + $0x3e8] sm:$0xff]
    %v6099 = vld [vmem:[#allocation3 + $0x3f0] sm:$0xff]
    %v6100 = vld [vmem:[#allocation3 + $0x3f8] sm:$0xff]
    %v6101 = vld [vmem:[#allocation3 + $0x400] sm:$0xff]
    %v6102 = vld [vmem:[#allocation3 + $0x408] sm:$0xff]
    %v6103 = vld [vmem:[#allocation3 + $0x410] sm:$0xff]
    %v6104 = vld [vmem:[#allocation3 + $0x418] sm:$0xff]
    %v6105 = vld [vmem:[#allocation3 + $0x420] sm:$0xff]
    %v6106 = vld [vmem:[#allocation3 + $0x428] sm:$0xff]
    %v6107 = vld [vmem:[#allocation3 + $0x430] sm:$0xff]
    %v6108 = vld [vmem:[#allocation3 + $0x438] sm:$0xff]
    %v6109 = vld [vmem:[#allocation3 + $0x440] sm:$0xff]
    %v6110 = vld [vmem:[#allocation3 + $0x448] sm:$0xff]
    %v6111 = vld [vmem:[#allocation3 + $0x450] sm:$0xff]
    %v6112 = vld [vmem:[#allocation3 + $0x458] sm:$0xff]
    %v6113 = vld [vmem:[#allocation3 + $0x460] sm:$0xff]
    %v6114 = vld [vmem:[#allocation3 + $0x468] sm:$0xff]
    %v6115 = vld [vmem:[#allocation3 + $0x470] sm:$0xff]
    %v6116 = vld [vmem:[#allocation3 + $0x478] sm:$0xff]
    %v6117 = vld [vmem:[#allocation3 + $0x480] sm:$0xff]
    %v6118 = vld [vmem:[#allocation3 + $0x488] sm:$0xff]
    %v6119 = vld [vmem:[#allocation3 + $0x490] sm:$0xff]
    %v6120 = vld [vmem:[#allocation3 + $0x498] sm:$0xff]
    %v6121 = vld [vmem:[#allocation3 + $0x4a0] sm:$0xff]
    %v6122 = vld [vmem:[#allocation3 + $0x4a8] sm:$0xff]
    %v6123 = vld [vmem:[#allocation3 + $0x4b0] sm:$0xff]
    %v6124 = vld [vmem:[#allocation3 + $0x4b8] sm:$0xff]
    %v6125 = vld [vmem:[#allocation3 + $0x4c0] sm:$0xff]
    %v6126 = vld [vmem:[#allocation3 + $0x4c8] sm:$0xff]
    %v6127 = vld [vmem:[#allocation3 + $0x4d0] sm:$0xff]
    %v6128 = vld [vmem:[#allocation3 + $0x4d8] sm:$0xff]
    %v6129 = vld [vmem:[#allocation3 + $0x4e0] sm:$0xff]
    %v6130 = vld [vmem:[#allocation3 + $0x4e8] sm:$0xff]
    %v6131 = vld [vmem:[#allocation3 + $0x4f0] sm:$0xff]
    %v6132 = vld [vmem:[#allocation3 + $0x4f8] sm:$0xff]
    %v6133 = vld [vmem:[#allocation3 + $0x500] sm:$0xff]
    %v6134 = vld [vmem:[#allocation3 + $0x508] sm:$0xff]
    %v6135 = vld [vmem:[#allocation3 + $0x510] sm:$0xff]
    %v6136 = vld [vmem:[#allocation3 + $0x518] sm:$0xff]
    %v6137 = vld [vmem:[#allocation3 + $0x520] sm:$0xff]
    %v6138 = vld [vmem:[#allocation3 + $0x528] sm:$0xff]
    %v6139 = vld [vmem:[#allocation3 + $0x530] sm:$0xff]
    %v6140 = vld [vmem:[#allocation3 + $0x538] sm:$0xff]
    %v6141 = vld [vmem:[#allocation3 + $0x540] sm:$0xff]
    %v6142 = vld [vmem:[#allocation3 + $0x548] sm:$0xff]
    %v6143 = vld [vmem:[#allocation3 + $0x550] sm:$0xff]
    %v6144 = vld [vmem:[#allocation3 + $0x558] sm:$0xff]
    %v6145 = vld [vmem:[#allocation3 + $0x560] sm:$0xff]
    %v6146 = vld [vmem:[#allocation3 + $0x568] sm:$0xff]
    %v6147 = vld [vmem:[#allocation3 + $0x570] sm:$0xff]
    %6149 = vset.pattern.permute.xlu0 2
    %6150 = vperm.xlu0 %6149, %v5971
    %v6151 = vpop.permute.xlu0 %6150
    %6154 = vset.pattern.permute.xlu0 2
    %6155 = vperm.xlu0 %6154, %v5972
    %v6156 = vpop.permute.xlu0 %6155
    %v6162 = vunpack.c.l.b16 %v5967
    %v6163 = vunpack.c.h.b16 %v5967
    %v6164 = vunpack.c.l.b16 %v5968
    %v6165 = vunpack.c.h.b16 %v5968
    %v6166 = vunpack.c.l.b16 %v5969
    %v6167 = vunpack.c.h.b16 %v5969
    %v6168 = vunpack.c.l.b16 %v5970
    %v6169 = vunpack.c.h.b16 %v5970
    %v6170 = vpack.c.b16 %v6166, %v6162
    %v6171 = vpack.c.b16 %v6167, %v6163
    %v6172 = vpack.c.b16 %v6168, %v6164
    %v6173 = vpack.c.b16 %v6169, %v6165
    %v6178 = vsel %vm1926, %v6173, 0
    %6180 = vmatprep.subr.bf16.mxu0 %v5974
    %6181 = vmatpush1.bf16.msra.mxu0 %v5973
    %6182 = vmatprep.subr.bf16.mxu0 %v5981
    %6183 = vmatpush1.bf16.msra.mxu0 %v5980
    %6184 = vmatprep.subr.bf16.mxu0 %v5988
    %6185 = vmatpush1.bf16.msra.mxu0 %v5987
    %6186 = vmatprep.subr.bf16.mxu0 %v5995
    %6187 = vmatpush1.bf16.msra.mxu0 %v5994
    %6188 = vmatprep.subr.bf16.mxu0 %v6002
    %6189 = vmatpush1.bf16.msra.mxu0 %v6001
    %6190 = vmatprep.subr.bf16.mxu0 %v6009
    %6191 = vmatpush1.bf16.msra.mxu0 %v6008
    %6192 = vmatprep.subr.bf16.mxu0 %v6016
    %6193 = vmatpush1.bf16.msra.mxu0 %v6015
    %6194 = vmatprep.subr.bf16.mxu0 %v6023
    %6195 = vmatpush1.bf16.msra.mxu0 %v6022
    %6196 = vmatprep.subr.bf16.mxu0 %v6030
    %6197 = vmatpush1.bf16.msra.mxu0 %v6029
    %6198 = vmatprep.subr.bf16.mxu0 %v6037
    %6199 = vmatpush1.bf16.msra.mxu0 %v6036
    %6200 = vmatprep.subr.bf16.mxu0 %v6044
    %6201 = vmatpush1.bf16.msra.mxu0 %v6043
    %6202 = vmatprep.subr.bf16.mxu0 %v6051
    %6203 = vmatpush1.bf16.msra.mxu0 %v6050
    %6204 = vmatprep.subr.bf16.mxu0 %v6058
    %6205 = vmatpush1.bf16.msra.mxu0 %v6057
    %6206 = vmatprep.subr.bf16.mxu0 %v6065
    %6207 = vmatpush1.bf16.msra.mxu0 %v6064
    %6208 = vmatprep.subr.bf16.mxu0 %v6072
    %6209 = vmatpush1.bf16.msra.mxu0 %v6071
    %6210 = vmatprep.subr.bf16.mxu0 %v6079
    %6211 = vmatpush1.bf16.msra.mxu0 %v6078
    %6212 = vmatprep.mubr.bf16.mxu0 %v6171
    %6213 = vmatmul.mubr.bf16.gmra.mrb[0].mxu0 %v6170
    %v6214 = vpop.f32.mrb[0].mxu0
    %v6215 = vadd.f32 %v6151, %v6214
    %v6216 = vpop.f32.mrb[0].mxu0
    %v6217 = vadd.f32 %v6151, %v6216
    %v6218 = vpop.f32.mrb[0].mxu0
    %v6219 = vadd.f32 %v6156, %v6218
    %v6220 = vpop.f32.mrb[0].mxu0
    %v6221 = vadd.f32 %v6156, %v6220
    %6222 = vdwg.mxu0
    %6223 = vmatprep.subr.bf16.mxu0 %v6086
    %6224 = vmatpush1.bf16.msra.mxu0 %v6085
    %6225 = vmatprep.subr.bf16.mxu0 %v6093
    %6226 = vmatpush1.bf16.msra.mxu0 %v6092
    %6227 = vmatprep.subr.bf16.mxu0 %v6100
    %6228 = vmatpush1.bf16.msra.mxu0 %v6099
    %6229 = vmatprep.subr.bf16.mxu0 %v6107
    %6230 = vmatpush1.bf16.msra.mxu0 %v6106
    %6231 = vmatprep.subr.bf16.mxu0 %v6114
    %6232 = vmatpush1.bf16.msra.mxu0 %v6113
    %6233 = vmatprep.subr.bf16.mxu0 %v6121
    %6234 = vmatpush1.bf16.msra.mxu0 %v6120
    %6235 = vmatprep.subr.bf16.mxu0 %v6128
    %6236 = vmatpush1.bf16.msra.mxu0 %v6127
    %6237 = vmatprep.subr.bf16.mxu0 %v6135
    %6238 = vmatpush1.bf16.msra.mxu0 %v6134
    %6239 = vmatprep.subr.bf16.mxu0 %v6142
    %6240 = vmatpush1.bf16.msra.mxu0 %v6141
    %6241 = vmatprep.subr.bf16.mxu0 0
    %6242 = vmatpush1.bf16.msra.mxu0 0
    %6243 = vmatprep.subr.bf16.mxu0 0
    %6244 = vmatpush1.bf16.msra.mxu0 0
    %6245 = vmatprep.subr.bf16.mxu0 0
    %6246 = vmatpush1.bf16.msra.mxu0 0
    %6247 = vmatprep.subr.bf16.mxu0 0
    %6248 = vmatpush1.bf16.msra.mxu0 0
    %6249 = vmatprep.subr.bf16.mxu0 0
    %6250 = vmatpush1.bf16.msra.mxu0 0
    %6251 = vmatprep.subr.bf16.mxu0 0
    %6252 = vmatpush1.bf16.msra.mxu0 0
    %6253 = vmatprep.subr.bf16.mxu0 0
    %6254 = vmatpush1.bf16.msra.mxu0 0
    %6255 = vmatprep.mubr.bf16.mxu0 %v6178
    %6256 = vmatmul.mubr.bf16.gmra.mrb[0].mxu0 %v6172
    %v6257 = vpop.f32.mrb[0].mxu0
    %v6258 = vadd.f32 %v6215, %v6257
    %v6259 = vpop.f32.mrb[0].mxu0
    %v6260 = vadd.f32 %v6217, %v6259
    %v6261 = vpop.f32.mrb[0].mxu0
    %v6262 = vadd.f32 %v6219, %v6261
    %v6263 = vpop.f32.mrb[0].mxu0
    %v6264 = vadd.f32 %v6221, %v6263
    %6265 = vdwg.mxu0
    %6266 = vmatprep.subr.bf16.mxu0 %v5976
    %6267 = vmatpush1.bf16.msra.mxu0 %v5975
    %6268 = vmatprep.subr.bf16.mxu0 %v5983
    %6269 = vmatpush1.bf16.msra.mxu0 %v5982
    %6270 = vmatprep.subr.bf16.mxu0 %v5990
    %6271 = vmatpush1.bf16.msra.mxu0 %v5989
    %6272 = vmatprep.subr.bf16.mxu0 %v5997
    %6273 = vmatpush1.bf16.msra.mxu0 %v5996
    %6274 = vmatprep.subr.bf16.mxu0 %v6004
    %6275 = vmatpush1.bf16.msra.mxu0 %v6003
    %6276 = vmatprep.subr.bf16.mxu0 %v6011
    %6277 = vmatpush1.bf16.msra.mxu0 %v6010
    %6278 = vmatprep.subr.bf16.mxu0 %v6018
    %6279 = vmatpush1.bf16.msra.mxu0 %v6017
    %6280 = vmatprep.subr.bf16.mxu0 %v6025
    %6281 = vmatpush1.bf16.msra.mxu0 %v6024
    %6282 = vmatprep.subr.bf16.mxu0 %v6032
    %6283 = vmatpush1.bf16.msra.mxu0 %v6031
    %6284 = vmatprep.subr.bf16.mxu0 %v6039
    %6285 = vmatpush1.bf16.msra.mxu0 %v6038
    %6286 = vmatprep.subr.bf16.mxu0 %v6046
    %6287 = vmatpush1.bf16.msra.mxu0 %v6045
    %6288 = vmatprep.subr.bf16.mxu0 %v6053
    %6289 = vmatpush1.bf16.msra.mxu0 %v6052
    %6290 = vmatprep.subr.bf16.mxu0 %v6060
    %6291 = vmatpush1.bf16.msra.mxu0 %v6059
    %6292 = vmatprep.subr.bf16.mxu0 %v6067
    %6293 = vmatpush1.bf16.msra.mxu0 %v6066
    %6294 = vmatprep.subr.bf16.mxu0 %v6074
    %6295 = vmatpush1.bf16.msra.mxu0 %v6073
    %6296 = vmatprep.subr.bf16.mxu0 %v6081
    %6297 = vmatpush1.bf16.msra.mxu0 %v6080
    %6298 = vmatprep.mubr.bf16.mxu0 %v6171
    %6299 = vmatmul.mubr.bf16.gmra.mrb[0].mxu0 %v6170
    %v6300 = vpop.f32.mrb[0].mxu0
    %v6301 = vadd.f32 %v6151, %v6300
    %v6302 = vpop.f32.mrb[0].mxu0
    %v6303 = vadd.f32 %v6151, %v6302
    %v6304 = vpop.f32.mrb[0].mxu0
    %v6305 = vadd.f32 %v6156, %v6304
    %v6306 = vpop.f32.mrb[0].mxu0
    %v6307 = vadd.f32 %v6156, %v6306
    %6308 = vdwg.mxu0
    %6309 = vmatprep.subr.bf16.mxu0 %v6088
    %6310 = vmatpush1.bf16.msra.mxu0 %v6087
    %6311 = vmatprep.subr.bf16.mxu0 %v6095
    %6312 = vmatpush1.bf16.msra.mxu0 %v6094
    %6313 = vmatprep.subr.bf16.mxu0 %v6102
    %6314 = vmatpush1.bf16.msra.mxu0 %v6101
    %6315 = vmatprep.subr.bf16.mxu0 %v6109
    %6316 = vmatpush1.bf16.msra.mxu0 %v6108
    %6317 = vmatprep.subr.bf16.mxu0 %v6116
    %6318 = vmatpush1.bf16.msra.mxu0 %v6115
    %6319 = vmatprep.subr.bf16.mxu0 %v6123
    %6320 = vmatpush1.bf16.msra.mxu0 %v6122
    %6321 = vmatprep.subr.bf16.mxu0 %v6130
    %6322 = vmatpush1.bf16.msra.mxu0 %v6129
    %6323 = vmatprep.subr.bf16.mxu0 %v6137
    %6324 = vmatpush1.bf16.msra.mxu0 %v6136
    %6325 = vmatprep.subr.bf16.mxu0 %v6144
    %6326 = vmatpush1.bf16.msra.mxu0 %v6143
    %6327 = vmatprep.subr.bf16.mxu0 0
    %6328 = vmatpush1.bf16.msra.mxu0 0
    %6329 = vmatprep.subr.bf16.mxu0 0
    %6330 = vmatpush1.bf16.msra.mxu0 0
    %6331 = vmatprep.subr.bf16.mxu0 0
    %6332 = vmatpush1.bf16.msra.mxu0 0
    %6333 = vmatprep.subr.bf16.mxu0 0
    %6334 = vmatpush1.bf16.msra.mxu0 0
    %6335 = vmatprep.subr.bf16.mxu0 0
    %6336 = vmatpush1.bf16.msra.mxu0 0
    %6337 = vmatprep.subr.bf16.mxu0 0
    %6338 = vmatpush1.bf16.msra.mxu0 0
    %6339 = vmatprep.subr.bf16.mxu0 0
    %6340 = vmatpush1.bf16.msra.mxu0 0
    %6341 = vmatprep.mubr.bf16.mxu0 %v6178
    %6342 = vmatmul.mubr.bf16.gmra.mrb[0].mxu0 %v6172
    %v6343 = vpop.f32.mrb[0].mxu0
    %v6344 = vadd.f32 %v6301, %v6343
    %v6345 = vpop.f32.mrb[0].mxu0
    %v6346 = vadd.f32 %v6303, %v6345
    %v6347 = vpop.f32.mrb[0].mxu0
    %v6348 = vadd.f32 %v6305, %v6347
    %v6349 = vpop.f32.mrb[0].mxu0
    %v6350 = vadd.f32 %v6307, %v6349
    %6351 = vdwg.mxu0
    %6352 = vmatprep.subr.bf16.mxu0 %v5978
    %6353 = vmatpush1.bf16.msra.mxu0 %v5977
    %6354 = vmatprep.subr.bf16.mxu0 %v5985
    %6355 = vmatpush1.bf16.msra.mxu0 %v5984
    %6356 = vmatprep.subr.bf16.mxu0 %v5992
    %6357 = vmatpush1.bf16.msra.mxu0 %v5991
    %6358 = vmatprep.subr.bf16.mxu0 %v5999
    %6359 = vmatpush1.bf16.msra.mxu0 %v5998
    %6360 = vmatprep.subr.bf16.mxu0 %v6006
    %6361 = vmatpush1.bf16.msra.mxu0 %v6005
    %6362 = vmatprep.subr.bf16.mxu0 %v6013
    %6363 = vmatpush1.bf16.msra.mxu0 %v6012
    %6364 = vmatprep.subr.bf16.mxu0 %v6020
    %6365 = vmatpush1.bf16.msra.mxu0 %v6019
    %6366 = vmatprep.subr.bf16.mxu0 %v6027
    %6367 = vmatpush1.bf16.msra.mxu0 %v6026
    %6368 = vmatprep.subr.bf16.mxu0 %v6034
    %6369 = vmatpush1.bf16.msra.mxu0 %v6033
    %6370 = vmatprep.subr.bf16.mxu0 %v6041
    %6371 = vmatpush1.bf16.msra.mxu0 %v6040
    %6372 = vmatprep.subr.bf16.mxu0 %v6048
    %6373 = vmatpush1.bf16.msra.mxu0 %v6047
    %6374 = vmatprep.subr.bf16.mxu0 %v6055
    %6375 = vmatpush1.bf16.msra.mxu0 %v6054
    %6376 = vmatprep.subr.bf16.mxu0 %v6062
    %6377 = vmatpush1.bf16.msra.mxu0 %v6061
    %6378 = vmatprep.subr.bf16.mxu0 %v6069
    %6379 = vmatpush1.bf16.msra.mxu0 %v6068
    %6380 = vmatprep.subr.bf16.mxu0 %v6076
    %6381 = vmatpush1.bf16.msra.mxu0 %v6075
    %6382 = vmatprep.subr.bf16.mxu0 %v6083
    %6383 = vmatpush1.bf16.msra.mxu0 %v6082
    %6384 = vmatprep.mubr.bf16.mxu0 %v6171
    %6385 = vmatmul.mubr.bf16.gmra.mrb[0].mxu0 %v6170
    %v6386 = vpop.f32.mrb[0].mxu0
    %v6387 = vadd.f32 %v6151, %v6386
    %v6388 = vpop.f32.mrb[0].mxu0
    %v6389 = vadd.f32 %v6151, %v6388
    %v6390 = vpop.f32.mrb[0].mxu0
    %v6391 = vadd.f32 %v6156, %v6390
    %v6392 = vpop.f32.mrb[0].mxu0
    %v6393 = vadd.f32 %v6156, %v6392
    %6394 = vdwg.mxu0
    %6395 = vmatprep.subr.bf16.mxu0 %v6090
    %6396 = vmatpush1.bf16.msra.mxu0 %v6089
    %6397 = vmatprep.subr.bf16.mxu0 %v6097
    %6398 = vmatpush1.bf16.msra.mxu0 %v6096
    %6399 = vmatprep.subr.bf16.mxu0 %v6104
    %6400 = vmatpush1.bf16.msra.mxu0 %v6103
    %6401 = vmatprep.subr.bf16.mxu0 %v6111
    %6402 = vmatpush1.bf16.msra.mxu0 %v6110
    %6403 = vmatprep.subr.bf16.mxu0 %v6118
    %6404 = vmatpush1.bf16.msra.mxu0 %v6117
    %6405 = vmatprep.subr.bf16.mxu0 %v6125
    %6406 = vmatpush1.bf16.msra.mxu0 %v6124
    %6407 = vmatprep.subr.bf16.mxu0 %v6132
    %6408 = vmatpush1.bf16.msra.mxu0 %v6131
    %6409 = vmatprep.subr.bf16.mxu0 %v6139
    %6410 = vmatpush1.bf16.msra.mxu0 %v6138
    %6411 = vmatprep.subr.bf16.mxu0 %v6146
    %6412 = vmatpush1.bf16.msra.mxu0 %v6145
    %6413 = vmatprep.subr.bf16.mxu0 0
    %6414 = vmatpush1.bf16.msra.mxu0 0
    %6415 = vmatprep.subr.bf16.mxu0 0
    %6416 = vmatpush1.bf16.msra.mxu0 0
    %6417 = vmatprep.subr.bf16.mxu0 0
    %6418 = vmatpush1.bf16.msra.mxu0 0
    %6419 = vmatprep.subr.bf16.mxu0 0
    %6420 = vmatpush1.bf16.msra.mxu0 0
    %6421 = vmatprep.subr.bf16.mxu0 0
    %6422 = vmatpush1.bf16.msra.mxu0 0
    %6423 = vmatprep.subr.bf16.mxu0 0
    %6424 = vmatpush1.bf16.msra.mxu0 0
    %6425 = vmatprep.subr.bf16.mxu0 0
    %6426 = vmatpush1.bf16.msra.mxu0 0
    %6427 = vmatprep.mubr.bf16.mxu0 %v6178
    %6428 = vmatmul.mubr.bf16.gmra.mrb[0].mxu0 %v6172
    %v6429 = vpop.f32.mrb[0].mxu0
    %v6430 = vadd.f32 %v6387, %v6429
    %v6431 = vpop.f32.mrb[0].mxu0
    %v6432 = vadd.f32 %v6389, %v6431
    %v6433 = vpop.f32.mrb[0].mxu0
    %v6434 = vadd.f32 %v6391, %v6433
    %v6435 = vpop.f32.mrb[0].mxu0
    %v6436 = vadd.f32 %v6393, %v6435
    %6437 = vdwg.mxu0
    %6438 = vmatprep.subr.bf16.mxu0 0
    %6439 = vmatpush1.bf16.msra.mxu0 %v5979
    %6440 = vmatprep.subr.bf16.mxu0 0
    %6441 = vmatpush1.bf16.msra.mxu0 %v5986
    %6442 = vmatprep.subr.bf16.mxu0 0
    %6443 = vmatpush1.bf16.msra.mxu0 %v5993
    %6444 = vmatprep.subr.bf16.mxu0 0
    %6445 = vmatpush1.bf16.msra.mxu0 %v6000
    %6446 = vmatprep.subr.bf16.mxu0 0
    %6447 = vmatpush1.bf16.msra.mxu0 %v6007
    %6448 = vmatprep.subr.bf16.mxu0 0
    %6449 = vmatpush1.bf16.msra.mxu0 %v6014
    %6450 = vmatprep.subr.bf16.mxu0 0
    %6451 = vmatpush1.bf16.msra.mxu0 %v6021
    %6452 = vmatprep.subr.bf16.mxu0 0
    %6453 = vmatpush1.bf16.msra.mxu0 %v6028
    %6454 = vmatprep.subr.bf16.mxu0 0
    %6455 = vmatpush1.bf16.msra.mxu0 %v6035
    %6456 = vmatprep.subr.bf16.mxu0 0
    %6457 = vmatpush1.bf16.msra.mxu0 %v6042
    %6458 = vmatprep.subr.bf16.mxu0 0
    %6459 = vmatpush1.bf16.msra.mxu0 %v6049
    %6460 = vmatprep.subr.bf16.mxu0 0
    %6461 = vmatpush1.bf16.msra.mxu0 %v6056
    %6462 = vmatprep.subr.bf16.mxu0 0
    %6463 = vmatpush1.bf16.msra.mxu0 %v6063
    %6464 = vmatprep.subr.bf16.mxu0 0
    %6465 = vmatpush1.bf16.msra.mxu0 %v6070
    %6466 = vmatprep.subr.bf16.mxu0 0
    %6467 = vmatpush1.bf16.msra.mxu0 %v6077
    %6468 = vmatprep.subr.bf16.mxu0 0
    %6469 = vmatpush1.bf16.msra.mxu0 %v6084
    %6470 = vmatprep.mubr.bf16.mxu0 %v6171
    %6471 = vmatmul.mubr.bf16.gmra.mrb[0].mxu0 %v6170
    %v6472 = vpop.f32.mrb[0].mxu0
    %v6473 = vadd.f32 %v6151, %v6472
    %v6474 = vpop.f32.mrb[0].mxu0
    %v6475 = vpop.f32.mrb[0].mxu0
    %v6476 = vadd.f32 %v6156, %v6475
    %v6477 = vpop.f32.mrb[0].mxu0
    %6478 = vdwg.mxu0
    %6479 = vmatprep.subr.bf16.mxu0 0
    %6480 = vmatpush1.bf16.msra.mxu0 %v6091
    %6481 = vmatprep.subr.bf16.mxu0 0
    %6482 = vmatpush1.bf16.msra.mxu0 %v6098
    %6483 = vmatprep.subr.bf16.mxu0 0
    %6484 = vmatpush1.bf16.msra.mxu0 %v6105
    %6485 = vmatprep.subr.bf16.mxu0 0
    %6486 = vmatpush1.bf16.msra.mxu0 %v6112
    %6487 = vmatprep.subr.bf16.mxu0 0
    %6488 = vmatpush1.bf16.msra.mxu0 %v6119
    %6489 = vmatprep.subr.bf16.mxu0 0
    %6490 = vmatpush1.bf16.msra.mxu0 %v6126
    %6491 = vmatprep.subr.bf16.mxu0 0
    %6492 = vmatpush1.bf16.msra.mxu0 %v6133
    %6493 = vmatprep.subr.bf16.mxu0 0
    %6494 = vmatpush1.bf16.msra.mxu0 %v6140
    %6495 = vmatprep.subr.bf16.mxu0 0
    %6496 = vmatpush1.bf16.msra.mxu0 %v6147
    %6497 = vmatprep.subr.bf16.mxu0 0
    %6498 = vmatpush1.bf16.msra.mxu0 0
    %6499 = vmatprep.subr.bf16.mxu0 0
    %6500 = vmatpush1.bf16.msra.mxu0 0
    %6501 = vmatprep.subr.bf16.mxu0 0
    %6502 = vmatpush1.bf16.msra.mxu0 0
    %6503 = vmatprep.subr.bf16.mxu0 0
    %6504 = vmatpush1.bf16.msra.mxu0 0
    %6505 = vmatprep.subr.bf16.mxu0 0
    %6506 = vmatpush1.bf16.msra.mxu0 0
    %6507 = vmatprep.subr.bf16.mxu0 0
    %6508 = vmatpush1.bf16.msra.mxu0 0
    %6509 = vmatprep.subr.bf16.mxu0 0
    %6510 = vmatpush1.bf16.msra.mxu0 0
    %6511 = vmatprep.mubr.bf16.mxu0 %v6178
    %6512 = vmatmul.mubr.bf16.gmra.mrb[0].mxu0 %v6172
    %v6513 = vpop.f32.mrb[0].mxu0
    %v6514 = vadd.f32 %v6473, %v6513
    %v6515 = vpop.f32.mrb[0].mxu0
    %v6516 = vpop.f32.mrb[0].mxu0
    %v6517 = vadd.f32 %v6476, %v6516
    %v6518 = vpop.f32.mrb[0].mxu0
    %6519 = vdwg.mxu0
    %vm6520 = vcmp.gt.f32.partialorder %v6258, 0.0
    %vm6521 = vcmp.gt.f32.partialorder %v6260, 0.0
    %vm6522 = vcmp.gt.f32.partialorder %v6344, 0.0
    %vm6523 = vcmp.gt.f32.partialorder %v6346, 0.0
    %vm6524 = vcmp.gt.f32.partialorder %v6430, 0.0
    %vm6525 = vcmp.gt.f32.partialorder %v6432, 0.0
    %vm6526 = vcmp.gt.f32.partialorder %v6514, 0.0
    %vm6527 = vcmp.gt.f32.partialorder %v6262, 0.0
    %vm6528 = vcmp.gt.f32.partialorder %v6264, 0.0
    %vm6529 = vcmp.gt.f32.partialorder %v6348, 0.0
    %vm6530 = vcmp.gt.f32.partialorder %v6350, 0.0
    %vm6531 = vcmp.gt.f32.partialorder %v6434, 0.0
    %vm6532 = vcmp.gt.f32.partialorder %v6436, 0.0
    %vm6533 = vcmp.gt.f32.partialorder %v6517, 0.0
    %v6534 = vmul.f32 %v6258, 0.3
    %v6535 = vmul.f32 %v6260, 0.3
    %v6536 = vmul.f32 %v6344, 0.3
    %v6537 = vmul.f32 %v6346, 0.3
    %v6538 = vmul.f32 %v6430, 0.3
    %v6539 = vmul.f32 %v6432, 0.3
    %v6540 = vmul.f32 %v6514, 0.3
    %v6541 = vmul.f32 %v6262, 0.3
    %v6542 = vmul.f32 %v6264, 0.3
    %v6543 = vmul.f32 %v6348, 0.3
    %v6544 = vmul.f32 %v6350, 0.3
    %v6545 = vmul.f32 %v6434, 0.3
    %v6546 = vmul.f32 %v6436, 0.3
    %v6547 = vmul.f32 %v6517, 0.3
    %v6548 = vsel %vm6520, %v6258, %v6534
    %v6549 = vsel %vm6521, %v6260, %v6535
    %v6550 = vsel %vm6522, %v6344, %v6536
    %v6551 = vsel %vm6523, %v6346, %v6537
    %v6552 = vsel %vm6524, %v6430, %v6538
    %v6553 = vsel %vm6525, %v6432, %v6539
    %v6554 = vsel %vm6526, %v6514, %v6540
    %v6555 = vsel %vm6527, %v6262, %v6541
    %v6556 = vsel %vm6528, %v6264, %v6542
    %v6557 = vsel %vm6529, %v6348, %v6543
    %v6558 = vsel %vm6530, %v6350, %v6544
    %v6559 = vsel %vm6531, %v6434, %v6545
    %v6560 = vsel %vm6532, %v6436, %v6546
    %v6561 = vsel %vm6533, %v6517, %v6547
    %6562 = vst [vmem:[#allocation2] sm:$0xff] %v6548
    %6563 = vst [vmem:[#allocation2 + $0x8] sm:$0xff] %v6549
    %6564 = vst [vmem:[#allocation2 + $0x10] sm:$0xff] %v6550
    %6565 = vst [vmem:[#allocation2 + $0x18] sm:$0xff] %v6551
    %6566 = vst [vmem:[#allocation2 + $0x20] sm:$0xff] %v6552
    %6567 = vst [vmem:[#allocation2 + $0x28] sm:$0xff] %v6553
    %6568 = vst.msk [vmem:[#allocation2 + $0x30] sm:$0xff] %vm76, %v6554
    %6569 = vst [vmem:[#allocation2 + $0x38] sm:$0xff] %v6555
    %6570 = vst [vmem:[#allocation2 + $0x40] sm:$0xff] %v6556
    %6571 = vst [vmem:[#allocation2 + $0x48] sm:$0xff] %v6557
    %6572 = vst [vmem:[#allocation2 + $0x50] sm:$0xff] %v6558
    %6573 = vst [vmem:[#allocation2 + $0x58] sm:$0xff] %v6559
    %6574 = vst [vmem:[#allocation2 + $0x60] sm:$0xff] %v6560
    %6575 = vst.msk [vmem:[#allocation2 + $0x68] sm:$0xff] %vm76, %v6561
    %v6576 = vld [vmem:[#allocation2] sm:$0xff]
    %v6577 = vld [vmem:[#allocation2 + $0x8] sm:$0xff]
    %v6578 = vld [vmem:[#allocation2 + $0x10] sm:$0xff]
    %v6579 = vld [vmem:[#allocation2 + $0x18] sm:$0xff]
    %v6580 = vld [vmem:[#allocation2 + $0x20] sm:$0xff]
    %v6581 = vld [vmem:[#allocation2 + $0x28] sm:$0xff]
    %v6582 = vld [vmem:[#allocation2 + $0x30] sm:$0xff]
    %v6583 = vld [vmem:[#allocation2 + $0x38] sm:$0xff]
    %v6584 = vld [vmem:[#allocation2 + $0x40] sm:$0xff]
    %v6585 = vld [vmem:[#allocation2 + $0x48] sm:$0xff]
    %v6586 = vld [vmem:[#allocation2 + $0x50] sm:$0xff]
    %v6587 = vld [vmem:[#allocation2 + $0x58] sm:$0xff]
    %v6588 = vld [vmem:[#allocation2 + $0x60] sm:$0xff]
    %v6589 = vld [vmem:[#allocation2 + $0x68] sm:$0xff]
    %v6590 = vpack.c.bf16 %v6583, %v6576
    %v6591 = vpack.c.bf16 %v6584, %v6577
    %v6592 = vpack.c.bf16 %v6585, %v6578
    %v6593 = vpack.c.bf16 %v6586, %v6579
    %v6594 = vpack.c.bf16 %v6587, %v6580
    %v6595 = vpack.c.bf16 %v6588, %v6581
    %v6596 = vpack.c.bf16 %v6589, %v6582
    %6597 = vst [vmem:[#allocation3] sm:$0xff] %v6590
    %6598 = vst [vmem:[#allocation3 + $0x8] sm:$0xff] %v6591
    %6599 = vst [vmem:[#allocation3 + $0x10] sm:$0xff] %v6592
    %6600 = vst [vmem:[#allocation3 + $0x18] sm:$0xff] %v6593
    %6601 = vst [vmem:[#allocation3 + $0x20] sm:$0xff] %v6594
    %6602 = vst [vmem:[#allocation3 + $0x28] sm:$0xff] %v6595
    %6603 = vst.msk [vmem:[#allocation3 + $0x30] sm:$0xff] %vm76, %v6596
    %v6604 = vld [vmem:[#allocation2] sm:$0xff]
    %v6605 = vld [vmem:[#allocation2 + $0x8] sm:$0xff]
    %v6606 = vld [vmem:[#allocation2 + $0x10] sm:$0xff]
    %v6607 = vld [vmem:[#allocation2 + $0x18] sm:$0xff]
    %v6608 = vld [vmem:[#allocation2 + $0x20] sm:$0xff]
    %v6609 = vld [vmem:[#allocation2 + $0x28] sm:$0xff]
    %v6610 = vld [vmem:[#allocation2 + $0x30] sm:$0xff]
    %v6611 = vld [vmem:[#allocation2 + $0x38] sm:$0xff]
    %v6612 = vld [vmem:[#allocation2 + $0x40] sm:$0xff]
    %v6613 = vld [vmem:[#allocation2 + $0x48] sm:$0xff]
    %v6614 = vld [vmem:[#allocation2 + $0x50] sm:$0xff]
    %v6615 = vld [vmem:[#allocation2 + $0x58] sm:$0xff]
    %v6616 = vld [vmem:[#allocation2 + $0x60] sm:$0xff]
    %v6617 = vld [vmem:[#allocation2 + $0x68] sm:$0xff]
    %v6618 = vpack.c.bf16 %v6611, %v6604
    %v6619 = vpack.c.bf16 %v6612, %v6605
    %v6620 = vpack.c.bf16 %v6613, %v6606
    %v6621 = vpack.c.bf16 %v6614, %v6607
    %v6622 = vpack.c.bf16 %v6615, %v6608
    %v6623 = vpack.c.bf16 %v6616, %v6609
    %v6624 = vpack.c.bf16 %v6617, %v6610
    %6632 = vrot.lane.b32.xlu0 %v6618, 127
    %v6633 = vpop.permute.xlu0 %6632
    %6634 = vrot.lane.b32.xlu0 %v6619, 127
    %v6635 = vpop.permute.xlu0 %6634
    %6636 = vrot.lane.b32.xlu0 %v6620, 127
    %v6637 = vpop.permute.xlu0 %6636
    %6638 = vrot.lane.b32.xlu0 %v6621, 127
    %v6639 = vpop.permute.xlu0 %6638
    %6640 = vrot.lane.b32.xlu0 %v6622, 127
    %v6641 = vpop.permute.xlu0 %6640
    %6642 = vrot.lane.b32.xlu0 %v6623, 127
    %v6643 = vpop.permute.xlu0 %6642
    %6644 = vrot.lane.b32.xlu0 %v6624, 127
    %v6645 = vpop.permute.xlu0 %6644
    %v6646 = vsel %vm246, %v6633, %v6635
    %v6647 = vsel %vm246, %v6635, %v6637
    %v6648 = vsel %vm246, %v6637, %v6639
    %v6649 = vsel %vm246, %v6639, %v6641
    %v6650 = vsel %vm246, %v6641, %v6643
    %v6651 = vsel %vm246, %v6643, %v6645
    %6659 = vst [vmem:[#allocation3 + $0x38] sm:$0xff] %v6646
    %6660 = vst [vmem:[#allocation3 + $0x40] sm:$0xff] %v6647
    %6661 = vst [vmem:[#allocation3 + $0x48] sm:$0xff] %v6648
    %6662 = vst [vmem:[#allocation3 + $0x50] sm:$0xff] %v6649
    %6663 = vst [vmem:[#allocation3 + $0x58] sm:$0xff] %v6650
    %6664 = vst [vmem:[#allocation3 + $0x60] sm:$0xff] %v6651
    %6665 = vst.msk [vmem:[#allocation3 + $0x68] sm:$0xff] %vm76, %v6645
    %v6666 = vld [vmem:[#allocation2] sm:$0xff]
    %v6667 = vld [vmem:[#allocation2 + $0x8] sm:$0xff]
    %v6668 = vld [vmem:[#allocation2 + $0x10] sm:$0xff]
    %v6669 = vld [vmem:[#allocation2 + $0x18] sm:$0xff]
    %v6670 = vld [vmem:[#allocation2 + $0x20] sm:$0xff]
    %v6671 = vld [vmem:[#allocation2 + $0x28] sm:$0xff]
    %v6672 = vld [vmem:[#allocation2 + $0x30] sm:$0xff]
    %v6673 = vld [vmem:[#allocation2 + $0x38] sm:$0xff]
    %v6674 = vld [vmem:[#allocation2 + $0x40] sm:$0xff]
    %v6675 = vld [vmem:[#allocation2 + $0x48] sm:$0xff]
    %v6676 = vld [vmem:[#allocation2 + $0x50] sm:$0xff]
    %v6677 = vld [vmem:[#allocation2 + $0x58] sm:$0xff]
    %v6678 = vld [vmem:[#allocation2 + $0x60] sm:$0xff]
    %v6679 = vld [vmem:[#allocation2 + $0x68] sm:$0xff]
    %v6680 = vpack.c.bf16 %v6673, %v6666
    %v6681 = vpack.c.bf16 %v6674, %v6667
    %v6682 = vpack.c.bf16 %v6675, %v6668
    %v6683 = vpack.c.bf16 %v6676, %v6669
    %v6684 = vpack.c.bf16 %v6677, %v6670
    %v6685 = vpack.c.bf16 %v6678, %v6671
    %v6686 = vpack.c.bf16 %v6679, %v6672
    %6694 = vrot.lane.b32.xlu0 %v6680, 126
    %v6695 = vpop.permute.xlu0 %6694
    %6696 = vrot.lane.b32.xlu0 %v6681, 126
    %v6697 = vpop.permute.xlu0 %6696
    %6698 = vrot.lane.b32.xlu0 %v6682, 126
    %v6699 = vpop.permute.xlu0 %6698
    %6700 = vrot.lane.b32.xlu0 %v6683, 126
    %v6701 = vpop.permute.xlu0 %6700
    %6702 = vrot.lane.b32.xlu0 %v6684, 126
    %v6703 = vpop.permute.xlu0 %6702
    %6704 = vrot.lane.b32.xlu0 %v6685, 126
    %v6705 = vpop.permute.xlu0 %6704
    %6706 = vrot.lane.b32.xlu0 %v6686, 126
    %v6707 = vpop.permute.xlu0 %6706
    %v6708 = vsel %vm309, %v6695, %v6697
    %v6709 = vsel %vm309, %v6697, %v6699
    %v6710 = vsel %vm309, %v6699, %v6701
    %v6711 = vsel %vm309, %v6701, %v6703
    %v6712 = vsel %vm309, %v6703, %v6705
    %v6713 = vsel %vm309, %v6705, %v6707
    %6721 = vst [vmem:[#allocation3 + $0x70] sm:$0xff] %v6708
    %6722 = vst [vmem:[#allocation3 + $0x78] sm:$0xff] %v6709
    %6723 = vst [vmem:[#allocation3 + $0x80] sm:$0xff] %v6710
    %6724 = vst [vmem:[#allocation3 + $0x88] sm:$0xff] %v6711
    %6725 = vst [vmem:[#allocation3 + $0x90] sm:$0xff] %v6712
    %6726 = vst [vmem:[#allocation3 + $0x98] sm:$0xff] %v6713
    %6727 = vst.msk [vmem:[#allocation3 + $0xa0] sm:$0xff] %vm76, %v6707
    %v6728 = vld [vmem:[#allocation2] sm:$0xff]
    %v6729 = vld [vmem:[#allocation2 + $0x8] sm:$0xff]
    %v6730 = vld [vmem:[#allocation2 + $0x10] sm:$0xff]
    %v6731 = vld [vmem:[#allocation2 + $0x18] sm:$0xff]
    %v6732 = vld [vmem:[#allocation2 + $0x20] sm:$0xff]
    %v6733 = vld [vmem:[#allocation2 + $0x28] sm:$0xff]
    %v6734 = vld [vmem:[#allocation2 + $0x30] sm:$0xff]
    %v6735 = vld [vmem:[#allocation2 + $0x38] sm:$0xff]
    %v6736 = vld [vmem:[#allocation2 + $0x40] sm:$0xff]
    %v6737 = vld [vmem:[#allocation2 + $0x48] sm:$0xff]
    %v6738 = vld [vmem:[#allocation2 + $0x50] sm:$0xff]
    %v6739 = vld [vmem:[#allocation2 + $0x58] sm:$0xff]
    %v6740 = vld [vmem:[#allocation2 + $0x60] sm:$0xff]
    %v6741 = vld [vmem:[#allocation2 + $0x68] sm:$0xff]
    %v6742 = vpack.c.bf16 %v6735, %v6728
    %v6743 = vpack.c.bf16 %v6736, %v6729
    %v6744 = vpack.c.bf16 %v6737, %v6730
    %v6745 = vpack.c.bf16 %v6738, %v6731
    %v6746 = vpack.c.bf16 %v6739, %v6732
    %v6747 = vpack.c.bf16 %v6740, %v6733
    %v6748 = vpack.c.bf16 %v6741, %v6734
    %6756 = vrot.lane.b32.xlu0 %v6742, 125
    %v6757 = vpop.permute.xlu0 %6756
    %6758 = vrot.lane.b32.xlu0 %v6743, 125
    %v6759 = vpop.permute.xlu0 %6758
    %6760 = vrot.lane.b32.xlu0 %v6744, 125
    %v6761 = vpop.permute.xlu0 %6760
    %6762 = vrot.lane.b32.xlu0 %v6745, 125
    %v6763 = vpop.permute.xlu0 %6762
    %6764 = vrot.lane.b32.xlu0 %v6746, 125
    %v6765 = vpop.permute.xlu0 %6764
    %6766 = vrot.lane.b32.xlu0 %v6747, 125
    %v6767 = vpop.permute.xlu0 %6766
    %6768 = vrot.lane.b32.xlu0 %v6748, 125
    %v6769 = vpop.permute.xlu0 %6768
    %v6770 = vsel %vm372, %v6757, %v6759
    %v6771 = vsel %vm372, %v6759, %v6761
    %v6772 = vsel %vm372, %v6761, %v6763
    %v6773 = vsel %vm372, %v6763, %v6765
    %v6774 = vsel %vm372, %v6765, %v6767
    %v6775 = vsel %vm372, %v6767, %v6769
    %6783 = vst [vmem:[#allocation3 + $0xa8] sm:$0xff] %v6770
    %6784 = vst [vmem:[#allocation3 + $0xb0] sm:$0xff] %v6771
    %6785 = vst [vmem:[#allocation3 + $0xb8] sm:$0xff] %v6772
    %6786 = vst [vmem:[#allocation3 + $0xc0] sm:$0xff] %v6773
    %6787 = vst [vmem:[#allocation3 + $0xc8] sm:$0xff] %v6774
    %6788 = vst [vmem:[#allocation3 + $0xd0] sm:$0xff] %v6775
    %6789 = vst.msk [vmem:[#allocation3 + $0xd8] sm:$0xff] %vm76, %v6769
    %v6790 = vld [vmem:[#allocation2] sm:$0xff]
    %v6791 = vld [vmem:[#allocation2 + $0x8] sm:$0xff]
    %v6792 = vld [vmem:[#allocation2 + $0x10] sm:$0xff]
    %v6793 = vld [vmem:[#allocation2 + $0x18] sm:$0xff]
    %v6794 = vld [vmem:[#allocation2 + $0x20] sm:$0xff]
    %v6795 = vld [vmem:[#allocation2 + $0x28] sm:$0xff]
    %v6796 = vld [vmem:[#allocation2 + $0x30] sm:$0xff]
    %v6797 = vld [vmem:[#allocation2 + $0x38] sm:$0xff]
    %v6798 = vld [vmem:[#allocation2 + $0x40] sm:$0xff]
    %v6799 = vld [vmem:[#allocation2 + $0x48] sm:$0xff]
    %v6800 = vld [vmem:[#allocation2 + $0x50] sm:$0xff]
    %v6801 = vld [vmem:[#allocation2 + $0x58] sm:$0xff]
    %v6802 = vld [vmem:[#allocation2 + $0x60] sm:$0xff]
    %v6803 = vld [vmem:[#allocation2 + $0x68] sm:$0xff]
    %v6804 = vpack.c.bf16 %v6797, %v6790
    %v6805 = vpack.c.bf16 %v6798, %v6791
    %v6806 = vpack.c.bf16 %v6799, %v6792
    %v6807 = vpack.c.bf16 %v6800, %v6793
    %v6808 = vpack.c.bf16 %v6801, %v6794
    %v6809 = vpack.c.bf16 %v6802, %v6795
    %v6810 = vpack.c.bf16 %v6803, %v6796
    %6818 = vrot.lane.b32.xlu0 %v6804, 124
    %v6819 = vpop.permute.xlu0 %6818
    %6820 = vrot.lane.b32.xlu0 %v6805, 124
    %v6821 = vpop.permute.xlu0 %6820
    %6822 = vrot.lane.b32.xlu0 %v6806, 124
    %v6823 = vpop.permute.xlu0 %6822
    %6824 = vrot.lane.b32.xlu0 %v6807, 124
    %v6825 = vpop.permute.xlu0 %6824
    %6826 = vrot.lane.b32.xlu0 %v6808, 124
    %v6827 = vpop.permute.xlu0 %6826
    %6828 = vrot.lane.b32.xlu0 %v6809, 124
    %v6829 = vpop.permute.xlu0 %6828
    %6830 = vrot.lane.b32.xlu0 %v6810, 124
    %v6831 = vpop.permute.xlu0 %6830
    %v6832 = vsel %vm435, %v6819, %v6821
    %v6833 = vsel %vm435, %v6821, %v6823
    %v6834 = vsel %vm435, %v6823, %v6825
    %v6835 = vsel %vm435, %v6825, %v6827
    %v6836 = vsel %vm435, %v6827, %v6829
    %v6837 = vsel %vm435, %v6829, %v6831
    %6845 = vst [vmem:[#allocation3 + $0xe0] sm:$0xff] %v6832
    %6846 = vst [vmem:[#allocation3 + $0xe8] sm:$0xff] %v6833
    %6847 = vst [vmem:[#allocation3 + $0xf0] sm:$0xff] %v6834
    %6848 = vst [vmem:[#allocation3 + $0xf8] sm:$0xff] %v6835
    %6849 = vst [vmem:[#allocation3 + $0x100] sm:$0xff] %v6836
    %6850 = vst [vmem:[#allocation3 + $0x108] sm:$0xff] %v6837
    %6851 = vst.msk [vmem:[#allocation3 + $0x110] sm:$0xff] %vm76, %v6831
    %v6852 = vld [vmem:[#allocation2] sm:$0xff]
    %v6853 = vld [vmem:[#allocation2 + $0x8] sm:$0xff]
    %v6854 = vld [vmem:[#allocation2 + $0x10] sm:$0xff]
    %v6855 = vld [vmem:[#allocation2 + $0x18] sm:$0xff]
    %v6856 = vld [vmem:[#allocation2 + $0x20] sm:$0xff]
    %v6857 = vld [vmem:[#allocation2 + $0x28] sm:$0xff]
    %v6858 = vld [vmem:[#allocation2 + $0x30] sm:$0xff]
    %v6859 = vld [vmem:[#allocation2 + $0x38] sm:$0xff]
    %v6860 = vld [vmem:[#allocation2 + $0x40] sm:$0xff]
    %v6861 = vld [vmem:[#allocation2 + $0x48] sm:$0xff]
    %v6862 = vld [vmem:[#allocation2 + $0x50] sm:$0xff]
    %v6863 = vld [vmem:[#allocation2 + $0x58] sm:$0xff]
    %v6864 = vld [vmem:[#allocation2 + $0x60] sm:$0xff]
    %v6865 = vld [vmem:[#allocation2 + $0x68] sm:$0xff]
    %v6866 = vpack.c.bf16 %v6859, %v6852
    %v6867 = vpack.c.bf16 %v6860, %v6853
    %v6868 = vpack.c.bf16 %v6861, %v6854
    %v6869 = vpack.c.bf16 %v6862, %v6855
    %v6870 = vpack.c.bf16 %v6863, %v6856
    %v6871 = vpack.c.bf16 %v6864, %v6857
    %v6872 = vpack.c.bf16 %v6865, %v6858
    %6880 = vrot.lane.b32.xlu0 %v6866, 108
    %v6881 = vpop.permute.xlu0 %6880
    %6882 = vrot.lane.b32.xlu0 %v6867, 108
    %v6883 = vpop.permute.xlu0 %6882
    %6884 = vrot.lane.b32.xlu0 %v6868, 108
    %v6885 = vpop.permute.xlu0 %6884
    %6886 = vrot.lane.b32.xlu0 %v6869, 108
    %v6887 = vpop.permute.xlu0 %6886
    %6888 = vrot.lane.b32.xlu0 %v6870, 108
    %v6889 = vpop.permute.xlu0 %6888
    %6890 = vrot.lane.b32.xlu0 %v6871, 108
    %v6891 = vpop.permute.xlu0 %6890
    %6892 = vrot.lane.b32.xlu0 %v6872, 108
    %v6893 = vpop.permute.xlu0 %6892
    %v6894 = vsel %vm498, %v6881, %v6883
    %v6895 = vsel %vm498, %v6883, %v6885
    %v6896 = vsel %vm498, %v6885, %v6887
    %v6897 = vsel %vm498, %v6887, %v6889
    %v6898 = vsel %vm498, %v6889, %v6891
    %v6899 = vsel %vm498, %v6891, %v6893
    %6907 = vst [vmem:[#allocation3 + $0x118] sm:$0xff] %v6894
    %6908 = vst [vmem:[#allocation3 + $0x120] sm:$0xff] %v6895
    %6909 = vst [vmem:[#allocation3 + $0x128] sm:$0xff] %v6896
    %6910 = vst [vmem:[#allocation3 + $0x130] sm:$0xff] %v6897
    %6911 = vst [vmem:[#allocation3 + $0x138] sm:$0xff] %v6898
    %6912 = vst [vmem:[#allocation3 + $0x140] sm:$0xff] %v6899
    %6913 = vst.msk [vmem:[#allocation3 + $0x148] sm:$0xff] %vm76, %v6893
    %v6914 = vld [vmem:[#allocation2] sm:$0xff]
    %v6915 = vld [vmem:[#allocation2 + $0x8] sm:$0xff]
    %v6916 = vld [vmem:[#allocation2 + $0x10] sm:$0xff]
    %v6917 = vld [vmem:[#allocation2 + $0x18] sm:$0xff]
    %v6918 = vld [vmem:[#allocation2 + $0x20] sm:$0xff]
    %v6919 = vld [vmem:[#allocation2 + $0x28] sm:$0xff]
    %v6920 = vld [vmem:[#allocation2 + $0x30] sm:$0xff]
    %v6921 = vld [vmem:[#allocation2 + $0x38] sm:$0xff]
    %v6922 = vld [vmem:[#allocation2 + $0x40] sm:$0xff]
    %v6923 = vld [vmem:[#allocation2 + $0x48] sm:$0xff]
    %v6924 = vld [vmem:[#allocation2 + $0x50] sm:$0xff]
    %v6925 = vld [vmem:[#allocation2 + $0x58] sm:$0xff]
    %v6926 = vld [vmem:[#allocation2 + $0x60] sm:$0xff]
    %v6927 = vld [vmem:[#allocation2 + $0x68] sm:$0xff]
    %v6928 = vpack.c.bf16 %v6921, %v6914
    %v6929 = vpack.c.bf16 %v6922, %v6915
    %v6930 = vpack.c.bf16 %v6923, %v6916
    %v6931 = vpack.c.bf16 %v6924, %v6917
    %v6932 = vpack.c.bf16 %v6925, %v6918
    %v6933 = vpack.c.bf16 %v6926, %v6919
    %v6934 = vpack.c.bf16 %v6927, %v6920
    %6942 = vrot.lane.b32.xlu0 %v6928, 107
    %v6943 = vpop.permute.xlu0 %6942
    %6944 = vrot.lane.b32.xlu0 %v6929, 107
    %v6945 = vpop.permute.xlu0 %6944
    %6946 = vrot.lane.b32.xlu0 %v6930, 107
    %v6947 = vpop.permute.xlu0 %6946
    %6948 = vrot.lane.b32.xlu0 %v6931, 107
    %v6949 = vpop.permute.xlu0 %6948
    %6950 = vrot.lane.b32.xlu0 %v6932, 107
    %v6951 = vpop.permute.xlu0 %6950
    %6952 = vrot.lane.b32.xlu0 %v6933, 107
    %v6953 = vpop.permute.xlu0 %6952
    %6954 = vrot.lane.b32.xlu0 %v6934, 107
    %v6955 = vpop.permute.xlu0 %6954
    %v6956 = vsel %vm561, %v6943, %v6945
    %v6957 = vsel %vm561, %v6945, %v6947
    %v6958 = vsel %vm561, %v6947, %v6949
    %v6959 = vsel %vm561, %v6949, %v6951
    %v6960 = vsel %vm561, %v6951, %v6953
    %v6961 = vsel %vm561, %v6953, %v6955
    %6969 = vst [vmem:[#allocation3 + $0x150] sm:$0xff] %v6956
    %6970 = vst [vmem:[#allocation3 + $0x158] sm:$0xff] %v6957
    %6971 = vst [vmem:[#allocation3 + $0x160] sm:$0xff] %v6958
    %6972 = vst [vmem:[#allocation3 + $0x168] sm:$0xff] %v6959
    %6973 = vst [vmem:[#allocation3 + $0x170] sm:$0xff] %v6960
    %6974 = vst [vmem:[#allocation3 + $0x178] sm:$0xff] %v6961
    %6975 = vst.msk [vmem:[#allocation3 + $0x180] sm:$0xff] %vm76, %v6955
    %v6976 = vld [vmem:[#allocation2] sm:$0xff]
    %v6977 = vld [vmem:[#allocation2 + $0x8] sm:$0xff]
    %v6978 = vld [vmem:[#allocation2 + $0x10] sm:$0xff]
    %v6979 = vld [vmem:[#allocation2 + $0x18] sm:$0xff]
    %v6980 = vld [vmem:[#allocation2 + $0x20] sm:$0xff]
    %v6981 = vld [vmem:[#allocation2 + $0x28] sm:$0xff]
    %v6982 = vld [vmem:[#allocation2 + $0x30] sm:$0xff]
    %v6983 = vld [vmem:[#allocation2 + $0x38] sm:$0xff]
    %v6984 = vld [vmem:[#allocation2 + $0x40] sm:$0xff]
    %v6985 = vld [vmem:[#allocation2 + $0x48] sm:$0xff]
    %v6986 = vld [vmem:[#allocation2 + $0x50] sm:$0xff]
    %v6987 = vld [vmem:[#allocation2 + $0x58] sm:$0xff]
    %v6988 = vld [vmem:[#allocation2 + $0x60] sm:$0xff]
    %v6989 = vld [vmem:[#allocation2 + $0x68] sm:$0xff]
    %v6990 = vpack.c.bf16 %v6983, %v6976
    %v6991 = vpack.c.bf16 %v6984, %v6977
    %v6992 = vpack.c.bf16 %v6985, %v6978
    %v6993 = vpack.c.bf16 %v6986, %v6979
    %v6994 = vpack.c.bf16 %v6987, %v6980
    %v6995 = vpack.c.bf16 %v6988, %v6981
    %v6996 = vpack.c.bf16 %v6989, %v6982
    %7004 = vrot.lane.b32.xlu0 %v6990, 106
    %v7005 = vpop.permute.xlu0 %7004
    %7006 = vrot.lane.b32.xlu0 %v6991, 106
    %v7007 = vpop.permute.xlu0 %7006
    %7008 = vrot.lane.b32.xlu0 %v6992, 106
    %v7009 = vpop.permute.xlu0 %7008
    %7010 = vrot.lane.b32.xlu0 %v6993, 106
    %v7011 = vpop.permute.xlu0 %7010
    %7012 = vrot.lane.b32.xlu0 %v6994, 106
    %v7013 = vpop.permute.xlu0 %7012
    %7014 = vrot.lane.b32.xlu0 %v6995, 106
    %v7015 = vpop.permute.xlu0 %7014
    %7016 = vrot.lane.b32.xlu0 %v6996, 106
    %v7017 = vpop.permute.xlu0 %7016
    %v7018 = vsel %vm624, %v7005, %v7007
    %v7019 = vsel %vm624, %v7007, %v7009
    %v7020 = vsel %vm624, %v7009, %v7011
    %v7021 = vsel %vm624, %v7011, %v7013
    %v7022 = vsel %vm624, %v7013, %v7015
    %v7023 = vsel %vm624, %v7015, %v7017
    %7031 = vst [vmem:[#allocation3 + $0x188] sm:$0xff] %v7018
    %7032 = vst [vmem:[#allocation3 + $0x190] sm:$0xff] %v7019
    %7033 = vst [vmem:[#allocation3 + $0x198] sm:$0xff] %v7020
    %7034 = vst [vmem:[#allocation3 + $0x1a0] sm:$0xff] %v7021
    %7035 = vst [vmem:[#allocation3 + $0x1a8] sm:$0xff] %v7022
    %7036 = vst [vmem:[#allocation3 + $0x1b0] sm:$0xff] %v7023
    %7037 = vst.msk [vmem:[#allocation3 + $0x1b8] sm:$0xff] %vm76, %v7017
    %v7038 = vld [vmem:[#allocation2] sm:$0xff]
    %v7039 = vld [vmem:[#allocation2 + $0x8] sm:$0xff]
    %v7040 = vld [vmem:[#allocation2 + $0x10] sm:$0xff]
    %v7041 = vld [vmem:[#allocation2 + $0x18] sm:$0xff]
    %v7042 = vld [vmem:[#allocation2 + $0x20] sm:$0xff]
    %v7043 = vld [vmem:[#allocation2 + $0x28] sm:$0xff]
    %v7044 = vld [vmem:[#allocation2 + $0x30] sm:$0xff]
    %v7045 = vld [vmem:[#allocation2 + $0x38] sm:$0xff]
    %v7046 = vld [vmem:[#allocation2 + $0x40] sm:$0xff]
    %v7047 = vld [vmem:[#allocation2 + $0x48] sm:$0xff]
    %v7048 = vld [vmem:[#allocation2 + $0x50] sm:$0xff]
    %v7049 = vld [vmem:[#allocation2 + $0x58] sm:$0xff]
    %v7050 = vld [vmem:[#allocation2 + $0x60] sm:$0xff]
    %v7051 = vld [vmem:[#allocation2 + $0x68] sm:$0xff]
    %v7052 = vpack.c.bf16 %v7045, %v7038
    %v7053 = vpack.c.bf16 %v7046, %v7039
    %v7054 = vpack.c.bf16 %v7047, %v7040
    %v7055 = vpack.c.bf16 %v7048, %v7041
    %v7056 = vpack.c.bf16 %v7049, %v7042
    %v7057 = vpack.c.bf16 %v7050, %v7043
    %v7058 = vpack.c.bf16 %v7051, %v7044
    %7066 = vrot.lane.b32.xlu0 %v7052, 105
    %v7067 = vpop.permute.xlu0 %7066
    %7068 = vrot.lane.b32.xlu0 %v7053, 105
    %v7069 = vpop.permute.xlu0 %7068
    %7070 = vrot.lane.b32.xlu0 %v7054, 105
    %v7071 = vpop.permute.xlu0 %7070
    %7072 = vrot.lane.b32.xlu0 %v7055, 105
    %v7073 = vpop.permute.xlu0 %7072
    %7074 = vrot.lane.b32.xlu0 %v7056, 105
    %v7075 = vpop.permute.xlu0 %7074
    %7076 = vrot.lane.b32.xlu0 %v7057, 105
    %v7077 = vpop.permute.xlu0 %7076
    %7078 = vrot.lane.b32.xlu0 %v7058, 105
    %v7079 = vpop.permute.xlu0 %7078
    %v7080 = vsel %vm687, %v7067, %v7069
    %v7081 = vsel %vm687, %v7069, %v7071
    %v7082 = vsel %vm687, %v7071, %v7073
    %v7083 = vsel %vm687, %v7073, %v7075
    %v7084 = vsel %vm687, %v7075, %v7077
    %v7085 = vsel %vm687, %v7077, %v7079
    %7093 = vst [vmem:[#allocation3 + $0x1c0] sm:$0xff] %v7080
    %7094 = vst [vmem:[#allocation3 + $0x1c8] sm:$0xff] %v7081
    %7095 = vst [vmem:[#allocation3 + $0x1d0] sm:$0xff] %v7082
    %7096 = vst [vmem:[#allocation3 + $0x1d8] sm:$0xff] %v7083
    %7097 = vst [vmem:[#allocation3 + $0x1e0] sm:$0xff] %v7084
    %7098 = vst [vmem:[#allocation3 + $0x1e8] sm:$0xff] %v7085
    %7099 = vst.msk [vmem:[#allocation3 + $0x1f0] sm:$0xff] %vm76, %v7079
    %v7100 = vld [vmem:[#allocation2] sm:$0xff]
    %v7101 = vld [vmem:[#allocation2 + $0x8] sm:$0xff]
    %v7102 = vld [vmem:[#allocation2 + $0x10] sm:$0xff]
    %v7103 = vld [vmem:[#allocation2 + $0x18] sm:$0xff]
    %v7104 = vld [vmem:[#allocation2 + $0x20] sm:$0xff]
    %v7105 = vld [vmem:[#allocation2 + $0x28] sm:$0xff]
    %v7106 = vld [vmem:[#allocation2 + $0x30] sm:$0xff]
    %v7107 = vld [vmem:[#allocation2 + $0x38] sm:$0xff]
    %v7108 = vld [vmem:[#allocation2 + $0x40] sm:$0xff]
    %v7109 = vld [vmem:[#allocation2 + $0x48] sm:$0xff]
    %v7110 = vld [vmem:[#allocation2 + $0x50] sm:$0xff]
    %v7111 = vld [vmem:[#allocation2 + $0x58] sm:$0xff]
    %v7112 = vld [vmem:[#allocation2 + $0x60] sm:$0xff]
    %v7113 = vld [vmem:[#allocation2 + $0x68] sm:$0xff]
    %v7114 = vpack.c.bf16 %v7107, %v7100
    %v7115 = vpack.c.bf16 %v7108, %v7101
    %v7116 = vpack.c.bf16 %v7109, %v7102
    %v7117 = vpack.c.bf16 %v7110, %v7103
    %v7118 = vpack.c.bf16 %v7111, %v7104
    %v7119 = vpack.c.bf16 %v7112, %v7105
    %v7120 = vpack.c.bf16 %v7113, %v7106
    %7128 = vrot.lane.b32.xlu0 %v7114, 104
    %v7129 = vpop.permute.xlu0 %7128
    %7130 = vrot.lane.b32.xlu0 %v7115, 104
    %v7131 = vpop.permute.xlu0 %7130
    %7132 = vrot.lane.b32.xlu0 %v7116, 104
    %v7133 = vpop.permute.xlu0 %7132
    %7134 = vrot.lane.b32.xlu0 %v7117, 104
    %v7135 = vpop.permute.xlu0 %7134
    %7136 = vrot.lane.b32.xlu0 %v7118, 104
    %v7137 = vpop.permute.xlu0 %7136
    %7138 = vrot.lane.b32.xlu0 %v7119, 104
    %v7139 = vpop.permute.xlu0 %7138
    %7140 = vrot.lane.b32.xlu0 %v7120, 104
    %v7141 = vpop.permute.xlu0 %7140
    %v7142 = vsel %vm750, %v7129, %v7131
    %v7143 = vsel %vm750, %v7131, %v7133
    %v7144 = vsel %vm750, %v7133, %v7135
    %v7145 = vsel %vm750, %v7135, %v7137
    %v7146 = vsel %vm750, %v7137, %v7139
    %v7147 = vsel %vm750, %v7139, %v7141
    %7155 = vst [vmem:[#allocation3 + $0x1f8] sm:$0xff] %v7142
    %7156 = vst [vmem:[#allocation3 + $0x200] sm:$0xff] %v7143
    %7157 = vst [vmem:[#allocation3 + $0x208] sm:$0xff] %v7144
    %7158 = vst [vmem:[#allocation3 + $0x210] sm:$0xff] %v7145
    %7159 = vst [vmem:[#allocation3 + $0x218] sm:$0xff] %v7146
    %7160 = vst [vmem:[#allocation3 + $0x220] sm:$0xff] %v7147
    %7161 = vst.msk [vmem:[#allocation3 + $0x228] sm:$0xff] %vm76, %v7141
    %v7162 = vld [vmem:[#allocation2] sm:$0xff]
    %v7163 = vld [vmem:[#allocation2 + $0x8] sm:$0xff]
    %v7164 = vld [vmem:[#allocation2 + $0x10] sm:$0xff]
    %v7165 = vld [vmem:[#allocation2 + $0x18] sm:$0xff]
    %v7166 = vld [vmem:[#allocation2 + $0x20] sm:$0xff]
    %v7167 = vld [vmem:[#allocation2 + $0x28] sm:$0xff]
    %v7168 = vld [vmem:[#allocation2 + $0x30] sm:$0xff]
    %v7169 = vld [vmem:[#allocation2 + $0x38] sm:$0xff]
    %v7170 = vld [vmem:[#allocation2 + $0x40] sm:$0xff]
    %v7171 = vld [vmem:[#allocation2 + $0x48] sm:$0xff]
    %v7172 = vld [vmem:[#allocation2 + $0x50] sm:$0xff]
    %v7173 = vld [vmem:[#allocation2 + $0x58] sm:$0xff]
    %v7174 = vld [vmem:[#allocation2 + $0x60] sm:$0xff]
    %v7175 = vld [vmem:[#allocation2 + $0x68] sm:$0xff]
    %v7176 = vpack.c.bf16 %v7169, %v7162
    %v7177 = vpack.c.bf16 %v7170, %v7163
    %v7178 = vpack.c.bf16 %v7171, %v7164
    %v7179 = vpack.c.bf16 %v7172, %v7165
    %v7180 = vpack.c.bf16 %v7173, %v7166
    %v7181 = vpack.c.bf16 %v7174, %v7167
    %v7182 = vpack.c.bf16 %v7175, %v7168
    %7190 = vrot.lane.b32.xlu0 %v7176, 88
    %v7191 = vpop.permute.xlu0 %7190
    %7192 = vrot.lane.b32.xlu0 %v7177, 88
    %v7193 = vpop.permute.xlu0 %7192
    %7194 = vrot.lane.b32.xlu0 %v7178, 88
    %v7195 = vpop.permute.xlu0 %7194
    %7196 = vrot.lane.b32.xlu0 %v7179, 88
    %v7197 = vpop.permute.xlu0 %7196
    %7198 = vrot.lane.b32.xlu0 %v7180, 88
    %v7199 = vpop.permute.xlu0 %7198
    %7200 = vrot.lane.b32.xlu0 %v7181, 88
    %v7201 = vpop.permute.xlu0 %7200
    %7202 = vrot.lane.b32.xlu0 %v7182, 88
    %v7203 = vpop.permute.xlu0 %7202
    %v7204 = vsel %vm813, %v7191, %v7193
    %v7205 = vsel %vm813, %v7193, %v7195
    %v7206 = vsel %vm813, %v7195, %v7197
    %v7207 = vsel %vm813, %v7197, %v7199
    %v7208 = vsel %vm813, %v7199, %v7201
    %v7209 = vsel %vm813, %v7201, %v7203
    %7217 = vst [vmem:[#allocation3 + $0x230] sm:$0xff] %v7204
    %7218 = vst [vmem:[#allocation3 + $0x238] sm:$0xff] %v7205
    %7219 = vst [vmem:[#allocation3 + $0x240] sm:$0xff] %v7206
    %7220 = vst [vmem:[#allocation3 + $0x248] sm:$0xff] %v7207
    %7221 = vst [vmem:[#allocation3 + $0x250] sm:$0xff] %v7208
    %7222 = vst [vmem:[#allocation3 + $0x258] sm:$0xff] %v7209
    %7223 = vst.msk [vmem:[#allocation3 + $0x260] sm:$0xff] %vm76, %v7203
    %v7224 = vld [vmem:[#allocation2] sm:$0xff]
    %v7225 = vld [vmem:[#allocation2 + $0x8] sm:$0xff]
    %v7226 = vld [vmem:[#allocation2 + $0x10] sm:$0xff]
    %v7227 = vld [vmem:[#allocation2 + $0x18] sm:$0xff]
    %v7228 = vld [vmem:[#allocation2 + $0x20] sm:$0xff]
    %v7229 = vld [vmem:[#allocation2 + $0x28] sm:$0xff]
    %v7230 = vld [vmem:[#allocation2 + $0x30] sm:$0xff]
    %v7231 = vld [vmem:[#allocation2 + $0x38] sm:$0xff]
    %v7232 = vld [vmem:[#allocation2 + $0x40] sm:$0xff]
    %v7233 = vld [vmem:[#allocation2 + $0x48] sm:$0xff]
    %v7234 = vld [vmem:[#allocation2 + $0x50] sm:$0xff]
    %v7235 = vld [vmem:[#allocation2 + $0x58] sm:$0xff]
    %v7236 = vld [vmem:[#allocation2 + $0x60] sm:$0xff]
    %v7237 = vld [vmem:[#allocation2 + $0x68] sm:$0xff]
    %v7238 = vpack.c.bf16 %v7231, %v7224
    %v7239 = vpack.c.bf16 %v7232, %v7225
    %v7240 = vpack.c.bf16 %v7233, %v7226
    %v7241 = vpack.c.bf16 %v7234, %v7227
    %v7242 = vpack.c.bf16 %v7235, %v7228
    %v7243 = vpack.c.bf16 %v7236, %v7229
    %v7244 = vpack.c.bf16 %v7237, %v7230
    %7252 = vrot.lane.b32.xlu0 %v7238, 87
    %v7253 = vpop.permute.xlu0 %7252
    %7254 = vrot.lane.b32.xlu0 %v7239, 87
    %v7255 = vpop.permute.xlu0 %7254
    %7256 = vrot.lane.b32.xlu0 %v7240, 87
    %v7257 = vpop.permute.xlu0 %7256
    %7258 = vrot.lane.b32.xlu0 %v7241, 87
    %v7259 = vpop.permute.xlu0 %7258
    %7260 = vrot.lane.b32.xlu0 %v7242, 87
    %v7261 = vpop.permute.xlu0 %7260
    %7262 = vrot.lane.b32.xlu0 %v7243, 87
    %v7263 = vpop.permute.xlu0 %7262
    %7264 = vrot.lane.b32.xlu0 %v7244, 87
    %v7265 = vpop.permute.xlu0 %7264
    %v7266 = vsel %vm876, %v7253, %v7255
    %v7267 = vsel %vm876, %v7255, %v7257
    %v7268 = vsel %vm876, %v7257, %v7259
    %v7269 = vsel %vm876, %v7259, %v7261
    %v7270 = vsel %vm876, %v7261, %v7263
    %v7271 = vsel %vm876, %v7263, %v7265
    %7279 = vst [vmem:[#allocation3 + $0x268] sm:$0xff] %v7266
    %7280 = vst [vmem:[#allocation3 + $0x270] sm:$0xff] %v7267
    %7281 = vst [vmem:[#allocation3 + $0x278] sm:$0xff] %v7268
    %7282 = vst [vmem:[#allocation3 + $0x280] sm:$0xff] %v7269
    %7283 = vst [vmem:[#allocation3 + $0x288] sm:$0xff] %v7270
    %7284 = vst [vmem:[#allocation3 + $0x290] sm:$0xff] %v7271
    %7285 = vst.msk [vmem:[#allocation3 + $0x298] sm:$0xff] %vm76, %v7265
    %v7286 = vld [vmem:[#allocation2] sm:$0xff]
    %v7287 = vld [vmem:[#allocation2 + $0x8] sm:$0xff]
    %v7288 = vld [vmem:[#allocation2 + $0x10] sm:$0xff]
    %v7289 = vld [vmem:[#allocation2 + $0x18] sm:$0xff]
    %v7290 = vld [vmem:[#allocation2 + $0x20] sm:$0xff]
    %v7291 = vld [vmem:[#allocation2 + $0x28] sm:$0xff]
    %v7292 = vld [vmem:[#allocation2 + $0x30] sm:$0xff]
    %v7293 = vld [vmem:[#allocation2 + $0x38] sm:$0xff]
    %v7294 = vld [vmem:[#allocation2 + $0x40] sm:$0xff]
    %v7295 = vld [vmem:[#allocation2 + $0x48] sm:$0xff]
    %v7296 = vld [vmem:[#allocation2 + $0x50] sm:$0xff]
    %v7297 = vld [vmem:[#allocation2 + $0x58] sm:$0xff]
    %v7298 = vld [vmem:[#allocation2 + $0x60] sm:$0xff]
    %v7299 = vld [vmem:[#allocation2 + $0x68] sm:$0xff]
    %v7300 = vpack.c.bf16 %v7293, %v7286
    %v7301 = vpack.c.bf16 %v7294, %v7287
    %v7302 = vpack.c.bf16 %v7295, %v7288
    %v7303 = vpack.c.bf16 %v7296, %v7289
    %v7304 = vpack.c.bf16 %v7297, %v7290
    %v7305 = vpack.c.bf16 %v7298, %v7291
    %v7306 = vpack.c.bf16 %v7299, %v7292
    %7314 = vrot.lane.b32.xlu0 %v7300, 86
    %v7315 = vpop.permute.xlu0 %7314
    %7316 = vrot.lane.b32.xlu0 %v7301, 86
    %v7317 = vpop.permute.xlu0 %7316
    %7318 = vrot.lane.b32.xlu0 %v7302, 86
    %v7319 = vpop.permute.xlu0 %7318
    %7320 = vrot.lane.b32.xlu0 %v7303, 86
    %v7321 = vpop.permute.xlu0 %7320
    %7322 = vrot.lane.b32.xlu0 %v7304, 86
    %v7323 = vpop.permute.xlu0 %7322
    %7324 = vrot.lane.b32.xlu0 %v7305, 86
    %v7325 = vpop.permute.xlu0 %7324
    %7326 = vrot.lane.b32.xlu0 %v7306, 86
    %v7327 = vpop.permute.xlu0 %7326
    %v7328 = vsel %vm939, %v7315, %v7317
    %v7329 = vsel %vm939, %v7317, %v7319
    %v7330 = vsel %vm939, %v7319, %v7321
    %v7331 = vsel %vm939, %v7321, %v7323
    %v7332 = vsel %vm939, %v7323, %v7325
    %v7333 = vsel %vm939, %v7325, %v7327
    %7341 = vst [vmem:[#allocation3 + $0x2a0] sm:$0xff] %v7328
    %7342 = vst [vmem:[#allocation3 + $0x2a8] sm:$0xff] %v7329
    %7343 = vst [vmem:[#allocation3 + $0x2b0] sm:$0xff] %v7330
    %7344 = vst [vmem:[#allocation3 + $0x2b8] sm:$0xff] %v7331
    %7345 = vst [vmem:[#allocation3 + $0x2c0] sm:$0xff] %v7332
    %7346 = vst [vmem:[#allocation3 + $0x2c8] sm:$0xff] %v7333
    %7347 = vst.msk [vmem:[#allocation3 + $0x2d0] sm:$0xff] %vm76, %v7327
    %v7348 = vld [vmem:[#allocation2] sm:$0xff]
    %v7349 = vld [vmem:[#allocation2 + $0x8] sm:$0xff]
    %v7350 = vld [vmem:[#allocation2 + $0x10] sm:$0xff]
    %v7351 = vld [vmem:[#allocation2 + $0x18] sm:$0xff]
    %v7352 = vld [vmem:[#allocation2 + $0x20] sm:$0xff]
    %v7353 = vld [vmem:[#allocation2 + $0x28] sm:$0xff]
    %v7354 = vld [vmem:[#allocation2 + $0x30] sm:$0xff]
    %v7355 = vld [vmem:[#allocation2 + $0x38] sm:$0xff]
    %v7356 = vld [vmem:[#allocation2 + $0x40] sm:$0xff]
    %v7357 = vld [vmem:[#allocation2 + $0x48] sm:$0xff]
    %v7358 = vld [vmem:[#allocation2 + $0x50] sm:$0xff]
    %v7359 = vld [vmem:[#allocation2 + $0x58] sm:$0xff]
    %v7360 = vld [vmem:[#allocation2 + $0x60] sm:$0xff]
    %v7361 = vld [vmem:[#allocation2 + $0x68] sm:$0xff]
    %v7362 = vpack.c.bf16 %v7355, %v7348
    %v7363 = vpack.c.bf16 %v7356, %v7349
    %v7364 = vpack.c.bf16 %v7357, %v7350
    %v7365 = vpack.c.bf16 %v7358, %v7351
    %v7366 = vpack.c.bf16 %v7359, %v7352
    %v7367 = vpack.c.bf16 %v7360, %v7353
    %v7368 = vpack.c.bf16 %v7361, %v7354
    %7376 = vrot.lane.b32.xlu0 %v7362, 85
    %v7377 = vpop.permute.xlu0 %7376
    %7378 = vrot.lane.b32.xlu0 %v7363, 85
    %v7379 = vpop.permute.xlu0 %7378
    %7380 = vrot.lane.b32.xlu0 %v7364, 85
    %v7381 = vpop.permute.xlu0 %7380
    %7382 = vrot.lane.b32.xlu0 %v7365, 85
    %v7383 = vpop.permute.xlu0 %7382
    %7384 = vrot.lane.b32.xlu0 %v7366, 85
    %v7385 = vpop.permute.xlu0 %7384
    %7386 = vrot.lane.b32.xlu0 %v7367, 85
    %v7387 = vpop.permute.xlu0 %7386
    %7388 = vrot.lane.b32.xlu0 %v7368, 85
    %v7389 = vpop.permute.xlu0 %7388
    %v7390 = vsel %vm1002, %v7377, %v7379
    %v7391 = vsel %vm1002, %v7379, %v7381
    %v7392 = vsel %vm1002, %v7381, %v7383
    %v7393 = vsel %vm1002, %v7383, %v7385
    %v7394 = vsel %vm1002, %v7385, %v7387
    %v7395 = vsel %vm1002, %v7387, %v7389
    %7403 = vst [vmem:[#allocation3 + $0x2d8] sm:$0xff] %v7390
    %7404 = vst [vmem:[#allocation3 + $0x2e0] sm:$0xff] %v7391
    %7405 = vst [vmem:[#allocation3 + $0x2e8] sm:$0xff] %v7392
    %7406 = vst [vmem:[#allocation3 + $0x2f0] sm:$0xff] %v7393
    %7407 = vst [vmem:[#allocation3 + $0x2f8] sm:$0xff] %v7394
    %7408 = vst [vmem:[#allocation3 + $0x300] sm:$0xff] %v7395
    %7409 = vst.msk [vmem:[#allocation3 + $0x308] sm:$0xff] %vm76, %v7389
    %v7410 = vld [vmem:[#allocation2] sm:$0xff]
    %v7411 = vld [vmem:[#allocation2 + $0x8] sm:$0xff]
    %v7412 = vld [vmem:[#allocation2 + $0x10] sm:$0xff]
    %v7413 = vld [vmem:[#allocation2 + $0x18] sm:$0xff]
    %v7414 = vld [vmem:[#allocation2 + $0x20] sm:$0xff]
    %v7415 = vld [vmem:[#allocation2 + $0x28] sm:$0xff]
    %v7416 = vld [vmem:[#allocation2 + $0x30] sm:$0xff]
    %v7417 = vld [vmem:[#allocation2 + $0x38] sm:$0xff]
    %v7418 = vld [vmem:[#allocation2 + $0x40] sm:$0xff]
    %v7419 = vld [vmem:[#allocation2 + $0x48] sm:$0xff]
    %v7420 = vld [vmem:[#allocation2 + $0x50] sm:$0xff]
    %v7421 = vld [vmem:[#allocation2 + $0x58] sm:$0xff]
    %v7422 = vld [vmem:[#allocation2 + $0x60] sm:$0xff]
    %v7423 = vld [vmem:[#allocation2 + $0x68] sm:$0xff]
    %v7424 = vpack.c.bf16 %v7417, %v7410
    %v7425 = vpack.c.bf16 %v7418, %v7411
    %v7426 = vpack.c.bf16 %v7419, %v7412
    %v7427 = vpack.c.bf16 %v7420, %v7413
    %v7428 = vpack.c.bf16 %v7421, %v7414
    %v7429 = vpack.c.bf16 %v7422, %v7415
    %v7430 = vpack.c.bf16 %v7423, %v7416
    %7438 = vrot.lane.b32.xlu0 %v7424, 84
    %v7439 = vpop.permute.xlu0 %7438
    %7440 = vrot.lane.b32.xlu0 %v7425, 84
    %v7441 = vpop.permute.xlu0 %7440
    %7442 = vrot.lane.b32.xlu0 %v7426, 84
    %v7443 = vpop.permute.xlu0 %7442
    %7444 = vrot.lane.b32.xlu0 %v7427, 84
    %v7445 = vpop.permute.xlu0 %7444
    %7446 = vrot.lane.b32.xlu0 %v7428, 84
    %v7447 = vpop.permute.xlu0 %7446
    %7448 = vrot.lane.b32.xlu0 %v7429, 84
    %v7449 = vpop.permute.xlu0 %7448
    %7450 = vrot.lane.b32.xlu0 %v7430, 84
    %v7451 = vpop.permute.xlu0 %7450
    %v7452 = vsel %vm1065, %v7439, %v7441
    %v7453 = vsel %vm1065, %v7441, %v7443
    %v7454 = vsel %vm1065, %v7443, %v7445
    %v7455 = vsel %vm1065, %v7445, %v7447
    %v7456 = vsel %vm1065, %v7447, %v7449
    %v7457 = vsel %vm1065, %v7449, %v7451
    %7465 = vst [vmem:[#allocation3 + $0x310] sm:$0xff] %v7452
    %7466 = vst [vmem:[#allocation3 + $0x318] sm:$0xff] %v7453
    %7467 = vst [vmem:[#allocation3 + $0x320] sm:$0xff] %v7454
    %7468 = vst [vmem:[#allocation3 + $0x328] sm:$0xff] %v7455
    %7469 = vst [vmem:[#allocation3 + $0x330] sm:$0xff] %v7456
    %7470 = vst [vmem:[#allocation3 + $0x338] sm:$0xff] %v7457
    %7471 = vst.msk [vmem:[#allocation3 + $0x340] sm:$0xff] %vm76, %v7451
    %v7472 = vld [vmem:[#allocation2] sm:$0xff]
    %v7473 = vld [vmem:[#allocation2 + $0x8] sm:$0xff]
    %v7474 = vld [vmem:[#allocation2 + $0x10] sm:$0xff]
    %v7475 = vld [vmem:[#allocation2 + $0x18] sm:$0xff]
    %v7476 = vld [vmem:[#allocation2 + $0x20] sm:$0xff]
    %v7477 = vld [vmem:[#allocation2 + $0x28] sm:$0xff]
    %v7478 = vld [vmem:[#allocation2 + $0x30] sm:$0xff]
    %v7479 = vld [vmem:[#allocation2 + $0x38] sm:$0xff]
    %v7480 = vld [vmem:[#allocation2 + $0x40] sm:$0xff]
    %v7481 = vld [vmem:[#allocation2 + $0x48] sm:$0xff]
    %v7482 = vld [vmem:[#allocation2 + $0x50] sm:$0xff]
    %v7483 = vld [vmem:[#allocation2 + $0x58] sm:$0xff]
    %v7484 = vld [vmem:[#allocation2 + $0x60] sm:$0xff]
    %v7485 = vld [vmem:[#allocation2 + $0x68] sm:$0xff]
    %v7486 = vpack.c.bf16 %v7479, %v7472
    %v7487 = vpack.c.bf16 %v7480, %v7473
    %v7488 = vpack.c.bf16 %v7481, %v7474
    %v7489 = vpack.c.bf16 %v7482, %v7475
    %v7490 = vpack.c.bf16 %v7483, %v7476
    %v7491 = vpack.c.bf16 %v7484, %v7477
    %v7492 = vpack.c.bf16 %v7485, %v7478
    %7500 = vrot.lane.b32.xlu0 %v7486, 68
    %v7501 = vpop.permute.xlu0 %7500
    %7502 = vrot.lane.b32.xlu0 %v7487, 68
    %v7503 = vpop.permute.xlu0 %7502
    %7504 = vrot.lane.b32.xlu0 %v7488, 68
    %v7505 = vpop.permute.xlu0 %7504
    %7506 = vrot.lane.b32.xlu0 %v7489, 68
    %v7507 = vpop.permute.xlu0 %7506
    %7508 = vrot.lane.b32.xlu0 %v7490, 68
    %v7509 = vpop.permute.xlu0 %7508
    %7510 = vrot.lane.b32.xlu0 %v7491, 68
    %v7511 = vpop.permute.xlu0 %7510
    %7512 = vrot.lane.b32.xlu0 %v7492, 68
    %v7513 = vpop.permute.xlu0 %7512
    %v7514 = vsel %vm1128, %v7501, %v7503
    %v7515 = vsel %vm1128, %v7503, %v7505
    %v7516 = vsel %vm1128, %v7505, %v7507
    %v7517 = vsel %vm1128, %v7507, %v7509
    %v7518 = vsel %vm1128, %v7509, %v7511
    %v7519 = vsel %vm1128, %v7511, %v7513
    %7527 = vst [vmem:[#allocation3 + $0x348] sm:$0xff] %v7514
    %7528 = vst [vmem:[#allocation3 + $0x350] sm:$0xff] %v7515
    %7529 = vst [vmem:[#allocation3 + $0x358] sm:$0xff] %v7516
    %7530 = vst [vmem:[#allocation3 + $0x360] sm:$0xff] %v7517
    %7531 = vst [vmem:[#allocation3 + $0x368] sm:$0xff] %v7518
    %7532 = vst [vmem:[#allocation3 + $0x370] sm:$0xff] %v7519
    %7533 = vst.msk [vmem:[#allocation3 + $0x378] sm:$0xff] %vm76, %v7513
    %v7534 = vld [vmem:[#allocation2] sm:$0xff]
    %v7535 = vld [vmem:[#allocation2 + $0x8] sm:$0xff]
    %v7536 = vld [vmem:[#allocation2 + $0x10] sm:$0xff]
    %v7537 = vld [vmem:[#allocation2 + $0x18] sm:$0xff]
    %v7538 = vld [vmem:[#allocation2 + $0x20] sm:$0xff]
    %v7539 = vld [vmem:[#allocation2 + $0x28] sm:$0xff]
    %v7540 = vld [vmem:[#allocation2 + $0x30] sm:$0xff]
    %v7541 = vld [vmem:[#allocation2 + $0x38] sm:$0xff]
    %v7542 = vld [vmem:[#allocation2 + $0x40] sm:$0xff]
    %v7543 = vld [vmem:[#allocation2 + $0x48] sm:$0xff]
    %v7544 = vld [vmem:[#allocation2 + $0x50] sm:$0xff]
    %v7545 = vld [vmem:[#allocation2 + $0x58] sm:$0xff]
    %v7546 = vld [vmem:[#allocation2 + $0x60] sm:$0xff]
    %v7547 = vld [vmem:[#allocation2 + $0x68] sm:$0xff]
    %v7548 = vpack.c.bf16 %v7541, %v7534
    %v7549 = vpack.c.bf16 %v7542, %v7535
    %v7550 = vpack.c.bf16 %v7543, %v7536
    %v7551 = vpack.c.bf16 %v7544, %v7537
    %v7552 = vpack.c.bf16 %v7545, %v7538
    %v7553 = vpack.c.bf16 %v7546, %v7539
    %v7554 = vpack.c.bf16 %v7547, %v7540
    %7562 = vrot.lane.b32.xlu0 %v7548, 67
    %v7563 = vpop.permute.xlu0 %7562
    %7564 = vrot.lane.b32.xlu0 %v7549, 67
    %v7565 = vpop.permute.xlu0 %7564
    %7566 = vrot.lane.b32.xlu0 %v7550, 67
    %v7567 = vpop.permute.xlu0 %7566
    %7568 = vrot.lane.b32.xlu0 %v7551, 67
    %v7569 = vpop.permute.xlu0 %7568
    %7570 = vrot.lane.b32.xlu0 %v7552, 67
    %v7571 = vpop.permute.xlu0 %7570
    %7572 = vrot.lane.b32.xlu0 %v7553, 67
    %v7573 = vpop.permute.xlu0 %7572
    %7574 = vrot.lane.b32.xlu0 %v7554, 67
    %v7575 = vpop.permute.xlu0 %7574
    %v7576 = vsel %vm1191, %v7563, %v7565
    %v7577 = vsel %vm1191, %v7565, %v7567
    %v7578 = vsel %vm1191, %v7567, %v7569
    %v7579 = vsel %vm1191, %v7569, %v7571
    %v7580 = vsel %vm1191, %v7571, %v7573
    %v7581 = vsel %vm1191, %v7573, %v7575
    %7589 = vst [vmem:[#allocation3 + $0x380] sm:$0xff] %v7576
    %7590 = vst [vmem:[#allocation3 + $0x388] sm:$0xff] %v7577
    %7591 = vst [vmem:[#allocation3 + $0x390] sm:$0xff] %v7578
    %7592 = vst [vmem:[#allocation3 + $0x398] sm:$0xff] %v7579
    %7593 = vst [vmem:[#allocation3 + $0x3a0] sm:$0xff] %v7580
    %7594 = vst [vmem:[#allocation3 + $0x3a8] sm:$0xff] %v7581
    %7595 = vst.msk [vmem:[#allocation3 + $0x3b0] sm:$0xff] %vm76, %v7575
    %v7596 = vld [vmem:[#allocation2] sm:$0xff]
    %v7597 = vld [vmem:[#allocation2 + $0x8] sm:$0xff]
    %v7598 = vld [vmem:[#allocation2 + $0x10] sm:$0xff]
    %v7599 = vld [vmem:[#allocation2 + $0x18] sm:$0xff]
    %v7600 = vld [vmem:[#allocation2 + $0x20] sm:$0xff]
    %v7601 = vld [vmem:[#allocation2 + $0x28] sm:$0xff]
    %v7602 = vld [vmem:[#allocation2 + $0x30] sm:$0xff]
    %v7603 = vld [vmem:[#allocation2 + $0x38] sm:$0xff]
    %v7604 = vld [vmem:[#allocation2 + $0x40] sm:$0xff]
    %v7605 = vld [vmem:[#allocation2 + $0x48] sm:$0xff]
    %v7606 = vld [vmem:[#allocation2 + $0x50] sm:$0xff]
    %v7607 = vld [vmem:[#allocation2 + $0x58] sm:$0xff]
    %v7608 = vld [vmem:[#allocation2 + $0x60] sm:$0xff]
    %v7609 = vld [vmem:[#allocation2 + $0x68] sm:$0xff]
    %v7610 = vpack.c.bf16 %v7603, %v7596
    %v7611 = vpack.c.bf16 %v7604, %v7597
    %v7612 = vpack.c.bf16 %v7605, %v7598
    %v7613 = vpack.c.bf16 %v7606, %v7599
    %v7614 = vpack.c.bf16 %v7607, %v7600
    %v7615 = vpack.c.bf16 %v7608, %v7601
    %v7616 = vpack.c.bf16 %v7609, %v7602
    %7624 = vrot.lane.b32.xlu0 %v7610, 66
    %v7625 = vpop.permute.xlu0 %7624
    %7626 = vrot.lane.b32.xlu0 %v7611, 66
    %v7627 = vpop.permute.xlu0 %7626
    %7628 = vrot.lane.b32.xlu0 %v7612, 66
    %v7629 = vpop.permute.xlu0 %7628
    %7630 = vrot.lane.b32.xlu0 %v7613, 66
    %v7631 = vpop.permute.xlu0 %7630
    %7632 = vrot.lane.b32.xlu0 %v7614, 66
    %v7633 = vpop.permute.xlu0 %7632
    %7634 = vrot.lane.b32.xlu0 %v7615, 66
    %v7635 = vpop.permute.xlu0 %7634
    %7636 = vrot.lane.b32.xlu0 %v7616, 66
    %v7637 = vpop.permute.xlu0 %7636
    %v7638 = vsel %vm1254, %v7625, %v7627
    %v7639 = vsel %vm1254, %v7627, %v7629
    %v7640 = vsel %vm1254, %v7629, %v7631
    %v7641 = vsel %vm1254, %v7631, %v7633
    %v7642 = vsel %vm1254, %v7633, %v7635
    %v7643 = vsel %vm1254, %v7635, %v7637
    %7651 = vst [vmem:[#allocation3 + $0x3b8] sm:$0xff] %v7638
    %7652 = vst [vmem:[#allocation3 + $0x3c0] sm:$0xff] %v7639
    %7653 = vst [vmem:[#allocation3 + $0x3c8] sm:$0xff] %v7640
    %7654 = vst [vmem:[#allocation3 + $0x3d0] sm:$0xff] %v7641
    %7655 = vst [vmem:[#allocation3 + $0x3d8] sm:$0xff] %v7642
    %7656 = vst [vmem:[#allocation3 + $0x3e0] sm:$0xff] %v7643
    %7657 = vst.msk [vmem:[#allocation3 + $0x3e8] sm:$0xff] %vm76, %v7637
    %v7658 = vld [vmem:[#allocation2] sm:$0xff]
    %v7659 = vld [vmem:[#allocation2 + $0x8] sm:$0xff]
    %v7660 = vld [vmem:[#allocation2 + $0x10] sm:$0xff]
    %v7661 = vld [vmem:[#allocation2 + $0x18] sm:$0xff]
    %v7662 = vld [vmem:[#allocation2 + $0x20] sm:$0xff]
    %v7663 = vld [vmem:[#allocation2 + $0x28] sm:$0xff]
    %v7664 = vld [vmem:[#allocation2 + $0x30] sm:$0xff]
    %v7665 = vld [vmem:[#allocation2 + $0x38] sm:$0xff]
    %v7666 = vld [vmem:[#allocation2 + $0x40] sm:$0xff]
    %v7667 = vld [vmem:[#allocation2 + $0x48] sm:$0xff]
    %v7668 = vld [vmem:[#allocation2 + $0x50] sm:$0xff]
    %v7669 = vld [vmem:[#allocation2 + $0x58] sm:$0xff]
    %v7670 = vld [vmem:[#allocation2 + $0x60] sm:$0xff]
    %v7671 = vld [vmem:[#allocation2 + $0x68] sm:$0xff]
    %v7672 = vpack.c.bf16 %v7665, %v7658
    %v7673 = vpack.c.bf16 %v7666, %v7659
    %v7674 = vpack.c.bf16 %v7667, %v7660
    %v7675 = vpack.c.bf16 %v7668, %v7661
    %v7676 = vpack.c.bf16 %v7669, %v7662
    %v7677 = vpack.c.bf16 %v7670, %v7663
    %v7678 = vpack.c.bf16 %v7671, %v7664
    %7686 = vrot.lane.b32.xlu0 %v7672, 65
    %v7687 = vpop.permute.xlu0 %7686
    %7688 = vrot.lane.b32.xlu0 %v7673, 65
    %v7689 = vpop.permute.xlu0 %7688
    %7690 = vrot.lane.b32.xlu0 %v7674, 65
    %v7691 = vpop.permute.xlu0 %7690
    %7692 = vrot.lane.b32.xlu0 %v7675, 65
    %v7693 = vpop.permute.xlu0 %7692
    %7694 = vrot.lane.b32.xlu0 %v7676, 65
    %v7695 = vpop.permute.xlu0 %7694
    %7696 = vrot.lane.b32.xlu0 %v7677, 65
    %v7697 = vpop.permute.xlu0 %7696
    %7698 = vrot.lane.b32.xlu0 %v7678, 65
    %v7699 = vpop.permute.xlu0 %7698
    %v7700 = vsel %vm1317, %v7687, %v7689
    %v7701 = vsel %vm1317, %v7689, %v7691
    %v7702 = vsel %vm1317, %v7691, %v7693
    %v7703 = vsel %vm1317, %v7693, %v7695
    %v7704 = vsel %vm1317, %v7695, %v7697
    %v7705 = vsel %vm1317, %v7697, %v7699
    %7713 = vst [vmem:[#allocation3 + $0x3f0] sm:$0xff] %v7700
    %7714 = vst [vmem:[#allocation3 + $0x3f8] sm:$0xff] %v7701
    %7715 = vst [vmem:[#allocation3 + $0x400] sm:$0xff] %v7702
    %7716 = vst [vmem:[#allocation3 + $0x408] sm:$0xff] %v7703
    %7717 = vst [vmem:[#allocation3 + $0x410] sm:$0xff] %v7704
    %7718 = vst [vmem:[#allocation3 + $0x418] sm:$0xff] %v7705
    %7719 = vst.msk [vmem:[#allocation3 + $0x420] sm:$0xff] %vm76, %v7699
    %v7720 = vld [vmem:[#allocation2] sm:$0xff]
    %v7721 = vld [vmem:[#allocation2 + $0x8] sm:$0xff]
    %v7722 = vld [vmem:[#allocation2 + $0x10] sm:$0xff]
    %v7723 = vld [vmem:[#allocation2 + $0x18] sm:$0xff]
    %v7724 = vld [vmem:[#allocation2 + $0x20] sm:$0xff]
    %v7725 = vld [vmem:[#allocation2 + $0x28] sm:$0xff]
    %v7726 = vld [vmem:[#allocation2 + $0x30] sm:$0xff]
    %v7727 = vld [vmem:[#allocation2 + $0x38] sm:$0xff]
    %v7728 = vld [vmem:[#allocation2 + $0x40] sm:$0xff]
    %v7729 = vld [vmem:[#allocation2 + $0x48] sm:$0xff]
    %v7730 = vld [vmem:[#allocation2 + $0x50] sm:$0xff]
    %v7731 = vld [vmem:[#allocation2 + $0x58] sm:$0xff]
    %v7732 = vld [vmem:[#allocation2 + $0x60] sm:$0xff]
    %v7733 = vld [vmem:[#allocation2 + $0x68] sm:$0xff]
    %v7734 = vpack.c.bf16 %v7727, %v7720
    %v7735 = vpack.c.bf16 %v7728, %v7721
    %v7736 = vpack.c.bf16 %v7729, %v7722
    %v7737 = vpack.c.bf16 %v7730, %v7723
    %v7738 = vpack.c.bf16 %v7731, %v7724
    %v7739 = vpack.c.bf16 %v7732, %v7725
    %v7740 = vpack.c.bf16 %v7733, %v7726
    %7748 = vrot.lane.b32.xlu0 %v7734, 64
    %v7749 = vpop.permute.xlu0 %7748
    %7750 = vrot.lane.b32.xlu0 %v7735, 64
    %v7751 = vpop.permute.xlu0 %7750
    %7752 = vrot.lane.b32.xlu0 %v7736, 64
    %v7753 = vpop.permute.xlu0 %7752
    %7754 = vrot.lane.b32.xlu0 %v7737, 64
    %v7755 = vpop.permute.xlu0 %7754
    %7756 = vrot.lane.b32.xlu0 %v7738, 64
    %v7757 = vpop.permute.xlu0 %7756
    %7758 = vrot.lane.b32.xlu0 %v7739, 64
    %v7759 = vpop.permute.xlu0 %7758
    %7760 = vrot.lane.b32.xlu0 %v7740, 64
    %v7761 = vpop.permute.xlu0 %7760
    %v7762 = vsel %vm1380, %v7749, %v7751
    %v7763 = vsel %vm1380, %v7751, %v7753
    %v7764 = vsel %vm1380, %v7753, %v7755
    %v7765 = vsel %vm1380, %v7755, %v7757
    %v7766 = vsel %vm1380, %v7757, %v7759
    %v7767 = vsel %vm1380, %v7759, %v7761
    %7775 = vst [vmem:[#allocation3 + $0x428] sm:$0xff] %v7762
    %7776 = vst [vmem:[#allocation3 + $0x430] sm:$0xff] %v7763
    %7777 = vst [vmem:[#allocation3 + $0x438] sm:$0xff] %v7764
    %7778 = vst [vmem:[#allocation3 + $0x440] sm:$0xff] %v7765
    %7779 = vst [vmem:[#allocation3 + $0x448] sm:$0xff] %v7766
    %7780 = vst [vmem:[#allocation3 + $0x450] sm:$0xff] %v7767
    %7781 = vst.msk [vmem:[#allocation3 + $0x458] sm:$0xff] %vm76, %v7761
    %v7782 = vld [vmem:[#allocation2] sm:$0xff]
    %v7783 = vld [vmem:[#allocation2 + $0x8] sm:$0xff]
    %v7784 = vld [vmem:[#allocation2 + $0x10] sm:$0xff]
    %v7785 = vld [vmem:[#allocation2 + $0x18] sm:$0xff]
    %v7786 = vld [vmem:[#allocation2 + $0x20] sm:$0xff]
    %v7787 = vld [vmem:[#allocation2 + $0x28] sm:$0xff]
    %v7788 = vld [vmem:[#allocation2 + $0x30] sm:$0xff]
    %v7789 = vld [vmem:[#allocation2 + $0x38] sm:$0xff]
    %v7790 = vld [vmem:[#allocation2 + $0x40] sm:$0xff]
    %v7791 = vld [vmem:[#allocation2 + $0x48] sm:$0xff]
    %v7792 = vld [vmem:[#allocation2 + $0x50] sm:$0xff]
    %v7793 = vld [vmem:[#allocation2 + $0x58] sm:$0xff]
    %v7794 = vld [vmem:[#allocation2 + $0x60] sm:$0xff]
    %v7795 = vld [vmem:[#allocation2 + $0x68] sm:$0xff]
    %v7796 = vpack.c.bf16 %v7789, %v7782
    %v7797 = vpack.c.bf16 %v7790, %v7783
    %v7798 = vpack.c.bf16 %v7791, %v7784
    %v7799 = vpack.c.bf16 %v7792, %v7785
    %v7800 = vpack.c.bf16 %v7793, %v7786
    %v7801 = vpack.c.bf16 %v7794, %v7787
    %v7802 = vpack.c.bf16 %v7795, %v7788
    %7810 = vrot.lane.b32.xlu0 %v7796, 48
    %v7811 = vpop.permute.xlu0 %7810
    %7812 = vrot.lane.b32.xlu0 %v7797, 48
    %v7813 = vpop.permute.xlu0 %7812
    %7814 = vrot.lane.b32.xlu0 %v7798, 48
    %v7815 = vpop.permute.xlu0 %7814
    %7816 = vrot.lane.b32.xlu0 %v7799, 48
    %v7817 = vpop.permute.xlu0 %7816
    %7818 = vrot.lane.b32.xlu0 %v7800, 48
    %v7819 = vpop.permute.xlu0 %7818
    %7820 = vrot.lane.b32.xlu0 %v7801, 48
    %v7821 = vpop.permute.xlu0 %7820
    %7822 = vrot.lane.b32.xlu0 %v7802, 48
    %v7823 = vpop.permute.xlu0 %7822
    %v7824 = vsel %vm1443, %v7811, %v7813
    %v7825 = vsel %vm1443, %v7813, %v7815
    %v7826 = vsel %vm1443, %v7815, %v7817
    %v7827 = vsel %vm1443, %v7817, %v7819
    %v7828 = vsel %vm1443, %v7819, %v7821
    %v7829 = vsel %vm1443, %v7821, %v7823
    %7837 = vst [vmem:[#allocation3 + $0x460] sm:$0xff] %v7824
    %7838 = vst [vmem:[#allocation3 + $0x468] sm:$0xff] %v7825
    %7839 = vst [vmem:[#allocation3 + $0x470] sm:$0xff] %v7826
    %7840 = vst [vmem:[#allocation3 + $0x478] sm:$0xff] %v7827
    %7841 = vst [vmem:[#allocation3 + $0x480] sm:$0xff] %v7828
    %7842 = vst [vmem:[#allocation3 + $0x488] sm:$0xff] %v7829
    %7843 = vst.msk [vmem:[#allocation3 + $0x490] sm:$0xff] %vm76, %v7823
    %v7844 = vld [vmem:[#allocation2] sm:$0xff]
    %v7845 = vld [vmem:[#allocation2 + $0x8] sm:$0xff]
    %v7846 = vld [vmem:[#allocation2 + $0x10] sm:$0xff]
    %v7847 = vld [vmem:[#allocation2 + $0x18] sm:$0xff]
    %v7848 = vld [vmem:[#allocation2 + $0x20] sm:$0xff]
    %v7849 = vld [vmem:[#allocation2 + $0x28] sm:$0xff]
    %v7850 = vld [vmem:[#allocation2 + $0x30] sm:$0xff]
    %v7851 = vld [vmem:[#allocation2 + $0x38] sm:$0xff]
    %v7852 = vld [vmem:[#allocation2 + $0x40] sm:$0xff]
    %v7853 = vld [vmem:[#allocation2 + $0x48] sm:$0xff]
    %v7854 = vld [vmem:[#allocation2 + $0x50] sm:$0xff]
    %v7855 = vld [vmem:[#allocation2 + $0x58] sm:$0xff]
    %v7856 = vld [vmem:[#allocation2 + $0x60] sm:$0xff]
    %v7857 = vld [vmem:[#allocation2 + $0x68] sm:$0xff]
    %v7858 = vpack.c.bf16 %v7851, %v7844
    %v7859 = vpack.c.bf16 %v7852, %v7845
    %v7860 = vpack.c.bf16 %v7853, %v7846
    %v7861 = vpack.c.bf16 %v7854, %v7847
    %v7862 = vpack.c.bf16 %v7855, %v7848
    %v7863 = vpack.c.bf16 %v7856, %v7849
    %v7864 = vpack.c.bf16 %v7857, %v7850
    %7872 = vrot.lane.b32.xlu0 %v7858, 47
    %v7873 = vpop.permute.xlu0 %7872
    %7874 = vrot.lane.b32.xlu0 %v7859, 47
    %v7875 = vpop.permute.xlu0 %7874
    %7876 = vrot.lane.b32.xlu0 %v7860, 47
    %v7877 = vpop.permute.xlu0 %7876
    %7878 = vrot.lane.b32.xlu0 %v7861, 47
    %v7879 = vpop.permute.xlu0 %7878
    %7880 = vrot.lane.b32.xlu0 %v7862, 47
    %v7881 = vpop.permute.xlu0 %7880
    %7882 = vrot.lane.b32.xlu0 %v7863, 47
    %v7883 = vpop.permute.xlu0 %7882
    %7884 = vrot.lane.b32.xlu0 %v7864, 47
    %v7885 = vpop.permute.xlu0 %7884
    %v7886 = vsel %vm1506, %v7873, %v7875
    %v7887 = vsel %vm1506, %v7875, %v7877
    %v7888 = vsel %vm1506, %v7877, %v7879
    %v7889 = vsel %vm1506, %v7879, %v7881
    %v7890 = vsel %vm1506, %v7881, %v7883
    %v7891 = vsel %vm1506, %v7883, %v7885
    %7899 = vst [vmem:[#allocation3 + $0x498] sm:$0xff] %v7886
    %7900 = vst [vmem:[#allocation3 + $0x4a0] sm:$0xff] %v7887
    %7901 = vst [vmem:[#allocation3 + $0x4a8] sm:$0xff] %v7888
    %7902 = vst [vmem:[#allocation3 + $0x4b0] sm:$0xff] %v7889
    %7903 = vst [vmem:[#allocation3 + $0x4b8] sm:$0xff] %v7890
    %7904 = vst [vmem:[#allocation3 + $0x4c0] sm:$0xff] %v7891
    %7905 = vst.msk [vmem:[#allocation3 + $0x4c8] sm:$0xff] %vm76, %v7885
    %v7906 = vld [vmem:[#allocation2] sm:$0xff]
    %v7907 = vld [vmem:[#allocation2 + $0x8] sm:$0xff]
    %v7908 = vld [vmem:[#allocation2 + $0x10] sm:$0xff]
    %v7909 = vld [vmem:[#allocation2 + $0x18] sm:$0xff]
    %v7910 = vld [vmem:[#allocation2 + $0x20] sm:$0xff]
    %v7911 = vld [vmem:[#allocation2 + $0x28] sm:$0xff]
    %v7912 = vld [vmem:[#allocation2 + $0x30] sm:$0xff]
    %v7913 = vld [vmem:[#allocation2 + $0x38] sm:$0xff]
    %v7914 = vld [vmem:[#allocation2 + $0x40] sm:$0xff]
    %v7915 = vld [vmem:[#allocation2 + $0x48] sm:$0xff]
    %v7916 = vld [vmem:[#allocation2 + $0x50] sm:$0xff]
    %v7917 = vld [vmem:[#allocation2 + $0x58] sm:$0xff]
    %v7918 = vld [vmem:[#allocation2 + $0x60] sm:$0xff]
    %v7919 = vld [vmem:[#allocation2 + $0x68] sm:$0xff]
    %v7920 = vpack.c.bf16 %v7913, %v7906
    %v7921 = vpack.c.bf16 %v7914, %v7907
    %v7922 = vpack.c.bf16 %v7915, %v7908
    %v7923 = vpack.c.bf16 %v7916, %v7909
    %v7924 = vpack.c.bf16 %v7917, %v7910
    %v7925 = vpack.c.bf16 %v7918, %v7911
    %v7926 = vpack.c.bf16 %v7919, %v7912
    %7934 = vrot.lane.b32.xlu0 %v7920, 46
    %v7935 = vpop.permute.xlu0 %7934
    %7936 = vrot.lane.b32.xlu0 %v7921, 46
    %v7937 = vpop.permute.xlu0 %7936
    %7938 = vrot.lane.b32.xlu0 %v7922, 46
    %v7939 = vpop.permute.xlu0 %7938
    %7940 = vrot.lane.b32.xlu0 %v7923, 46
    %v7941 = vpop.permute.xlu0 %7940
    %7942 = vrot.lane.b32.xlu0 %v7924, 46
    %v7943 = vpop.permute.xlu0 %7942
    %7944 = vrot.lane.b32.xlu0 %v7925, 46
    %v7945 = vpop.permute.xlu0 %7944
    %7946 = vrot.lane.b32.xlu0 %v7926, 46
    %v7947 = vpop.permute.xlu0 %7946
    %v7948 = vsel %vm1569, %v7935, %v7937
    %v7949 = vsel %vm1569, %v7937, %v7939
    %v7950 = vsel %vm1569, %v7939, %v7941
    %v7951 = vsel %vm1569, %v7941, %v7943
    %v7952 = vsel %vm1569, %v7943, %v7945
    %v7953 = vsel %vm1569, %v7945, %v7947
    %7961 = vst [vmem:[#allocation3 + $0x4d0] sm:$0xff] %v7948
    %7962 = vst [vmem:[#allocation3 + $0x4d8] sm:$0xff] %v7949
    %7963 = vst [vmem:[#allocation3 + $0x4e0] sm:$0xff] %v7950
    %7964 = vst [vmem:[#allocation3 + $0x4e8] sm:$0xff] %v7951
    %7965 = vst [vmem:[#allocation3 + $0x4f0] sm:$0xff] %v7952
    %7966 = vst [vmem:[#allocation3 + $0x4f8] sm:$0xff] %v7953
    %7967 = vst.msk [vmem:[#allocation3 + $0x500] sm:$0xff] %vm76, %v7947
    %v7968 = vld [vmem:[#allocation2] sm:$0xff]
    %v7969 = vld [vmem:[#allocation2 + $0x8] sm:$0xff]
    %v7970 = vld [vmem:[#allocation2 + $0x10] sm:$0xff]
    %v7971 = vld [vmem:[#allocation2 + $0x18] sm:$0xff]
    %v7972 = vld [vmem:[#allocation2 + $0x20] sm:$0xff]
    %v7973 = vld [vmem:[#allocation2 + $0x28] sm:$0xff]
    %v7974 = vld [vmem:[#allocation2 + $0x30] sm:$0xff]
    %v7975 = vld [vmem:[#allocation2 + $0x38] sm:$0xff]
    %v7976 = vld [vmem:[#allocation2 + $0x40] sm:$0xff]
    %v7977 = vld [vmem:[#allocation2 + $0x48] sm:$0xff]
    %v7978 = vld [vmem:[#allocation2 + $0x50] sm:$0xff]
    %v7979 = vld [vmem:[#allocation2 + $0x58] sm:$0xff]
    %v7980 = vld [vmem:[#allocation2 + $0x60] sm:$0xff]
    %v7981 = vld [vmem:[#allocation2 + $0x68] sm:$0xff]
    %v7982 = vpack.c.bf16 %v7975, %v7968
    %v7983 = vpack.c.bf16 %v7976, %v7969
    %v7984 = vpack.c.bf16 %v7977, %v7970
    %v7985 = vpack.c.bf16 %v7978, %v7971
    %v7986 = vpack.c.bf16 %v7979, %v7972
    %v7987 = vpack.c.bf16 %v7980, %v7973
    %v7988 = vpack.c.bf16 %v7981, %v7974
    %7996 = vrot.lane.b32.xlu0 %v7982, 45
    %v7997 = vpop.permute.xlu0 %7996
    %7998 = vrot.lane.b32.xlu0 %v7983, 45
    %v7999 = vpop.permute.xlu0 %7998
    %8000 = vrot.lane.b32.xlu0 %v7984, 45
    %v8001 = vpop.permute.xlu0 %8000
    %8002 = vrot.lane.b32.xlu0 %v7985, 45
    %v8003 = vpop.permute.xlu0 %8002
    %8004 = vrot.lane.b32.xlu0 %v7986, 45
    %v8005 = vpop.permute.xlu0 %8004
    %8006 = vrot.lane.b32.xlu0 %v7987, 45
    %v8007 = vpop.permute.xlu0 %8006
    %8008 = vrot.lane.b32.xlu0 %v7988, 45
    %v8009 = vpop.permute.xlu0 %8008
    %v8010 = vsel %vm1632, %v7997, %v7999
    %v8011 = vsel %vm1632, %v7999, %v8001
    %v8012 = vsel %vm1632, %v8001, %v8003
    %v8013 = vsel %vm1632, %v8003, %v8005
    %v8014 = vsel %vm1632, %v8005, %v8007
    %v8015 = vsel %vm1632, %v8007, %v8009
    %8023 = vst [vmem:[#allocation3 + $0x508] sm:$0xff] %v8010
    %8024 = vst [vmem:[#allocation3 + $0x510] sm:$0xff] %v8011
    %8025 = vst [vmem:[#allocation3 + $0x518] sm:$0xff] %v8012
    %8026 = vst [vmem:[#allocation3 + $0x520] sm:$0xff] %v8013
    %8027 = vst [vmem:[#allocation3 + $0x528] sm:$0xff] %v8014
    %8028 = vst [vmem:[#allocation3 + $0x530] sm:$0xff] %v8015
    %8029 = vst.msk [vmem:[#allocation3 + $0x538] sm:$0xff] %vm76, %v8009
    %v8030 = vld [vmem:[#allocation2] sm:$0xff]
    %v8031 = vld [vmem:[#allocation2 + $0x8] sm:$0xff]
    %v8032 = vld [vmem:[#allocation2 + $0x10] sm:$0xff]
    %v8033 = vld [vmem:[#allocation2 + $0x18] sm:$0xff]
    %v8034 = vld [vmem:[#allocation2 + $0x20] sm:$0xff]
    %v8035 = vld [vmem:[#allocation2 + $0x28] sm:$0xff]
    %v8036 = vld [vmem:[#allocation2 + $0x30] sm:$0xff]
    %v8037 = vld [vmem:[#allocation2 + $0x38] sm:$0xff]
    %v8038 = vld [vmem:[#allocation2 + $0x40] sm:$0xff]
    %v8039 = vld [vmem:[#allocation2 + $0x48] sm:$0xff]
    %v8040 = vld [vmem:[#allocation2 + $0x50] sm:$0xff]
    %v8041 = vld [vmem:[#allocation2 + $0x58] sm:$0xff]
    %v8042 = vld [vmem:[#allocation2 + $0x60] sm:$0xff]
    %v8043 = vld [vmem:[#allocation2 + $0x68] sm:$0xff]
    %v8044 = vpack.c.bf16 %v8037, %v8030
    %v8045 = vpack.c.bf16 %v8038, %v8031
    %v8046 = vpack.c.bf16 %v8039, %v8032
    %v8047 = vpack.c.bf16 %v8040, %v8033
    %v8048 = vpack.c.bf16 %v8041, %v8034
    %v8049 = vpack.c.bf16 %v8042, %v8035
    %v8050 = vpack.c.bf16 %v8043, %v8036
    %8058 = vrot.lane.b32.xlu0 %v8044, 44
    %v8059 = vpop.permute.xlu0 %8058
    %8060 = vrot.lane.b32.xlu0 %v8045, 44
    %v8061 = vpop.permute.xlu0 %8060
    %8062 = vrot.lane.b32.xlu0 %v8046, 44
    %v8063 = vpop.permute.xlu0 %8062
    %8064 = vrot.lane.b32.xlu0 %v8047, 44
    %v8065 = vpop.permute.xlu0 %8064
    %8066 = vrot.lane.b32.xlu0 %v8048, 44
    %v8067 = vpop.permute.xlu0 %8066
    %8068 = vrot.lane.b32.xlu0 %v8049, 44
    %v8069 = vpop.permute.xlu0 %8068
    %8070 = vrot.lane.b32.xlu0 %v8050, 44
    %v8071 = vpop.permute.xlu0 %8070
    %v8072 = vsel %vm1695, %v8059, %v8061
    %v8073 = vsel %vm1695, %v8061, %v8063
    %v8074 = vsel %vm1695, %v8063, %v8065
    %v8075 = vsel %vm1695, %v8065, %v8067
    %v8076 = vsel %vm1695, %v8067, %v8069
    %v8077 = vsel %vm1695, %v8069, %v8071
    %8085 = vst [vmem:[#allocation3 + $0x540] sm:$0xff] %v8072
    %8086 = vst [vmem:[#allocation3 + $0x548] sm:$0xff] %v8073
    %8087 = vst [vmem:[#allocation3 + $0x550] sm:$0xff] %v8074
    %8088 = vst [vmem:[#allocation3 + $0x558] sm:$0xff] %v8075
    %8089 = vst [vmem:[#allocation3 + $0x560] sm:$0xff] %v8076
    %8090 = vst [vmem:[#allocation3 + $0x568] sm:$0xff] %v8077
    %8091 = vst.msk [vmem:[#allocation3 + $0x570] sm:$0xff] %vm76, %v8071
    %v8092 = vld [vmem:[#allocation7 + $0x60] sm:$0xff]
    %v8093 = vld [vmem:[#allocation7 + $0x68] sm:$0xff]
    %v8094 = vld [vmem:[#allocation7 + $0x70] sm:$0xff]
    %v8095 = vld [vmem:[#allocation7 + $0x78] sm:$0xff]
    %v8096 = vld [vmem:[#allocation9] sm:$0xff]
    %v8097 = vld [vmem:[#allocation9 + $0x8] sm:$0xff]
    %v8098 = vld [vmem:[#allocation3] sm:$0xff]
    %v8099 = vld [vmem:[#allocation3 + $0x8] sm:$0xff]
    %v8100 = vld [vmem:[#allocation3 + $0x10] sm:$0xff]
    %v8101 = vld [vmem:[#allocation3 + $0x18] sm:$0xff]
    %v8102 = vld [vmem:[#allocation3 + $0x20] sm:$0xff]
    %v8103 = vld [vmem:[#allocation3 + $0x28] sm:$0xff]
    %v8104 = vld [vmem:[#allocation3 + $0x30] sm:$0xff]
    %v8105 = vld [vmem:[#allocation3 + $0x38] sm:$0xff]
    %v8106 = vld [vmem:[#allocation3 + $0x40] sm:$0xff]
    %v8107 = vld [vmem:[#allocation3 + $0x48] sm:$0xff]
    %v8108 = vld [vmem:[#allocation3 + $0x50] sm:$0xff]
    %v8109 = vld [vmem:[#allocation3 + $0x58] sm:$0xff]
    %v8110 = vld [vmem:[#allocation3 + $0x60] sm:$0xff]
    %v8111 = vld [vmem:[#allocation3 + $0x68] sm:$0xff]
    %v8112 = vld [vmem:[#allocation3 + $0x70] sm:$0xff]
    %v8113 = vld [vmem:[#allocation3 + $0x78] sm:$0xff]
    %v8114 = vld [vmem:[#allocation3 + $0x80] sm:$0xff]
    %v8115 = vld [vmem:[#allocation3 + $0x88] sm:$0xff]
    %v8116 = vld [vmem:[#allocation3 + $0x90] sm:$0xff]
    %v8117 = vld [vmem:[#allocation3 + $0x98] sm:$0xff]
    %v8118 = vld [vmem:[#allocation3 + $0xa0] sm:$0xff]
    %v8119 = vld [vmem:[#allocation3 + $0xa8] sm:$0xff]
    %v8120 = vld [vmem:[#allocation3 + $0xb0] sm:$0xff]
    %v8121 = vld [vmem:[#allocation3 + $0xb8] sm:$0xff]
    %v8122 = vld [vmem:[#allocation3 + $0xc0] sm:$0xff]
    %v8123 = vld [vmem:[#allocation3 + $0xc8] sm:$0xff]
    %v8124 = vld [vmem:[#allocation3 + $0xd0] sm:$0xff]
    %v8125 = vld [vmem:[#allocation3 + $0xd8] sm:$0xff]
    %v8126 = vld [vmem:[#allocation3 + $0xe0] sm:$0xff]
    %v8127 = vld [vmem:[#allocation3 + $0xe8] sm:$0xff]
    %v8128 = vld [vmem:[#allocation3 + $0xf0] sm:$0xff]
    %v8129 = vld [vmem:[#allocation3 + $0xf8] sm:$0xff]
    %v8130 = vld [vmem:[#allocation3 + $0x100] sm:$0xff]
    %v8131 = vld [vmem:[#allocation3 + $0x108] sm:$0xff]
    %v8132 = vld [vmem:[#allocation3 + $0x110] sm:$0xff]
    %v8133 = vld [vmem:[#allocation3 + $0x118] sm:$0xff]
    %v8134 = vld [vmem:[#allocation3 + $0x120] sm:$0xff]
    %v8135 = vld [vmem:[#allocation3 + $0x128] sm:$0xff]
    %v8136 = vld [vmem:[#allocation3 + $0x130] sm:$0xff]
    %v8137 = vld [vmem:[#allocation3 + $0x138] sm:$0xff]
    %v8138 = vld [vmem:[#allocation3 + $0x140] sm:$0xff]
    %v8139 = vld [vmem:[#allocation3 + $0x148] sm:$0xff]
    %v8140 = vld [vmem:[#allocation3 + $0x150] sm:$0xff]
    %v8141 = vld [vmem:[#allocation3 + $0x158] sm:$0xff]
    %v8142 = vld [vmem:[#allocation3 + $0x160] sm:$0xff]
    %v8143 = vld [vmem:[#allocation3 + $0x168] sm:$0xff]
    %v8144 = vld [vmem:[#allocation3 + $0x170] sm:$0xff]
    %v8145 = vld [vmem:[#allocation3 + $0x178] sm:$0xff]
    %v8146 = vld [vmem:[#allocation3 + $0x180] sm:$0xff]
    %v8147 = vld [vmem:[#allocation3 + $0x188] sm:$0xff]
    %v8148 = vld [vmem:[#allocation3 + $0x190] sm:$0xff]
    %v8149 = vld [vmem:[#allocation3 + $0x198] sm:$0xff]
    %v8150 = vld [vmem:[#allocation3 + $0x1a0] sm:$0xff]
    %v8151 = vld [vmem:[#allocation3 + $0x1a8] sm:$0xff]
    %v8152 = vld [vmem:[#allocation3 + $0x1b0] sm:$0xff]
    %v8153 = vld [vmem:[#allocation3 + $0x1b8] sm:$0xff]
    %v8154 = vld [vmem:[#allocation3 + $0x1c0] sm:$0xff]
    %v8155 = vld [vmem:[#allocation3 + $0x1c8] sm:$0xff]
    %v8156 = vld [vmem:[#allocation3 + $0x1d0] sm:$0xff]
    %v8157 = vld [vmem:[#allocation3 + $0x1d8] sm:$0xff]
    %v8158 = vld [vmem:[#allocation3 + $0x1e0] sm:$0xff]
    %v8159 = vld [vmem:[#allocation3 + $0x1e8] sm:$0xff]
    %v8160 = vld [vmem:[#allocation3 + $0x1f0] sm:$0xff]
    %v8161 = vld [vmem:[#allocation3 + $0x1f8] sm:$0xff]
    %v8162 = vld [vmem:[#allocation3 + $0x200] sm:$0xff]
    %v8163 = vld [vmem:[#allocation3 + $0x208] sm:$0xff]
    %v8164 = vld [vmem:[#allocation3 + $0x210] sm:$0xff]
    %v8165 = vld [vmem:[#allocation3 + $0x218] sm:$0xff]
    %v8166 = vld [vmem:[#allocation3 + $0x220] sm:$0xff]
    %v8167 = vld [vmem:[#allocation3 + $0x228] sm:$0xff]
    %v8168 = vld [vmem:[#allocation3 + $0x230] sm:$0xff]
    %v8169 = vld [vmem:[#allocation3 + $0x238] sm:$0xff]
    %v8170 = vld [vmem:[#allocation3 + $0x240] sm:$0xff]
    %v8171 = vld [vmem:[#allocation3 + $0x248] sm:$0xff]
    %v8172 = vld [vmem:[#allocation3 + $0x250] sm:$0xff]
    %v8173 = vld [vmem:[#allocation3 + $0x258] sm:$0xff]
    %v8174 = vld [vmem:[#allocation3 + $0x260] sm:$0xff]
    %v8175 = vld [vmem:[#allocation3 + $0x268] sm:$0xff]
    %v8176 = vld [vmem:[#allocation3 + $0x270] sm:$0xff]
    %v8177 = vld [vmem:[#allocation3 + $0x278] sm:$0xff]
    %v8178 = vld [vmem:[#allocation3 + $0x280] sm:$0xff]
    %v8179 = vld [vmem:[#allocation3 + $0x288] sm:$0xff]
    %v8180 = vld [vmem:[#allocation3 + $0x290] sm:$0xff]
    %v8181 = vld [vmem:[#allocation3 + $0x298] sm:$0xff]
    %v8182 = vld [vmem:[#allocation3 + $0x2a0] sm:$0xff]
    %v8183 = vld [vmem:[#allocation3 + $0x2a8] sm:$0xff]
    %v8184 = vld [vmem:[#allocation3 + $0x2b0] sm:$0xff]
    %v8185 = vld [vmem:[#allocation3 + $0x2b8] sm:$0xff]
    %v8186 = vld [vmem:[#allocation3 + $0x2c0] sm:$0xff]
    %v8187 = vld [vmem:[#allocation3 + $0x2c8] sm:$0xff]
    %v8188 = vld [vmem:[#allocation3 + $0x2d0] sm:$0xff]
    %v8189 = vld [vmem:[#allocation3 + $0x2d8] sm:$0xff]
    %v8190 = vld [vmem:[#allocation3 + $0x2e0] sm:$0xff]
    %v8191 = vld [vmem:[#allocation3 + $0x2e8] sm:$0xff]
    %v8192 = vld [vmem:[#allocation3 + $0x2f0] sm:$0xff]
    %v8193 = vld [vmem:[#allocation3 + $0x2f8] sm:$0xff]
    %v8194 = vld [vmem:[#allocation3 + $0x300] sm:$0xff]
    %v8195 = vld [vmem:[#allocation3 + $0x308] sm:$0xff]
    %v8196 = vld [vmem:[#allocation3 + $0x310] sm:$0xff]
    %v8197 = vld [vmem:[#allocation3 + $0x318] sm:$0xff]
    %v8198 = vld [vmem:[#allocation3 + $0x320] sm:$0xff]
    %v8199 = vld [vmem:[#allocation3 + $0x328] sm:$0xff]
    %v8200 = vld [vmem:[#allocation3 + $0x330] sm:$0xff]
    %v8201 = vld [vmem:[#allocation3 + $0x338] sm:$0xff]
    %v8202 = vld [vmem:[#allocation3 + $0x340] sm:$0xff]
    %v8203 = vld [vmem:[#allocation3 + $0x348] sm:$0xff]
    %v8204 = vld [vmem:[#allocation3 + $0x350] sm:$0xff]
    %v8205 = vld [vmem:[#allocation3 + $0x358] sm:$0xff]
    %v8206 = vld [vmem:[#allocation3 + $0x360] sm:$0xff]
    %v8207 = vld [vmem:[#allocation3 + $0x368] sm:$0xff]
    %v8208 = vld [vmem:[#allocation3 + $0x370] sm:$0xff]
    %v8209 = vld [vmem:[#allocation3 + $0x378] sm:$0xff]
    %v8210 = vld [vmem:[#allocation3 + $0x380] sm:$0xff]
    %v8211 = vld [vmem:[#allocation3 + $0x388] sm:$0xff]
    %v8212 = vld [vmem:[#allocation3 + $0x390] sm:$0xff]
    %v8213 = vld [vmem:[#allocation3 + $0x398] sm:$0xff]
    %v8214 = vld [vmem:[#allocation3 + $0x3a0] sm:$0xff]
    %v8215 = vld [vmem:[#allocation3 + $0x3a8] sm:$0xff]
    %v8216 = vld [vmem:[#allocation3 + $0x3b0] sm:$0xff]
    %v8217 = vld [vmem:[#allocation3 + $0x3b8] sm:$0xff]
    %v8218 = vld [vmem:[#allocation3 + $0x3c0] sm:$0xff]
    %v8219 = vld [vmem:[#allocation3 + $0x3c8] sm:$0xff]
    %v8220 = vld [vmem:[#allocation3 + $0x3d0] sm:$0xff]
    %v8221 = vld [vmem:[#allocation3 + $0x3d8] sm:$0xff]
    %v8222 = vld [vmem:[#allocation3 + $0x3e0] sm:$0xff]
    %v8223 = vld [vmem:[#allocation3 + $0x3e8] sm:$0xff]
    %v8224 = vld [vmem:[#allocation3 + $0x3f0] sm:$0xff]
    %v8225 = vld [vmem:[#allocation3 + $0x3f8] sm:$0xff]
    %v8226 = vld [vmem:[#allocation3 + $0x400] sm:$0xff]
    %v8227 = vld [vmem:[#allocation3 + $0x408] sm:$0xff]
    %v8228 = vld [vmem:[#allocation3 + $0x410] sm:$0xff]
    %v8229 = vld [vmem:[#allocation3 + $0x418] sm:$0xff]
    %v8230 = vld [vmem:[#allocation3 + $0x420] sm:$0xff]
    %v8231 = vld [vmem:[#allocation3 + $0x428] sm:$0xff]
    %v8232 = vld [vmem:[#allocation3 + $0x430] sm:$0xff]
    %v8233 = vld [vmem:[#allocation3 + $0x438] sm:$0xff]
    %v8234 = vld [vmem:[#allocation3 + $0x440] sm:$0xff]
    %v8235 = vld [vmem:[#allocation3 + $0x448] sm:$0xff]
    %v8236 = vld [vmem:[#allocation3 + $0x450] sm:$0xff]
    %v8237 = vld [vmem:[#allocation3 + $0x458] sm:$0xff]
    %v8238 = vld [vmem:[#allocation3 + $0x460] sm:$0xff]
    %v8239 = vld [vmem:[#allocation3 + $0x468] sm:$0xff]
    %v8240 = vld [vmem:[#allocation3 + $0x470] sm:$0xff]
    %v8241 = vld [vmem:[#allocation3 + $0x478] sm:$0xff]
    %v8242 = vld [vmem:[#allocation3 + $0x480] sm:$0xff]
    %v8243 = vld [vmem:[#allocation3 + $0x488] sm:$0xff]
    %v8244 = vld [vmem:[#allocation3 + $0x490] sm:$0xff]
    %v8245 = vld [vmem:[#allocation3 + $0x498] sm:$0xff]
    %v8246 = vld [vmem:[#allocation3 + $0x4a0] sm:$0xff]
    %v8247 = vld [vmem:[#allocation3 + $0x4a8] sm:$0xff]
    %v8248 = vld [vmem:[#allocation3 + $0x4b0] sm:$0xff]
    %v8249 = vld [vmem:[#allocation3 + $0x4b8] sm:$0xff]
    %v8250 = vld [vmem:[#allocation3 + $0x4c0] sm:$0xff]
    %v8251 = vld [vmem:[#allocation3 + $0x4c8] sm:$0xff]
    %v8252 = vld [vmem:[#allocation3 + $0x4d0] sm:$0xff]
    %v8253 = vld [vmem:[#allocation3 + $0x4d8] sm:$0xff]
    %v8254 = vld [vmem:[#allocation3 + $0x4e0] sm:$0xff]
    %v8255 = vld [vmem:[#allocation3 + $0x4e8] sm:$0xff]
    %v8256 = vld [vmem:[#allocation3 + $0x4f0] sm:$0xff]
    %v8257 = vld [vmem:[#allocation3 + $0x4f8] sm:$0xff]
    %v8258 = vld [vmem:[#allocation3 + $0x500] sm:$0xff]
    %v8259 = vld [vmem:[#allocation3 + $0x508] sm:$0xff]
    %v8260 = vld [vmem:[#allocation3 + $0x510] sm:$0xff]
    %v8261 = vld [vmem:[#allocation3 + $0x518] sm:$0xff]
    %v8262 = vld [vmem:[#allocation3 + $0x520] sm:$0xff]
    %v8263 = vld [vmem:[#allocation3 + $0x528] sm:$0xff]
    %v8264 = vld [vmem:[#allocation3 + $0x530] sm:$0xff]
    %v8265 = vld [vmem:[#allocation3 + $0x538] sm:$0xff]
    %v8266 = vld [vmem:[#allocation3 + $0x540] sm:$0xff]
    %v8267 = vld [vmem:[#allocation3 + $0x548] sm:$0xff]
    %v8268 = vld [vmem:[#allocation3 + $0x550] sm:$0xff]
    %v8269 = vld [vmem:[#allocation3 + $0x558] sm:$0xff]
    %v8270 = vld [vmem:[#allocation3 + $0x560] sm:$0xff]
    %v8271 = vld [vmem:[#allocation3 + $0x568] sm:$0xff]
    %v8272 = vld [vmem:[#allocation3 + $0x570] sm:$0xff]
    %8274 = vset.pattern.permute.xlu0 3
    %8275 = vperm.xlu0 %8274, %v8096
    %v8276 = vpop.permute.xlu0 %8275
    %8279 = vset.pattern.permute.xlu0 3
    %8280 = vperm.xlu0 %8279, %v8097
    %v8281 = vpop.permute.xlu0 %8280
    %v8287 = vunpack.c.l.b16 %v8092
    %v8288 = vunpack.c.h.b16 %v8092
    %v8289 = vunpack.c.l.b16 %v8093
    %v8290 = vunpack.c.h.b16 %v8093
    %v8291 = vunpack.c.l.b16 %v8094
    %v8292 = vunpack.c.h.b16 %v8094
    %v8293 = vunpack.c.l.b16 %v8095
    %v8294 = vunpack.c.h.b16 %v8095
    %v8295 = vpack.c.b16 %v8291, %v8287
    %v8296 = vpack.c.b16 %v8292, %v8288
    %v8297 = vpack.c.b16 %v8293, %v8289
    %v8298 = vpack.c.b16 %v8294, %v8290
    %v8303 = vsel %vm1926, %v8298, 0
    %8305 = vmatprep.subr.bf16.mxu0 %v8099
    %8306 = vmatpush1.bf16.msra.mxu0 %v8098
    %8307 = vmatprep.subr.bf16.mxu0 %v8106
    %8308 = vmatpush1.bf16.msra.mxu0 %v8105
    %8309 = vmatprep.subr.bf16.mxu0 %v8113
    %8310 = vmatpush1.bf16.msra.mxu0 %v8112
    %8311 = vmatprep.subr.bf16.mxu0 %v8120
    %8312 = vmatpush1.bf16.msra.mxu0 %v8119
    %8313 = vmatprep.subr.bf16.mxu0 %v8127
    %8314 = vmatpush1.bf16.msra.mxu0 %v8126
    %8315 = vmatprep.subr.bf16.mxu0 %v8134
    %8316 = vmatpush1.bf16.msra.mxu0 %v8133
    %8317 = vmatprep.subr.bf16.mxu0 %v8141
    %8318 = vmatpush1.bf16.msra.mxu0 %v8140
    %8319 = vmatprep.subr.bf16.mxu0 %v8148
    %8320 = vmatpush1.bf16.msra.mxu0 %v8147
    %8321 = vmatprep.subr.bf16.mxu0 %v8155
    %8322 = vmatpush1.bf16.msra.mxu0 %v8154
    %8323 = vmatprep.subr.bf16.mxu0 %v8162
    %8324 = vmatpush1.bf16.msra.mxu0 %v8161
    %8325 = vmatprep.subr.bf16.mxu0 %v8169
    %8326 = vmatpush1.bf16.msra.mxu0 %v8168
    %8327 = vmatprep.subr.bf16.mxu0 %v8176
    %8328 = vmatpush1.bf16.msra.mxu0 %v8175
    %8329 = vmatprep.subr.bf16.mxu0 %v8183
    %8330 = vmatpush1.bf16.msra.mxu0 %v8182
    %8331 = vmatprep.subr.bf16.mxu0 %v8190
    %8332 = vmatpush1.bf16.msra.mxu0 %v8189
    %8333 = vmatprep.subr.bf16.mxu0 %v8197
    %8334 = vmatpush1.bf16.msra.mxu0 %v8196
    %8335 = vmatprep.subr.bf16.mxu0 %v8204
    %8336 = vmatpush1.bf16.msra.mxu0 %v8203
    %8337 = vmatprep.mubr.bf16.mxu0 %v8296
    %8338 = vmatmul.mubr.bf16.gmra.mrb[0].mxu0 %v8295
    %v8339 = vpop.f32.mrb[0].mxu0
    %v8340 = vadd.f32 %v8276, %v8339
    %v8341 = vpop.f32.mrb[0].mxu0
    %v8342 = vadd.f32 %v8276, %v8341
    %v8343 = vpop.f32.mrb[0].mxu0
    %v8344 = vadd.f32 %v8281, %v8343
    %v8345 = vpop.f32.mrb[0].mxu0
    %v8346 = vadd.f32 %v8281, %v8345
    %8347 = vdwg.mxu0
    %8348 = vmatprep.subr.bf16.mxu0 %v8211
    %8349 = vmatpush1.bf16.msra.mxu0 %v8210
    %8350 = vmatprep.subr.bf16.mxu0 %v8218
    %8351 = vmatpush1.bf16.msra.mxu0 %v8217
    %8352 = vmatprep.subr.bf16.mxu0 %v8225
    %8353 = vmatpush1.bf16.msra.mxu0 %v8224
    %8354 = vmatprep.subr.bf16.mxu0 %v8232
    %8355 = vmatpush1.bf16.msra.mxu0 %v8231
    %8356 = vmatprep.subr.bf16.mxu0 %v8239
    %8357 = vmatpush1.bf16.msra.mxu0 %v8238
    %8358 = vmatprep.subr.bf16.mxu0 %v8246
    %8359 = vmatpush1.bf16.msra.mxu0 %v8245
    %8360 = vmatprep.subr.bf16.mxu0 %v8253
    %8361 = vmatpush1.bf16.msra.mxu0 %v8252
    %8362 = vmatprep.subr.bf16.mxu0 %v8260
    %8363 = vmatpush1.bf16.msra.mxu0 %v8259
    %8364 = vmatprep.subr.bf16.mxu0 %v8267
    %8365 = vmatpush1.bf16.msra.mxu0 %v8266
    %8366 = vmatprep.subr.bf16.mxu0 0
    %8367 = vmatpush1.bf16.msra.mxu0 0
    %8368 = vmatprep.subr.bf16.mxu0 0
    %8369 = vmatpush1.bf16.msra.mxu0 0
    %8370 = vmatprep.subr.bf16.mxu0 0
    %8371 = vmatpush1.bf16.msra.mxu0 0
    %8372 = vmatprep.subr.bf16.mxu0 0
    %8373 = vmatpush1.bf16.msra.mxu0 0
    %8374 = vmatprep.subr.bf16.mxu0 0
    %8375 = vmatpush1.bf16.msra.mxu0 0
    %8376 = vmatprep.subr.bf16.mxu0 0
    %8377 = vmatpush1.bf16.msra.mxu0 0
    %8378 = vmatprep.subr.bf16.mxu0 0
    %8379 = vmatpush1.bf16.msra.mxu0 0
    %8380 = vmatprep.mubr.bf16.mxu0 %v8303
    %8381 = vmatmul.mubr.bf16.gmra.mrb[0].mxu0 %v8297
    %v8382 = vpop.f32.mrb[0].mxu0
    %v8383 = vadd.f32 %v8340, %v8382
    %v8384 = vpop.f32.mrb[0].mxu0
    %v8385 = vadd.f32 %v8342, %v8384
    %v8386 = vpop.f32.mrb[0].mxu0
    %v8387 = vadd.f32 %v8344, %v8386
    %v8388 = vpop.f32.mrb[0].mxu0
    %v8389 = vadd.f32 %v8346, %v8388
    %8390 = vdwg.mxu0
    %8391 = vmatprep.subr.bf16.mxu0 %v8101
    %8392 = vmatpush1.bf16.msra.mxu0 %v8100
    %8393 = vmatprep.subr.bf16.mxu0 %v8108
    %8394 = vmatpush1.bf16.msra.mxu0 %v8107
    %8395 = vmatprep.subr.bf16.mxu0 %v8115
    %8396 = vmatpush1.bf16.msra.mxu0 %v8114
    %8397 = vmatprep.subr.bf16.mxu0 %v8122
    %8398 = vmatpush1.bf16.msra.mxu0 %v8121
    %8399 = vmatprep.subr.bf16.mxu0 %v8129
    %8400 = vmatpush1.bf16.msra.mxu0 %v8128
    %8401 = vmatprep.subr.bf16.mxu0 %v8136
    %8402 = vmatpush1.bf16.msra.mxu0 %v8135
    %8403 = vmatprep.subr.bf16.mxu0 %v8143
    %8404 = vmatpush1.bf16.msra.mxu0 %v8142
    %8405 = vmatprep.subr.bf16.mxu0 %v8150
    %8406 = vmatpush1.bf16.msra.mxu0 %v8149
    %8407 = vmatprep.subr.bf16.mxu0 %v8157
    %8408 = vmatpush1.bf16.msra.mxu0 %v8156
    %8409 = vmatprep.subr.bf16.mxu0 %v8164
    %8410 = vmatpush1.bf16.msra.mxu0 %v8163
    %8411 = vmatprep.subr.bf16.mxu0 %v8171
    %8412 = vmatpush1.bf16.msra.mxu0 %v8170
    %8413 = vmatprep.subr.bf16.mxu0 %v8178
    %8414 = vmatpush1.bf16.msra.mxu0 %v8177
    %8415 = vmatprep.subr.bf16.mxu0 %v8185
    %8416 = vmatpush1.bf16.msra.mxu0 %v8184
    %8417 = vmatprep.subr.bf16.mxu0 %v8192
    %8418 = vmatpush1.bf16.msra.mxu0 %v8191
    %8419 = vmatprep.subr.bf16.mxu0 %v8199
    %8420 = vmatpush1.bf16.msra.mxu0 %v8198
    %8421 = vmatprep.subr.bf16.mxu0 %v8206
    %8422 = vmatpush1.bf16.msra.mxu0 %v8205
    %8423 = vmatprep.mubr.bf16.mxu0 %v8296
    %8424 = vmatmul.mubr.bf16.gmra.mrb[0].mxu0 %v8295
    %v8425 = vpop.f32.mrb[0].mxu0
    %v8426 = vadd.f32 %v8276, %v8425
    %v8427 = vpop.f32.mrb[0].mxu0
    %v8428 = vadd.f32 %v8276, %v8427
    %v8429 = vpop.f32.mrb[0].mxu0
    %v8430 = vadd.f32 %v8281, %v8429
    %v8431 = vpop.f32.mrb[0].mxu0
    %v8432 = vadd.f32 %v8281, %v8431
    %8433 = vdwg.mxu0
    %8434 = vmatprep.subr.bf16.mxu0 %v8213
    %8435 = vmatpush1.bf16.msra.mxu0 %v8212
    %8436 = vmatprep.subr.bf16.mxu0 %v8220
    %8437 = vmatpush1.bf16.msra.mxu0 %v8219
    %8438 = vmatprep.subr.bf16.mxu0 %v8227
    %8439 = vmatpush1.bf16.msra.mxu0 %v8226
    %8440 = vmatprep.subr.bf16.mxu0 %v8234
    %8441 = vmatpush1.bf16.msra.mxu0 %v8233
    %8442 = vmatprep.subr.bf16.mxu0 %v8241
    %8443 = vmatpush1.bf16.msra.mxu0 %v8240
    %8444 = vmatprep.subr.bf16.mxu0 %v8248
    %8445 = vmatpush1.bf16.msra.mxu0 %v8247
    %8446 = vmatprep.subr.bf16.mxu0 %v8255
    %8447 = vmatpush1.bf16.msra.mxu0 %v8254
    %8448 = vmatprep.subr.bf16.mxu0 %v8262
    %8449 = vmatpush1.bf16.msra.mxu0 %v8261
    %8450 = vmatprep.subr.bf16.mxu0 %v8269
    %8451 = vmatpush1.bf16.msra.mxu0 %v8268
    %8452 = vmatprep.subr.bf16.mxu0 0
    %8453 = vmatpush1.bf16.msra.mxu0 0
    %8454 = vmatprep.subr.bf16.mxu0 0
    %8455 = vmatpush1.bf16.msra.mxu0 0
    %8456 = vmatprep.subr.bf16.mxu0 0
    %8457 = vmatpush1.bf16.msra.mxu0 0
    %8458 = vmatprep.subr.bf16.mxu0 0
    %8459 = vmatpush1.bf16.msra.mxu0 0
    %8460 = vmatprep.subr.bf16.mxu0 0
    %8461 = vmatpush1.bf16.msra.mxu0 0
    %8462 = vmatprep.subr.bf16.mxu0 0
    %8463 = vmatpush1.bf16.msra.mxu0 0
    %8464 = vmatprep.subr.bf16.mxu0 0
    %8465 = vmatpush1.bf16.msra.mxu0 0
    %8466 = vmatprep.mubr.bf16.mxu0 %v8303
    %8467 = vmatmul.mubr.bf16.gmra.mrb[0].mxu0 %v8297
    %v8468 = vpop.f32.mrb[0].mxu0
    %v8469 = vadd.f32 %v8426, %v8468
    %v8470 = vpop.f32.mrb[0].mxu0
    %v8471 = vadd.f32 %v8428, %v8470
    %v8472 = vpop.f32.mrb[0].mxu0
    %v8473 = vadd.f32 %v8430, %v8472
    %v8474 = vpop.f32.mrb[0].mxu0
    %v8475 = vadd.f32 %v8432, %v8474
    %8476 = vdwg.mxu0
    %8477 = vmatprep.subr.bf16.mxu0 %v8103
    %8478 = vmatpush1.bf16.msra.mxu0 %v8102
    %8479 = vmatprep.subr.bf16.mxu0 %v8110
    %8480 = vmatpush1.bf16.msra.mxu0 %v8109
    %8481 = vmatprep.subr.bf16.mxu0 %v8117
    %8482 = vmatpush1.bf16.msra.mxu0 %v8116
    %8483 = vmatprep.subr.bf16.mxu0 %v8124
    %8484 = vmatpush1.bf16.msra.mxu0 %v8123
    %8485 = vmatprep.subr.bf16.mxu0 %v8131
    %8486 = vmatpush1.bf16.msra.mxu0 %v8130
    %8487 = vmatprep.subr.bf16.mxu0 %v8138
    %8488 = vmatpush1.bf16.msra.mxu0 %v8137
    %8489 = vmatprep.subr.bf16.mxu0 %v8145
    %8490 = vmatpush1.bf16.msra.mxu0 %v8144
    %8491 = vmatprep.subr.bf16.mxu0 %v8152
    %8492 = vmatpush1.bf16.msra.mxu0 %v8151
    %8493 = vmatprep.subr.bf16.mxu0 %v8159
    %8494 = vmatpush1.bf16.msra.mxu0 %v8158
    %8495 = vmatprep.subr.bf16.mxu0 %v8166
    %8496 = vmatpush1.bf16.msra.mxu0 %v8165
    %8497 = vmatprep.subr.bf16.mxu0 %v8173
    %8498 = vmatpush1.bf16.msra.mxu0 %v8172
    %8499 = vmatprep.subr.bf16.mxu0 %v8180
    %8500 = vmatpush1.bf16.msra.mxu0 %v8179
    %8501 = vmatprep.subr.bf16.mxu0 %v8187
    %8502 = vmatpush1.bf16.msra.mxu0 %v8186
    %8503 = vmatprep.subr.bf16.mxu0 %v8194
    %8504 = vmatpush1.bf16.msra.mxu0 %v8193
    %8505 = vmatprep.subr.bf16.mxu0 %v8201
    %8506 = vmatpush1.bf16.msra.mxu0 %v8200
    %8507 = vmatprep.subr.bf16.mxu0 %v8208
    %8508 = vmatpush1.bf16.msra.mxu0 %v8207
    %8509 = vmatprep.mubr.bf16.mxu0 %v8296
    %8510 = vmatmul.mubr.bf16.gmra.mrb[0].mxu0 %v8295
    %v8511 = vpop.f32.mrb[0].mxu0
    %v8512 = vadd.f32 %v8276, %v8511
    %v8513 = vpop.f32.mrb[0].mxu0
    %v8514 = vadd.f32 %v8276, %v8513
    %v8515 = vpop.f32.mrb[0].mxu0
    %v8516 = vadd.f32 %v8281, %v8515
    %v8517 = vpop.f32.mrb[0].mxu0
    %v8518 = vadd.f32 %v8281, %v8517
    %8519 = vdwg.mxu0
    %8520 = vmatprep.subr.bf16.mxu0 %v8215
    %8521 = vmatpush1.bf16.msra.mxu0 %v8214
    %8522 = vmatprep.subr.bf16.mxu0 %v8222
    %8523 = vmatpush1.bf16.msra.mxu0 %v8221
    %8524 = vmatprep.subr.bf16.mxu0 %v8229
    %8525 = vmatpush1.bf16.msra.mxu0 %v8228
    %8526 = vmatprep.subr.bf16.mxu0 %v8236
    %8527 = vmatpush1.bf16.msra.mxu0 %v8235
    %8528 = vmatprep.subr.bf16.mxu0 %v8243
    %8529 = vmatpush1.bf16.msra.mxu0 %v8242
    %8530 = vmatprep.subr.bf16.mxu0 %v8250
    %8531 = vmatpush1.bf16.msra.mxu0 %v8249
    %8532 = vmatprep.subr.bf16.mxu0 %v8257
    %8533 = vmatpush1.bf16.msra.mxu0 %v8256
    %8534 = vmatprep.subr.bf16.mxu0 %v8264
    %8535 = vmatpush1.bf16.msra.mxu0 %v8263
    %8536 = vmatprep.subr.bf16.mxu0 %v8271
    %8537 = vmatpush1.bf16.msra.mxu0 %v8270
    %8538 = vmatprep.subr.bf16.mxu0 0
    %8539 = vmatpush1.bf16.msra.mxu0 0
    %8540 = vmatprep.subr.bf16.mxu0 0
    %8541 = vmatpush1.bf16.msra.mxu0 0
    %8542 = vmatprep.subr.bf16.mxu0 0
    %8543 = vmatpush1.bf16.msra.mxu0 0
    %8544 = vmatprep.subr.bf16.mxu0 0
    %8545 = vmatpush1.bf16.msra.mxu0 0
    %8546 = vmatprep.subr.bf16.mxu0 0
    %8547 = vmatpush1.bf16.msra.mxu0 0
    %8548 = vmatprep.subr.bf16.mxu0 0
    %8549 = vmatpush1.bf16.msra.mxu0 0
    %8550 = vmatprep.subr.bf16.mxu0 0
    %8551 = vmatpush1.bf16.msra.mxu0 0
    %8552 = vmatprep.mubr.bf16.mxu0 %v8303
    %8553 = vmatmul.mubr.bf16.gmra.mrb[0].mxu0 %v8297
    %v8554 = vpop.f32.mrb[0].mxu0
    %v8555 = vadd.f32 %v8512, %v8554
    %v8556 = vpop.f32.mrb[0].mxu0
    %v8557 = vadd.f32 %v8514, %v8556
    %v8558 = vpop.f32.mrb[0].mxu0
    %v8559 = vadd.f32 %v8516, %v8558
    %v8560 = vpop.f32.mrb[0].mxu0
    %v8561 = vadd.f32 %v8518, %v8560
    %8562 = vdwg.mxu0
    %8563 = vmatprep.subr.bf16.mxu0 0
    %8564 = vmatpush1.bf16.msra.mxu0 %v8104
    %8565 = vmatprep.subr.bf16.mxu0 0
    %8566 = vmatpush1.bf16.msra.mxu0 %v8111
    %8567 = vmatprep.subr.bf16.mxu0 0
    %8568 = vmatpush1.bf16.msra.mxu0 %v8118
    %8569 = vmatprep.subr.bf16.mxu0 0
    %8570 = vmatpush1.bf16.msra.mxu0 %v8125
    %8571 = vmatprep.subr.bf16.mxu0 0
    %8572 = vmatpush1.bf16.msra.mxu0 %v8132
    %8573 = vmatprep.subr.bf16.mxu0 0
    %8574 = vmatpush1.bf16.msra.mxu0 %v8139
    %8575 = vmatprep.subr.bf16.mxu0 0
    %8576 = vmatpush1.bf16.msra.mxu0 %v8146
    %8577 = vmatprep.subr.bf16.mxu0 0
    %8578 = vmatpush1.bf16.msra.mxu0 %v8153
    %8579 = vmatprep.subr.bf16.mxu0 0
    %8580 = vmatpush1.bf16.msra.mxu0 %v8160
    %8581 = vmatprep.subr.bf16.mxu0 0
    %8582 = vmatpush1.bf16.msra.mxu0 %v8167
    %8583 = vmatprep.subr.bf16.mxu0 0
    %8584 = vmatpush1.bf16.msra.mxu0 %v8174
    %8585 = vmatprep.subr.bf16.mxu0 0
    %8586 = vmatpush1.bf16.msra.mxu0 %v8181
    %8587 = vmatprep.subr.bf16.mxu0 0
    %8588 = vmatpush1.bf16.msra.mxu0 %v8188
    %8589 = vmatprep.subr.bf16.mxu0 0
    %8590 = vmatpush1.bf16.msra.mxu0 %v8195
    %8591 = vmatprep.subr.bf16.mxu0 0
    %8592 = vmatpush1.bf16.msra.mxu0 %v8202
    %8593 = vmatprep.subr.bf16.mxu0 0
    %8594 = vmatpush1.bf16.msra.mxu0 %v8209
    %8595 = vmatprep.mubr.bf16.mxu0 %v8296
    %8596 = vmatmul.mubr.bf16.gmra.mrb[0].mxu0 %v8295
    %v8597 = vpop.f32.mrb[0].mxu0
    %v8598 = vadd.f32 %v8276, %v8597
    %v8599 = vpop.f32.mrb[0].mxu0
    %v8600 = vpop.f32.mrb[0].mxu0
    %v8601 = vadd.f32 %v8281, %v8600
    %v8602 = vpop.f32.mrb[0].mxu0
    %8603 = vdwg.mxu0
    %8604 = vmatprep.subr.bf16.mxu0 0
    %8605 = vmatpush1.bf16.msra.mxu0 %v8216
    %8606 = vmatprep.subr.bf16.mxu0 0
    %8607 = vmatpush1.bf16.msra.mxu0 %v8223
    %8608 = vmatprep.subr.bf16.mxu0 0
    %8609 = vmatpush1.bf16.msra.mxu0 %v8230
    %8610 = vmatprep.subr.bf16.mxu0 0
    %8611 = vmatpush1.bf16.msra.mxu0 %v8237
    %8612 = vmatprep.subr.bf16.mxu0 0
    %8613 = vmatpush1.bf16.msra.mxu0 %v8244
    %8614 = vmatprep.subr.bf16.mxu0 0
    %8615 = vmatpush1.bf16.msra.mxu0 %v8251
    %8616 = vmatprep.subr.bf16.mxu0 0
    %8617 = vmatpush1.bf16.msra.mxu0 %v8258
    %8618 = vmatprep.subr.bf16.mxu0 0
    %8619 = vmatpush1.bf16.msra.mxu0 %v8265
    %8620 = vmatprep.subr.bf16.mxu0 0
    %8621 = vmatpush1.bf16.msra.mxu0 %v8272
    %8622 = vmatprep.subr.bf16.mxu0 0
    %8623 = vmatpush1.bf16.msra.mxu0 0
    %8624 = vmatprep.subr.bf16.mxu0 0
    %8625 = vmatpush1.bf16.msra.mxu0 0
    %8626 = vmatprep.subr.bf16.mxu0 0
    %8627 = vmatpush1.bf16.msra.mxu0 0
    %8628 = vmatprep.subr.bf16.mxu0 0
    %8629 = vmatpush1.bf16.msra.mxu0 0
    %8630 = vmatprep.subr.bf16.mxu0 0
    %8631 = vmatpush1.bf16.msra.mxu0 0
    %8632 = vmatprep.subr.bf16.mxu0 0
    %8633 = vmatpush1.bf16.msra.mxu0 0
    %8634 = vmatprep.subr.bf16.mxu0 0
    %8635 = vmatpush1.bf16.msra.mxu0 0
    %8636 = vmatprep.mubr.bf16.mxu0 %v8303
    %8637 = vmatmul.mubr.bf16.gmra.mrb[0].mxu0 %v8297
    %v8638 = vpop.f32.mrb[0].mxu0
    %v8639 = vadd.f32 %v8598, %v8638
    %v8640 = vpop.f32.mrb[0].mxu0
    %v8641 = vpop.f32.mrb[0].mxu0
    %v8642 = vadd.f32 %v8601, %v8641
    %v8643 = vpop.f32.mrb[0].mxu0
    %8644 = vdwg.mxu0
    %vm8645 = vcmp.gt.f32.partialorder %v8383, 0.0
    %vm8646 = vcmp.gt.f32.partialorder %v8385, 0.0
    %vm8647 = vcmp.gt.f32.partialorder %v8469, 0.0
    %vm8648 = vcmp.gt.f32.partialorder %v8471, 0.0
    %vm8649 = vcmp.gt.f32.partialorder %v8555, 0.0
    %vm8650 = vcmp.gt.f32.partialorder %v8557, 0.0
    %vm8651 = vcmp.gt.f32.partialorder %v8639, 0.0
    %vm8652 = vcmp.gt.f32.partialorder %v8387, 0.0
    %vm8653 = vcmp.gt.f32.partialorder %v8389, 0.0
    %vm8654 = vcmp.gt.f32.partialorder %v8473, 0.0
    %vm8655 = vcmp.gt.f32.partialorder %v8475, 0.0
    %vm8656 = vcmp.gt.f32.partialorder %v8559, 0.0
    %vm8657 = vcmp.gt.f32.partialorder %v8561, 0.0
    %vm8658 = vcmp.gt.f32.partialorder %v8642, 0.0
    %v8659 = vmul.f32 %v8383, 0.3
    %v8660 = vmul.f32 %v8385, 0.3
    %v8661 = vmul.f32 %v8469, 0.3
    %v8662 = vmul.f32 %v8471, 0.3
    %v8663 = vmul.f32 %v8555, 0.3
    %v8664 = vmul.f32 %v8557, 0.3
    %v8665 = vmul.f32 %v8639, 0.3
    %v8666 = vmul.f32 %v8387, 0.3
    %v8667 = vmul.f32 %v8389, 0.3
    %v8668 = vmul.f32 %v8473, 0.3
    %v8669 = vmul.f32 %v8475, 0.3
    %v8670 = vmul.f32 %v8559, 0.3
    %v8671 = vmul.f32 %v8561, 0.3
    %v8672 = vmul.f32 %v8642, 0.3
    %v8673 = vsel %vm8645, %v8383, %v8659
    %v8674 = vsel %vm8646, %v8385, %v8660
    %v8675 = vsel %vm8647, %v8469, %v8661
    %v8676 = vsel %vm8648, %v8471, %v8662
    %v8677 = vsel %vm8649, %v8555, %v8663
    %v8678 = vsel %vm8650, %v8557, %v8664
    %v8679 = vsel %vm8651, %v8639, %v8665
    %v8680 = vsel %vm8652, %v8387, %v8666
    %v8681 = vsel %vm8653, %v8389, %v8667
    %v8682 = vsel %vm8654, %v8473, %v8668
    %v8683 = vsel %vm8655, %v8475, %v8669
    %v8684 = vsel %vm8656, %v8559, %v8670
    %v8685 = vsel %vm8657, %v8561, %v8671
    %v8686 = vsel %vm8658, %v8642, %v8672
    %8687 = vst [vmem:[#allocation2] sm:$0xff] %v8673
    %8688 = vst [vmem:[#allocation2 + $0x8] sm:$0xff] %v8674
    %8689 = vst [vmem:[#allocation2 + $0x10] sm:$0xff] %v8675
    %8690 = vst [vmem:[#allocation2 + $0x18] sm:$0xff] %v8676
    %8691 = vst [vmem:[#allocation2 + $0x20] sm:$0xff] %v8677
    %8692 = vst [vmem:[#allocation2 + $0x28] sm:$0xff] %v8678
    %8693 = vst.msk [vmem:[#allocation2 + $0x30] sm:$0xff] %vm76, %v8679
    %8694 = vst [vmem:[#allocation2 + $0x38] sm:$0xff] %v8680
    %8695 = vst [vmem:[#allocation2 + $0x40] sm:$0xff] %v8681
    %8696 = vst [vmem:[#allocation2 + $0x48] sm:$0xff] %v8682
    %8697 = vst [vmem:[#allocation2 + $0x50] sm:$0xff] %v8683
    %8698 = vst [vmem:[#allocation2 + $0x58] sm:$0xff] %v8684
    %8699 = vst [vmem:[#allocation2 + $0x60] sm:$0xff] %v8685
    %8700 = vst.msk [vmem:[#allocation2 + $0x68] sm:$0xff] %vm76, %v8686
    %v8701 = vld [vmem:[#allocation2] sm:$0xff]
    %v8702 = vld [vmem:[#allocation2 + $0x38] sm:$0xff]
    %v8703 = vadd.f32 %v8701, 0.0
    %v8704 = vadd.f32 %v8702, 0.0
    %8707 = vrot.lane.b32.xlu0 %v8701, 108
    %v8708 = vpop.permute.xlu0 %8707
    %8709 = vrot.lane.b32.xlu0 %v8702, 108
    %v8710 = vpop.permute.xlu0 %8709
    %v8713 = vadd.f32 %v8703, %v8708
    %v8714 = vadd.f32 %v8704, %v8710
    %8715 = vrot.lane.b32.xlu0 %v8701, 88
    %v8716 = vpop.permute.xlu0 %8715
    %8717 = vrot.lane.b32.xlu0 %v8702, 88
    %v8718 = vpop.permute.xlu0 %8717
    %v8721 = vadd.f32 %v8713, %v8716
    %v8722 = vadd.f32 %v8714, %v8718
    %8723 = vrot.lane.b32.xlu0 %v8701, 68
    %v8724 = vpop.permute.xlu0 %8723
    %8725 = vrot.lane.b32.xlu0 %v8702, 68
    %v8726 = vpop.permute.xlu0 %8725
    %v8729 = vadd.f32 %v8721, %v8724
    %v8730 = vadd.f32 %v8722, %v8726
    %vm8731 = vcmask 31744
    %v8732 = vsel %vm8731, %v8729, 0.0
    %8733 = vadd.xlane.f32.xlu0 %v8732
    %v8734 = vpop.xlane.xlu0 %8733
    %v8735 = vsel %vm8731, %v8730, 0.0
    %8736 = vadd.xlane.f32.xlu0 %v8735
    %v8737 = vpop.xlane.xlu0 %8736
    %v8738 = vmul.f32 %v8734, 0.0625
    %v8739 = vmul.f32 %v8737, 0.0625
    %v8740 = vld [vmem:[#allocation2 + $0x18] sm:$0xff]
    %v8741 = vld [vmem:[#allocation2 + $0x50] sm:$0xff]
    %v8742 = vadd.f32 %v8740, 0.0
    %v8743 = vadd.f32 %v8741, 0.0
    %8746 = vrot.lane.b32.xlu0 %v8740, 108
    %v8747 = vpop.permute.xlu0 %8746
    %8748 = vrot.lane.b32.xlu0 %v8741, 108
    %v8749 = vpop.permute.xlu0 %8748
    %v8752 = vadd.f32 %v8742, %v8747
    %v8753 = vadd.f32 %v8743, %v8749
    %8754 = vrot.lane.b32.xlu0 %v8740, 88
    %v8755 = vpop.permute.xlu0 %8754
    %8756 = vrot.lane.b32.xlu0 %v8741, 88
    %v8757 = vpop.permute.xlu0 %8756
    %v8760 = vadd.f32 %v8752, %v8755
    %v8761 = vadd.f32 %v8753, %v8757
    %8762 = vrot.lane.b32.xlu0 %v8740, 68
    %v8763 = vpop.permute.xlu0 %8762
    %8764 = vrot.lane.b32.xlu0 %v8741, 68
    %v8765 = vpop.permute.xlu0 %8764
    %v8768 = vadd.f32 %v8760, %v8763
    %v8769 = vadd.f32 %v8761, %v8765
    %8772 = vrot.lane.b32.xlu0 %v8768, 112
    %v8773 = vpop.permute.xlu0 %8772
    %8774 = vrot.lane.b32.xlu0 %v8769, 112
    %v8775 = vpop.permute.xlu0 %8774
    %v8778 = vsel %vm8731, %v8773, 0.0
    %8779 = vadd.xlane.f32.xlu0 %v8778
    %v8780 = vpop.xlane.xlu0 %8779
    %v8781 = vsel %vm8731, %v8775, 0.0
    %8782 = vadd.xlane.f32.xlu0 %v8781
    %v8783 = vpop.xlane.xlu0 %8782
    %v8784 = vmul.f32 %v8780, 0.0625
    %v8785 = vmul.f32 %v8783, 0.0625
    %vm8786 = vcmask 7168
    %v8787 = vsel %vm8786, %v8738, %v8784
    %v8788 = vsel %vm8786, %v8739, %v8785
    %v8789 = vld [vmem:[#allocation9 + $0x10] sm:$0xff]
    %v8790 = vld [vmem:[#allocation9 + $0x18] sm:$0xff]
    %v8791 = vld [vmem:[#allocation9 + $0x20] sm:$0xff]
    %v8792 = vld [vmem:[#allocation9 + $0x28] sm:$0xff]
    %v8793 = vld [vmem:[#allocation9 + $0x30] sm:$0xff]
    %v8794 = vld [vmem:[#allocation9 + $0x38] sm:$0xff]
    %v8795 = vld [vmem:[#allocation9 + $0x40] sm:$0x3]
    %v8796 = vld [vmem:[#allocation9 + $0x42] sm:$0xff]
    %v8797 = vld [vmem:[#allocation9 + $0x4a] sm:$0x3]
    %v8798 = vld [vmem:[#allocation9 + $0x4c] sm:$0x1]
    %8800 = vset.pattern.permute.xlu0 16
    %8801 = vperm.xlu0 %8800, %v8789
    %v8802 = vpop.permute.xlu0 %8801
    %8805 = vset.pattern.permute.xlu0 16
    %8806 = vperm.xlu0 %8805, %v8790
    %v8807 = vpop.permute.xlu0 %8806
    %8810 = vset.pattern.permute.xlu0 16
    %8811 = vperm.xlu0 %8810, %v8791
    %v8812 = vpop.permute.xlu0 %8811
    %8815 = vset.pattern.permute.xlu0 16
    %8816 = vperm.xlu0 %8815, %v8792
    %v8817 = vpop.permute.xlu0 %8816
    %8820 = vset.pattern.permute.xlu0 16
    %8821 = vperm.xlu0 %8820, %v8793
    %v8822 = vpop.permute.xlu0 %8821
    %8825 = vset.pattern.permute.xlu0 16
    %8826 = vperm.xlu0 %8825, %v8794
    %v8827 = vpop.permute.xlu0 %8826
    %8830 = vset.pattern.permute.xlu0 16
    %8831 = vperm.xlu0 %8830, %v8795
    %v8832 = vpop.permute.xlu0 %8831
    %v8834 = vsel %vm1926, %v8789, 0
    %v8836 = vsel %vm1926, %v8790, 0
    %v8838 = vsel %vm1926, %v8791, 0
    %v8840 = vsel %vm1926, %v8792, 0
    %v8842 = vsel %vm1926, %v8793, 0
    %v8844 = vsel %vm1926, %v8794, 0
    %v8846 = vsel %vm1926, %v8795, 0
    %8848 = vmatprep.subr.mxu0 0.0
    %8849 = vmatpush1.msra.mxu0 %v8787
    %8850 = vmatprep.subr.mxu0 0.0
    %8851 = vmatpush1.msra.mxu0 %v8788
    %8852 = vmatprep.subr.mxu0 0.0
    %8853 = vmatpush1.msra.mxu0 0.0
    %8854 = vmatprep.subr.mxu0 0.0
    %8855 = vmatpush1.msra.mxu0 0.0
    %8856 = vmatprep.subr.mxu0 0.0
    %8857 = vmatpush1.msra.mxu0 0.0
    %8858 = vmatprep.subr.mxu0 0.0
    %8859 = vmatpush1.msra.mxu0 0.0
    %8860 = vmatprep.subr.mxu0 0.0
    %8861 = vmatpush1.msra.mxu0 0.0
    %8862 = vmatprep.subr.mxu0 0.0
    %8863 = vmatpush1.msra.mxu0 0.0
    %8864 = vmatprep.subr.mxu0 0.0
    %8865 = vmatpush1.msra.mxu0 0.0
    %8866 = vmatprep.subr.mxu0 0.0
    %8867 = vmatpush1.msra.mxu0 0.0
    %8868 = vmatprep.subr.mxu0 0.0
    %8869 = vmatpush1.msra.mxu0 0.0
    %8870 = vmatprep.subr.mxu0 0.0
    %8871 = vmatpush1.msra.mxu0 0.0
    %8872 = vmatprep.subr.mxu0 0.0
    %8873 = vmatpush1.msra.mxu0 0.0
    %8874 = vmatprep.subr.mxu0 0.0
    %8875 = vmatpush1.msra.mxu0 0.0
    %8876 = vmatprep.subr.mxu0 0.0
    %8877 = vmatpush1.msra.mxu0 0.0
    %8878 = vmatprep.subr.mxu0 0.0
    %8879 = vmatpush1.msra.mxu0 0.0
    %8880 = vmatprep.subr.mxu0 0.0
    %8881 = vmatpush1.msra.mxu0 0.0
    %8882 = vmatprep.subr.mxu0 0.0
    %8883 = vmatpush1.msra.mxu0 0.0
    %8884 = vmatprep.subr.mxu0 0.0
    %8885 = vmatpush1.msra.mxu0 0.0
    %8886 = vmatprep.subr.mxu0 0.0
    %8887 = vmatpush1.msra.mxu0 0.0
    %8888 = vmatprep.subr.mxu0 0.0
    %8889 = vmatpush1.msra.mxu0 0.0
    %8890 = vmatprep.subr.mxu0 0.0
    %8891 = vmatpush1.msra.mxu0 0.0
    %8892 = vmatprep.subr.mxu0 0.0
    %8893 = vmatpush1.msra.mxu0 0.0
    %8894 = vmatprep.subr.mxu0 0.0
    %8895 = vmatpush1.msra.mxu0 0.0
    %8896 = vmatprep.subr.mxu0 0.0
    %8897 = vmatpush1.msra.mxu0 0.0
    %8898 = vmatprep.subr.mxu0 0.0
    %8899 = vmatpush1.msra.mxu0 0.0
    %8900 = vmatprep.subr.mxu0 0.0
    %8901 = vmatpush1.msra.mxu0 0.0
    %8902 = vmatprep.subr.mxu0 0.0
    %8903 = vmatpush1.msra.mxu0 0.0
    %8904 = vmatprep.subr.mxu0 0.0
    %8905 = vmatpush1.msra.mxu0 0.0
    %8906 = vmatprep.subr.mxu0 0.0
    %8907 = vmatpush1.msra.mxu0 0.0
    %8908 = vmatprep.subr.mxu0 0.0
    %8909 = vmatpush1.msra.mxu0 0.0
    %8910 = vmatprep.subr.mxu0 0.0
    %8911 = vmatpush1.msra.mxu0 0.0
    %8912 = vmatprep.mubr.f32.mxu0 0.0
    %8913 = vmatmul.mubr.f32.gmra.mrb[0].mxu0 %v8834
    %v8914 = vpop.f32.mrb[0].mxu0
    %v8915 = vadd.f32 %v8802, %v8914
    %v8916 = vpop.f32.mrb[0].mxu0
    %8917 = vmatprep.mubr.f32.mxu0 0.0
    %8918 = vmatmul.mubr.f32.gmra.mrb[0].mxu0 %v8836
    %v8919 = vpop.f32.mrb[0].mxu0
    %v8920 = vadd.f32 %v8807, %v8919
    %v8921 = vpop.f32.mrb[0].mxu0
    %8922 = vmatprep.mubr.f32.mxu0 0.0
    %8923 = vmatmul.mubr.f32.gmra.mrb[0].mxu0 %v8838
    %v8924 = vpop.f32.mrb[0].mxu0
    %v8925 = vadd.f32 %v8812, %v8924
    %v8926 = vpop.f32.mrb[0].mxu0
    %8927 = vmatprep.mubr.f32.mxu0 0.0
    %8928 = vmatmul.mubr.f32.gmra.mrb[0].mxu0 %v8840
    %v8929 = vpop.f32.mrb[0].mxu0
    %v8930 = vadd.f32 %v8817, %v8929
    %v8931 = vpop.f32.mrb[0].mxu0
    %8932 = vmatprep.mubr.f32.mxu0 0.0
    %8933 = vmatmul.mubr.f32.gmra.mrb[0].mxu0 %v8842
    %v8934 = vpop.f32.mrb[0].mxu0
    %v8935 = vadd.f32 %v8822, %v8934
    %v8936 = vpop.f32.mrb[0].mxu0
    %8937 = vmatprep.mubr.f32.mxu0 0.0
    %8938 = vmatmul.mubr.f32.gmra.mrb[0].mxu0 %v8844
    %v8939 = vpop.f32.mrb[0].mxu0
    %v8940 = vadd.f32 %v8827, %v8939
    %v8941 = vpop.f32.mrb[0].mxu0
    %8942 = vmatprep.mubr.f32.mxu0 0.0
    %8943 = vmatmul.mubr.f32.gmra.mrb[0].mxu0 %v8846
    %v8944 = vpop.f32.mrb[0].mxu0
    %v8945 = vadd.f32 %v8832, %v8944
    %v8946 = vpop.f32.mrb[0].mxu0
    %8947 = vdwg.mxu0
    %vm8948 = vcmp.gt.f32.partialorder %v8915, 0.0
    %vm8949 = vcmp.gt.f32.partialorder %v8920, 0.0
    %vm8950 = vcmp.gt.f32.partialorder %v8925, 0.0
    %vm8951 = vcmp.gt.f32.partialorder %v8930, 0.0
    %vm8952 = vcmp.gt.f32.partialorder %v8935, 0.0
    %vm8953 = vcmp.gt.f32.partialorder %v8940, 0.0
    %vm8954 = vcmp.gt.f32.partialorder %v8945, 0.0
    %v8955 = vmul.f32 %v8915, 0.3
    %v8956 = vmul.f32 %v8920, 0.3
    %v8957 = vmul.f32 %v8925, 0.3
    %v8958 = vmul.f32 %v8930, 0.3
    %v8959 = vmul.f32 %v8935, 0.3
    %v8960 = vmul.f32 %v8940, 0.3
    %v8961 = vmul.f32 %v8945, 0.3
    %v8962 = vsel %vm8948, %v8915, %v8955
    %v8963 = vsel %vm8949, %v8920, %v8956
    %v8964 = vsel %vm8950, %v8925, %v8957
    %v8965 = vsel %vm8951, %v8930, %v8958
    %v8966 = vsel %vm8952, %v8935, %v8959
    %v8967 = vsel %vm8953, %v8940, %v8960
    %v8968 = vsel %vm8954, %v8945, %v8961
    %8970 = vset.pattern.permute.xlu0 50
    %8971 = vperm.xlu0 %8970, %v8796
    %v8972 = vpop.permute.xlu0 %8971
    %8975 = vset.pattern.permute.xlu0 50
    %8976 = vperm.xlu0 %8975, %v8797
    %v8977 = vpop.permute.xlu0 %8976
    %vm8979 = vcmask 408576
    %v8980 = vsel %vm8979, %v8796, 0
    %v8982 = vsel %vm8979, %v8797, 0
    %vm8984 = vcmask 1041408
    %v8986 = vsel %vm8984, %v8968, 0
    %8988 = vmatprep.subr.mxu0 0.0
    %8989 = vmatpush1.msra.mxu0 %v8962
    %8990 = vmatprep.subr.mxu0 0.0
    %8991 = vmatpush1.msra.mxu0 %v8963
    %8992 = vmatprep.subr.mxu0 0.0
    %8993 = vmatpush1.msra.mxu0 %v8964
    %8994 = vmatprep.subr.mxu0 0.0
    %8995 = vmatpush1.msra.mxu0 %v8965
    %8996 = vmatprep.subr.mxu0 0.0
    %8997 = vmatpush1.msra.mxu0 %v8966
    %8998 = vmatprep.subr.mxu0 0.0
    %8999 = vmatpush1.msra.mxu0 %v8967
    %9000 = vmatprep.subr.mxu0 0.0
    %9001 = vmatpush1.msra.mxu0 %v8986
    %9002 = vmatprep.subr.mxu0 0.0
    %9003 = vmatpush1.msra.mxu0 0.0
    %9004 = vmatprep.subr.mxu0 0.0
    %9005 = vmatpush1.msra.mxu0 0.0
    %9006 = vmatprep.subr.mxu0 0.0
    %9007 = vmatpush1.msra.mxu0 0.0
    %9008 = vmatprep.subr.mxu0 0.0
    %9009 = vmatpush1.msra.mxu0 0.0
    %9010 = vmatprep.subr.mxu0 0.0
    %9011 = vmatpush1.msra.mxu0 0.0
    %9012 = vmatprep.subr.mxu0 0.0
    %9013 = vmatpush1.msra.mxu0 0.0
    %9014 = vmatprep.subr.mxu0 0.0
    %9015 = vmatpush1.msra.mxu0 0.0
    %9016 = vmatprep.subr.mxu0 0.0
    %9017 = vmatpush1.msra.mxu0 0.0
    %9018 = vmatprep.subr.mxu0 0.0
    %9019 = vmatpush1.msra.mxu0 0.0
    %9020 = vmatprep.subr.mxu0 0.0
    %9021 = vmatpush1.msra.mxu0 0.0
    %9022 = vmatprep.subr.mxu0 0.0
    %9023 = vmatpush1.msra.mxu0 0.0
    %9024 = vmatprep.subr.mxu0 0.0
    %9025 = vmatpush1.msra.mxu0 0.0
    %9026 = vmatprep.subr.mxu0 0.0
    %9027 = vmatpush1.msra.mxu0 0.0
    %9028 = vmatprep.subr.mxu0 0.0
    %9029 = vmatpush1.msra.mxu0 0.0
    %9030 = vmatprep.subr.mxu0 0.0
    %9031 = vmatpush1.msra.mxu0 0.0
    %9032 = vmatprep.subr.mxu0 0.0
    %9033 = vmatpush1.msra.mxu0 0.0
    %9034 = vmatprep.subr.mxu0 0.0
    %9035 = vmatpush1.msra.mxu0 0.0
    %9036 = vmatprep.subr.mxu0 0.0
    %9037 = vmatpush1.msra.mxu0 0.0
    %9038 = vmatprep.subr.mxu0 0.0
    %9039 = vmatpush1.msra.mxu0 0.0
    %9040 = vmatprep.subr.mxu0 0.0
    %9041 = vmatpush1.msra.mxu0 0.0
    %9042 = vmatprep.subr.mxu0 0.0
    %9043 = vmatpush1.msra.mxu0 0.0
    %9044 = vmatprep.subr.mxu0 0.0
    %9045 = vmatpush1.msra.mxu0 0.0
    %9046 = vmatprep.subr.mxu0 0.0
    %9047 = vmatpush1.msra.mxu0 0.0
    %9048 = vmatprep.subr.mxu0 0.0
    %9049 = vmatpush1.msra.mxu0 0.0
    %9050 = vmatprep.subr.mxu0 0.0
    %9051 = vmatpush1.msra.mxu0 0.0
    %9052 = vmatprep.mubr.f32.mxu0 0.0
    %9053 = vmatmul.mubr.f32.gmra.mrb[0].mxu0 %v8980
    %v9054 = vpop.f32.mrb[0].mxu0
    %v9055 = vadd.f32 %v8972, %v9054
    %v9056 = vpop.f32.mrb[0].mxu0
    %9057 = vmatprep.mubr.f32.mxu0 0.0
    %9058 = vmatmul.mubr.f32.gmra.mrb[0].mxu0 %v8982
    %v9059 = vpop.f32.mrb[0].mxu0
    %v9060 = vadd.f32 %v8977, %v9059
    %v9061 = vpop.f32.mrb[0].mxu0
    %9062 = vdwg.mxu0
    %vm9063 = vcmp.gt.f32.partialorder %v9055, 0.0
    %vm9064 = vcmp.gt.f32.partialorder %v9060, 0.0
    %v9065 = vmul.f32 %v9055, 0.3
    %v9066 = vmul.f32 %v9060, 0.3
    %v9067 = vsel %vm9063, %v9055, %v9065
    %v9068 = vsel %vm9064, %v9060, %v9066
    %9070 = vset.pattern.permute.xlu0 10
    %9071 = vperm.xlu0 %9070, %v8798
    %v9072 = vpop.permute.xlu0 %9071
    %vm9074 = vcmask 80896
    %v9075 = vsel %vm9074, %v8798, 0
    %v9078 = vsel %vm8984, %v9068, 0
    %9080 = vmatprep.subr.mxu0 0.0
    %9081 = vmatpush1.msra.mxu0 %v9067
    %9082 = vmatprep.subr.mxu0 0.0
    %9083 = vmatpush1.msra.mxu0 %v9078
    %9084 = vmatprep.subr.mxu0 0.0
    %9085 = vmatpush1.msra.mxu0 0.0
    %9086 = vmatprep.subr.mxu0 0.0
    %9087 = vmatpush1.msra.mxu0 0.0
    %9088 = vmatprep.subr.mxu0 0.0
    %9089 = vmatpush1.msra.mxu0 0.0
    %9090 = vmatprep.subr.mxu0 0.0
    %9091 = vmatpush1.msra.mxu0 0.0
    %9092 = vmatprep.subr.mxu0 0.0
    %9093 = vmatpush1.msra.mxu0 0.0
    %9094 = vmatprep.subr.mxu0 0.0
    %9095 = vmatpush1.msra.mxu0 0.0
    %9096 = vmatprep.subr.mxu0 0.0
    %9097 = vmatpush1.msra.mxu0 0.0
    %9098 = vmatprep.subr.mxu0 0.0
    %9099 = vmatpush1.msra.mxu0 0.0
    %9100 = vmatprep.subr.mxu0 0.0
    %9101 = vmatpush1.msra.mxu0 0.0
    %9102 = vmatprep.subr.mxu0 0.0
    %9103 = vmatpush1.msra.mxu0 0.0
    %9104 = vmatprep.subr.mxu0 0.0
    %9105 = vmatpush1.msra.mxu0 0.0
    %9106 = vmatprep.subr.mxu0 0.0
    %9107 = vmatpush1.msra.mxu0 0.0
    %9108 = vmatprep.subr.mxu0 0.0
    %9109 = vmatpush1.msra.mxu0 0.0
    %9110 = vmatprep.subr.mxu0 0.0
    %9111 = vmatpush1.msra.mxu0 0.0
    %9112 = vmatprep.subr.mxu0 0.0
    %9113 = vmatpush1.msra.mxu0 0.0
    %9114 = vmatprep.subr.mxu0 0.0
    %9115 = vmatpush1.msra.mxu0 0.0
    %9116 = vmatprep.subr.mxu0 0.0
    %9117 = vmatpush1.msra.mxu0 0.0
    %9118 = vmatprep.subr.mxu0 0.0
    %9119 = vmatpush1.msra.mxu0 0.0
    %9120 = vmatprep.subr.mxu0 0.0
    %9121 = vmatpush1.msra.mxu0 0.0
    %9122 = vmatprep.subr.mxu0 0.0
    %9123 = vmatpush1.msra.mxu0 0.0
    %9124 = vmatprep.subr.mxu0 0.0
    %9125 = vmatpush1.msra.mxu0 0.0
    %9126 = vmatprep.subr.mxu0 0.0
    %9127 = vmatpush1.msra.mxu0 0.0
    %9128 = vmatprep.subr.mxu0 0.0
    %9129 = vmatpush1.msra.mxu0 0.0
    %9130 = vmatprep.subr.mxu0 0.0
    %9131 = vmatpush1.msra.mxu0 0.0
    %9132 = vmatprep.subr.mxu0 0.0
    %9133 = vmatpush1.msra.mxu0 0.0
    %9134 = vmatprep.subr.mxu0 0.0
    %9135 = vmatpush1.msra.mxu0 0.0
    %9136 = vmatprep.subr.mxu0 0.0
    %9137 = vmatpush1.msra.mxu0 0.0
    %9138 = vmatprep.subr.mxu0 0.0
    %9139 = vmatpush1.msra.mxu0 0.0
    %9140 = vmatprep.subr.mxu0 0.0
    %9141 = vmatpush1.msra.mxu0 0.0
    %9142 = vmatprep.subr.mxu0 0.0
    %9143 = vmatpush1.msra.mxu0 0.0
    %9144 = vmatprep.mubr.f32.mxu0 0.0
    %9145 = vmatmul.mubr.f32.gmra.mrb[0].mxu0 %v9075
    %v9146 = vpop.f32.mrb[0].mxu0
    %v9147 = vadd.f32 %v9072, %v9146
    %v9148 = vpop.f32.mrb[0].mxu0
    %9149 = vdwg.mxu0
    %vm9150 = vcmask 8192
    %9151 = vst.msk [vmem:[#allocation10] sm:$0x1] %vm9150, %v9147
    // Predicated region
    $region26: #{tpu_custom_call.1} parent=1 // pred_check
      _
    $region27: #{tpu_custom_call.1} parent=1 // pred_check_branch
      %9153 = sbr.rel (0) target = $region29
    $region28: #{tpu_custom_call.1} parent=1 // pred_region
      %s9155 = ssub.s32 16, 16
      %9156 = vsyncadd [#allocation6], %s9155
      %s9158 = sshll.u32 [#allocation10], 4
      %s9159 = int_to_ptr.vmem [resolvable:$true] %s9158
      %9161 = dma.vmem_to_hbm [thread:$0]  %s9159, 16, %s3, [#allocation6]
    $region29: #{tpu_custom_call.1} parent=1 // pred_fallthru
      _
    // Predicated region
    $region30: #{tpu_custom_call.1} parent=1 // pred_check
      _
    $region31: #{tpu_custom_call.1} parent=1 // pred_check_branch
      %9163 = sbr.rel (0) target = $region33
    $region32: #{tpu_custom_call.1} parent=1 // pred_region
      %9164 = dma.done [#allocation6], 16
    $region33: #{tpu_custom_call.1} parent=1 // pred_fallthru
      _
    %9165 = vsyncpa [#allocation5], 1
    %9166 = vsyncpa [#allocation8], 1
    %9167 = vsyncpa [#allocation6], 1

</llo_original>
